<compile_context>
chip_gen: v7x
topology: tpu7x:2x2x1
jax: 0.10.0
libtpu: 0.0.40
codegen_flags: <defaults>
</compile_context>

<pallas_src>
import functools

import jax
import jax.numpy as jnp
from jax import lax
from jax.experimental import pallas as pl
from jax.experimental.pallas import tpu as pltpu


_VMEM = pl.BlockSpec(memory_space=pltpu.MemorySpace.VMEM)


# ------------------------------ Pallas kernels ------------------------------

def _enc_conv3x3_kernel(x_ref, w_ref, b_ref, o_ref, *, offsets, phases, m):
    """Conv2d(3x3, stride 2, pad 1) + bias + ReLU as 9 shifted-row matmuls.

    x_ref : (4, Min, Cin) f32  parity-split, spatially padded, flattened input
                               (Min >= m + max(offsets); tail rows are zero)
    w_ref : (9, Cin, Cout) bf16 per-tap weight matrices
    b_ref : (1, Cout)      f32  bias
    o_ref : (m, Cout)      f32  output over the full padded output grid
    """
    cout = o_ref.shape[-1]
    acc = jnp.zeros((m, cout), jnp.float32)
    for t in range(9):
        # bf16 MXU operands, f32 accumulation (single-pass MXU path).
        a = x_ref[phases[t], pl.ds(offsets[t], m), :].astype(jnp.bfloat16)
        acc = acc + jnp.dot(a, w_ref[t], preferred_element_type=jnp.float32)
    o_ref[...] = jnp.maximum(acc + b_ref[...], 0.0)


def _dec_convT3x3_kernel(x_ref, w_ref, b_ref, o_ref, *, pitch, m, sigmoid):
    """Polyphase ConvTranspose2d(3x3, s=2, p=1, output_padding=1) + bias + act.

    Each output parity (py, px) is a stride-1 conv over the COMPACT (non
    zero-dilated) input using its own subset of the 9 taps:
        out[2i  , 2j  ] = x[i,j]W11
        out[2i  , 2j+1] = x[i,j+1]W10 + x[i,j]W12
        out[2i+1, 2j  ] = x[i+1,j]W01 + x[i,j]W21
        out[2i+1, 2j+1] = x[i+1,j+1]W00 + x[i+1,j]W02 + x[i,j+1]W20 + x[i,j]W22

    x_ref : (Min, Cin) f32  input flattened over a (IH+1, IW+1) bottom/right
                            zero-padded grid, plus zero tail rows
    w_ref : (9, Cin, Cout) bf16 per-tap (UNFLIPPED) weight matrices
    b_ref : (1, Cout)      f32
    o_ref : (4, m, Cout)   f32 — one slab per output parity p = 2*py + px
    """
    def dot(a, b):
        return jnp.dot(a, b, preferred_element_type=jnp.float32)

    def w(ky, kx):
        return w_ref[ky * 3 + kx]

    # The four shifted views of the compact input (cast once each to bf16).
    x00 = x_ref[pl.ds(0, m), :].astype(jnp.bfloat16)            # x[i  , j  ]
    x01 = x_ref[pl.ds(1, m), :].astype(jnp.bfloat16)            # x[i  , j+1]
    x10 = x_ref[pl.ds(pitch, m), :].astype(jnp.bfloat16)        # x[i+1, j  ]
    x11 = x_ref[pl.ds(pitch + 1, m), :].astype(jnp.bfloat16)    # x[i+1, j+1]

    pre = (
        dot(x00, w(1, 1)),                                      # (even, even)
        dot(x01, w(1, 0)) + dot(x00, w(1, 2)),                  # (even, odd )
        dot(x10, w(0, 1)) + dot(x00, w(2, 1)),                  # (odd , even)
        dot(x11, w(0, 0)) + dot(x10, w(0, 2))
        + dot(x01, w(2, 0)) + dot(x00, w(2, 2)),                # (odd , odd )
    )
    for p in range(4):
        y = pre[p] + b_ref[...]
        if sigmoid:
            # exp + approximate reciprocal both use the EUP slot; logits here
            # are O(1) so exp(-y) cannot overflow.
            y = pl.reciprocal(1.0 + jnp.exp(-y), approx=True)
        else:
            y = jnp.maximum(y, 0.0)
        o_ref[p, :, :] = y


# ----------------------------- layer wrappers -----------------------------

def _conv3x3_s2_relu(x, w_taps, bias):
    """Conv2d(k=3, s=2, p=1) + bias + ReLU on NHWC f32 input (H, W even)."""
    B, H, W, Cin = x.shape
    assert H % 2 == 0 and W % 2 == 0
    OH, OW = H // 2, W // 2
    OHp, OWp = OH + 1, OW + 1
    Cout = w_taps.shape[-1]
    Mp = B * OHp * OWp

    # pad by 1, parity-split so every stride-2 tap is a contiguous row shift of
    # one flattened 2-D matrix (no im2col blow-up, size-preserving).
    xp = jnp.pad(x, ((0, 0), (1, 1), (1, 1), (0, 0)))
    pf = (xp.reshape(B, OHp, 2, OWp, 2, Cin)
            .transpose(2, 4, 0, 1, 3, 5)
            .reshape(4, Mp, Cin))
    # zero tail rows so the kernel can compute/store the FULL padded output
    # grid without post-kernel padding: max row read = Mp - 1 + OWp + 1.
    pf = jnp.pad(pf, ((0, 0), (0, OWp + 1), (0, 0)))

    offsets = tuple((kh // 2) * OWp + (kw // 2)
                    for kh in range(3) for kw in range(3))
    phases = tuple((kh % 2) * 2 + (kw % 2)
                   for kh in range(3) for kw in range(3))
    assert pf.shape[1] >= Mp + max(offsets)          # in-bounds for all taps

    out = pl.pallas_call(
        functools.partial(_enc_conv3x3_kernel,
                          offsets=offsets, phases=phases, m=Mp),
        out_shape=jax.ShapeDtypeStruct((Mp, Cout), jnp.float32),
        in_specs=[_VMEM, _VMEM, _VMEM],
        out_specs=_VMEM,
    )(pf, w_taps, bias)

    # drop the garbage rows/cols of the padded output grid, restore NHWC
    return out.reshape(B, OHp, OWp, Cout)[:, :OH, :OW, :]


def _convT3x3_s2(x, w_taps, bias, sigmoid):
    """ConvTranspose2d(k=3, s=2, p=1, output_padding=1) + bias + act, NHWC."""
    B, IH, IW, Cin = x.shape
    IHp, IWp = IH + 1, IW + 1
    Cout = w_taps.shape[-1]
    Mp = B * IHp * IWp

    # compact input, zero-padded bottom/right (boundary taps) and with zero
    # tail rows so the full padded grid is computed in-bounds.
    xp = jnp.pad(x, ((0, 0), (0, 1), (0, 1), (0, 0))).reshape(Mp, Cin)
    xp = jnp.pad(xp, ((0, IWp + 1), (0, 0)))
    assert xp.shape[0] >= Mp + IWp + 1               # in-bounds for all taps

    out = pl.pallas_call(
        functools.partial(_dec_convT3x3_kernel,
                          pitch=IWp, m=Mp, sigmoid=sigmoid),
        out_shape=jax.ShapeDtypeStruct((4, Mp, Cout), jnp.float32),
        in_specs=[_VMEM, _VMEM, _VMEM],
        out_specs=_VMEM,
    )(xp, w_taps, bias)

    # crop the padded grid and interleave the 4 parities (sub-pixel shuffle)
    out = out.reshape(2, 2, B, IHp, IWp, Cout)[:, :, :, :IH, :IW, :]
    return out.transpose(2, 3, 0, 4, 1, 5).reshape(B, 2 * IH, 2 * IW, Cout)


# ----------------------------- forward (jitted) -----------------------------

@jax.jit
def capsule_autoencoder_forward(x_nchw, packed):
    x = jnp.transpose(x_nchw, (0, 2, 3, 1))            # NCHW -> NHWC
    for p in packed["encoder"]:
        x = _conv3x3_s2_relu(x, p["w_taps"], p["bias"])
    dec = packed["decoder"]
    for i, p in enumerate(dec):
        x = _convT3x3_s2(x, p["w_taps"], p["bias"],
                         sigmoid=(i == len(dec) - 1))
    # the last layer's Cout was zero-padded to 128 lanes at pack time so its
    # stores are unmasked / lane-dense; crop back to the real 3 channels.
    x = x[..., :3]
    return jnp.transpose(x, (0, 3, 1, 2))               # back to NCHW


# ----------------------------- params & packing -----------------------------

def init_params(key):
    enc_ch = [(3, 32), (32, 64), (64, 128)]
    dec_ch = [(128, 64), (64, 32), (32, 3)]
    params = dict(encoder=[], decoder=[])
    for cin, cout in enc_ch:
        key, kw, kb = jax.random.split(key, 3)
        params["encoder"].append(dict(
            # PyTorch Conv2d weight layout: (Cout, Cin, KH, KW)
            w=jax.random.normal(kw, (cout, cin, 3, 3), jnp.float32)
              / jnp.sqrt(cin * 9.0),
            b=0.1 * jax.random.normal(kb, (cout,), jnp.float32)))
    for cin, cout in dec_ch:
        key, kw, kb = jax.random.split(key, 3)
        params["decoder"].append(dict(
            # PyTorch ConvTranspose2d weight layout: (Cin, Cout, KH, KW)
            w=jax.random.normal(kw, (cin, cout, 3, 3), jnp.float32)
              / jnp.sqrt(cin * 9.0),
            b=0.1 * jax.random.normal(kb, (cout,), jnp.float32)))
    return params


def pack_params(params):
    """One-time repack: per-tap (9, Cin, Cout) bf16 weights + (1, Cout) f32 bias.

    Decoder weights are stored UNFLIPPED (the polyphase kernel uses the direct
    transposed-conv taps).  The last decoder layer's Cout is zero-padded from
    3 to 128 so the widest-M store epilogue is lane-dense (cropped outside).
    """
    enc = []
    for p in params["encoder"]:
        w = p["w"]                                   # (Cout, Cin, 3, 3)
        cout, cin = w.shape[0], w.shape[1]
        w_taps = jnp.transpose(w, (2, 3, 1, 0)).reshape(9, cin, cout)
        enc.append(dict(w_taps=w_taps.astype(jnp.bfloat16),
                        bias=p["b"].reshape(1, cout).astype(jnp.float32)))
    dec = []
    n_dec = len(params["decoder"])
    for i, p in enumerate(params["decoder"]):
        w = p["w"]                                   # (Cin, Cout, 3, 3)
        cin, cout = w.shape[0], w.shape[1]
        w_taps = jnp.transpose(w, (2, 3, 0, 1)).reshape(9, cin, cout)
        bias = p["b"].reshape(1, cout)
        if i == n_dec - 1 and cout < 128:            # lane-dense final store
            w_taps = jnp.pad(w_taps, ((0, 0), (0, 0), (0, 128 - cout)))
            bias = jnp.pad(bias, ((0, 0), (0, 128 - cout)))
        dec.append(dict(w_taps=w_taps.astype(jnp.bfloat16),
                        bias=bias.astype(jnp.float32)))
    return dict(encoder=enc, decoder=dec)


# ----------------------------- pure-XLA reference -----------------------------

def reference_forward(x_nchw, params):
    """All-f32, HIGHEST-precision reference matching the PyTorch module."""
    x = jnp.transpose(x_nchw, (0, 2, 3, 1))
    for p in params["encoder"]:
        w_hwio = jnp.transpose(p["w"], (2, 3, 1, 0))
        x = lax.conv_general_dilated(
            x, w_hwio, window_strides=(2, 2), padding=((1, 1), (1, 1)),
            dimension_numbers=("NHWC", "HWIO", "NHWC"),
            precision=lax.Precision.HIGHEST) + p["b"]
        x = jnp.maximum(x, 0.0)
    n_dec = len(params["decoder"])
    for i, p in enumerate(params["decoder"]):
        w_hwio = jnp.transpose(jnp.flip(p["w"], (2, 3)), (2, 3, 0, 1))
        x = lax.conv_general_dilated(
            x, w_hwio, window_strides=(1, 1), padding=((1, 2), (1, 2)),
            lhs_dilation=(2, 2),
            dimension_numbers=("NHWC", "HWIO", "NHWC"),
            precision=lax.Precision.HIGHEST) + p["b"]
        x = jnp.maximum(x, 0.0) if i < n_dec - 1 else jax.nn.sigmoid(x)
    return jnp.transpose(x, (0, 3, 1, 2))


# ----------------------------- main -----------------------------

if __name__ == "__main__":
    key = jax.random.PRNGKey(0)
    k_params, k_x = jax.random.split(key)
    params = init_params(k_params)
    packed = pack_params(params)                     # one-time weight repack

    x = jax.random.normal(k_x, (2, 3, 16, 16), jnp.float32)   # NCHW, as in PyTorch

    out = jax.block_until_ready(capsule_autoencoder_forward(x, packed))
    assert out.shape == (2, 3, 16, 16), out.shape

    ref = jax.block_until_ready(reference_forward(x, params))
    max_err = float(jnp.max(jnp.abs(out - ref)))
    # Kernel runs bf16-in / f32-acc on the MXU (fast path); reference is all-f32
    # HIGHEST, so the tolerance reflects bf16 operand quantization over 6 layers.
    if not jnp.allclose(out, ref, rtol=3e-2, atol=3e-2):
        raise AssertionError(f"mismatch vs reference: max abs err = {max_err}")

    print("KERNEL_OK")
</pallas_src>

<mosaic_0001>
module attributes {stable_mosaic.version = 11 : i64} {
  func.func @_enc_conv3x3_kernel(%arg0: memref<4x172x3xf32, #tpu.memory_space<vmem>>, %arg1: memref<9x3x32xbf16, #tpu.memory_space<vmem>>, %arg2: memref<1x32xf32, #tpu.memory_space<vmem>>, %arg3: memref<162x32xf32, #tpu.memory_space<vmem>>) attributes {dimension_semantics = [], scalar_prefetch = 0 : i64, scratch_operands = 0 : i64, tpu.core_type = #tpu.core_type<tc>} {
    %cst = arith.constant 0.000000e+00 : f32
    %0 = vector.broadcast %cst : f32 to vector<162x32xf32>
    %c0 = arith.constant 0 : index
    %c0_0 = arith.constant 0 : index
    %c0_1 = arith.constant 0 : index
    %1 = vector.load %arg0[%c0, %c0_0, %c0_1] : memref<4x172x3xf32, #tpu.memory_space<vmem>>, vector<1x162x3xf32>
    %2 = vector.shape_cast %1 : vector<1x162x3xf32> to vector<162x3xf32>
    %3 = arith.truncf %2 : vector<162x3xf32> to vector<162x3xbf16>
    %c0_2 = arith.constant 0 : index
    %c0_3 = arith.constant 0 : index
    %c0_4 = arith.constant 0 : index
    %4 = vector.load %arg1[%c0_2, %c0_3, %c0_4] : memref<9x3x32xbf16, #tpu.memory_space<vmem>>, vector<1x3x32xbf16>
    %5 = vector.shape_cast %4 : vector<1x3x32xbf16> to vector<3x32xbf16>
    %cst_5 = arith.constant dense<0.000000e+00> : vector<162x32xf32>
    %6 = tpu.matmul %3, %5, %cst_5 {dimension_numbers = #tpu.dot_dimension_numbers<[1], [0], [0], [1], [0, 0, 1, 1], [], []>} : vector<162x3xbf16>, vector<3x32xbf16>, vector<162x32xf32> -> vector<162x32xf32>
    %7 = arith.addf %0, %6 : vector<162x32xf32>
    %c1 = arith.constant 1 : index
    %c0_6 = arith.constant 0 : index
    %c0_7 = arith.constant 0 : index
    %8 = vector.load %arg0[%c1, %c0_6, %c0_7] : memref<4x172x3xf32, #tpu.memory_space<vmem>>, vector<1x162x3xf32>
    %9 = vector.shape_cast %8 : vector<1x162x3xf32> to vector<162x3xf32>
    %10 = arith.truncf %9 : vector<162x3xf32> to vector<162x3xbf16>
    %c1_8 = arith.constant 1 : index
    %c0_9 = arith.constant 0 : index
    %c0_10 = arith.constant 0 : index
    %11 = vector.load %arg1[%c1_8, %c0_9, %c0_10] : memref<9x3x32xbf16, #tpu.memory_space<vmem>>, vector<1x3x32xbf16>
    %12 = vector.shape_cast %11 : vector<1x3x32xbf16> to vector<3x32xbf16>
    %cst_11 = arith.constant dense<0.000000e+00> : vector<162x32xf32>
    %13 = tpu.matmul %10, %12, %cst_11 {dimension_numbers = #tpu.dot_dimension_numbers<[1], [0], [0], [1], [0, 0, 1, 1], [], []>} : vector<162x3xbf16>, vector<3x32xbf16>, vector<162x32xf32> -> vector<162x32xf32>
    %14 = arith.addf %7, %13 : vector<162x32xf32>
    %c0_12 = arith.constant 0 : index
    %c1_13 = arith.constant 1 : index
    %c0_14 = arith.constant 0 : index
    %15 = vector.load %arg0[%c0_12, %c1_13, %c0_14] : memref<4x172x3xf32, #tpu.memory_space<vmem>>, vector<1x162x3xf32>
    %16 = vector.shape_cast %15 : vector<1x162x3xf32> to vector<162x3xf32>
    %17 = arith.truncf %16 : vector<162x3xf32> to vector<162x3xbf16>
    %c2 = arith.constant 2 : index
    %c0_15 = arith.constant 0 : index
    %c0_16 = arith.constant 0 : index
    %18 = vector.load %arg1[%c2, %c0_15, %c0_16] : memref<9x3x32xbf16, #tpu.memory_space<vmem>>, vector<1x3x32xbf16>
    %19 = vector.shape_cast %18 : vector<1x3x32xbf16> to vector<3x32xbf16>
    %cst_17 = arith.constant dense<0.000000e+00> : vector<162x32xf32>
    %20 = tpu.matmul %17, %19, %cst_17 {dimension_numbers = #tpu.dot_dimension_numbers<[1], [0], [0], [1], [0, 0, 1, 1], [], []>} : vector<162x3xbf16>, vector<3x32xbf16>, vector<162x32xf32> -> vector<162x32xf32>
    %21 = arith.addf %14, %20 : vector<162x32xf32>
    %c2_18 = arith.constant 2 : index
    %c0_19 = arith.constant 0 : index
    %c0_20 = arith.constant 0 : index
    %22 = vector.load %arg0[%c2_18, %c0_19, %c0_20] : memref<4x172x3xf32, #tpu.memory_space<vmem>>, vector<1x162x3xf32>
    %23 = vector.shape_cast %22 : vector<1x162x3xf32> to vector<162x3xf32>
    %24 = arith.truncf %23 : vector<162x3xf32> to vector<162x3xbf16>
    %c3 = arith.constant 3 : index
    %c0_21 = arith.constant 0 : index
    %c0_22 = arith.constant 0 : index
    %25 = vector.load %arg1[%c3, %c0_21, %c0_22] : memref<9x3x32xbf16, #tpu.memory_space<vmem>>, vector<1x3x32xbf16>
    %26 = vector.shape_cast %25 : vector<1x3x32xbf16> to vector<3x32xbf16>
    %cst_23 = arith.constant dense<0.000000e+00> : vector<162x32xf32>
    %27 = tpu.matmul %24, %26, %cst_23 {dimension_numbers = #tpu.dot_dimension_numbers<[1], [0], [0], [1], [0, 0, 1, 1], [], []>} : vector<162x3xbf16>, vector<3x32xbf16>, vector<162x32xf32> -> vector<162x32xf32>
    %28 = arith.addf %21, %27 : vector<162x32xf32>
    %c3_24 = arith.constant 3 : index
    %c0_25 = arith.constant 0 : index
    %c0_26 = arith.constant 0 : index
    %29 = vector.load %arg0[%c3_24, %c0_25, %c0_26] : memref<4x172x3xf32, #tpu.memory_space<vmem>>, vector<1x162x3xf32>
    %30 = vector.shape_cast %29 : vector<1x162x3xf32> to vector<162x3xf32>
    %31 = arith.truncf %30 : vector<162x3xf32> to vector<162x3xbf16>
    %c4 = arith.constant 4 : index
    %c0_27 = arith.constant 0 : index
    %c0_28 = arith.constant 0 : index
    %32 = vector.load %arg1[%c4, %c0_27, %c0_28] : memref<9x3x32xbf16, #tpu.memory_space<vmem>>, vector<1x3x32xbf16>
    %33 = vector.shape_cast %32 : vector<1x3x32xbf16> to vector<3x32xbf16>
    %cst_29 = arith.constant dense<0.000000e+00> : vector<162x32xf32>
    %34 = tpu.matmul %31, %33, %cst_29 {dimension_numbers = #tpu.dot_dimension_numbers<[1], [0], [0], [1], [0, 0, 1, 1], [], []>} : vector<162x3xbf16>, vector<3x32xbf16>, vector<162x32xf32> -> vector<162x32xf32>
    %35 = arith.addf %28, %34 : vector<162x32xf32>
    %c2_30 = arith.constant 2 : index
    %c1_31 = arith.constant 1 : index
    %c0_32 = arith.constant 0 : index
    %36 = vector.load %arg0[%c2_30, %c1_31, %c0_32] : memref<4x172x3xf32, #tpu.memory_space<vmem>>, vector<1x162x3xf32>
    %37 = vector.shape_cast %36 : vector<1x162x3xf32> to vector<162x3xf32>
    %38 = arith.truncf %37 : vector<162x3xf32> to vector<162x3xbf16>
    %c5 = arith.constant 5 : index
    %c0_33 = arith.constant 0 : index
    %c0_34 = arith.constant 0 : index
    %39 = vector.load %arg1[%c5, %c0_33, %c0_34] : memref<9x3x32xbf16, #tpu.memory_space<vmem>>, vector<1x3x32xbf16>
    %40 = vector.shape_cast %39 : vector<1x3x32xbf16> to vector<3x32xbf16>
    %cst_35 = arith.constant dense<0.000000e+00> : vector<162x32xf32>
    %41 = tpu.matmul %38, %40, %cst_35 {dimension_numbers = #tpu.dot_dimension_numbers<[1], [0], [0], [1], [0, 0, 1, 1], [], []>} : vector<162x3xbf16>, vector<3x32xbf16>, vector<162x32xf32> -> vector<162x32xf32>
    %42 = arith.addf %35, %41 : vector<162x32xf32>
    %c0_36 = arith.constant 0 : index
    %c9 = arith.constant 9 : index
    %c0_37 = arith.constant 0 : index
    %43 = vector.load %arg0[%c0_36, %c9, %c0_37] : memref<4x172x3xf32, #tpu.memory_space<vmem>>, vector<1x162x3xf32>
    %44 = vector.shape_cast %43 : vector<1x162x3xf32> to vector<162x3xf32>
    %45 = arith.truncf %44 : vector<162x3xf32> to vector<162x3xbf16>
    %c6 = arith.constant 6 : index
    %c0_38 = arith.constant 0 : index
    %c0_39 = arith.constant 0 : index
    %46 = vector.load %arg1[%c6, %c0_38, %c0_39] : memref<9x3x32xbf16, #tpu.memory_space<vmem>>, vector<1x3x32xbf16>
    %47 = vector.shape_cast %46 : vector<1x3x32xbf16> to vector<3x32xbf16>
    %cst_40 = arith.constant dense<0.000000e+00> : vector<162x32xf32>
    %48 = tpu.matmul %45, %47, %cst_40 {dimension_numbers = #tpu.dot_dimension_numbers<[1], [0], [0], [1], [0, 0, 1, 1], [], []>} : vector<162x3xbf16>, vector<3x32xbf16>, vector<162x32xf32> -> vector<162x32xf32>
    %49 = arith.addf %42, %48 : vector<162x32xf32>
    %c1_41 = arith.constant 1 : index
    %c9_42 = arith.constant 9 : index
    %c0_43 = arith.constant 0 : index
    %50 = vector.load %arg0[%c1_41, %c9_42, %c0_43] : memref<4x172x3xf32, #tpu.memory_space<vmem>>, vector<1x162x3xf32>
    %51 = vector.shape_cast %50 : vector<1x162x3xf32> to vector<162x3xf32>
    %52 = arith.truncf %51 : vector<162x3xf32> to vector<162x3xbf16>
    %c7 = arith.constant 7 : index
    %c0_44 = arith.constant 0 : index
    %c0_45 = arith.constant 0 : index
    %53 = vector.load %arg1[%c7, %c0_44, %c0_45] : memref<9x3x32xbf16, #tpu.memory_space<vmem>>, vector<1x3x32xbf16>
    %54 = vector.shape_cast %53 : vector<1x3x32xbf16> to vector<3x32xbf16>
    %cst_46 = arith.constant dense<0.000000e+00> : vector<162x32xf32>
    %55 = tpu.matmul %52, %54, %cst_46 {dimension_numbers = #tpu.dot_dimension_numbers<[1], [0], [0], [1], [0, 0, 1, 1], [], []>} : vector<162x3xbf16>, vector<3x32xbf16>, vector<162x32xf32> -> vector<162x32xf32>
    %56 = arith.addf %49, %55 : vector<162x32xf32>
    %c0_47 = arith.constant 0 : index
    %c10 = arith.constant 10 : index
    %c0_48 = arith.constant 0 : index
    %57 = vector.load %arg0[%c0_47, %c10, %c0_48] : memref<4x172x3xf32, #tpu.memory_space<vmem>>, vector<1x162x3xf32>
    %58 = vector.shape_cast %57 : vector<1x162x3xf32> to vector<162x3xf32>
    %59 = arith.truncf %58 : vector<162x3xf32> to vector<162x3xbf16>
    %c8 = arith.constant 8 : index
    %c0_49 = arith.constant 0 : index
    %c0_50 = arith.constant 0 : index
    %60 = vector.load %arg1[%c8, %c0_49, %c0_50] : memref<9x3x32xbf16, #tpu.memory_space<vmem>>, vector<1x3x32xbf16>
    %61 = vector.shape_cast %60 : vector<1x3x32xbf16> to vector<3x32xbf16>
    %cst_51 = arith.constant dense<0.000000e+00> : vector<162x32xf32>
    %62 = tpu.matmul %59, %61, %cst_51 {dimension_numbers = #tpu.dot_dimension_numbers<[1], [0], [0], [1], [0, 0, 1, 1], [], []>} : vector<162x3xbf16>, vector<3x32xbf16>, vector<162x32xf32> -> vector<162x32xf32>
    %63 = arith.addf %56, %62 : vector<162x32xf32>
    %c0_52 = arith.constant 0 : index
    %c0_53 = arith.constant 0 : index
    %64 = vector.load %arg2[%c0_52, %c0_53] : memref<1x32xf32, #tpu.memory_space<vmem>>, vector<1x32xf32>
    %65 = vector.broadcast %64 : vector<1x32xf32> to vector<162x32xf32>
    %66 = arith.addf %63, %65 : vector<162x32xf32>
    %cst_54 = arith.constant 0.000000e+00 : f32
    %67 = vector.broadcast %cst_54 : f32 to vector<162x32xf32>
    %68 = arith.maximumf %66, %67 : vector<162x32xf32>
    %c0_55 = arith.constant 0 : index
    %c0_56 = arith.constant 0 : index
    %69 = vector.load %arg3[%c0_55, %c0_56] : memref<162x32xf32, #tpu.memory_space<vmem>>, vector<162x32xf32>
    tpu.vector_store %arg3[%c0_55, %c0_56], %68 {strides = array<i32>} : memref<162x32xf32, #tpu.memory_space<vmem>>, vector<162x32xf32>,
    return
  }
}

module attributes {stable_mosaic.version = 11 : i64} {
  func.func @_enc_conv3x3_kernel(%arg0: memref<4x56x32xf32, #tpu.memory_space<vmem>>, %arg1: memref<9x32x64xbf16, #tpu.memory_space<vmem>>, %arg2: memref<1x64xf32, #tpu.memory_space<vmem>>, %arg3: memref<50x64xf32, #tpu.memory_space<vmem>>) attributes {dimension_semantics = [], scalar_prefetch = 0 : i64, scratch_operands = 0 : i64, tpu.core_type = #tpu.core_type<tc>} {
    %cst = arith.constant 0.000000e+00 : f32
    %0 = vector.broadcast %cst : f32 to vector<50x64xf32>
    %c0 = arith.constant 0 : index
    %c0_0 = arith.constant 0 : index
    %c0_1 = arith.constant 0 : index
    %1 = vector.load %arg0[%c0, %c0_0, %c0_1] : memref<4x56x32xf32, #tpu.memory_space<vmem>>, vector<1x50x32xf32>
    %2 = vector.shape_cast %1 : vector<1x50x32xf32> to vector<50x32xf32>
    %3 = arith.truncf %2 : vector<50x32xf32> to vector<50x32xbf16>
    %c0_2 = arith.constant 0 : index
    %c0_3 = arith.constant 0 : index
    %c0_4 = arith.constant 0 : index
    %4 = vector.load %arg1[%c0_2, %c0_3, %c0_4] : memref<9x32x64xbf16, #tpu.memory_space<vmem>>, vector<1x32x64xbf16>
    %5 = vector.shape_cast %4 : vector<1x32x64xbf16> to vector<32x64xbf16>
    %cst_5 = arith.constant dense<0.000000e+00> : vector<50x64xf32>
    %6 = tpu.matmul %3, %5, %cst_5 {dimension_numbers = #tpu.dot_dimension_numbers<[1], [0], [0], [1], [0, 0, 1, 1], [], []>} : vector<50x32xbf16>, vector<32x64xbf16>, vector<50x64xf32> -> vector<50x64xf32>
    %7 = arith.addf %0, %6 : vector<50x64xf32>
    %c1 = arith.constant 1 : index
    %c0_6 = arith.constant 0 : index
    %c0_7 = arith.constant 0 : index
    %8 = vector.load %arg0[%c1, %c0_6, %c0_7] : memref<4x56x32xf32, #tpu.memory_space<vmem>>, vector<1x50x32xf32>
    %9 = vector.shape_cast %8 : vector<1x50x32xf32> to vector<50x32xf32>
    %10 = arith.truncf %9 : vector<50x32xf32> to vector<50x32xbf16>
    %c1_8 = arith.constant 1 : index
    %c0_9 = arith.constant 0 : index
    %c0_10 = arith.constant 0 : index
    %11 = vector.load %arg1[%c1_8, %c0_9, %c0_10] : memref<9x32x64xbf16, #tpu.memory_space<vmem>>, vector<1x32x64xbf16>
    %12 = vector.shape_cast %11 : vector<1x32x64xbf16> to vector<32x64xbf16>
    %cst_11 = arith.constant dense<0.000000e+00> : vector<50x64xf32>
    %13 = tpu.matmul %10, %12, %cst_11 {dimension_numbers = #tpu.dot_dimension_numbers<[1], [0], [0], [1], [0, 0, 1, 1], [], []>} : vector<50x32xbf16>, vector<32x64xbf16>, vector<50x64xf32> -> vector<50x64xf32>
    %14 = arith.addf %7, %13 : vector<50x64xf32>
    %c0_12 = arith.constant 0 : index
    %c1_13 = arith.constant 1 : index
    %c0_14 = arith.constant 0 : index
    %15 = vector.load %arg0[%c0_12, %c1_13, %c0_14] : memref<4x56x32xf32, #tpu.memory_space<vmem>>, vector<1x50x32xf32>
    %16 = vector.shape_cast %15 : vector<1x50x32xf32> to vector<50x32xf32>
    %17 = arith.truncf %16 : vector<50x32xf32> to vector<50x32xbf16>
    %c2 = arith.constant 2 : index
    %c0_15 = arith.constant 0 : index
    %c0_16 = arith.constant 0 : index
    %18 = vector.load %arg1[%c2, %c0_15, %c0_16] : memref<9x32x64xbf16, #tpu.memory_space<vmem>>, vector<1x32x64xbf16>
    %19 = vector.shape_cast %18 : vector<1x32x64xbf16> to vector<32x64xbf16>
    %cst_17 = arith.constant dense<0.000000e+00> : vector<50x64xf32>
    %20 = tpu.matmul %17, %19, %cst_17 {dimension_numbers = #tpu.dot_dimension_numbers<[1], [0], [0], [1], [0, 0, 1, 1], [], []>} : vector<50x32xbf16>, vector<32x64xbf16>, vector<50x64xf32> -> vector<50x64xf32>
    %21 = arith.addf %14, %20 : vector<50x64xf32>
    %c2_18 = arith.constant 2 : index
    %c0_19 = arith.constant 0 : index
    %c0_20 = arith.constant 0 : index
    %22 = vector.load %arg0[%c2_18, %c0_19, %c0_20] : memref<4x56x32xf32, #tpu.memory_space<vmem>>, vector<1x50x32xf32>
    %23 = vector.shape_cast %22 : vector<1x50x32xf32> to vector<50x32xf32>
    %24 = arith.truncf %23 : vector<50x32xf32> to vector<50x32xbf16>
    %c3 = arith.constant 3 : index
    %c0_21 = arith.constant 0 : index
    %c0_22 = arith.constant 0 : index
    %25 = vector.load %arg1[%c3, %c0_21, %c0_22] : memref<9x32x64xbf16, #tpu.memory_space<vmem>>, vector<1x32x64xbf16>
    %26 = vector.shape_cast %25 : vector<1x32x64xbf16> to vector<32x64xbf16>
    %cst_23 = arith.constant dense<0.000000e+00> : vector<50x64xf32>
    %27 = tpu.matmul %24, %26, %cst_23 {dimension_numbers = #tpu.dot_dimension_numbers<[1], [0], [0], [1], [0, 0, 1, 1], [], []>} : vector<50x32xbf16>, vector<32x64xbf16>, vector<50x64xf32> -> vector<50x64xf32>
    %28 = arith.addf %21, %27 : vector<50x64xf32>
    %c3_24 = arith.constant 3 : index
    %c0_25 = arith.constant 0 : index
    %c0_26 = arith.constant 0 : index
    %29 = vector.load %arg0[%c3_24, %c0_25, %c0_26] : memref<4x56x32xf32, #tpu.memory_space<vmem>>, vector<1x50x32xf32>
    %30 = vector.shape_cast %29 : vector<1x50x32xf32> to vector<50x32xf32>
    %31 = arith.truncf %30 : vector<50x32xf32> to vector<50x32xbf16>
    %c4 = arith.constant 4 : index
    %c0_27 = arith.constant 0 : index
    %c0_28 = arith.constant 0 : index
    %32 = vector.load %arg1[%c4, %c0_27, %c0_28] : memref<9x32x64xbf16, #tpu.memory_space<vmem>>, vector<1x32x64xbf16>
    %33 = vector.shape_cast %32 : vector<1x32x64xbf16> to vector<32x64xbf16>
    %cst_29 = arith.constant dense<0.000000e+00> : vector<50x64xf32>
    %34 = tpu.matmul %31, %33, %cst_29 {dimension_numbers = #tpu.dot_dimension_numbers<[1], [0], [0], [1], [0, 0, 1, 1], [], []>} : vector<50x32xbf16>, vector<32x64xbf16>, vector<50x64xf32> -> vector<50x64xf32>
    %35 = arith.addf %28, %34 : vector<50x64xf32>
    %c2_30 = arith.constant 2 : index
    %c1_31 = arith.constant 1 : index
    %c0_32 = arith.constant 0 : index
    %36 = vector.load %arg0[%c2_30, %c1_31, %c0_32] : memref<4x56x32xf32, #tpu.memory_space<vmem>>, vector<1x50x32xf32>
    %37 = vector.shape_cast %36 : vector<1x50x32xf32> to vector<50x32xf32>
    %38 = arith.truncf %37 : vector<50x32xf32> to vector<50x32xbf16>
    %c5 = arith.constant 5 : index
    %c0_33 = arith.constant 0 : index
    %c0_34 = arith.constant 0 : index
    %39 = vector.load %arg1[%c5, %c0_33, %c0_34] : memref<9x32x64xbf16, #tpu.memory_space<vmem>>, vector<1x32x64xbf16>
    %40 = vector.shape_cast %39 : vector<1x32x64xbf16> to vector<32x64xbf16>
    %cst_35 = arith.constant dense<0.000000e+00> : vector<50x64xf32>
    %41 = tpu.matmul %38, %40, %cst_35 {dimension_numbers = #tpu.dot_dimension_numbers<[1], [0], [0], [1], [0, 0, 1, 1], [], []>} : vector<50x32xbf16>, vector<32x64xbf16>, vector<50x64xf32> -> vector<50x64xf32>
    %42 = arith.addf %35, %41 : vector<50x64xf32>
    %c0_36 = arith.constant 0 : index
    %c5_37 = arith.constant 5 : index
    %c0_38 = arith.constant 0 : index
    %43 = vector.load %arg0[%c0_36, %c5_37, %c0_38] : memref<4x56x32xf32, #tpu.memory_space<vmem>>, vector<1x50x32xf32>
    %44 = vector.shape_cast %43 : vector<1x50x32xf32> to vector<50x32xf32>
    %45 = arith.truncf %44 : vector<50x32xf32> to vector<50x32xbf16>
    %c6 = arith.constant 6 : index
    %c0_39 = arith.constant 0 : index
    %c0_40 = arith.constant 0 : index
    %46 = vector.load %arg1[%c6, %c0_39, %c0_40] : memref<9x32x64xbf16, #tpu.memory_space<vmem>>, vector<1x32x64xbf16>
    %47 = vector.shape_cast %46 : vector<1x32x64xbf16> to vector<32x64xbf16>
    %cst_41 = arith.constant dense<0.000000e+00> : vector<50x64xf32>
    %48 = tpu.matmul %45, %47, %cst_41 {dimension_numbers = #tpu.dot_dimension_numbers<[1], [0], [0], [1], [0, 0, 1, 1], [], []>} : vector<50x32xbf16>, vector<32x64xbf16>, vector<50x64xf32> -> vector<50x64xf32>
    %49 = arith.addf %42, %48 : vector<50x64xf32>
    %c1_42 = arith.constant 1 : index
    %c5_43 = arith.constant 5 : index
    %c0_44 = arith.constant 0 : index
    %50 = vector.load %arg0[%c1_42, %c5_43, %c0_44] : memref<4x56x32xf32, #tpu.memory_space<vmem>>, vector<1x50x32xf32>
    %51 = vector.shape_cast %50 : vector<1x50x32xf32> to vector<50x32xf32>
    %52 = arith.truncf %51 : vector<50x32xf32> to vector<50x32xbf16>
    %c7 = arith.constant 7 : index
    %c0_45 = arith.constant 0 : index
    %c0_46 = arith.constant 0 : index
    %53 = vector.load %arg1[%c7, %c0_45, %c0_46] : memref<9x32x64xbf16, #tpu.memory_space<vmem>>, vector<1x32x64xbf16>
    %54 = vector.shape_cast %53 : vector<1x32x64xbf16> to vector<32x64xbf16>
    %cst_47 = arith.constant dense<0.000000e+00> : vector<50x64xf32>
    %55 = tpu.matmul %52, %54, %cst_47 {dimension_numbers = #tpu.dot_dimension_numbers<[1], [0], [0], [1], [0, 0, 1, 1], [], []>} : vector<50x32xbf16>, vector<32x64xbf16>, vector<50x64xf32> -> vector<50x64xf32>
    %56 = arith.addf %49, %55 : vector<50x64xf32>
    %c0_48 = arith.constant 0 : index
    %c6_49 = arith.constant 6 : index
    %c0_50 = arith.constant 0 : index
    %57 = vector.load %arg0[%c0_48, %c6_49, %c0_50] : memref<4x56x32xf32, #tpu.memory_space<vmem>>, vector<1x50x32xf32>
    %58 = vector.shape_cast %57 : vector<1x50x32xf32> to vector<50x32xf32>
    %59 = arith.truncf %58 : vector<50x32xf32> to vector<50x32xbf16>
    %c8 = arith.constant 8 : index
    %c0_51 = arith.constant 0 : index
    %c0_52 = arith.constant 0 : index
    %60 = vector.load %arg1[%c8, %c0_51, %c0_52] : memref<9x32x64xbf16, #tpu.memory_space<vmem>>, vector<1x32x64xbf16>
    %61 = vector.shape_cast %60 : vector<1x32x64xbf16> to vector<32x64xbf16>
    %cst_53 = arith.constant dense<0.000000e+00> : vector<50x64xf32>
    %62 = tpu.matmul %59, %61, %cst_53 {dimension_numbers = #tpu.dot_dimension_numbers<[1], [0], [0], [1], [0, 0, 1, 1], [], []>} : vector<50x32xbf16>, vector<32x64xbf16>, vector<50x64xf32> -> vector<50x64xf32>
    %63 = arith.addf %56, %62 : vector<50x64xf32>
    %c0_54 = arith.constant 0 : index
    %c0_55 = arith.constant 0 : index
    %64 = vector.load %arg2[%c0_54, %c0_55] : memref<1x64xf32, #tpu.memory_space<vmem>>, vector<1x64xf32>
    %65 = vector.broadcast %64 : vector<1x64xf32> to vector<50x64xf32>
    %66 = arith.addf %63, %65 : vector<50x64xf32>
    %cst_56 = arith.constant 0.000000e+00 : f32
    %67 = vector.broadcast %cst_56 : f32 to vector<50x64xf32>
    %68 = arith.maximumf %66, %67 : vector<50x64xf32>
    %c0_57 = arith.constant 0 : index
    %c0_58 = arith.constant 0 : index
    %69 = vector.load %arg3[%c0_57, %c0_58] : memref<50x64xf32, #tpu.memory_space<vmem>>, vector<50x64xf32>
    tpu.vector_store %arg3[%c0_57, %c0_58], %68 {strides = array<i32>} : memref<50x64xf32, #tpu.memory_space<vmem>>, vector<50x64xf32>,
    return
  }
}

module attributes {stable_mosaic.version = 11 : i64} {
  func.func @_enc_conv3x3_kernel(%arg0: memref<4x22x64xf32, #tpu.memory_space<vmem>>, %arg1: memref<9x64x128xbf16, #tpu.memory_space<vmem>>, %arg2: memref<1x128xf32, #tpu.memory_space<vmem>>, %arg3: memref<18x128xf32, #tpu.memory_space<vmem>>) attributes {dimension_semantics = [], scalar_prefetch = 0 : i64, scratch_operands = 0 : i64, tpu.core_type = #tpu.core_type<tc>} {
    %cst = arith.constant 0.000000e+00 : f32
    %0 = vector.broadcast %cst : f32 to vector<18x128xf32>
    %c0 = arith.constant 0 : index
    %c0_0 = arith.constant 0 : index
    %c0_1 = arith.constant 0 : index
    %1 = vector.load %arg0[%c0, %c0_0, %c0_1] : memref<4x22x64xf32, #tpu.memory_space<vmem>>, vector<1x18x64xf32>
    %2 = vector.shape_cast %1 : vector<1x18x64xf32> to vector<18x64xf32>
    %3 = arith.truncf %2 : vector<18x64xf32> to vector<18x64xbf16>
    %c0_2 = arith.constant 0 : index
    %c0_3 = arith.constant 0 : index
    %c0_4 = arith.constant 0 : index
    %4 = vector.load %arg1[%c0_2, %c0_3, %c0_4] : memref<9x64x128xbf16, #tpu.memory_space<vmem>>, vector<1x64x128xbf16>
    %5 = vector.shape_cast %4 : vector<1x64x128xbf16> to vector<64x128xbf16>
    %cst_5 = arith.constant dense<0.000000e+00> : vector<18x128xf32>
    %6 = tpu.matmul %3, %5, %cst_5 {dimension_numbers = #tpu.dot_dimension_numbers<[1], [0], [0], [1], [0, 0, 1, 1], [], []>} : vector<18x64xbf16>, vector<64x128xbf16>, vector<18x128xf32> -> vector<18x128xf32>
    %7 = arith.addf %0, %6 : vector<18x128xf32>
    %c1 = arith.constant 1 : index
    %c0_6 = arith.constant 0 : index
    %c0_7 = arith.constant 0 : index
    %8 = vector.load %arg0[%c1, %c0_6, %c0_7] : memref<4x22x64xf32, #tpu.memory_space<vmem>>, vector<1x18x64xf32>
    %9 = vector.shape_cast %8 : vector<1x18x64xf32> to vector<18x64xf32>
    %10 = arith.truncf %9 : vector<18x64xf32> to vector<18x64xbf16>
    %c1_8 = arith.constant 1 : index
    %c0_9 = arith.constant 0 : index
    %c0_10 = arith.constant 0 : index
    %11 = vector.load %arg1[%c1_8, %c0_9, %c0_10] : memref<9x64x128xbf16, #tpu.memory_space<vmem>>, vector<1x64x128xbf16>
    %12 = vector.shape_cast %11 : vector<1x64x128xbf16> to vector<64x128xbf16>
    %cst_11 = arith.constant dense<0.000000e+00> : vector<18x128xf32>
    %13 = tpu.matmul %10, %12, %cst_11 {dimension_numbers = #tpu.dot_dimension_numbers<[1], [0], [0], [1], [0, 0, 1, 1], [], []>} : vector<18x64xbf16>, vector<64x128xbf16>, vector<18x128xf32> -> vector<18x128xf32>
    %14 = arith.addf %7, %13 : vector<18x128xf32>
    %c0_12 = arith.constant 0 : index
    %c1_13 = arith.constant 1 : index
    %c0_14 = arith.constant 0 : index
    %15 = vector.load %arg0[%c0_12, %c1_13, %c0_14] : memref<4x22x64xf32, #tpu.memory_space<vmem>>, vector<1x18x64xf32>
    %16 = vector.shape_cast %15 : vector<1x18x64xf32> to vector<18x64xf32>
    %17 = arith.truncf %16 : vector<18x64xf32> to vector<18x64xbf16>
    %c2 = arith.constant 2 : index
    %c0_15 = arith.constant 0 : index
    %c0_16 = arith.constant 0 : index
    %18 = vector.load %arg1[%c2, %c0_15, %c0_16] : memref<9x64x128xbf16, #tpu.memory_space<vmem>>, vector<1x64x128xbf16>
    %19 = vector.shape_cast %18 : vector<1x64x128xbf16> to vector<64x128xbf16>
    %cst_17 = arith.constant dense<0.000000e+00> : vector<18x128xf32>
    %20 = tpu.matmul %17, %19, %cst_17 {dimension_numbers = #tpu.dot_dimension_numbers<[1], [0], [0], [1], [0, 0, 1, 1], [], []>} : vector<18x64xbf16>, vector<64x128xbf16>, vector<18x128xf32> -> vector<18x128xf32>
    %21 = arith.addf %14, %20 : vector<18x128xf32>
    %c2_18 = arith.constant 2 : index
    %c0_19 = arith.constant 0 : index
    %c0_20 = arith.constant 0 : index
    %22 = vector.load %arg0[%c2_18, %c0_19, %c0_20] : memref<4x22x64xf32, #tpu.memory_space<vmem>>, vector<1x18x64xf32>
    %23 = vector.shape_cast %22 : vector<1x18x64xf32> to vector<18x64xf32>
    %24 = arith.truncf %23 : vector<18x64xf32> to vector<18x64xbf16>
    %c3 = arith.constant 3 : index
    %c0_21 = arith.constant 0 : index
    %c0_22 = arith.constant 0 : index
    %25 = vector.load %arg1[%c3, %c0_21, %c0_22] : memref<9x64x128xbf16, #tpu.memory_space<vmem>>, vector<1x64x128xbf16>
    %26 = vector.shape_cast %25 : vector<1x64x128xbf16> to vector<64x128xbf16>
    %cst_23 = arith.constant dense<0.000000e+00> : vector<18x128xf32>
    %27 = tpu.matmul %24, %26, %cst_23 {dimension_numbers = #tpu.dot_dimension_numbers<[1], [0], [0], [1], [0, 0, 1, 1], [], []>} : vector<18x64xbf16>, vector<64x128xbf16>, vector<18x128xf32> -> vector<18x128xf32>
    %28 = arith.addf %21, %27 : vector<18x128xf32>
    %c3_24 = arith.constant 3 : index
    %c0_25 = arith.constant 0 : index
    %c0_26 = arith.constant 0 : index
    %29 = vector.load %arg0[%c3_24, %c0_25, %c0_26] : memref<4x22x64xf32, #tpu.memory_space<vmem>>, vector<1x18x64xf32>
    %30 = vector.shape_cast %29 : vector<1x18x64xf32> to vector<18x64xf32>
    %31 = arith.truncf %30 : vector<18x64xf32> to vector<18x64xbf16>
    %c4 = arith.constant 4 : index
    %c0_27 = arith.constant 0 : index
    %c0_28 = arith.constant 0 : index
    %32 = vector.load %arg1[%c4, %c0_27, %c0_28] : memref<9x64x128xbf16, #tpu.memory_space<vmem>>, vector<1x64x128xbf16>
    %33 = vector.shape_cast %32 : vector<1x64x128xbf16> to vector<64x128xbf16>
    %cst_29 = arith.constant dense<0.000000e+00> : vector<18x128xf32>
    %34 = tpu.matmul %31, %33, %cst_29 {dimension_numbers = #tpu.dot_dimension_numbers<[1], [0], [0], [1], [0, 0, 1, 1], [], []>} : vector<18x64xbf16>, vector<64x128xbf16>, vector<18x128xf32> -> vector<18x128xf32>
    %35 = arith.addf %28, %34 : vector<18x128xf32>
    %c2_30 = arith.constant 2 : index
    %c1_31 = arith.constant 1 : index
    %c0_32 = arith.constant 0 : index
    %36 = vector.load %arg0[%c2_30, %c1_31, %c0_32] : memref<4x22x64xf32, #tpu.memory_space<vmem>>, vector<1x18x64xf32>
    %37 = vector.shape_cast %36 : vector<1x18x64xf32> to vector<18x64xf32>
    %38 = arith.truncf %37 : vector<18x64xf32> to vector<18x64xbf16>
    %c5 = arith.constant 5 : index
    %c0_33 = arith.constant 0 : index
    %c0_34 = arith.constant 0 : index
    %39 = vector.load %arg1[%c5, %c0_33, %c0_34] : memref<9x64x128xbf16, #tpu.memory_space<vmem>>, vector<1x64x128xbf16>
    %40 = vector.shape_cast %39 : vector<1x64x128xbf16> to vector<64x128xbf16>
    %cst_35 = arith.constant dense<0.000000e+00> : vector<18x128xf32>
    %41 = tpu.matmul %38, %40, %cst_35 {dimension_numbers = #tpu.dot_dimension_numbers<[1], [0], [0], [1], [0, 0, 1, 1], [], []>} : vector<18x64xbf16>, vector<64x128xbf16>, vector<18x128xf32> -> vector<18x128xf32>
    %42 = arith.addf %35, %41 : vector<18x128xf32>
    %c0_36 = arith.constant 0 : index
    %c3_37 = arith.constant 3 : index
    %c0_38 = arith.constant 0 : index
    %43 = vector.load %arg0[%c0_36, %c3_37, %c0_38] : memref<4x22x64xf32, #tpu.memory_space<vmem>>, vector<1x18x64xf32>
    %44 = vector.shape_cast %43 : vector<1x18x64xf32> to vector<18x64xf32>
    %45 = arith.truncf %44 : vector<18x64xf32> to vector<18x64xbf16>
    %c6 = arith.constant 6 : index
    %c0_39 = arith.constant 0 : index
    %c0_40 = arith.constant 0 : index
    %46 = vector.load %arg1[%c6, %c0_39, %c0_40] : memref<9x64x128xbf16, #tpu.memory_space<vmem>>, vector<1x64x128xbf16>
    %47 = vector.shape_cast %46 : vector<1x64x128xbf16> to vector<64x128xbf16>
    %cst_41 = arith.constant dense<0.000000e+00> : vector<18x128xf32>
    %48 = tpu.matmul %45, %47, %cst_41 {dimension_numbers = #tpu.dot_dimension_numbers<[1], [0], [0], [1], [0, 0, 1, 1], [], []>} : vector<18x64xbf16>, vector<64x128xbf16>, vector<18x128xf32> -> vector<18x128xf32>
    %49 = arith.addf %42, %48 : vector<18x128xf32>
    %c1_42 = arith.constant 1 : index
    %c3_43 = arith.constant 3 : index
    %c0_44 = arith.constant 0 : index
    %50 = vector.load %arg0[%c1_42, %c3_43, %c0_44] : memref<4x22x64xf32, #tpu.memory_space<vmem>>, vector<1x18x64xf32>
    %51 = vector.shape_cast %50 : vector<1x18x64xf32> to vector<18x64xf32>
    %52 = arith.truncf %51 : vector<18x64xf32> to vector<18x64xbf16>
    %c7 = arith.constant 7 : index
    %c0_45 = arith.constant 0 : index
    %c0_46 = arith.constant 0 : index
    %53 = vector.load %arg1[%c7, %c0_45, %c0_46] : memref<9x64x128xbf16, #tpu.memory_space<vmem>>, vector<1x64x128xbf16>
    %54 = vector.shape_cast %53 : vector<1x64x128xbf16> to vector<64x128xbf16>
    %cst_47 = arith.constant dense<0.000000e+00> : vector<18x128xf32>
    %55 = tpu.matmul %52, %54, %cst_47 {dimension_numbers = #tpu.dot_dimension_numbers<[1], [0], [0], [1], [0, 0, 1, 1], [], []>} : vector<18x64xbf16>, vector<64x128xbf16>, vector<18x128xf32> -> vector<18x128xf32>
    %56 = arith.addf %49, %55 : vector<18x128xf32>
    %c0_48 = arith.constant 0 : index
    %c4_49 = arith.constant 4 : index
    %c0_50 = arith.constant 0 : index
    %57 = vector.load %arg0[%c0_48, %c4_49, %c0_50] : memref<4x22x64xf32, #tpu.memory_space<vmem>>, vector<1x18x64xf32>
    %58 = vector.shape_cast %57 : vector<1x18x64xf32> to vector<18x64xf32>
    %59 = arith.truncf %58 : vector<18x64xf32> to vector<18x64xbf16>
    %c8 = arith.constant 8 : index
    %c0_51 = arith.constant 0 : index
    %c0_52 = arith.constant 0 : index
    %60 = vector.load %arg1[%c8, %c0_51, %c0_52] : memref<9x64x128xbf16, #tpu.memory_space<vmem>>, vector<1x64x128xbf16>
    %61 = vector.shape_cast %60 : vector<1x64x128xbf16> to vector<64x128xbf16>
    %cst_53 = arith.constant dense<0.000000e+00> : vector<18x128xf32>
    %62 = tpu.matmul %59, %61, %cst_53 {dimension_numbers = #tpu.dot_dimension_numbers<[1], [0], [0], [1], [0, 0, 1, 1], [], []>} : vector<18x64xbf16>, vector<64x128xbf16>, vector<18x128xf32> -> vector<18x128xf32>
    %63 = arith.addf %56, %62 : vector<18x128xf32>
    %c0_54 = arith.constant 0 : index
    %c0_55 = arith.constant 0 : index
    %64 = vector.load %arg2[%c0_54, %c0_55] : memref<1x128xf32, #tpu.memory_space<vmem>>, vector<1x128xf32>
    %65 = vector.broadcast %64 : vector<1x128xf32> to vector<18x128xf32>
    %66 = arith.addf %63, %65 : vector<18x128xf32>
    %cst_56 = arith.constant 0.000000e+00 : f32
    %67 = vector.broadcast %cst_56 : f32 to vector<18x128xf32>
    %68 = arith.maximumf %66, %67 : vector<18x128xf32>
    %c0_57 = arith.constant 0 : index
    %c0_58 = arith.constant 0 : index
    %69 = vector.load %arg3[%c0_57, %c0_58] : memref<18x128xf32, #tpu.memory_space<vmem>>, vector<18x128xf32>
    tpu.vector_store %arg3[%c0_57, %c0_58], %68 {strides = array<i32>} : memref<18x128xf32, #tpu.memory_space<vmem>>, vector<18x128xf32>,
    return
  }
}

module attributes {stable_mosaic.version = 11 : i64} {
  func.func @_dec_convT3x3_kernel(%arg0: memref<22x128xf32, #tpu.memory_space<vmem>>, %arg1: memref<9x128x64xbf16, #tpu.memory_space<vmem>>, %arg2: memref<1x64xf32, #tpu.memory_space<vmem>>, %arg3: memref<4x18x64xf32, #tpu.memory_space<vmem>>) attributes {dimension_semantics = [], scalar_prefetch = 0 : i64, scratch_operands = 0 : i64, tpu.core_type = #tpu.core_type<tc>} {
    %c0 = arith.constant 0 : index
    %c0_0 = arith.constant 0 : index
    %0 = vector.load %arg0[%c0, %c0_0] : memref<22x128xf32, #tpu.memory_space<vmem>>, vector<18x128xf32>
    %1 = arith.truncf %0 : vector<18x128xf32> to vector<18x128xbf16>
    %c1 = arith.constant 1 : index
    %c0_1 = arith.constant 0 : index
    %2 = vector.load %arg0[%c1, %c0_1] : memref<22x128xf32, #tpu.memory_space<vmem>>, vector<18x128xf32>
    %3 = arith.truncf %2 : vector<18x128xf32> to vector<18x128xbf16>
    %c3 = arith.constant 3 : index
    %c0_2 = arith.constant 0 : index
    %4 = vector.load %arg0[%c3, %c0_2] : memref<22x128xf32, #tpu.memory_space<vmem>>, vector<18x128xf32>
    %5 = arith.truncf %4 : vector<18x128xf32> to vector<18x128xbf16>
    %c4 = arith.constant 4 : index
    %c0_3 = arith.constant 0 : index
    %6 = vector.load %arg0[%c4, %c0_3] : memref<22x128xf32, #tpu.memory_space<vmem>>, vector<18x128xf32>
    %7 = arith.truncf %6 : vector<18x128xf32> to vector<18x128xbf16>
    %c4_4 = arith.constant 4 : index
    %c0_5 = arith.constant 0 : index
    %c0_6 = arith.constant 0 : index
    %8 = vector.load %arg1[%c4_4, %c0_5, %c0_6] : memref<9x128x64xbf16, #tpu.memory_space<vmem>>, vector<1x128x64xbf16>
    %9 = vector.shape_cast %8 : vector<1x128x64xbf16> to vector<128x64xbf16>
    %cst = arith.constant dense<0.000000e+00> : vector<18x64xf32>
    %10 = tpu.matmul %1, %9, %cst {dimension_numbers = #tpu.dot_dimension_numbers<[1], [0], [0], [1], [0, 0, 1, 1], [], []>} : vector<18x128xbf16>, vector<128x64xbf16>, vector<18x64xf32> -> vector<18x64xf32>
    %c3_7 = arith.constant 3 : index
    %c0_8 = arith.constant 0 : index
    %c0_9 = arith.constant 0 : index
    %11 = vector.load %arg1[%c3_7, %c0_8, %c0_9] : memref<9x128x64xbf16, #tpu.memory_space<vmem>>, vector<1x128x64xbf16>
    %12 = vector.shape_cast %11 : vector<1x128x64xbf16> to vector<128x64xbf16>
    %cst_10 = arith.constant dense<0.000000e+00> : vector<18x64xf32>
    %13 = tpu.matmul %3, %12, %cst_10 {dimension_numbers = #tpu.dot_dimension_numbers<[1], [0], [0], [1], [0, 0, 1, 1], [], []>} : vector<18x128xbf16>, vector<128x64xbf16>, vector<18x64xf32> -> vector<18x64xf32>
    %c5 = arith.constant 5 : index
    %c0_11 = arith.constant 0 : index
    %c0_12 = arith.constant 0 : index
    %14 = vector.load %arg1[%c5, %c0_11, %c0_12] : memref<9x128x64xbf16, #tpu.memory_space<vmem>>, vector<1x128x64xbf16>
    %15 = vector.shape_cast %14 : vector<1x128x64xbf16> to vector<128x64xbf16>
    %cst_13 = arith.constant dense<0.000000e+00> : vector<18x64xf32>
    %16 = tpu.matmul %1, %15, %cst_13 {dimension_numbers = #tpu.dot_dimension_numbers<[1], [0], [0], [1], [0, 0, 1, 1], [], []>} : vector<18x128xbf16>, vector<128x64xbf16>, vector<18x64xf32> -> vector<18x64xf32>
    %17 = arith.addf %13, %16 : vector<18x64xf32>
    %c1_14 = arith.constant 1 : index
    %c0_15 = arith.constant 0 : index
    %c0_16 = arith.constant 0 : index
    %18 = vector.load %arg1[%c1_14, %c0_15, %c0_16] : memref<9x128x64xbf16, #tpu.memory_space<vmem>>, vector<1x128x64xbf16>
    %19 = vector.shape_cast %18 : vector<1x128x64xbf16> to vector<128x64xbf16>
    %cst_17 = arith.constant dense<0.000000e+00> : vector<18x64xf32>
    %20 = tpu.matmul %5, %19, %cst_17 {dimension_numbers = #tpu.dot_dimension_numbers<[1], [0], [0], [1], [0, 0, 1, 1], [], []>} : vector<18x128xbf16>, vector<128x64xbf16>, vector<18x64xf32> -> vector<18x64xf32>
    %c7 = arith.constant 7 : index
    %c0_18 = arith.constant 0 : index
    %c0_19 = arith.constant 0 : index
    %21 = vector.load %arg1[%c7, %c0_18, %c0_19] : memref<9x128x64xbf16, #tpu.memory_space<vmem>>, vector<1x128x64xbf16>
    %22 = vector.shape_cast %21 : vector<1x128x64xbf16> to vector<128x64xbf16>
    %cst_20 = arith.constant dense<0.000000e+00> : vector<18x64xf32>
    %23 = tpu.matmul %1, %22, %cst_20 {dimension_numbers = #tpu.dot_dimension_numbers<[1], [0], [0], [1], [0, 0, 1, 1], [], []>} : vector<18x128xbf16>, vector<128x64xbf16>, vector<18x64xf32> -> vector<18x64xf32>
    %24 = arith.addf %20, %23 : vector<18x64xf32>
    %c0_21 = arith.constant 0 : index
    %c0_22 = arith.constant 0 : index
    %c0_23 = arith.constant 0 : index
    %25 = vector.load %arg1[%c0_21, %c0_22, %c0_23] : memref<9x128x64xbf16, #tpu.memory_space<vmem>>, vector<1x128x64xbf16>
    %26 = vector.shape_cast %25 : vector<1x128x64xbf16> to vector<128x64xbf16>
    %cst_24 = arith.constant dense<0.000000e+00> : vector<18x64xf32>
    %27 = tpu.matmul %7, %26, %cst_24 {dimension_numbers = #tpu.dot_dimension_numbers<[1], [0], [0], [1], [0, 0, 1, 1], [], []>} : vector<18x128xbf16>, vector<128x64xbf16>, vector<18x64xf32> -> vector<18x64xf32>
    %c2 = arith.constant 2 : index
    %c0_25 = arith.constant 0 : index
    %c0_26 = arith.constant 0 : index
    %28 = vector.load %arg1[%c2, %c0_25, %c0_26] : memref<9x128x64xbf16, #tpu.memory_space<vmem>>, vector<1x128x64xbf16>
    %29 = vector.shape_cast %28 : vector<1x128x64xbf16> to vector<128x64xbf16>
    %cst_27 = arith.constant dense<0.000000e+00> : vector<18x64xf32>
    %30 = tpu.matmul %5, %29, %cst_27 {dimension_numbers = #tpu.dot_dimension_numbers<[1], [0], [0], [1], [0, 0, 1, 1], [], []>} : vector<18x128xbf16>, vector<128x64xbf16>, vector<18x64xf32> -> vector<18x64xf32>
    %31 = arith.addf %27, %30 : vector<18x64xf32>
    %c6 = arith.constant 6 : index
    %c0_28 = arith.constant 0 : index
    %c0_29 = arith.constant 0 : index
    %32 = vector.load %arg1[%c6, %c0_28, %c0_29] : memref<9x128x64xbf16, #tpu.memory_space<vmem>>, vector<1x128x64xbf16>
    %33 = vector.shape_cast %32 : vector<1x128x64xbf16> to vector<128x64xbf16>
    %cst_30 = arith.constant dense<0.000000e+00> : vector<18x64xf32>
    %34 = tpu.matmul %3, %33, %cst_30 {dimension_numbers = #tpu.dot_dimension_numbers<[1], [0], [0], [1], [0, 0, 1, 1], [], []>} : vector<18x128xbf16>, vector<128x64xbf16>, vector<18x64xf32> -> vector<18x64xf32>
    %35 = arith.addf %31, %34 : vector<18x64xf32>
    %c8 = arith.constant 8 : index
    %c0_31 = arith.constant 0 : index
    %c0_32 = arith.constant 0 : index
    %36 = vector.load %arg1[%c8, %c0_31, %c0_32] : memref<9x128x64xbf16, #tpu.memory_space<vmem>>, vector<1x128x64xbf16>
    %37 = vector.shape_cast %36 : vector<1x128x64xbf16> to vector<128x64xbf16>
    %cst_33 = arith.constant dense<0.000000e+00> : vector<18x64xf32>
    %38 = tpu.matmul %1, %37, %cst_33 {dimension_numbers = #tpu.dot_dimension_numbers<[1], [0], [0], [1], [0, 0, 1, 1], [], []>} : vector<18x128xbf16>, vector<128x64xbf16>, vector<18x64xf32> -> vector<18x64xf32>
    %39 = arith.addf %35, %38 : vector<18x64xf32>
    %c0_34 = arith.constant 0 : index
    %c0_35 = arith.constant 0 : index
    %40 = vector.load %arg2[%c0_34, %c0_35] : memref<1x64xf32, #tpu.memory_space<vmem>>, vector<1x64xf32>
    %41 = vector.broadcast %40 : vector<1x64xf32> to vector<18x64xf32>
    %42 = arith.addf %10, %41 : vector<18x64xf32>
    %cst_36 = arith.constant 0.000000e+00 : f32
    %43 = vector.broadcast %cst_36 : f32 to vector<18x64xf32>
    %44 = arith.maximumf %42, %43 : vector<18x64xf32>
    %c0_37 = arith.constant 0 : index
    %c0_38 = arith.constant 0 : index
    %c0_39 = arith.constant 0 : index
    %45 = vector.load %arg3[%c0_37, %c0_38, %c0_39] : memref<4x18x64xf32, #tpu.memory_space<vmem>>, vector<1x18x64xf32>
    %46 = vector.shape_cast %45 : vector<1x18x64xf32> to vector<18x64xf32>
    %47 = vector.shape_cast %44 : vector<18x64xf32> to vector<1x18x64xf32>
    tpu.vector_store %arg3[%c0_37, %c0_38, %c0_39], %47 {strides = array<i32>} : memref<4x18x64xf32, #tpu.memory_space<vmem>>, vector<1x18x64xf32>,
    %c0_40 = arith.constant 0 : index
    %c0_41 = arith.constant 0 : index
    %48 = vector.load %arg2[%c0_40, %c0_41] : memref<1x64xf32, #tpu.memory_space<vmem>>, vector<1x64xf32>
    %49 = vector.broadcast %48 : vector<1x64xf32> to vector<18x64xf32>
    %50 = arith.addf %17, %49 : vector<18x64xf32>
    %cst_42 = arith.constant 0.000000e+00 : f32
    %51 = vector.broadcast %cst_42 : f32 to vector<18x64xf32>
    %52 = arith.maximumf %50, %51 : vector<18x64xf32>
    %c1_43 = arith.constant 1 : index
    %c0_44 = arith.constant 0 : index
    %c0_45 = arith.constant 0 : index
    %53 = vector.load %arg3[%c1_43, %c0_44, %c0_45] : memref<4x18x64xf32, #tpu.memory_space<vmem>>, vector<1x18x64xf32>
    %54 = vector.shape_cast %53 : vector<1x18x64xf32> to vector<18x64xf32>
    %55 = vector.shape_cast %52 : vector<18x64xf32> to vector<1x18x64xf32>
    tpu.vector_store %arg3[%c1_43, %c0_44, %c0_45], %55 {strides = array<i32>} : memref<4x18x64xf32, #tpu.memory_space<vmem>>, vector<1x18x64xf32>,
    %c0_46 = arith.constant 0 : index
    %c0_47 = arith.constant 0 : index
    %56 = vector.load %arg2[%c0_46, %c0_47] : memref<1x64xf32, #tpu.memory_space<vmem>>, vector<1x64xf32>
    %57 = vector.broadcast %56 : vector<1x64xf32> to vector<18x64xf32>
    %58 = arith.addf %24, %57 : vector<18x64xf32>
    %cst_48 = arith.constant 0.000000e+00 : f32
    %59 = vector.broadcast %cst_48 : f32 to vector<18x64xf32>
    %60 = arith.maximumf %58, %59 : vector<18x64xf32>
    %c2_49 = arith.constant 2 : index
    %c0_50 = arith.constant 0 : index
    %c0_51 = arith.constant 0 : index
    %61 = vector.load %arg3[%c2_49, %c0_50, %c0_51] : memref<4x18x64xf32, #tpu.memory_space<vmem>>, vector<1x18x64xf32>
    %62 = vector.shape_cast %61 : vector<1x18x64xf32> to vector<18x64xf32>
    %63 = vector.shape_cast %60 : vector<18x64xf32> to vector<1x18x64xf32>
    tpu.vector_store %arg3[%c2_49, %c0_50, %c0_51], %63 {strides = array<i32>} : memref<4x18x64xf32, #tpu.memory_space<vmem>>, vector<1x18x64xf32>,
    %c0_52 = arith.constant 0 : index
    %c0_53 = arith.constant 0 : index
    %64 = vector.load %arg2[%c0_52, %c0_53] : memref<1x64xf32, #tpu.memory_space<vmem>>, vector<1x64xf32>
    %65 = vector.broadcast %64 : vector<1x64xf32> to vector<18x64xf32>
    %66 = arith.addf %39, %65 : vector<18x64xf32>
    %cst_54 = arith.constant 0.000000e+00 : f32
    %67 = vector.broadcast %cst_54 : f32 to vector<18x64xf32>
    %68 = arith.maximumf %66, %67 : vector<18x64xf32>
    %c3_55 = arith.constant 3 : index
    %c0_56 = arith.constant 0 : index
    %c0_57 = arith.constant 0 : index
    %69 = vector.load %arg3[%c3_55, %c0_56, %c0_57] : memref<4x18x64xf32, #tpu.memory_space<vmem>>, vector<1x18x64xf32>
    %70 = vector.shape_cast %69 : vector<1x18x64xf32> to vector<18x64xf32>
    %71 = vector.shape_cast %68 : vector<18x64xf32> to vector<1x18x64xf32>
    tpu.vector_store %arg3[%c3_55, %c0_56, %c0_57], %71 {strides = array<i32>} : memref<4x18x64xf32, #tpu.memory_space<vmem>>, vector<1x18x64xf32>,
    return
  }
}

module attributes {stable_mosaic.version = 11 : i64} {
  func.func @_dec_convT3x3_kernel(%arg0: memref<56x64xf32, #tpu.memory_space<vmem>>, %arg1: memref<9x64x32xbf16, #tpu.memory_space<vmem>>, %arg2: memref<1x32xf32, #tpu.memory_space<vmem>>, %arg3: memref<4x50x32xf32, #tpu.memory_space<vmem>>) attributes {dimension_semantics = [], scalar_prefetch = 0 : i64, scratch_operands = 0 : i64, tpu.core_type = #tpu.core_type<tc>} {
    %c0 = arith.constant 0 : index
    %c0_0 = arith.constant 0 : index
    %0 = vector.load %arg0[%c0, %c0_0] : memref<56x64xf32, #tpu.memory_space<vmem>>, vector<50x64xf32>
    %1 = arith.truncf %0 : vector<50x64xf32> to vector<50x64xbf16>
    %c1 = arith.constant 1 : index
    %c0_1 = arith.constant 0 : index
    %2 = vector.load %arg0[%c1, %c0_1] : memref<56x64xf32, #tpu.memory_space<vmem>>, vector<50x64xf32>
    %3 = arith.truncf %2 : vector<50x64xf32> to vector<50x64xbf16>
    %c5 = arith.constant 5 : index
    %c0_2 = arith.constant 0 : index
    %4 = vector.load %arg0[%c5, %c0_2] : memref<56x64xf32, #tpu.memory_space<vmem>>, vector<50x64xf32>
    %5 = arith.truncf %4 : vector<50x64xf32> to vector<50x64xbf16>
    %c6 = arith.constant 6 : index
    %c0_3 = arith.constant 0 : index
    %6 = vector.load %arg0[%c6, %c0_3] : memref<56x64xf32, #tpu.memory_space<vmem>>, vector<50x64xf32>
    %7 = arith.truncf %6 : vector<50x64xf32> to vector<50x64xbf16>
    %c4 = arith.constant 4 : index
    %c0_4 = arith.constant 0 : index
    %c0_5 = arith.constant 0 : index
    %8 = vector.load %arg1[%c4, %c0_4, %c0_5] : memref<9x64x32xbf16, #tpu.memory_space<vmem>>, vector<1x64x32xbf16>
    %9 = vector.shape_cast %8 : vector<1x64x32xbf16> to vector<64x32xbf16>
    %cst = arith.constant dense<0.000000e+00> : vector<50x32xf32>
    %10 = tpu.matmul %1, %9, %cst {dimension_numbers = #tpu.dot_dimension_numbers<[1], [0], [0], [1], [0, 0, 1, 1], [], []>} : vector<50x64xbf16>, vector<64x32xbf16>, vector<50x32xf32> -> vector<50x32xf32>
    %c3 = arith.constant 3 : index
    %c0_6 = arith.constant 0 : index
    %c0_7 = arith.constant 0 : index
    %11 = vector.load %arg1[%c3, %c0_6, %c0_7] : memref<9x64x32xbf16, #tpu.memory_space<vmem>>, vector<1x64x32xbf16>
    %12 = vector.shape_cast %11 : vector<1x64x32xbf16> to vector<64x32xbf16>
    %cst_8 = arith.constant dense<0.000000e+00> : vector<50x32xf32>
    %13 = tpu.matmul %3, %12, %cst_8 {dimension_numbers = #tpu.dot_dimension_numbers<[1], [0], [0], [1], [0, 0, 1, 1], [], []>} : vector<50x64xbf16>, vector<64x32xbf16>, vector<50x32xf32> -> vector<50x32xf32>
    %c5_9 = arith.constant 5 : index
    %c0_10 = arith.constant 0 : index
    %c0_11 = arith.constant 0 : index
    %14 = vector.load %arg1[%c5_9, %c0_10, %c0_11] : memref<9x64x32xbf16, #tpu.memory_space<vmem>>, vector<1x64x32xbf16>
    %15 = vector.shape_cast %14 : vector<1x64x32xbf16> to vector<64x32xbf16>
    %cst_12 = arith.constant dense<0.000000e+00> : vector<50x32xf32>
    %16 = tpu.matmul %1, %15, %cst_12 {dimension_numbers = #tpu.dot_dimension_numbers<[1], [0], [0], [1], [0, 0, 1, 1], [], []>} : vector<50x64xbf16>, vector<64x32xbf16>, vector<50x32xf32> -> vector<50x32xf32>
    %17 = arith.addf %13, %16 : vector<50x32xf32>
    %c1_13 = arith.constant 1 : index
    %c0_14 = arith.constant 0 : index
    %c0_15 = arith.constant 0 : index
    %18 = vector.load %arg1[%c1_13, %c0_14, %c0_15] : memref<9x64x32xbf16, #tpu.memory_space<vmem>>, vector<1x64x32xbf16>
    %19 = vector.shape_cast %18 : vector<1x64x32xbf16> to vector<64x32xbf16>
    %cst_16 = arith.constant dense<0.000000e+00> : vector<50x32xf32>
    %20 = tpu.matmul %5, %19, %cst_16 {dimension_numbers = #tpu.dot_dimension_numbers<[1], [0], [0], [1], [0, 0, 1, 1], [], []>} : vector<50x64xbf16>, vector<64x32xbf16>, vector<50x32xf32> -> vector<50x32xf32>
    %c7 = arith.constant 7 : index
    %c0_17 = arith.constant 0 : index
    %c0_18 = arith.constant 0 : index
    %21 = vector.load %arg1[%c7, %c0_17, %c0_18] : memref<9x64x32xbf16, #tpu.memory_space<vmem>>, vector<1x64x32xbf16>
    %22 = vector.shape_cast %21 : vector<1x64x32xbf16> to vector<64x32xbf16>
    %cst_19 = arith.constant dense<0.000000e+00> : vector<50x32xf32>
    %23 = tpu.matmul %1, %22, %cst_19 {dimension_numbers = #tpu.dot_dimension_numbers<[1], [0], [0], [1], [0, 0, 1, 1], [], []>} : vector<50x64xbf16>, vector<64x32xbf16>, vector<50x32xf32> -> vector<50x32xf32>
    %24 = arith.addf %20, %23 : vector<50x32xf32>
    %c0_20 = arith.constant 0 : index
    %c0_21 = arith.constant 0 : index
    %c0_22 = arith.constant 0 : index
    %25 = vector.load %arg1[%c0_20, %c0_21, %c0_22] : memref<9x64x32xbf16, #tpu.memory_space<vmem>>, vector<1x64x32xbf16>
    %26 = vector.shape_cast %25 : vector<1x64x32xbf16> to vector<64x32xbf16>
    %cst_23 = arith.constant dense<0.000000e+00> : vector<50x32xf32>
    %27 = tpu.matmul %7, %26, %cst_23 {dimension_numbers = #tpu.dot_dimension_numbers<[1], [0], [0], [1], [0, 0, 1, 1], [], []>} : vector<50x64xbf16>, vector<64x32xbf16>, vector<50x32xf32> -> vector<50x32xf32>
    %c2 = arith.constant 2 : index
    %c0_24 = arith.constant 0 : index
    %c0_25 = arith.constant 0 : index
    %28 = vector.load %arg1[%c2, %c0_24, %c0_25] : memref<9x64x32xbf16, #tpu.memory_space<vmem>>, vector<1x64x32xbf16>
    %29 = vector.shape_cast %28 : vector<1x64x32xbf16> to vector<64x32xbf16>
    %cst_26 = arith.constant dense<0.000000e+00> : vector<50x32xf32>
    %30 = tpu.matmul %5, %29, %cst_26 {dimension_numbers = #tpu.dot_dimension_numbers<[1], [0], [0], [1], [0, 0, 1, 1], [], []>} : vector<50x64xbf16>, vector<64x32xbf16>, vector<50x32xf32> -> vector<50x32xf32>
    %31 = arith.addf %27, %30 : vector<50x32xf32>
    %c6_27 = arith.constant 6 : index
    %c0_28 = arith.constant 0 : index
    %c0_29 = arith.constant 0 : index
    %32 = vector.load %arg1[%c6_27, %c0_28, %c0_29] : memref<9x64x32xbf16, #tpu.memory_space<vmem>>, vector<1x64x32xbf16>
    %33 = vector.shape_cast %32 : vector<1x64x32xbf16> to vector<64x32xbf16>
    %cst_30 = arith.constant dense<0.000000e+00> : vector<50x32xf32>
    %34 = tpu.matmul %3, %33, %cst_30 {dimension_numbers = #tpu.dot_dimension_numbers<[1], [0], [0], [1], [0, 0, 1, 1], [], []>} : vector<50x64xbf16>, vector<64x32xbf16>, vector<50x32xf32> -> vector<50x32xf32>
    %35 = arith.addf %31, %34 : vector<50x32xf32>
    %c8 = arith.constant 8 : index
    %c0_31 = arith.constant 0 : index
    %c0_32 = arith.constant 0 : index
    %36 = vector.load %arg1[%c8, %c0_31, %c0_32] : memref<9x64x32xbf16, #tpu.memory_space<vmem>>, vector<1x64x32xbf16>
    %37 = vector.shape_cast %36 : vector<1x64x32xbf16> to vector<64x32xbf16>
    %cst_33 = arith.constant dense<0.000000e+00> : vector<50x32xf32>
    %38 = tpu.matmul %1, %37, %cst_33 {dimension_numbers = #tpu.dot_dimension_numbers<[1], [0], [0], [1], [0, 0, 1, 1], [], []>} : vector<50x64xbf16>, vector<64x32xbf16>, vector<50x32xf32> -> vector<50x32xf32>
    %39 = arith.addf %35, %38 : vector<50x32xf32>
    %c0_34 = arith.constant 0 : index
    %c0_35 = arith.constant 0 : index
    %40 = vector.load %arg2[%c0_34, %c0_35] : memref<1x32xf32, #tpu.memory_space<vmem>>, vector<1x32xf32>
    %41 = vector.broadcast %40 : vector<1x32xf32> to vector<50x32xf32>
    %42 = arith.addf %10, %41 : vector<50x32xf32>
    %cst_36 = arith.constant 0.000000e+00 : f32
    %43 = vector.broadcast %cst_36 : f32 to vector<50x32xf32>
    %44 = arith.maximumf %42, %43 : vector<50x32xf32>
    %c0_37 = arith.constant 0 : index
    %c0_38 = arith.constant 0 : index
    %c0_39 = arith.constant 0 : index
    %45 = vector.load %arg3[%c0_37, %c0_38, %c0_39] : memref<4x50x32xf32, #tpu.memory_space<vmem>>, vector<1x50x32xf32>
    %46 = vector.shape_cast %45 : vector<1x50x32xf32> to vector<50x32xf32>
    %47 = vector.shape_cast %44 : vector<50x32xf32> to vector<1x50x32xf32>
    tpu.vector_store %arg3[%c0_37, %c0_38, %c0_39], %47 {strides = array<i32>} : memref<4x50x32xf32, #tpu.memory_space<vmem>>, vector<1x50x32xf32>,
    %c0_40 = arith.constant 0 : index
    %c0_41 = arith.constant 0 : index
    %48 = vector.load %arg2[%c0_40, %c0_41] : memref<1x32xf32, #tpu.memory_space<vmem>>, vector<1x32xf32>
    %49 = vector.broadcast %48 : vector<1x32xf32> to vector<50x32xf32>
    %50 = arith.addf %17, %49 : vector<50x32xf32>
    %cst_42 = arith.constant 0.000000e+00 : f32
    %51 = vector.broadcast %cst_42 : f32 to vector<50x32xf32>
    %52 = arith.maximumf %50, %51 : vector<50x32xf32>
    %c1_43 = arith.constant 1 : index
    %c0_44 = arith.constant 0 : index
    %c0_45 = arith.constant 0 : index
    %53 = vector.load %arg3[%c1_43, %c0_44, %c0_45] : memref<4x50x32xf32, #tpu.memory_space<vmem>>, vector<1x50x32xf32>
    %54 = vector.shape_cast %53 : vector<1x50x32xf32> to vector<50x32xf32>
    %55 = vector.shape_cast %52 : vector<50x32xf32> to vector<1x50x32xf32>
    tpu.vector_store %arg3[%c1_43, %c0_44, %c0_45], %55 {strides = array<i32>} : memref<4x50x32xf32, #tpu.memory_space<vmem>>, vector<1x50x32xf32>,
    %c0_46 = arith.constant 0 : index
    %c0_47 = arith.constant 0 : index
    %56 = vector.load %arg2[%c0_46, %c0_47] : memref<1x32xf32, #tpu.memory_space<vmem>>, vector<1x32xf32>
    %57 = vector.broadcast %56 : vector<1x32xf32> to vector<50x32xf32>
    %58 = arith.addf %24, %57 : vector<50x32xf32>
    %cst_48 = arith.constant 0.000000e+00 : f32
    %59 = vector.broadcast %cst_48 : f32 to vector<50x32xf32>
    %60 = arith.maximumf %58, %59 : vector<50x32xf32>
    %c2_49 = arith.constant 2 : index
    %c0_50 = arith.constant 0 : index
    %c0_51 = arith.constant 0 : index
    %61 = vector.load %arg3[%c2_49, %c0_50, %c0_51] : memref<4x50x32xf32, #tpu.memory_space<vmem>>, vector<1x50x32xf32>
    %62 = vector.shape_cast %61 : vector<1x50x32xf32> to vector<50x32xf32>
    %63 = vector.shape_cast %60 : vector<50x32xf32> to vector<1x50x32xf32>
    tpu.vector_store %arg3[%c2_49, %c0_50, %c0_51], %63 {strides = array<i32>} : memref<4x50x32xf32, #tpu.memory_space<vmem>>, vector<1x50x32xf32>,
    %c0_52 = arith.constant 0 : index
    %c0_53 = arith.constant 0 : index
    %64 = vector.load %arg2[%c0_52, %c0_53] : memref<1x32xf32, #tpu.memory_space<vmem>>, vector<1x32xf32>
    %65 = vector.broadcast %64 : vector<1x32xf32> to vector<50x32xf32>
    %66 = arith.addf %39, %65 : vector<50x32xf32>
    %cst_54 = arith.constant 0.000000e+00 : f32
    %67 = vector.broadcast %cst_54 : f32 to vector<50x32xf32>
    %68 = arith.maximumf %66, %67 : vector<50x32xf32>
    %c3_55 = arith.constant 3 : index
    %c0_56 = arith.constant 0 : index
    %c0_57 = arith.constant 0 : index
    %69 = vector.load %arg3[%c3_55, %c0_56, %c0_57] : memref<4x50x32xf32, #tpu.memory_space<vmem>>, vector<1x50x32xf32>
    %70 = vector.shape_cast %69 : vector<1x50x32xf32> to vector<50x32xf32>
    %71 = vector.shape_cast %68 : vector<50x32xf32> to vector<1x50x32xf32>
    tpu.vector_store %arg3[%c3_55, %c0_56, %c0_57], %71 {strides = array<i32>} : memref<4x50x32xf32, #tpu.memory_space<vmem>>, vector<1x50x32xf32>,
    return
  }
}

module attributes {stable_mosaic.version = 11 : i64} {
  func.func @_dec_convT3x3_kernel(%arg0: memref<172x32xf32, #tpu.memory_space<vmem>>, %arg1: memref<9x32x128xbf16, #tpu.memory_space<vmem>>, %arg2: memref<1x128xf32, #tpu.memory_space<vmem>>, %arg3: memref<4x162x128xf32, #tpu.memory_space<vmem>>) attributes {dimension_semantics = [], scalar_prefetch = 0 : i64, scratch_operands = 0 : i64, tpu.core_type = #tpu.core_type<tc>} {
    %c0 = arith.constant 0 : index
    %c0_0 = arith.constant 0 : index
    %0 = vector.load %arg0[%c0, %c0_0] : memref<172x32xf32, #tpu.memory_space<vmem>>, vector<162x32xf32>
    %1 = arith.truncf %0 : vector<162x32xf32> to vector<162x32xbf16>
    %c1 = arith.constant 1 : index
    %c0_1 = arith.constant 0 : index
    %2 = vector.load %arg0[%c1, %c0_1] : memref<172x32xf32, #tpu.memory_space<vmem>>, vector<162x32xf32>
    %3 = arith.truncf %2 : vector<162x32xf32> to vector<162x32xbf16>
    %c9 = arith.constant 9 : index
    %c0_2 = arith.constant 0 : index
    %4 = vector.load %arg0[%c9, %c0_2] : memref<172x32xf32, #tpu.memory_space<vmem>>, vector<162x32xf32>
    %5 = arith.truncf %4 : vector<162x32xf32> to vector<162x32xbf16>
    %c10 = arith.constant 10 : index
    %c0_3 = arith.constant 0 : index
    %6 = vector.load %arg0[%c10, %c0_3] : memref<172x32xf32, #tpu.memory_space<vmem>>, vector<162x32xf32>
    %7 = arith.truncf %6 : vector<162x32xf32> to vector<162x32xbf16>
    %c4 = arith.constant 4 : index
    %c0_4 = arith.constant 0 : index
    %c0_5 = arith.constant 0 : index
    %8 = vector.load %arg1[%c4, %c0_4, %c0_5] : memref<9x32x128xbf16, #tpu.memory_space<vmem>>, vector<1x32x128xbf16>
    %9 = vector.shape_cast %8 : vector<1x32x128xbf16> to vector<32x128xbf16>
    %cst = arith.constant dense<0.000000e+00> : vector<162x128xf32>
    %10 = tpu.matmul %1, %9, %cst {dimension_numbers = #tpu.dot_dimension_numbers<[1], [0], [0], [1], [0, 0, 1, 1], [], []>} : vector<162x32xbf16>, vector<32x128xbf16>, vector<162x128xf32> -> vector<162x128xf32>
    %c3 = arith.constant 3 : index
    %c0_6 = arith.constant 0 : index
    %c0_7 = arith.constant 0 : index
    %11 = vector.load %arg1[%c3, %c0_6, %c0_7] : memref<9x32x128xbf16, #tpu.memory_space<vmem>>, vector<1x32x128xbf16>
    %12 = vector.shape_cast %11 : vector<1x32x128xbf16> to vector<32x128xbf16>
    %cst_8 = arith.constant dense<0.000000e+00> : vector<162x128xf32>
    %13 = tpu.matmul %3, %12, %cst_8 {dimension_numbers = #tpu.dot_dimension_numbers<[1], [0], [0], [1], [0, 0, 1, 1], [], []>} : vector<162x32xbf16>, vector<32x128xbf16>, vector<162x128xf32> -> vector<162x128xf32>
    %c5 = arith.constant 5 : index
    %c0_9 = arith.constant 0 : index
    %c0_10 = arith.constant 0 : index
    %14 = vector.load %arg1[%c5, %c0_9, %c0_10] : memref<9x32x128xbf16, #tpu.memory_space<vmem>>, vector<1x32x128xbf16>
    %15 = vector.shape_cast %14 : vector<1x32x128xbf16> to vector<32x128xbf16>
    %cst_11 = arith.constant dense<0.000000e+00> : vector<162x128xf32>
    %16 = tpu.matmul %1, %15, %cst_11 {dimension_numbers = #tpu.dot_dimension_numbers<[1], [0], [0], [1], [0, 0, 1, 1], [], []>} : vector<162x32xbf16>, vector<32x128xbf16>, vector<162x128xf32> -> vector<162x128xf32>
    %17 = arith.addf %13, %16 : vector<162x128xf32>
    %c1_12 = arith.constant 1 : index
    %c0_13 = arith.constant 0 : index
    %c0_14 = arith.constant 0 : index
    %18 = vector.load %arg1[%c1_12, %c0_13, %c0_14] : memref<9x32x128xbf16, #tpu.memory_space<vmem>>, vector<1x32x128xbf16>
    %19 = vector.shape_cast %18 : vector<1x32x128xbf16> to vector<32x128xbf16>
    %cst_15 = arith.constant dense<0.000000e+00> : vector<162x128xf32>
    %20 = tpu.matmul %5, %19, %cst_15 {dimension_numbers = #tpu.dot_dimension_numbers<[1], [0], [0], [1], [0, 0, 1, 1], [], []>} : vector<162x32xbf16>, vector<32x128xbf16>, vector<162x128xf32> -> vector<162x128xf32>
    %c7 = arith.constant 7 : index
    %c0_16 = arith.constant 0 : index
    %c0_17 = arith.constant 0 : index
    %21 = vector.load %arg1[%c7, %c0_16, %c0_17] : memref<9x32x128xbf16, #tpu.memory_space<vmem>>, vector<1x32x128xbf16>
    %22 = vector.shape_cast %21 : vector<1x32x128xbf16> to vector<32x128xbf16>
    %cst_18 = arith.constant dense<0.000000e+00> : vector<162x128xf32>
    %23 = tpu.matmul %1, %22, %cst_18 {dimension_numbers = #tpu.dot_dimension_numbers<[1], [0], [0], [1], [0, 0, 1, 1], [], []>} : vector<162x32xbf16>, vector<32x128xbf16>, vector<162x128xf32> -> vector<162x128xf32>
    %24 = arith.addf %20, %23 : vector<162x128xf32>
    %c0_19 = arith.constant 0 : index
    %c0_20 = arith.constant 0 : index
    %c0_21 = arith.constant 0 : index
    %25 = vector.load %arg1[%c0_19, %c0_20, %c0_21] : memref<9x32x128xbf16, #tpu.memory_space<vmem>>, vector<1x32x128xbf16>
    %26 = vector.shape_cast %25 : vector<1x32x128xbf16> to vector<32x128xbf16>
    %cst_22 = arith.constant dense<0.000000e+00> : vector<162x128xf32>
    %27 = tpu.matmul %7, %26, %cst_22 {dimension_numbers = #tpu.dot_dimension_numbers<[1], [0], [0], [1], [0, 0, 1, 1], [], []>} : vector<162x32xbf16>, vector<32x128xbf16>, vector<162x128xf32> -> vector<162x128xf32>
    %c2 = arith.constant 2 : index
    %c0_23 = arith.constant 0 : index
    %c0_24 = arith.constant 0 : index
    %28 = vector.load %arg1[%c2, %c0_23, %c0_24] : memref<9x32x128xbf16, #tpu.memory_space<vmem>>, vector<1x32x128xbf16>
    %29 = vector.shape_cast %28 : vector<1x32x128xbf16> to vector<32x128xbf16>
    %cst_25 = arith.constant dense<0.000000e+00> : vector<162x128xf32>
    %30 = tpu.matmul %5, %29, %cst_25 {dimension_numbers = #tpu.dot_dimension_numbers<[1], [0], [0], [1], [0, 0, 1, 1], [], []>} : vector<162x32xbf16>, vector<32x128xbf16>, vector<162x128xf32> -> vector<162x128xf32>
    %31 = arith.addf %27, %30 : vector<162x128xf32>
    %c6 = arith.constant 6 : index
    %c0_26 = arith.constant 0 : index
    %c0_27 = arith.constant 0 : index
    %32 = vector.load %arg1[%c6, %c0_26, %c0_27] : memref<9x32x128xbf16, #tpu.memory_space<vmem>>, vector<1x32x128xbf16>
    %33 = vector.shape_cast %32 : vector<1x32x128xbf16> to vector<32x128xbf16>
    %cst_28 = arith.constant dense<0.000000e+00> : vector<162x128xf32>
    %34 = tpu.matmul %3, %33, %cst_28 {dimension_numbers = #tpu.dot_dimension_numbers<[1], [0], [0], [1], [0, 0, 1, 1], [], []>} : vector<162x32xbf16>, vector<32x128xbf16>, vector<162x128xf32> -> vector<162x128xf32>
    %35 = arith.addf %31, %34 : vector<162x128xf32>
    %c8 = arith.constant 8 : index
    %c0_29 = arith.constant 0 : index
    %c0_30 = arith.constant 0 : index
    %36 = vector.load %arg1[%c8, %c0_29, %c0_30] : memref<9x32x128xbf16, #tpu.memory_space<vmem>>, vector<1x32x128xbf16>
    %37 = vector.shape_cast %36 : vector<1x32x128xbf16> to vector<32x128xbf16>
    %cst_31 = arith.constant dense<0.000000e+00> : vector<162x128xf32>
    %38 = tpu.matmul %1, %37, %cst_31 {dimension_numbers = #tpu.dot_dimension_numbers<[1], [0], [0], [1], [0, 0, 1, 1], [], []>} : vector<162x32xbf16>, vector<32x128xbf16>, vector<162x128xf32> -> vector<162x128xf32>
    %39 = arith.addf %35, %38 : vector<162x128xf32>
    %c0_32 = arith.constant 0 : index
    %c0_33 = arith.constant 0 : index
    %40 = vector.load %arg2[%c0_32, %c0_33] : memref<1x128xf32, #tpu.memory_space<vmem>>, vector<1x128xf32>
    %41 = vector.broadcast %40 : vector<1x128xf32> to vector<162x128xf32>
    %42 = arith.addf %10, %41 : vector<162x128xf32>
    %cst_34 = arith.constant 0.000000e+00 : f32
    %43 = vector.broadcast %cst_34 : f32 to vector<162x128xf32>
    %44 = arith.subf %43, %42 : vector<162x128xf32>
    %45 = math.exp %44 : vector<162x128xf32>
    %cst_35 = arith.constant 1.000000e+00 : f32
    %46 = vector.broadcast %cst_35 : f32 to vector<162x128xf32>
    %47 = arith.addf %46, %45 : vector<162x128xf32>
    %48 = tpu.reciprocal %47 {approx = true} : vector<162x128xf32> -> vector<162x128xf32>
    %c0_36 = arith.constant 0 : index
    %c0_37 = arith.constant 0 : index
    %c0_38 = arith.constant 0 : index
    %49 = vector.load %arg3[%c0_36, %c0_37, %c0_38] : memref<4x162x128xf32, #tpu.memory_space<vmem>>, vector<1x162x128xf32>
    %50 = vector.shape_cast %49 : vector<1x162x128xf32> to vector<162x128xf32>
    %51 = vector.shape_cast %48 : vector<162x128xf32> to vector<1x162x128xf32>
    tpu.vector_store %arg3[%c0_36, %c0_37, %c0_38], %51 {strides = array<i32>} : memref<4x162x128xf32, #tpu.memory_space<vmem>>, vector<1x162x128xf32>,
    %c0_39 = arith.constant 0 : index
    %c0_40 = arith.constant 0 : index
    %52 = vector.load %arg2[%c0_39, %c0_40] : memref<1x128xf32, #tpu.memory_space<vmem>>, vector<1x128xf32>
    %53 = vector.broadcast %52 : vector<1x128xf32> to vector<162x128xf32>
    %54 = arith.addf %17, %53 : vector<162x128xf32>
    %cst_41 = arith.constant 0.000000e+00 : f32
    %55 = vector.broadcast %cst_41 : f32 to vector<162x128xf32>
    %56 = arith.subf %55, %54 : vector<162x128xf32>
    %57 = math.exp %56 : vector<162x128xf32>
    %cst_42 = arith.constant 1.000000e+00 : f32
    %58 = vector.broadcast %cst_42 : f32 to vector<162x128xf32>
    %59 = arith.addf %58, %57 : vector<162x128xf32>
    %60 = tpu.reciprocal %59 {approx = true} : vector<162x128xf32> -> vector<162x128xf32>
    %c1_43 = arith.constant 1 : index
    %c0_44 = arith.constant 0 : index
    %c0_45 = arith.constant 0 : index
    %61 = vector.load %arg3[%c1_43, %c0_44, %c0_45] : memref<4x162x128xf32, #tpu.memory_space<vmem>>, vector<1x162x128xf32>
    %62 = vector.shape_cast %61 : vector<1x162x128xf32> to vector<162x128xf32>
    %63 = vector.shape_cast %60 : vector<162x128xf32> to vector<1x162x128xf32>
    tpu.vector_store %arg3[%c1_43, %c0_44, %c0_45], %63 {strides = array<i32>} : memref<4x162x128xf32, #tpu.memory_space<vmem>>, vector<1x162x128xf32>,
    %c0_46 = arith.constant 0 : index
    %c0_47 = arith.constant 0 : index
    %64 = vector.load %arg2[%c0_46, %c0_47] : memref<1x128xf32, #tpu.memory_space<vmem>>, vector<1x128xf32>
    %65 = vector.broadcast %64 : vector<1x128xf32> to vector<162x128xf32>
    %66 = arith.addf %24, %65 : vector<162x128xf32>
    %cst_48 = arith.constant 0.000000e+00 : f32
    %67 = vector.broadcast %cst_48 : f32 to vector<162x128xf32>
    %68 = arith.subf %67, %66 : vector<162x128xf32>
    %69 = math.exp %68 : vector<162x128xf32>
    %cst_49 = arith.constant 1.000000e+00 : f32
    %70 = vector.broadcast %cst_49 : f32 to vector<162x128xf32>
    %71 = arith.addf %70, %69 : vector<162x128xf32>
    %72 = tpu.reciprocal %71 {approx = true} : vector<162x128xf32> -> vector<162x128xf32>
    %c2_50 = arith.constant 2 : index
    %c0_51 = arith.constant 0 : index
    %c0_52 = arith.constant 0 : index
    %73 = vector.load %arg3[%c2_50, %c0_51, %c0_52] : memref<4x162x128xf32, #tpu.memory_space<vmem>>, vector<1x162x128xf32>
    %74 = vector.shape_cast %73 : vector<1x162x128xf32> to vector<162x128xf32>
    %75 = vector.shape_cast %72 : vector<162x128xf32> to vector<1x162x128xf32>
    tpu.vector_store %arg3[%c2_50, %c0_51, %c0_52], %75 {strides = array<i32>} : memref<4x162x128xf32, #tpu.memory_space<vmem>>, vector<1x162x128xf32>,
    %c0_53 = arith.constant 0 : index
    %c0_54 = arith.constant 0 : index
    %76 = vector.load %arg2[%c0_53, %c0_54] : memref<1x128xf32, #tpu.memory_space<vmem>>, vector<1x128xf32>
    %77 = vector.broadcast %76 : vector<1x128xf32> to vector<162x128xf32>
    %78 = arith.addf %39, %77 : vector<162x128xf32>
    %cst_55 = arith.constant 0.000000e+00 : f32
    %79 = vector.broadcast %cst_55 : f32 to vector<162x128xf32>
    %80 = arith.subf %79, %78 : vector<162x128xf32>
    %81 = math.exp %80 : vector<162x128xf32>
    %cst_56 = arith.constant 1.000000e+00 : f32
    %82 = vector.broadcast %cst_56 : f32 to vector<162x128xf32>
    %83 = arith.addf %82, %81 : vector<162x128xf32>
    %84 = tpu.reciprocal %83 {approx = true} : vector<162x128xf32> -> vector<162x128xf32>
    %c3_57 = arith.constant 3 : index
    %c0_58 = arith.constant 0 : index
    %c0_59 = arith.constant 0 : index
    %85 = vector.load %arg3[%c3_57, %c0_58, %c0_59] : memref<4x162x128xf32, #tpu.memory_space<vmem>>, vector<1x162x128xf32>
    %86 = vector.shape_cast %85 : vector<1x162x128xf32> to vector<162x128xf32>
    %87 = vector.shape_cast %84 : vector<162x128xf32> to vector<1x162x128xf32>
    tpu.vector_store %arg3[%c3_57, %c0_58, %c0_59], %87 {strides = array<i32>} : memref<4x162x128xf32, #tpu.memory_space<vmem>>, vector<1x162x128xf32>,
    return
  }
}

</mosaic_0001>

<llo_original>
// kernel: capsule_autoencoder_forward.6
$region0: #{capsule_autoencoder_forward.6}
  #allocation0 [shape = 'u32[]', space=smem, size = 0x4, offset = 0x4, fixed_abs, tag = 'smem constant byte address 0x4 - core index']
  #allocation1 [shape = 'u32[144,128]{1,0:T(1,128)}', space=vmem, size = 0x12000, scoped, tag = 'internal scratch']
  %s0 = inlined_call_operand.vmem [shape: f32[4,172,3], index: 0, kind: input, shape index: {}]
  %s1 = inlined_call_operand.vmem [shape: bf16[9,3,32], index: 1, kind: input, shape index: {}]
  %s2 = inlined_call_operand.vmem [shape: f32[1,32], index: 2, kind: input, shape index: {}]
  %s3 = inlined_call_operand.vmem [shape: f32[162,32], index: 3, kind: output, shape index: {}]
  %s4 = sld [smem:[#allocation0]]
  $region22: #{capsule_autoencoder_forward.6} parent=0
    _
  %s6 = ssub.s32 1, %s4
  %s7 = scalar_select 0, %s6, %s4
  // Predicated region
  $region2: #{capsule_autoencoder_forward.6} parent=0 // pred_check
    _
  $region3: #{capsule_autoencoder_forward.6} parent=0 // pred_check_branch
    %9 = sbr.rel (0) target = $region5
  $region4: #{capsule_autoencoder_forward.6} parent=0 // pred_region
    _
  $region5: #{capsule_autoencoder_forward.6} parent=0 // pred_fallthru
    _
  // Predicated region
  $region6: #{capsule_autoencoder_forward.6} parent=0 // pred_check
    _
  $region7: #{capsule_autoencoder_forward.6} parent=0 // pred_check_branch
    %11 = sbr.rel (0) target = $region9
  $region8: #{capsule_autoencoder_forward.6} parent=0 // pred_region
    _
  $region9: #{capsule_autoencoder_forward.6} parent=0 // pred_fallthru
    _
  // Predicated region
  $region10: #{capsule_autoencoder_forward.6} parent=0 // pred_check
    _
  $region11: #{capsule_autoencoder_forward.6} parent=0 // pred_check_branch
    %13 = sbr.rel (0) target = $region13
  $region12: #{capsule_autoencoder_forward.6} parent=0 // pred_region
    _
  $region13: #{capsule_autoencoder_forward.6} parent=0 // pred_fallthru
    _
  %v15 = vld [vmem:[%s0] sm:$0xff]
  %v16 = vld [vmem:[%s0 + $0x8] sm:$0xff]
  %v17 = vld [vmem:[%s0 + $0x10] sm:$0xff]
  %v18 = vld [vmem:[%s0 + $0x18] sm:$0xff]
  %v19 = vld [vmem:[%s0 + $0x20] sm:$0xff]
  %v20 = vld [vmem:[%s0 + $0x28] sm:$0xff]
  %v21 = vld [vmem:[%s0 + $0x30] sm:$0xff]
  %v22 = vld [vmem:[%s0 + $0x38] sm:$0xff]
  %v23 = vld [vmem:[%s0 + $0x40] sm:$0xff]
  %v24 = vld [vmem:[%s0 + $0x48] sm:$0xff]
  %v25 = vld [vmem:[%s0 + $0x50] sm:$0xff]
  %v26 = vld [vmem:[%s0 + $0x58] sm:$0xff]
  %v27 = vld [vmem:[%s0 + $0x60] sm:$0xff]
  %v28 = vld [vmem:[%s0 + $0x68] sm:$0xff]
  %v29 = vld [vmem:[%s0 + $0x70] sm:$0xff]
  %v30 = vld [vmem:[%s0 + $0x78] sm:$0xff]
  %v31 = vld [vmem:[%s0 + $0x80] sm:$0xff]
  %v32 = vld [vmem:[%s0 + $0x88] sm:$0xff]
  %v33 = vld [vmem:[%s0 + $0x90] sm:$0xff]
  %v34 = vld [vmem:[%s0 + $0x98] sm:$0xff]
  %v35 = vld [vmem:[%s0 + $0xa0] sm:$0x3]
  %v36 = vpack.c.bf16 %v16, %v15
  %v37 = vpack.c.bf16 %v18, %v17
  %v38 = vpack.c.bf16 %v20, %v19
  %v39 = vpack.c.bf16 %v22, %v21
  %v40 = vpack.c.bf16 %v24, %v23
  %v41 = vpack.c.bf16 %v26, %v25
  %v42 = vpack.c.bf16 %v28, %v27
  %v43 = vpack.c.bf16 %v30, %v29
  %v44 = vpack.c.bf16 %v32, %v31
  %v45 = vpack.c.bf16 %v34, %v33
  %v46 = vpack.c.bf16 %v35, %v35
  %v47 = vld [vmem:[%s1] sm:$0x3]
  %s48 = scalar_lea.vmem %s0, 176
  %v49 = vld [vmem:[%s48] sm:$0xff]
  %v50 = vld [vmem:[%s48 + $0x8] sm:$0xff]
  %v51 = vld [vmem:[%s48 + $0x10] sm:$0xff]
  %v52 = vld [vmem:[%s48 + $0x18] sm:$0xff]
  %v53 = vld [vmem:[%s48 + $0x20] sm:$0xff]
  %v54 = vld [vmem:[%s48 + $0x28] sm:$0xff]
  %v55 = vld [vmem:[%s48 + $0x30] sm:$0xff]
  %v56 = vld [vmem:[%s48 + $0x38] sm:$0xff]
  %v57 = vld [vmem:[%s48 + $0x40] sm:$0xff]
  %v58 = vld [vmem:[%s48 + $0x48] sm:$0xff]
  %v59 = vld [vmem:[%s48 + $0x50] sm:$0xff]
  %v60 = vld [vmem:[%s48 + $0x58] sm:$0xff]
  %v61 = vld [vmem:[%s48 + $0x60] sm:$0xff]
  %v62 = vld [vmem:[%s48 + $0x68] sm:$0xff]
  %v63 = vld [vmem:[%s48 + $0x70] sm:$0xff]
  %v64 = vld [vmem:[%s48 + $0x78] sm:$0xff]
  %v65 = vld [vmem:[%s48 + $0x80] sm:$0xff]
  %v66 = vld [vmem:[%s48 + $0x88] sm:$0xff]
  %v67 = vld [vmem:[%s48 + $0x90] sm:$0xff]
  %v68 = vld [vmem:[%s48 + $0x98] sm:$0xff]
  %v69 = vld [vmem:[%s48 + $0xa0] sm:$0x3]
  %v70 = vpack.c.bf16 %v50, %v49
  %v71 = vpack.c.bf16 %v52, %v51
  %v72 = vpack.c.bf16 %v54, %v53
  %v73 = vpack.c.bf16 %v56, %v55
  %v74 = vpack.c.bf16 %v58, %v57
  %v75 = vpack.c.bf16 %v60, %v59
  %v76 = vpack.c.bf16 %v62, %v61
  %v77 = vpack.c.bf16 %v64, %v63
  %v78 = vpack.c.bf16 %v66, %v65
  %v79 = vpack.c.bf16 %v68, %v67
  %v80 = vpack.c.bf16 %v69, %v69
  %s81 = scalar_lea.vmem %s1, 2
  %v82 = vld [vmem:[%s81] sm:$0x3]
  %vm83 = vcmask 23552
  %v85 = vsel %vm83, %v70, 0
  %v88 = vsel %vm83, %v71, 0
  %v91 = vsel %vm83, %v72, 0
  %v94 = vsel %vm83, %v73, 0
  %v97 = vsel %vm83, %v74, 0
  %v100 = vsel %vm83, %v75, 0
  %v103 = vsel %vm83, %v76, 0
  %v106 = vsel %vm83, %v77, 0
  %v109 = vsel %vm83, %v78, 0
  %v112 = vsel %vm83, %v79, 0
  %v115 = vsel %vm83, %v80, 0
  %vm117 = vcmask 1040384
  %vm118 = vcmask 1041408
  %v119 = vsel %vm117, 4294967295, 65535
  %v120 = vsel %vm118, %v119, 0
  %v122 = vand.u32 %v82, %v120
  %124 = vmatprep.subr.bf16.mxu0 0
  %125 = vmatpush1.bf16.msra.mxu0 %v122
  %126 = vmatprep.subr.bf16.mxu0 0
  %127 = vmatpush1.bf16.msra.mxu0 0
  %128 = vmatprep.subr.bf16.mxu0 0
  %129 = vmatpush1.bf16.msra.mxu0 0
  %130 = vmatprep.subr.bf16.mxu0 0
  %131 = vmatpush1.bf16.msra.mxu0 0
  %132 = vmatprep.subr.bf16.mxu0 0
  %133 = vmatpush1.bf16.msra.mxu0 0
  %134 = vmatprep.subr.bf16.mxu0 0
  %135 = vmatpush1.bf16.msra.mxu0 0
  %136 = vmatprep.subr.bf16.mxu0 0
  %137 = vmatpush1.bf16.msra.mxu0 0
  %138 = vmatprep.subr.bf16.mxu0 0
  %139 = vmatpush1.bf16.msra.mxu0 0
  %140 = vmatprep.subr.bf16.mxu0 0
  %141 = vmatpush1.bf16.msra.mxu0 0
  %142 = vmatprep.subr.bf16.mxu0 0
  %143 = vmatpush1.bf16.msra.mxu0 0
  %144 = vmatprep.subr.bf16.mxu0 0
  %145 = vmatpush1.bf16.msra.mxu0 0
  %146 = vmatprep.subr.bf16.mxu0 0
  %147 = vmatpush1.bf16.msra.mxu0 0
  %148 = vmatprep.subr.bf16.mxu0 0
  %149 = vmatpush1.bf16.msra.mxu0 0
  %150 = vmatprep.subr.bf16.mxu0 0
  %151 = vmatpush1.bf16.msra.mxu0 0
  %152 = vmatprep.subr.bf16.mxu0 0
  %153 = vmatpush1.bf16.msra.mxu0 0
  %154 = vmatprep.subr.bf16.mxu0 0
  %155 = vmatpush1.bf16.msra.mxu0 0
  %156 = vmatprep.mubr.bf16.mxu0 0
  %157 = vmatmul.mubr.bf16.gmra.mrb[0].mxu0 %v85
  %v158 = vpop.f32.mrb[0].mxu0
  %v159 = vadd.f32 0.0, %v158
  %v160 = vpop.f32.mrb[0].mxu0
  %v161 = vpop.f32.mrb[0].mxu0
  %v162 = vadd.f32 0.0, %v161
  %v163 = vpop.f32.mrb[0].mxu0
  %164 = vmatprep.mubr.bf16.mxu0 0
  %165 = vmatmul.mubr.bf16.gmra.mrb[0].mxu0 %v88
  %v166 = vpop.f32.mrb[0].mxu0
  %v167 = vadd.f32 0.0, %v166
  %v168 = vpop.f32.mrb[0].mxu0
  %v169 = vpop.f32.mrb[0].mxu0
  %v170 = vadd.f32 0.0, %v169
  %v171 = vpop.f32.mrb[0].mxu0
  %172 = vmatprep.mubr.bf16.mxu0 0
  %173 = vmatmul.mubr.bf16.gmra.mrb[0].mxu0 %v91
  %v174 = vpop.f32.mrb[0].mxu0
  %v175 = vadd.f32 0.0, %v174
  %v176 = vpop.f32.mrb[0].mxu0
  %v177 = vpop.f32.mrb[0].mxu0
  %v178 = vadd.f32 0.0, %v177
  %v179 = vpop.f32.mrb[0].mxu0
  %180 = vmatprep.mubr.bf16.mxu0 0
  %181 = vmatmul.mubr.bf16.gmra.mrb[0].mxu0 %v94
  %v182 = vpop.f32.mrb[0].mxu0
  %v183 = vadd.f32 0.0, %v182
  %v184 = vpop.f32.mrb[0].mxu0
  %v185 = vpop.f32.mrb[0].mxu0
  %v186 = vadd.f32 0.0, %v185
  %v187 = vpop.f32.mrb[0].mxu0
  %188 = vmatprep.mubr.bf16.mxu0 0
  %189 = vmatmul.mubr.bf16.gmra.mrb[0].mxu0 %v97
  %v190 = vpop.f32.mrb[0].mxu0
  %v191 = vadd.f32 0.0, %v190
  %v192 = vpop.f32.mrb[0].mxu0
  %v193 = vpop.f32.mrb[0].mxu0
  %v194 = vadd.f32 0.0, %v193
  %v195 = vpop.f32.mrb[0].mxu0
  %196 = vmatprep.mubr.bf16.mxu0 0
  %197 = vmatmul.mubr.bf16.gmra.mrb[0].mxu0 %v100
  %v198 = vpop.f32.mrb[0].mxu0
  %v199 = vadd.f32 0.0, %v198
  %v200 = vpop.f32.mrb[0].mxu0
  %v201 = vpop.f32.mrb[0].mxu0
  %v202 = vadd.f32 0.0, %v201
  %v203 = vpop.f32.mrb[0].mxu0
  %204 = vmatprep.mubr.bf16.mxu0 0
  %205 = vmatmul.mubr.bf16.gmra.mrb[0].mxu0 %v103
  %v206 = vpop.f32.mrb[0].mxu0
  %v207 = vadd.f32 0.0, %v206
  %v208 = vpop.f32.mrb[0].mxu0
  %v209 = vpop.f32.mrb[0].mxu0
  %v210 = vadd.f32 0.0, %v209
  %v211 = vpop.f32.mrb[0].mxu0
  %212 = vmatprep.mubr.bf16.mxu0 0
  %213 = vmatmul.mubr.bf16.gmra.mrb[0].mxu0 %v106
  %v214 = vpop.f32.mrb[0].mxu0
  %v215 = vadd.f32 0.0, %v214
  %v216 = vpop.f32.mrb[0].mxu0
  %v217 = vpop.f32.mrb[0].mxu0
  %v218 = vadd.f32 0.0, %v217
  %v219 = vpop.f32.mrb[0].mxu0
  %220 = vmatprep.mubr.bf16.mxu0 0
  %221 = vmatmul.mubr.bf16.gmra.mrb[0].mxu0 %v109
  %v222 = vpop.f32.mrb[0].mxu0
  %v223 = vadd.f32 0.0, %v222
  %v224 = vpop.f32.mrb[0].mxu0
  %v225 = vpop.f32.mrb[0].mxu0
  %v226 = vadd.f32 0.0, %v225
  %v227 = vpop.f32.mrb[0].mxu0
  %228 = vmatprep.mubr.bf16.mxu0 0
  %229 = vmatmul.mubr.bf16.gmra.mrb[0].mxu0 %v112
  %v230 = vpop.f32.mrb[0].mxu0
  %v231 = vadd.f32 0.0, %v230
  %v232 = vpop.f32.mrb[0].mxu0
  %v233 = vpop.f32.mrb[0].mxu0
  %v234 = vadd.f32 0.0, %v233
  %v235 = vpop.f32.mrb[0].mxu0
  %236 = vmatprep.mubr.bf16.mxu0 0
  %237 = vmatmul.mubr.bf16.gmra.mrb[0].mxu0 %v115
  %v238 = vpop.f32.mrb[0].mxu0
  %v239 = vadd.f32 0.0, %v238
  %v240 = vpop.f32.mrb[0].mxu0
  %v241 = vpop.f32.mrb[0].mxu0
  %v242 = vpop.f32.mrb[0].mxu0
  %243 = vdwg.mxu0
  %v245 = vsel %vm83, %v36, 0
  %v248 = vsel %vm83, %v37, 0
  %v251 = vsel %vm83, %v38, 0
  %v254 = vsel %vm83, %v39, 0
  %v257 = vsel %vm83, %v40, 0
  %v260 = vsel %vm83, %v41, 0
  %v263 = vsel %vm83, %v42, 0
  %v266 = vsel %vm83, %v43, 0
  %v269 = vsel %vm83, %v44, 0
  %v272 = vsel %vm83, %v45, 0
  %v275 = vsel %vm83, %v46, 0
  %v278 = vand.u32 %v47, %v120
  %280 = vmatprep.subr.bf16.mxu0 0
  %281 = vmatpush1.bf16.msra.mxu0 %v278
  %282 = vmatprep.subr.bf16.mxu0 0
  %283 = vmatpush1.bf16.msra.mxu0 0
  %284 = vmatprep.subr.bf16.mxu0 0
  %285 = vmatpush1.bf16.msra.mxu0 0
  %286 = vmatprep.subr.bf16.mxu0 0
  %287 = vmatpush1.bf16.msra.mxu0 0
  %288 = vmatprep.subr.bf16.mxu0 0
  %289 = vmatpush1.bf16.msra.mxu0 0
  %290 = vmatprep.subr.bf16.mxu0 0
  %291 = vmatpush1.bf16.msra.mxu0 0
  %292 = vmatprep.subr.bf16.mxu0 0
  %293 = vmatpush1.bf16.msra.mxu0 0
  %294 = vmatprep.subr.bf16.mxu0 0
  %295 = vmatpush1.bf16.msra.mxu0 0
  %296 = vmatprep.subr.bf16.mxu0 0
  %297 = vmatpush1.bf16.msra.mxu0 0
  %298 = vmatprep.subr.bf16.mxu0 0
  %299 = vmatpush1.bf16.msra.mxu0 0
  %300 = vmatprep.subr.bf16.mxu0 0
  %301 = vmatpush1.bf16.msra.mxu0 0
  %302 = vmatprep.subr.bf16.mxu0 0
  %303 = vmatpush1.bf16.msra.mxu0 0
  %304 = vmatprep.subr.bf16.mxu0 0
  %305 = vmatpush1.bf16.msra.mxu0 0
  %306 = vmatprep.subr.bf16.mxu0 0
  %307 = vmatpush1.bf16.msra.mxu0 0
  %308 = vmatprep.subr.bf16.mxu0 0
  %309 = vmatpush1.bf16.msra.mxu0 0
  %310 = vmatprep.subr.bf16.mxu0 0
  %311 = vmatpush1.bf16.msra.mxu0 0
  %312 = vmatprep.mubr.bf16.mxu0 0
  %313 = vmatmul.mubr.bf16.gmra.mrb[0].mxu0 %v245
  %v314 = vpop.f32.mrb[0].mxu0
  %v315 = vadd.f32 %v159, %v314
  %v316 = vpop.f32.mrb[0].mxu0
  %v317 = vpop.f32.mrb[0].mxu0
  %v318 = vadd.f32 %v162, %v317
  %v319 = vpop.f32.mrb[0].mxu0
  %320 = vmatprep.mubr.bf16.mxu0 0
  %321 = vmatmul.mubr.bf16.gmra.mrb[0].mxu0 %v248
  %v322 = vpop.f32.mrb[0].mxu0
  %v323 = vadd.f32 %v167, %v322
  %v324 = vpop.f32.mrb[0].mxu0
  %v325 = vpop.f32.mrb[0].mxu0
  %v326 = vadd.f32 %v170, %v325
  %v327 = vpop.f32.mrb[0].mxu0
  %328 = vmatprep.mubr.bf16.mxu0 0
  %329 = vmatmul.mubr.bf16.gmra.mrb[0].mxu0 %v251
  %v330 = vpop.f32.mrb[0].mxu0
  %v331 = vadd.f32 %v175, %v330
  %v332 = vpop.f32.mrb[0].mxu0
  %v333 = vpop.f32.mrb[0].mxu0
  %v334 = vadd.f32 %v178, %v333
  %v335 = vpop.f32.mrb[0].mxu0
  %336 = vmatprep.mubr.bf16.mxu0 0
  %337 = vmatmul.mubr.bf16.gmra.mrb[0].mxu0 %v254
  %v338 = vpop.f32.mrb[0].mxu0
  %v339 = vadd.f32 %v183, %v338
  %v340 = vpop.f32.mrb[0].mxu0
  %v341 = vpop.f32.mrb[0].mxu0
  %v342 = vadd.f32 %v186, %v341
  %v343 = vpop.f32.mrb[0].mxu0
  %344 = vmatprep.mubr.bf16.mxu0 0
  %345 = vmatmul.mubr.bf16.gmra.mrb[0].mxu0 %v257
  %v346 = vpop.f32.mrb[0].mxu0
  %v347 = vadd.f32 %v191, %v346
  %v348 = vpop.f32.mrb[0].mxu0
  %v349 = vpop.f32.mrb[0].mxu0
  %v350 = vadd.f32 %v194, %v349
  %v351 = vpop.f32.mrb[0].mxu0
  %352 = vmatprep.mubr.bf16.mxu0 0
  %353 = vmatmul.mubr.bf16.gmra.mrb[0].mxu0 %v260
  %v354 = vpop.f32.mrb[0].mxu0
  %v355 = vadd.f32 %v199, %v354
  %v356 = vpop.f32.mrb[0].mxu0
  %v357 = vpop.f32.mrb[0].mxu0
  %v358 = vadd.f32 %v202, %v357
  %v359 = vpop.f32.mrb[0].mxu0
  %360 = vmatprep.mubr.bf16.mxu0 0
  %361 = vmatmul.mubr.bf16.gmra.mrb[0].mxu0 %v263
  %v362 = vpop.f32.mrb[0].mxu0
  %v363 = vadd.f32 %v207, %v362
  %v364 = vpop.f32.mrb[0].mxu0
  %v365 = vpop.f32.mrb[0].mxu0
  %v366 = vadd.f32 %v210, %v365
  %v367 = vpop.f32.mrb[0].mxu0
  %368 = vmatprep.mubr.bf16.mxu0 0
  %369 = vmatmul.mubr.bf16.gmra.mrb[0].mxu0 %v266
  %v370 = vpop.f32.mrb[0].mxu0
  %v371 = vadd.f32 %v215, %v370
  %v372 = vpop.f32.mrb[0].mxu0
  %v373 = vpop.f32.mrb[0].mxu0
  %v374 = vadd.f32 %v218, %v373
  %v375 = vpop.f32.mrb[0].mxu0
  %376 = vmatprep.mubr.bf16.mxu0 0
  %377 = vmatmul.mubr.bf16.gmra.mrb[0].mxu0 %v269
  %v378 = vpop.f32.mrb[0].mxu0
  %v379 = vadd.f32 %v223, %v378
  %v380 = vpop.f32.mrb[0].mxu0
  %v381 = vpop.f32.mrb[0].mxu0
  %v382 = vadd.f32 %v226, %v381
  %v383 = vpop.f32.mrb[0].mxu0
  %384 = vmatprep.mubr.bf16.mxu0 0
  %385 = vmatmul.mubr.bf16.gmra.mrb[0].mxu0 %v272
  %v386 = vpop.f32.mrb[0].mxu0
  %v387 = vadd.f32 %v231, %v386
  %v388 = vpop.f32.mrb[0].mxu0
  %v389 = vpop.f32.mrb[0].mxu0
  %v390 = vadd.f32 %v234, %v389
  %v391 = vpop.f32.mrb[0].mxu0
  %392 = vmatprep.mubr.bf16.mxu0 0
  %393 = vmatmul.mubr.bf16.gmra.mrb[0].mxu0 %v275
  %v394 = vpop.f32.mrb[0].mxu0
  %v395 = vadd.f32 %v239, %v394
  %v396 = vpop.f32.mrb[0].mxu0
  %v397 = vpop.f32.mrb[0].mxu0
  %v398 = vpop.f32.mrb[0].mxu0
  %399 = vdwg.mxu0
  %v400 = vld [vmem:[%s0 + $0x1] sm:$0xff]
  %v401 = vld [vmem:[%s0 + $0x9] sm:$0xff]
  %v402 = vld [vmem:[%s0 + $0x11] sm:$0xff]
  %v403 = vld [vmem:[%s0 + $0x19] sm:$0xff]
  %v404 = vld [vmem:[%s0 + $0x21] sm:$0xff]
  %v405 = vld [vmem:[%s0 + $0x29] sm:$0xff]
  %v406 = vld [vmem:[%s0 + $0x31] sm:$0xff]
  %v407 = vld [vmem:[%s0 + $0x39] sm:$0xff]
  %v408 = vld [vmem:[%s0 + $0x41] sm:$0xff]
  %v409 = vld [vmem:[%s0 + $0x49] sm:$0xff]
  %v410 = vld [vmem:[%s0 + $0x51] sm:$0xff]
  %v411 = vld [vmem:[%s0 + $0x59] sm:$0xff]
  %v412 = vld [vmem:[%s0 + $0x61] sm:$0xff]
  %v413 = vld [vmem:[%s0 + $0x69] sm:$0xff]
  %v414 = vld [vmem:[%s0 + $0x71] sm:$0xff]
  %v415 = vld [vmem:[%s0 + $0x79] sm:$0xff]
  %v416 = vld [vmem:[%s0 + $0x81] sm:$0xff]
  %v417 = vld [vmem:[%s0 + $0x89] sm:$0xff]
  %v418 = vld [vmem:[%s0 + $0x91] sm:$0xff]
  %v419 = vld [vmem:[%s0 + $0x99] sm:$0xff]
  %v420 = vld [vmem:[%s0 + $0xa1] sm:$0x3]
  %v421 = vpack.c.bf16 %v401, %v400
  %v422 = vpack.c.bf16 %v403, %v402
  %v423 = vpack.c.bf16 %v405, %v404
  %v424 = vpack.c.bf16 %v407, %v406
  %v425 = vpack.c.bf16 %v409, %v408
  %v426 = vpack.c.bf16 %v411, %v410
  %v427 = vpack.c.bf16 %v413, %v412
  %v428 = vpack.c.bf16 %v415, %v414
  %v429 = vpack.c.bf16 %v417, %v416
  %v430 = vpack.c.bf16 %v419, %v418
  %v431 = vpack.c.bf16 %v420, %v420
  %s432 = scalar_lea.vmem %s1, 4
  %v433 = vld [vmem:[%s432] sm:$0x3]
  %v435 = vsel %vm83, %v421, 0
  %v438 = vsel %vm83, %v422, 0
  %v441 = vsel %vm83, %v423, 0
  %v444 = vsel %vm83, %v424, 0
  %v447 = vsel %vm83, %v425, 0
  %v450 = vsel %vm83, %v426, 0
  %v453 = vsel %vm83, %v427, 0
  %v456 = vsel %vm83, %v428, 0
  %v459 = vsel %vm83, %v429, 0
  %v462 = vsel %vm83, %v430, 0
  %v465 = vsel %vm83, %v431, 0
  %v468 = vand.u32 %v433, %v120
  %470 = vmatprep.subr.bf16.mxu0 0
  %471 = vmatpush1.bf16.msra.mxu0 %v468
  %472 = vmatprep.subr.bf16.mxu0 0
  %473 = vmatpush1.bf16.msra.mxu0 0
  %474 = vmatprep.subr.bf16.mxu0 0
  %475 = vmatpush1.bf16.msra.mxu0 0
  %476 = vmatprep.subr.bf16.mxu0 0
  %477 = vmatpush1.bf16.msra.mxu0 0
  %478 = vmatprep.subr.bf16.mxu0 0
  %479 = vmatpush1.bf16.msra.mxu0 0
  %480 = vmatprep.subr.bf16.mxu0 0
  %481 = vmatpush1.bf16.msra.mxu0 0
  %482 = vmatprep.subr.bf16.mxu0 0
  %483 = vmatpush1.bf16.msra.mxu0 0
  %484 = vmatprep.subr.bf16.mxu0 0
  %485 = vmatpush1.bf16.msra.mxu0 0
  %486 = vmatprep.subr.bf16.mxu0 0
  %487 = vmatpush1.bf16.msra.mxu0 0
  %488 = vmatprep.subr.bf16.mxu0 0
  %489 = vmatpush1.bf16.msra.mxu0 0
  %490 = vmatprep.subr.bf16.mxu0 0
  %491 = vmatpush1.bf16.msra.mxu0 0
  %492 = vmatprep.subr.bf16.mxu0 0
  %493 = vmatpush1.bf16.msra.mxu0 0
  %494 = vmatprep.subr.bf16.mxu0 0
  %495 = vmatpush1.bf16.msra.mxu0 0
  %496 = vmatprep.subr.bf16.mxu0 0
  %497 = vmatpush1.bf16.msra.mxu0 0
  %498 = vmatprep.subr.bf16.mxu0 0
  %499 = vmatpush1.bf16.msra.mxu0 0
  %500 = vmatprep.subr.bf16.mxu0 0
  %501 = vmatpush1.bf16.msra.mxu0 0
  %502 = vmatprep.mubr.bf16.mxu0 0
  %503 = vmatmul.mubr.bf16.gmra.mrb[0].mxu0 %v435
  %v504 = vpop.f32.mrb[0].mxu0
  %v505 = vadd.f32 0.0, %v504
  %v506 = vpop.f32.mrb[0].mxu0
  %v507 = vpop.f32.mrb[0].mxu0
  %v508 = vadd.f32 0.0, %v507
  %v509 = vpop.f32.mrb[0].mxu0
  %510 = vmatprep.mubr.bf16.mxu0 0
  %511 = vmatmul.mubr.bf16.gmra.mrb[0].mxu0 %v438
  %v512 = vpop.f32.mrb[0].mxu0
  %v513 = vadd.f32 0.0, %v512
  %v514 = vpop.f32.mrb[0].mxu0
  %v515 = vpop.f32.mrb[0].mxu0
  %v516 = vadd.f32 0.0, %v515
  %v517 = vpop.f32.mrb[0].mxu0
  %518 = vmatprep.mubr.bf16.mxu0 0
  %519 = vmatmul.mubr.bf16.gmra.mrb[0].mxu0 %v441
  %v520 = vpop.f32.mrb[0].mxu0
  %v521 = vadd.f32 0.0, %v520
  %v522 = vpop.f32.mrb[0].mxu0
  %v523 = vpop.f32.mrb[0].mxu0
  %v524 = vadd.f32 0.0, %v523
  %v525 = vpop.f32.mrb[0].mxu0
  %526 = vmatprep.mubr.bf16.mxu0 0
  %527 = vmatmul.mubr.bf16.gmra.mrb[0].mxu0 %v444
  %v528 = vpop.f32.mrb[0].mxu0
  %v529 = vadd.f32 0.0, %v528
  %v530 = vpop.f32.mrb[0].mxu0
  %v531 = vpop.f32.mrb[0].mxu0
  %v532 = vadd.f32 0.0, %v531
  %v533 = vpop.f32.mrb[0].mxu0
  %534 = vmatprep.mubr.bf16.mxu0 0
  %535 = vmatmul.mubr.bf16.gmra.mrb[0].mxu0 %v447
  %v536 = vpop.f32.mrb[0].mxu0
  %v537 = vadd.f32 0.0, %v536
  %v538 = vpop.f32.mrb[0].mxu0
  %v539 = vpop.f32.mrb[0].mxu0
  %v540 = vadd.f32 0.0, %v539
  %v541 = vpop.f32.mrb[0].mxu0
  %542 = vmatprep.mubr.bf16.mxu0 0
  %543 = vmatmul.mubr.bf16.gmra.mrb[0].mxu0 %v450
  %v544 = vpop.f32.mrb[0].mxu0
  %v545 = vadd.f32 0.0, %v544
  %v546 = vpop.f32.mrb[0].mxu0
  %v547 = vpop.f32.mrb[0].mxu0
  %v548 = vadd.f32 0.0, %v547
  %v549 = vpop.f32.mrb[0].mxu0
  %550 = vmatprep.mubr.bf16.mxu0 0
  %551 = vmatmul.mubr.bf16.gmra.mrb[0].mxu0 %v453
  %v552 = vpop.f32.mrb[0].mxu0
  %v553 = vadd.f32 0.0, %v552
  %v554 = vpop.f32.mrb[0].mxu0
  %v555 = vpop.f32.mrb[0].mxu0
  %v556 = vadd.f32 0.0, %v555
  %v557 = vpop.f32.mrb[0].mxu0
  %558 = vmatprep.mubr.bf16.mxu0 0
  %559 = vmatmul.mubr.bf16.gmra.mrb[0].mxu0 %v456
  %v560 = vpop.f32.mrb[0].mxu0
  %v561 = vadd.f32 0.0, %v560
  %v562 = vpop.f32.mrb[0].mxu0
  %v563 = vpop.f32.mrb[0].mxu0
  %v564 = vadd.f32 0.0, %v563
  %v565 = vpop.f32.mrb[0].mxu0
  %566 = vmatprep.mubr.bf16.mxu0 0
  %567 = vmatmul.mubr.bf16.gmra.mrb[0].mxu0 %v459
  %v568 = vpop.f32.mrb[0].mxu0
  %v569 = vadd.f32 0.0, %v568
  %v570 = vpop.f32.mrb[0].mxu0
  %v571 = vpop.f32.mrb[0].mxu0
  %v572 = vadd.f32 0.0, %v571
  %v573 = vpop.f32.mrb[0].mxu0
  %574 = vmatprep.mubr.bf16.mxu0 0
  %575 = vmatmul.mubr.bf16.gmra.mrb[0].mxu0 %v462
  %v576 = vpop.f32.mrb[0].mxu0
  %v577 = vadd.f32 0.0, %v576
  %v578 = vpop.f32.mrb[0].mxu0
  %v579 = vpop.f32.mrb[0].mxu0
  %v580 = vadd.f32 0.0, %v579
  %v581 = vpop.f32.mrb[0].mxu0
  %582 = vmatprep.mubr.bf16.mxu0 0
  %583 = vmatmul.mubr.bf16.gmra.mrb[0].mxu0 %v465
  %v584 = vpop.f32.mrb[0].mxu0
  %v585 = vadd.f32 0.0, %v584
  %v586 = vpop.f32.mrb[0].mxu0
  %v587 = vpop.f32.mrb[0].mxu0
  %v588 = vpop.f32.mrb[0].mxu0
  %589 = vdwg.mxu0
  %v590 = vadd.f32 %v315, %v505
  %v591 = vadd.f32 %v318, %v508
  %v592 = vadd.f32 %v323, %v513
  %v593 = vadd.f32 %v326, %v516
  %v594 = vadd.f32 %v331, %v521
  %v595 = vadd.f32 %v334, %v524
  %v596 = vadd.f32 %v339, %v529
  %v597 = vadd.f32 %v342, %v532
  %v598 = vadd.f32 %v347, %v537
  %v599 = vadd.f32 %v350, %v540
  %v600 = vadd.f32 %v355, %v545
  %v601 = vadd.f32 %v358, %v548
  %v602 = vadd.f32 %v363, %v553
  %v603 = vadd.f32 %v366, %v556
  %v604 = vadd.f32 %v371, %v561
  %v605 = vadd.f32 %v374, %v564
  %v606 = vadd.f32 %v379, %v569
  %v607 = vadd.f32 %v382, %v572
  %v608 = vadd.f32 %v387, %v577
  %v609 = vadd.f32 %v390, %v580
  %v610 = vadd.f32 %v395, %v585
  %s611 = scalar_lea.vmem %s0, 352
  %v612 = vld [vmem:[%s611] sm:$0xff]
  %v613 = vld [vmem:[%s611 + $0x8] sm:$0xff]
  %v614 = vld [vmem:[%s611 + $0x10] sm:$0xff]
  %v615 = vld [vmem:[%s611 + $0x18] sm:$0xff]
  %v616 = vld [vmem:[%s611 + $0x20] sm:$0xff]
  %v617 = vld [vmem:[%s611 + $0x28] sm:$0xff]
  %v618 = vld [vmem:[%s611 + $0x30] sm:$0xff]
  %v619 = vld [vmem:[%s611 + $0x38] sm:$0xff]
  %v620 = vld [vmem:[%s611 + $0x40] sm:$0xff]
  %v621 = vld [vmem:[%s611 + $0x48] sm:$0xff]
  %v622 = vld [vmem:[%s611 + $0x50] sm:$0xff]
  %v623 = vld [vmem:[%s611 + $0x58] sm:$0xff]
  %v624 = vld [vmem:[%s611 + $0x60] sm:$0xff]
  %v625 = vld [vmem:[%s611 + $0x68] sm:$0xff]
  %v626 = vld [vmem:[%s611 + $0x70] sm:$0xff]
  %v627 = vld [vmem:[%s611 + $0x78] sm:$0xff]
  %v628 = vld [vmem:[%s611 + $0x80] sm:$0xff]
  %v629 = vld [vmem:[%s611 + $0x88] sm:$0xff]
  %v630 = vld [vmem:[%s611 + $0x90] sm:$0xff]
  %v631 = vld [vmem:[%s611 + $0x98] sm:$0xff]
  %v632 = vld [vmem:[%s611 + $0xa0] sm:$0x3]
  %v633 = vpack.c.bf16 %v613, %v612
  %v634 = vpack.c.bf16 %v615, %v614
  %v635 = vpack.c.bf16 %v617, %v616
  %v636 = vpack.c.bf16 %v619, %v618
  %v637 = vpack.c.bf16 %v621, %v620
  %v638 = vpack.c.bf16 %v623, %v622
  %v639 = vpack.c.bf16 %v625, %v624
  %v640 = vpack.c.bf16 %v627, %v626
  %v641 = vpack.c.bf16 %v629, %v628
  %v642 = vpack.c.bf16 %v631, %v630
  %v643 = vpack.c.bf16 %v632, %v632
  %s644 = scalar_lea.vmem %s1, 6
  %v645 = vld [vmem:[%s644] sm:$0x3]
  %v647 = vsel %vm83, %v633, 0
  %v650 = vsel %vm83, %v634, 0
  %v653 = vsel %vm83, %v635, 0
  %v656 = vsel %vm83, %v636, 0
  %v659 = vsel %vm83, %v637, 0
  %v662 = vsel %vm83, %v638, 0
  %v665 = vsel %vm83, %v639, 0
  %v668 = vsel %vm83, %v640, 0
  %v671 = vsel %vm83, %v641, 0
  %v674 = vsel %vm83, %v642, 0
  %v677 = vsel %vm83, %v643, 0
  %v680 = vand.u32 %v645, %v120
  %682 = vmatprep.subr.bf16.mxu0 0
  %683 = vmatpush1.bf16.msra.mxu0 %v680
  %684 = vmatprep.subr.bf16.mxu0 0
  %685 = vmatpush1.bf16.msra.mxu0 0
  %686 = vmatprep.subr.bf16.mxu0 0
  %687 = vmatpush1.bf16.msra.mxu0 0
  %688 = vmatprep.subr.bf16.mxu0 0
  %689 = vmatpush1.bf16.msra.mxu0 0
  %690 = vmatprep.subr.bf16.mxu0 0
  %691 = vmatpush1.bf16.msra.mxu0 0
  %692 = vmatprep.subr.bf16.mxu0 0
  %693 = vmatpush1.bf16.msra.mxu0 0
  %694 = vmatprep.subr.bf16.mxu0 0
  %695 = vmatpush1.bf16.msra.mxu0 0
  %696 = vmatprep.subr.bf16.mxu0 0
  %697 = vmatpush1.bf16.msra.mxu0 0
  %698 = vmatprep.subr.bf16.mxu0 0
  %699 = vmatpush1.bf16.msra.mxu0 0
  %700 = vmatprep.subr.bf16.mxu0 0
  %701 = vmatpush1.bf16.msra.mxu0 0
  %702 = vmatprep.subr.bf16.mxu0 0
  %703 = vmatpush1.bf16.msra.mxu0 0
  %704 = vmatprep.subr.bf16.mxu0 0
  %705 = vmatpush1.bf16.msra.mxu0 0
  %706 = vmatprep.subr.bf16.mxu0 0
  %707 = vmatpush1.bf16.msra.mxu0 0
  %708 = vmatprep.subr.bf16.mxu0 0
  %709 = vmatpush1.bf16.msra.mxu0 0
  %710 = vmatprep.subr.bf16.mxu0 0
  %711 = vmatpush1.bf16.msra.mxu0 0
  %712 = vmatprep.subr.bf16.mxu0 0
  %713 = vmatpush1.bf16.msra.mxu0 0
  %714 = vmatprep.mubr.bf16.mxu0 0
  %715 = vmatmul.mubr.bf16.gmra.mrb[0].mxu0 %v647
  %v716 = vpop.f32.mrb[0].mxu0
  %v717 = vadd.f32 0.0, %v716
  %v718 = vpop.f32.mrb[0].mxu0
  %v719 = vpop.f32.mrb[0].mxu0
  %v720 = vadd.f32 0.0, %v719
  %v721 = vpop.f32.mrb[0].mxu0
  %722 = vmatprep.mubr.bf16.mxu0 0
  %723 = vmatmul.mubr.bf16.gmra.mrb[0].mxu0 %v650
  %v724 = vpop.f32.mrb[0].mxu0
  %v725 = vadd.f32 0.0, %v724
  %v726 = vpop.f32.mrb[0].mxu0
  %v727 = vpop.f32.mrb[0].mxu0
  %v728 = vadd.f32 0.0, %v727
  %v729 = vpop.f32.mrb[0].mxu0
  %730 = vmatprep.mubr.bf16.mxu0 0
  %731 = vmatmul.mubr.bf16.gmra.mrb[0].mxu0 %v653
  %v732 = vpop.f32.mrb[0].mxu0
  %v733 = vadd.f32 0.0, %v732
  %v734 = vpop.f32.mrb[0].mxu0
  %v735 = vpop.f32.mrb[0].mxu0
  %v736 = vadd.f32 0.0, %v735
  %v737 = vpop.f32.mrb[0].mxu0
  %738 = vmatprep.mubr.bf16.mxu0 0
  %739 = vmatmul.mubr.bf16.gmra.mrb[0].mxu0 %v656
  %v740 = vpop.f32.mrb[0].mxu0
  %v741 = vadd.f32 0.0, %v740
  %v742 = vpop.f32.mrb[0].mxu0
  %v743 = vpop.f32.mrb[0].mxu0
  %v744 = vadd.f32 0.0, %v743
  %v745 = vpop.f32.mrb[0].mxu0
  %746 = vmatprep.mubr.bf16.mxu0 0
  %747 = vmatmul.mubr.bf16.gmra.mrb[0].mxu0 %v659
  %v748 = vpop.f32.mrb[0].mxu0
  %v749 = vadd.f32 0.0, %v748
  %v750 = vpop.f32.mrb[0].mxu0
  %v751 = vpop.f32.mrb[0].mxu0
  %v752 = vadd.f32 0.0, %v751
  %v753 = vpop.f32.mrb[0].mxu0
  %754 = vmatprep.mubr.bf16.mxu0 0
  %755 = vmatmul.mubr.bf16.gmra.mrb[0].mxu0 %v662
  %v756 = vpop.f32.mrb[0].mxu0
  %v757 = vadd.f32 0.0, %v756
  %v758 = vpop.f32.mrb[0].mxu0
  %v759 = vpop.f32.mrb[0].mxu0
  %v760 = vadd.f32 0.0, %v759
  %v761 = vpop.f32.mrb[0].mxu0
  %762 = vmatprep.mubr.bf16.mxu0 0
  %763 = vmatmul.mubr.bf16.gmra.mrb[0].mxu0 %v665
  %v764 = vpop.f32.mrb[0].mxu0
  %v765 = vadd.f32 0.0, %v764
  %v766 = vpop.f32.mrb[0].mxu0
  %v767 = vpop.f32.mrb[0].mxu0
  %v768 = vadd.f32 0.0, %v767
  %v769 = vpop.f32.mrb[0].mxu0
  %770 = vmatprep.mubr.bf16.mxu0 0
  %771 = vmatmul.mubr.bf16.gmra.mrb[0].mxu0 %v668
  %v772 = vpop.f32.mrb[0].mxu0
  %v773 = vadd.f32 0.0, %v772
  %v774 = vpop.f32.mrb[0].mxu0
  %v775 = vpop.f32.mrb[0].mxu0
  %v776 = vadd.f32 0.0, %v775
  %v777 = vpop.f32.mrb[0].mxu0
  %778 = vmatprep.mubr.bf16.mxu0 0
  %779 = vmatmul.mubr.bf16.gmra.mrb[0].mxu0 %v671
  %v780 = vpop.f32.mrb[0].mxu0
  %v781 = vadd.f32 0.0, %v780
  %v782 = vpop.f32.mrb[0].mxu0
  %v783 = vpop.f32.mrb[0].mxu0
  %v784 = vadd.f32 0.0, %v783
  %v785 = vpop.f32.mrb[0].mxu0
  %786 = vmatprep.mubr.bf16.mxu0 0
  %787 = vmatmul.mubr.bf16.gmra.mrb[0].mxu0 %v674
  %v788 = vpop.f32.mrb[0].mxu0
  %v789 = vadd.f32 0.0, %v788
  %v790 = vpop.f32.mrb[0].mxu0
  %v791 = vpop.f32.mrb[0].mxu0
  %v792 = vadd.f32 0.0, %v791
  %v793 = vpop.f32.mrb[0].mxu0
  %794 = vmatprep.mubr.bf16.mxu0 0
  %795 = vmatmul.mubr.bf16.gmra.mrb[0].mxu0 %v677
  %v796 = vpop.f32.mrb[0].mxu0
  %v797 = vadd.f32 0.0, %v796
  %v798 = vpop.f32.mrb[0].mxu0
  %v799 = vpop.f32.mrb[0].mxu0
  %v800 = vpop.f32.mrb[0].mxu0
  %801 = vdwg.mxu0
  %v802 = vadd.f32 %v590, %v717
  %v803 = vadd.f32 %v591, %v720
  %v804 = vadd.f32 %v592, %v725
  %v805 = vadd.f32 %v593, %v728
  %v806 = vadd.f32 %v594, %v733
  %v807 = vadd.f32 %v595, %v736
  %v808 = vadd.f32 %v596, %v741
  %v809 = vadd.f32 %v597, %v744
  %v810 = vadd.f32 %v598, %v749
  %v811 = vadd.f32 %v599, %v752
  %v812 = vadd.f32 %v600, %v757
  %v813 = vadd.f32 %v601, %v760
  %v814 = vadd.f32 %v602, %v765
  %v815 = vadd.f32 %v603, %v768
  %v816 = vadd.f32 %v604, %v773
  %v817 = vadd.f32 %v605, %v776
  %v818 = vadd.f32 %v606, %v781
  %v819 = vadd.f32 %v607, %v784
  %v820 = vadd.f32 %v608, %v789
  %v821 = vadd.f32 %v609, %v792
  %v822 = vadd.f32 %v610, %v797
  %s823 = scalar_lea.vmem %s0, 528
  %v824 = vld [vmem:[%s823] sm:$0xff]
  %v825 = vld [vmem:[%s823 + $0x8] sm:$0xff]
  %v826 = vld [vmem:[%s823 + $0x10] sm:$0xff]
  %v827 = vld [vmem:[%s823 + $0x18] sm:$0xff]
  %v828 = vld [vmem:[%s823 + $0x20] sm:$0xff]
  %v829 = vld [vmem:[%s823 + $0x28] sm:$0xff]
  %v830 = vld [vmem:[%s823 + $0x30] sm:$0xff]
  %v831 = vld [vmem:[%s823 + $0x38] sm:$0xff]
  %v832 = vld [vmem:[%s823 + $0x40] sm:$0xff]
  %v833 = vld [vmem:[%s823 + $0x48] sm:$0xff]
  %v834 = vld [vmem:[%s823 + $0x50] sm:$0xff]
  %v835 = vld [vmem:[%s823 + $0x58] sm:$0xff]
  %v836 = vld [vmem:[%s823 + $0x60] sm:$0xff]
  %v837 = vld [vmem:[%s823 + $0x68] sm:$0xff]
  %v838 = vld [vmem:[%s823 + $0x70] sm:$0xff]
  %v839 = vld [vmem:[%s823 + $0x78] sm:$0xff]
  %v840 = vld [vmem:[%s823 + $0x80] sm:$0xff]
  %v841 = vld [vmem:[%s823 + $0x88] sm:$0xff]
  %v842 = vld [vmem:[%s823 + $0x90] sm:$0xff]
  %v843 = vld [vmem:[%s823 + $0x98] sm:$0xff]
  %v844 = vld [vmem:[%s823 + $0xa0] sm:$0x3]
  %v845 = vpack.c.bf16 %v825, %v824
  %v846 = vpack.c.bf16 %v827, %v826
  %v847 = vpack.c.bf16 %v829, %v828
  %v848 = vpack.c.bf16 %v831, %v830
  %v849 = vpack.c.bf16 %v833, %v832
  %v850 = vpack.c.bf16 %v835, %v834
  %v851 = vpack.c.bf16 %v837, %v836
  %v852 = vpack.c.bf16 %v839, %v838
  %v853 = vpack.c.bf16 %v841, %v840
  %v854 = vpack.c.bf16 %v843, %v842
  %v855 = vpack.c.bf16 %v844, %v844
  %s856 = scalar_lea.vmem %s1, 8
  %v857 = vld [vmem:[%s856] sm:$0x3]
  %v859 = vsel %vm83, %v845, 0
  %v862 = vsel %vm83, %v846, 0
  %v865 = vsel %vm83, %v847, 0
  %v868 = vsel %vm83, %v848, 0
  %v871 = vsel %vm83, %v849, 0
  %v874 = vsel %vm83, %v850, 0
  %v877 = vsel %vm83, %v851, 0
  %v880 = vsel %vm83, %v852, 0
  %v883 = vsel %vm83, %v853, 0
  %v886 = vsel %vm83, %v854, 0
  %v889 = vsel %vm83, %v855, 0
  %v892 = vand.u32 %v857, %v120
  %894 = vmatprep.subr.bf16.mxu0 0
  %895 = vmatpush1.bf16.msra.mxu0 %v892
  %896 = vmatprep.subr.bf16.mxu0 0
  %897 = vmatpush1.bf16.msra.mxu0 0
  %898 = vmatprep.subr.bf16.mxu0 0
  %899 = vmatpush1.bf16.msra.mxu0 0
  %900 = vmatprep.subr.bf16.mxu0 0
  %901 = vmatpush1.bf16.msra.mxu0 0
  %902 = vmatprep.subr.bf16.mxu0 0
  %903 = vmatpush1.bf16.msra.mxu0 0
  %904 = vmatprep.subr.bf16.mxu0 0
  %905 = vmatpush1.bf16.msra.mxu0 0
  %906 = vmatprep.subr.bf16.mxu0 0
  %907 = vmatpush1.bf16.msra.mxu0 0
  %908 = vmatprep.subr.bf16.mxu0 0
  %909 = vmatpush1.bf16.msra.mxu0 0
  %910 = vmatprep.subr.bf16.mxu0 0
  %911 = vmatpush1.bf16.msra.mxu0 0
  %912 = vmatprep.subr.bf16.mxu0 0
  %913 = vmatpush1.bf16.msra.mxu0 0
  %914 = vmatprep.subr.bf16.mxu0 0
  %915 = vmatpush1.bf16.msra.mxu0 0
  %916 = vmatprep.subr.bf16.mxu0 0
  %917 = vmatpush1.bf16.msra.mxu0 0
  %918 = vmatprep.subr.bf16.mxu0 0
  %919 = vmatpush1.bf16.msra.mxu0 0
  %920 = vmatprep.subr.bf16.mxu0 0
  %921 = vmatpush1.bf16.msra.mxu0 0
  %922 = vmatprep.subr.bf16.mxu0 0
  %923 = vmatpush1.bf16.msra.mxu0 0
  %924 = vmatprep.subr.bf16.mxu0 0
  %925 = vmatpush1.bf16.msra.mxu0 0
  %926 = vmatprep.mubr.bf16.mxu0 0
  %927 = vmatmul.mubr.bf16.gmra.mrb[0].mxu0 %v859
  %v928 = vpop.f32.mrb[0].mxu0
  %v929 = vadd.f32 0.0, %v928
  %v930 = vpop.f32.mrb[0].mxu0
  %v931 = vpop.f32.mrb[0].mxu0
  %v932 = vadd.f32 0.0, %v931
  %v933 = vpop.f32.mrb[0].mxu0
  %934 = vmatprep.mubr.bf16.mxu0 0
  %935 = vmatmul.mubr.bf16.gmra.mrb[0].mxu0 %v862
  %v936 = vpop.f32.mrb[0].mxu0
  %v937 = vadd.f32 0.0, %v936
  %v938 = vpop.f32.mrb[0].mxu0
  %v939 = vpop.f32.mrb[0].mxu0
  %v940 = vadd.f32 0.0, %v939
  %v941 = vpop.f32.mrb[0].mxu0
  %942 = vmatprep.mubr.bf16.mxu0 0
  %943 = vmatmul.mubr.bf16.gmra.mrb[0].mxu0 %v865
  %v944 = vpop.f32.mrb[0].mxu0
  %v945 = vadd.f32 0.0, %v944
  %v946 = vpop.f32.mrb[0].mxu0
  %v947 = vpop.f32.mrb[0].mxu0
  %v948 = vadd.f32 0.0, %v947
  %v949 = vpop.f32.mrb[0].mxu0
  %950 = vmatprep.mubr.bf16.mxu0 0
  %951 = vmatmul.mubr.bf16.gmra.mrb[0].mxu0 %v868
  %v952 = vpop.f32.mrb[0].mxu0
  %v953 = vadd.f32 0.0, %v952
  %v954 = vpop.f32.mrb[0].mxu0
  %v955 = vpop.f32.mrb[0].mxu0
  %v956 = vadd.f32 0.0, %v955
  %v957 = vpop.f32.mrb[0].mxu0
  %958 = vmatprep.mubr.bf16.mxu0 0
  %959 = vmatmul.mubr.bf16.gmra.mrb[0].mxu0 %v871
  %v960 = vpop.f32.mrb[0].mxu0
  %v961 = vadd.f32 0.0, %v960
  %v962 = vpop.f32.mrb[0].mxu0
  %v963 = vpop.f32.mrb[0].mxu0
  %v964 = vadd.f32 0.0, %v963
  %v965 = vpop.f32.mrb[0].mxu0
  %966 = vmatprep.mubr.bf16.mxu0 0
  %967 = vmatmul.mubr.bf16.gmra.mrb[0].mxu0 %v874
  %v968 = vpop.f32.mrb[0].mxu0
  %v969 = vadd.f32 0.0, %v968
  %v970 = vpop.f32.mrb[0].mxu0
  %v971 = vpop.f32.mrb[0].mxu0
  %v972 = vadd.f32 0.0, %v971
  %v973 = vpop.f32.mrb[0].mxu0
  %974 = vmatprep.mubr.bf16.mxu0 0
  %975 = vmatmul.mubr.bf16.gmra.mrb[0].mxu0 %v877
  %v976 = vpop.f32.mrb[0].mxu0
  %v977 = vadd.f32 0.0, %v976
  %v978 = vpop.f32.mrb[0].mxu0
  %v979 = vpop.f32.mrb[0].mxu0
  %v980 = vadd.f32 0.0, %v979
  %v981 = vpop.f32.mrb[0].mxu0
  %982 = vmatprep.mubr.bf16.mxu0 0
  %983 = vmatmul.mubr.bf16.gmra.mrb[0].mxu0 %v880
  %v984 = vpop.f32.mrb[0].mxu0
  %v985 = vadd.f32 0.0, %v984
  %v986 = vpop.f32.mrb[0].mxu0
  %v987 = vpop.f32.mrb[0].mxu0
  %v988 = vadd.f32 0.0, %v987
  %v989 = vpop.f32.mrb[0].mxu0
  %990 = vmatprep.mubr.bf16.mxu0 0
  %991 = vmatmul.mubr.bf16.gmra.mrb[0].mxu0 %v883
  %v992 = vpop.f32.mrb[0].mxu0
  %v993 = vadd.f32 0.0, %v992
  %v994 = vpop.f32.mrb[0].mxu0
  %v995 = vpop.f32.mrb[0].mxu0
  %v996 = vadd.f32 0.0, %v995
  %v997 = vpop.f32.mrb[0].mxu0
  %998 = vmatprep.mubr.bf16.mxu0 0
  %999 = vmatmul.mubr.bf16.gmra.mrb[0].mxu0 %v886
  %v1000 = vpop.f32.mrb[0].mxu0
  %v1001 = vadd.f32 0.0, %v1000
  %v1002 = vpop.f32.mrb[0].mxu0
  %v1003 = vpop.f32.mrb[0].mxu0
  %v1004 = vadd.f32 0.0, %v1003
  %v1005 = vpop.f32.mrb[0].mxu0
  %1006 = vmatprep.mubr.bf16.mxu0 0
  %1007 = vmatmul.mubr.bf16.gmra.mrb[0].mxu0 %v889
  %v1008 = vpop.f32.mrb[0].mxu0
  %v1009 = vadd.f32 0.0, %v1008
  %v1010 = vpop.f32.mrb[0].mxu0
  %v1011 = vpop.f32.mrb[0].mxu0
  %v1012 = vpop.f32.mrb[0].mxu0
  %1013 = vdwg.mxu0
  %v1014 = vadd.f32 %v802, %v929
  %v1015 = vadd.f32 %v803, %v932
  %v1016 = vadd.f32 %v804, %v937
  %v1017 = vadd.f32 %v805, %v940
  %v1018 = vadd.f32 %v806, %v945
  %v1019 = vadd.f32 %v807, %v948
  %v1020 = vadd.f32 %v808, %v953
  %v1021 = vadd.f32 %v809, %v956
  %v1022 = vadd.f32 %v810, %v961
  %v1023 = vadd.f32 %v811, %v964
  %v1024 = vadd.f32 %v812, %v969
  %v1025 = vadd.f32 %v813, %v972
  %v1026 = vadd.f32 %v814, %v977
  %v1027 = vadd.f32 %v815, %v980
  %v1028 = vadd.f32 %v816, %v985
  %v1029 = vadd.f32 %v817, %v988
  %v1030 = vadd.f32 %v818, %v993
  %v1031 = vadd.f32 %v819, %v996
  %v1032 = vadd.f32 %v820, %v1001
  %v1033 = vadd.f32 %v821, %v1004
  %v1034 = vadd.f32 %v822, %v1009
  %v1035 = vld [vmem:[%s611 + $0x1] sm:$0xff]
  %v1036 = vld [vmem:[%s611 + $0x9] sm:$0xff]
  %v1037 = vld [vmem:[%s611 + $0x11] sm:$0xff]
  %v1038 = vld [vmem:[%s611 + $0x19] sm:$0xff]
  %v1039 = vld [vmem:[%s611 + $0x21] sm:$0xff]
  %v1040 = vld [vmem:[%s611 + $0x29] sm:$0xff]
  %v1041 = vld [vmem:[%s611 + $0x31] sm:$0xff]
  %v1042 = vld [vmem:[%s611 + $0x39] sm:$0xff]
  %v1043 = vld [vmem:[%s611 + $0x41] sm:$0xff]
  %v1044 = vld [vmem:[%s611 + $0x49] sm:$0xff]
  %v1045 = vld [vmem:[%s611 + $0x51] sm:$0xff]
  %v1046 = vld [vmem:[%s611 + $0x59] sm:$0xff]
  %v1047 = vld [vmem:[%s611 + $0x61] sm:$0xff]
  %v1048 = vld [vmem:[%s611 + $0x69] sm:$0xff]
  %v1049 = vld [vmem:[%s611 + $0x71] sm:$0xff]
  %v1050 = vld [vmem:[%s611 + $0x79] sm:$0xff]
  %v1051 = vld [vmem:[%s611 + $0x81] sm:$0xff]
  %v1052 = vld [vmem:[%s611 + $0x89] sm:$0xff]
  %v1053 = vld [vmem:[%s611 + $0x91] sm:$0xff]
  %v1054 = vld [vmem:[%s611 + $0x99] sm:$0xff]
  %v1055 = vld [vmem:[%s611 + $0xa1] sm:$0x3]
  %v1056 = vpack.c.bf16 %v1036, %v1035
  %v1057 = vpack.c.bf16 %v1038, %v1037
  %v1058 = vpack.c.bf16 %v1040, %v1039
  %v1059 = vpack.c.bf16 %v1042, %v1041
  %v1060 = vpack.c.bf16 %v1044, %v1043
  %v1061 = vpack.c.bf16 %v1046, %v1045
  %v1062 = vpack.c.bf16 %v1048, %v1047
  %v1063 = vpack.c.bf16 %v1050, %v1049
  %v1064 = vpack.c.bf16 %v1052, %v1051
  %v1065 = vpack.c.bf16 %v1054, %v1053
  %v1066 = vpack.c.bf16 %v1055, %v1055
  %s1067 = scalar_lea.vmem %s1, 10
  %v1068 = vld [vmem:[%s1067] sm:$0x3]
  %v1070 = vsel %vm83, %v1056, 0
  %v1073 = vsel %vm83, %v1057, 0
  %v1076 = vsel %vm83, %v1058, 0
  %v1079 = vsel %vm83, %v1059, 0
  %v1082 = vsel %vm83, %v1060, 0
  %v1085 = vsel %vm83, %v1061, 0
  %v1088 = vsel %vm83, %v1062, 0
  %v1091 = vsel %vm83, %v1063, 0
  %v1094 = vsel %vm83, %v1064, 0
  %v1097 = vsel %vm83, %v1065, 0
  %v1100 = vsel %vm83, %v1066, 0
  %v1103 = vand.u32 %v1068, %v120
  %1105 = vmatprep.subr.bf16.mxu0 0
  %1106 = vmatpush1.bf16.msra.mxu0 %v1103
  %1107 = vmatprep.subr.bf16.mxu0 0
  %1108 = vmatpush1.bf16.msra.mxu0 0
  %1109 = vmatprep.subr.bf16.mxu0 0
  %1110 = vmatpush1.bf16.msra.mxu0 0
  %1111 = vmatprep.subr.bf16.mxu0 0
  %1112 = vmatpush1.bf16.msra.mxu0 0
  %1113 = vmatprep.subr.bf16.mxu0 0
  %1114 = vmatpush1.bf16.msra.mxu0 0
  %1115 = vmatprep.subr.bf16.mxu0 0
  %1116 = vmatpush1.bf16.msra.mxu0 0
  %1117 = vmatprep.subr.bf16.mxu0 0
  %1118 = vmatpush1.bf16.msra.mxu0 0
  %1119 = vmatprep.subr.bf16.mxu0 0
  %1120 = vmatpush1.bf16.msra.mxu0 0
  %1121 = vmatprep.subr.bf16.mxu0 0
  %1122 = vmatpush1.bf16.msra.mxu0 0
  %1123 = vmatprep.subr.bf16.mxu0 0
  %1124 = vmatpush1.bf16.msra.mxu0 0
  %1125 = vmatprep.subr.bf16.mxu0 0
  %1126 = vmatpush1.bf16.msra.mxu0 0
  %1127 = vmatprep.subr.bf16.mxu0 0
  %1128 = vmatpush1.bf16.msra.mxu0 0
  %1129 = vmatprep.subr.bf16.mxu0 0
  %1130 = vmatpush1.bf16.msra.mxu0 0
  %1131 = vmatprep.subr.bf16.mxu0 0
  %1132 = vmatpush1.bf16.msra.mxu0 0
  %1133 = vmatprep.subr.bf16.mxu0 0
  %1134 = vmatpush1.bf16.msra.mxu0 0
  %1135 = vmatprep.subr.bf16.mxu0 0
  %1136 = vmatpush1.bf16.msra.mxu0 0
  %1137 = vmatprep.mubr.bf16.mxu0 0
  %1138 = vmatmul.mubr.bf16.gmra.mrb[0].mxu0 %v1070
  %v1139 = vpop.f32.mrb[0].mxu0
  %v1140 = vadd.f32 0.0, %v1139
  %v1141 = vpop.f32.mrb[0].mxu0
  %v1142 = vpop.f32.mrb[0].mxu0
  %v1143 = vadd.f32 0.0, %v1142
  %v1144 = vpop.f32.mrb[0].mxu0
  %1145 = vmatprep.mubr.bf16.mxu0 0
  %1146 = vmatmul.mubr.bf16.gmra.mrb[0].mxu0 %v1073
  %v1147 = vpop.f32.mrb[0].mxu0
  %v1148 = vadd.f32 0.0, %v1147
  %v1149 = vpop.f32.mrb[0].mxu0
  %v1150 = vpop.f32.mrb[0].mxu0
  %v1151 = vadd.f32 0.0, %v1150
  %v1152 = vpop.f32.mrb[0].mxu0
  %1153 = vmatprep.mubr.bf16.mxu0 0
  %1154 = vmatmul.mubr.bf16.gmra.mrb[0].mxu0 %v1076
  %v1155 = vpop.f32.mrb[0].mxu0
  %v1156 = vadd.f32 0.0, %v1155
  %v1157 = vpop.f32.mrb[0].mxu0
  %v1158 = vpop.f32.mrb[0].mxu0
  %v1159 = vadd.f32 0.0, %v1158
  %v1160 = vpop.f32.mrb[0].mxu0
  %1161 = vmatprep.mubr.bf16.mxu0 0
  %1162 = vmatmul.mubr.bf16.gmra.mrb[0].mxu0 %v1079
  %v1163 = vpop.f32.mrb[0].mxu0
  %v1164 = vadd.f32 0.0, %v1163
  %v1165 = vpop.f32.mrb[0].mxu0
  %v1166 = vpop.f32.mrb[0].mxu0
  %v1167 = vadd.f32 0.0, %v1166
  %v1168 = vpop.f32.mrb[0].mxu0
  %1169 = vmatprep.mubr.bf16.mxu0 0
  %1170 = vmatmul.mubr.bf16.gmra.mrb[0].mxu0 %v1082
  %v1171 = vpop.f32.mrb[0].mxu0
  %v1172 = vadd.f32 0.0, %v1171
  %v1173 = vpop.f32.mrb[0].mxu0
  %v1174 = vpop.f32.mrb[0].mxu0
  %v1175 = vadd.f32 0.0, %v1174
  %v1176 = vpop.f32.mrb[0].mxu0
  %1177 = vmatprep.mubr.bf16.mxu0 0
  %1178 = vmatmul.mubr.bf16.gmra.mrb[0].mxu0 %v1085
  %v1179 = vpop.f32.mrb[0].mxu0
  %v1180 = vadd.f32 0.0, %v1179
  %v1181 = vpop.f32.mrb[0].mxu0
  %v1182 = vpop.f32.mrb[0].mxu0
  %v1183 = vadd.f32 0.0, %v1182
  %v1184 = vpop.f32.mrb[0].mxu0
  %1185 = vmatprep.mubr.bf16.mxu0 0
  %1186 = vmatmul.mubr.bf16.gmra.mrb[0].mxu0 %v1088
  %v1187 = vpop.f32.mrb[0].mxu0
  %v1188 = vadd.f32 0.0, %v1187
  %v1189 = vpop.f32.mrb[0].mxu0
  %v1190 = vpop.f32.mrb[0].mxu0
  %v1191 = vadd.f32 0.0, %v1190
  %v1192 = vpop.f32.mrb[0].mxu0
  %1193 = vmatprep.mubr.bf16.mxu0 0
  %1194 = vmatmul.mubr.bf16.gmra.mrb[0].mxu0 %v1091
  %v1195 = vpop.f32.mrb[0].mxu0
  %v1196 = vadd.f32 0.0, %v1195
  %v1197 = vpop.f32.mrb[0].mxu0
  %v1198 = vpop.f32.mrb[0].mxu0
  %v1199 = vadd.f32 0.0, %v1198
  %v1200 = vpop.f32.mrb[0].mxu0
  %1201 = vmatprep.mubr.bf16.mxu0 0
  %1202 = vmatmul.mubr.bf16.gmra.mrb[0].mxu0 %v1094
  %v1203 = vpop.f32.mrb[0].mxu0
  %v1204 = vadd.f32 0.0, %v1203
  %v1205 = vpop.f32.mrb[0].mxu0
  %v1206 = vpop.f32.mrb[0].mxu0
  %v1207 = vadd.f32 0.0, %v1206
  %v1208 = vpop.f32.mrb[0].mxu0
  %1209 = vmatprep.mubr.bf16.mxu0 0
  %1210 = vmatmul.mubr.bf16.gmra.mrb[0].mxu0 %v1097
  %v1211 = vpop.f32.mrb[0].mxu0
  %v1212 = vadd.f32 0.0, %v1211
  %v1213 = vpop.f32.mrb[0].mxu0
  %v1214 = vpop.f32.mrb[0].mxu0
  %v1215 = vadd.f32 0.0, %v1214
  %v1216 = vpop.f32.mrb[0].mxu0
  %1217 = vmatprep.mubr.bf16.mxu0 0
  %1218 = vmatmul.mubr.bf16.gmra.mrb[0].mxu0 %v1100
  %v1219 = vpop.f32.mrb[0].mxu0
  %v1220 = vadd.f32 0.0, %v1219
  %v1221 = vpop.f32.mrb[0].mxu0
  %v1222 = vpop.f32.mrb[0].mxu0
  %v1223 = vpop.f32.mrb[0].mxu0
  %1224 = vdwg.mxu0
  %v1225 = vadd.f32 %v1014, %v1140
  %v1226 = vadd.f32 %v1015, %v1143
  %v1227 = vadd.f32 %v1016, %v1148
  %v1228 = vadd.f32 %v1017, %v1151
  %v1229 = vadd.f32 %v1018, %v1156
  %v1230 = vadd.f32 %v1019, %v1159
  %v1231 = vadd.f32 %v1020, %v1164
  %v1232 = vadd.f32 %v1021, %v1167
  %v1233 = vadd.f32 %v1022, %v1172
  %v1234 = vadd.f32 %v1023, %v1175
  %v1235 = vadd.f32 %v1024, %v1180
  %v1236 = vadd.f32 %v1025, %v1183
  %v1237 = vadd.f32 %v1026, %v1188
  %v1238 = vadd.f32 %v1027, %v1191
  %v1239 = vadd.f32 %v1028, %v1196
  %v1240 = vadd.f32 %v1029, %v1199
  %v1241 = vadd.f32 %v1030, %v1204
  %v1242 = vadd.f32 %v1031, %v1207
  %v1243 = vadd.f32 %v1032, %v1212
  %v1244 = vadd.f32 %v1033, %v1215
  %v1245 = vadd.f32 %v1034, %v1220
  %v1246 = vld [vmem:[%s0 + $0x9] sm:$0xff]
  %v1247 = vld [vmem:[%s0 + $0x11] sm:$0xff]
  %v1248 = vld [vmem:[%s0 + $0x19] sm:$0xff]
  %v1249 = vld [vmem:[%s0 + $0x21] sm:$0xff]
  %v1250 = vld [vmem:[%s0 + $0x29] sm:$0xff]
  %v1251 = vld [vmem:[%s0 + $0x31] sm:$0xff]
  %v1252 = vld [vmem:[%s0 + $0x39] sm:$0xff]
  %v1253 = vld [vmem:[%s0 + $0x41] sm:$0xff]
  %v1254 = vld [vmem:[%s0 + $0x49] sm:$0xff]
  %v1255 = vld [vmem:[%s0 + $0x51] sm:$0xff]
  %v1256 = vld [vmem:[%s0 + $0x59] sm:$0xff]
  %v1257 = vld [vmem:[%s0 + $0x61] sm:$0xff]
  %v1258 = vld [vmem:[%s0 + $0x69] sm:$0xff]
  %v1259 = vld [vmem:[%s0 + $0x71] sm:$0xff]
  %v1260 = vld [vmem:[%s0 + $0x79] sm:$0xff]
  %v1261 = vld [vmem:[%s0 + $0x81] sm:$0xff]
  %v1262 = vld [vmem:[%s0 + $0x89] sm:$0xff]
  %v1263 = vld [vmem:[%s0 + $0x91] sm:$0xff]
  %v1264 = vld [vmem:[%s0 + $0x99] sm:$0xff]
  %v1265 = vld [vmem:[%s0 + $0xa1] sm:$0xff]
  %v1266 = vld [vmem:[%s0 + $0xa9] sm:$0x3]
  %v1267 = vpack.c.bf16 %v1247, %v1246
  %v1268 = vpack.c.bf16 %v1249, %v1248
  %v1269 = vpack.c.bf16 %v1251, %v1250
  %v1270 = vpack.c.bf16 %v1253, %v1252
  %v1271 = vpack.c.bf16 %v1255, %v1254
  %v1272 = vpack.c.bf16 %v1257, %v1256
  %v1273 = vpack.c.bf16 %v1259, %v1258
  %v1274 = vpack.c.bf16 %v1261, %v1260
  %v1275 = vpack.c.bf16 %v1263, %v1262
  %v1276 = vpack.c.bf16 %v1265, %v1264
  %v1277 = vpack.c.bf16 %v1266, %v1266
  %s1278 = scalar_lea.vmem %s1, 12
  %v1279 = vld [vmem:[%s1278] sm:$0x3]
  %v1281 = vsel %vm83, %v1267, 0
  %v1284 = vsel %vm83, %v1268, 0
  %v1287 = vsel %vm83, %v1269, 0
  %v1290 = vsel %vm83, %v1270, 0
  %v1293 = vsel %vm83, %v1271, 0
  %v1296 = vsel %vm83, %v1272, 0
  %v1299 = vsel %vm83, %v1273, 0
  %v1302 = vsel %vm83, %v1274, 0
  %v1305 = vsel %vm83, %v1275, 0
  %v1308 = vsel %vm83, %v1276, 0
  %v1311 = vsel %vm83, %v1277, 0
  %v1314 = vand.u32 %v1279, %v120
  %1316 = vmatprep.subr.bf16.mxu0 0
  %1317 = vmatpush1.bf16.msra.mxu0 %v1314
  %1318 = vmatprep.subr.bf16.mxu0 0
  %1319 = vmatpush1.bf16.msra.mxu0 0
  %1320 = vmatprep.subr.bf16.mxu0 0
  %1321 = vmatpush1.bf16.msra.mxu0 0
  %1322 = vmatprep.subr.bf16.mxu0 0
  %1323 = vmatpush1.bf16.msra.mxu0 0
  %1324 = vmatprep.subr.bf16.mxu0 0
  %1325 = vmatpush1.bf16.msra.mxu0 0
  %1326 = vmatprep.subr.bf16.mxu0 0
  %1327 = vmatpush1.bf16.msra.mxu0 0
  %1328 = vmatprep.subr.bf16.mxu0 0
  %1329 = vmatpush1.bf16.msra.mxu0 0
  %1330 = vmatprep.subr.bf16.mxu0 0
  %1331 = vmatpush1.bf16.msra.mxu0 0
  %1332 = vmatprep.subr.bf16.mxu0 0
  %1333 = vmatpush1.bf16.msra.mxu0 0
  %1334 = vmatprep.subr.bf16.mxu0 0
  %1335 = vmatpush1.bf16.msra.mxu0 0
  %1336 = vmatprep.subr.bf16.mxu0 0
  %1337 = vmatpush1.bf16.msra.mxu0 0
  %1338 = vmatprep.subr.bf16.mxu0 0
  %1339 = vmatpush1.bf16.msra.mxu0 0
  %1340 = vmatprep.subr.bf16.mxu0 0
  %1341 = vmatpush1.bf16.msra.mxu0 0
  %1342 = vmatprep.subr.bf16.mxu0 0
  %1343 = vmatpush1.bf16.msra.mxu0 0
  %1344 = vmatprep.subr.bf16.mxu0 0
  %1345 = vmatpush1.bf16.msra.mxu0 0
  %1346 = vmatprep.subr.bf16.mxu0 0
  %1347 = vmatpush1.bf16.msra.mxu0 0
  %1348 = vmatprep.mubr.bf16.mxu0 0
  %1349 = vmatmul.mubr.bf16.gmra.mrb[0].mxu0 %v1281
  %v1350 = vpop.f32.mrb[0].mxu0
  %v1351 = vadd.f32 0.0, %v1350
  %v1352 = vpop.f32.mrb[0].mxu0
  %v1353 = vpop.f32.mrb[0].mxu0
  %v1354 = vadd.f32 0.0, %v1353
  %v1355 = vpop.f32.mrb[0].mxu0
  %1356 = vmatprep.mubr.bf16.mxu0 0
  %1357 = vmatmul.mubr.bf16.gmra.mrb[0].mxu0 %v1284
  %v1358 = vpop.f32.mrb[0].mxu0
  %v1359 = vadd.f32 0.0, %v1358
  %v1360 = vpop.f32.mrb[0].mxu0
  %v1361 = vpop.f32.mrb[0].mxu0
  %v1362 = vadd.f32 0.0, %v1361
  %v1363 = vpop.f32.mrb[0].mxu0
  %1364 = vmatprep.mubr.bf16.mxu0 0
  %1365 = vmatmul.mubr.bf16.gmra.mrb[0].mxu0 %v1287
  %v1366 = vpop.f32.mrb[0].mxu0
  %v1367 = vadd.f32 0.0, %v1366
  %v1368 = vpop.f32.mrb[0].mxu0
  %v1369 = vpop.f32.mrb[0].mxu0
  %v1370 = vadd.f32 0.0, %v1369
  %v1371 = vpop.f32.mrb[0].mxu0
  %1372 = vmatprep.mubr.bf16.mxu0 0
  %1373 = vmatmul.mubr.bf16.gmra.mrb[0].mxu0 %v1290
  %v1374 = vpop.f32.mrb[0].mxu0
  %v1375 = vadd.f32 0.0, %v1374
  %v1376 = vpop.f32.mrb[0].mxu0
  %v1377 = vpop.f32.mrb[0].mxu0
  %v1378 = vadd.f32 0.0, %v1377
  %v1379 = vpop.f32.mrb[0].mxu0
  %1380 = vmatprep.mubr.bf16.mxu0 0
  %1381 = vmatmul.mubr.bf16.gmra.mrb[0].mxu0 %v1293
  %v1382 = vpop.f32.mrb[0].mxu0
  %v1383 = vadd.f32 0.0, %v1382
  %v1384 = vpop.f32.mrb[0].mxu0
  %v1385 = vpop.f32.mrb[0].mxu0
  %v1386 = vadd.f32 0.0, %v1385
  %v1387 = vpop.f32.mrb[0].mxu0
  %1388 = vmatprep.mubr.bf16.mxu0 0
  %1389 = vmatmul.mubr.bf16.gmra.mrb[0].mxu0 %v1296
  %v1390 = vpop.f32.mrb[0].mxu0
  %v1391 = vadd.f32 0.0, %v1390
  %v1392 = vpop.f32.mrb[0].mxu0
  %v1393 = vpop.f32.mrb[0].mxu0
  %v1394 = vadd.f32 0.0, %v1393
  %v1395 = vpop.f32.mrb[0].mxu0
  %1396 = vmatprep.mubr.bf16.mxu0 0
  %1397 = vmatmul.mubr.bf16.gmra.mrb[0].mxu0 %v1299
  %v1398 = vpop.f32.mrb[0].mxu0
  %v1399 = vadd.f32 0.0, %v1398
  %v1400 = vpop.f32.mrb[0].mxu0
  %v1401 = vpop.f32.mrb[0].mxu0
  %v1402 = vadd.f32 0.0, %v1401
  %v1403 = vpop.f32.mrb[0].mxu0
  %1404 = vmatprep.mubr.bf16.mxu0 0
  %1405 = vmatmul.mubr.bf16.gmra.mrb[0].mxu0 %v1302
  %v1406 = vpop.f32.mrb[0].mxu0
  %v1407 = vadd.f32 0.0, %v1406
  %v1408 = vpop.f32.mrb[0].mxu0
  %v1409 = vpop.f32.mrb[0].mxu0
  %v1410 = vadd.f32 0.0, %v1409
  %v1411 = vpop.f32.mrb[0].mxu0
  %1412 = vmatprep.mubr.bf16.mxu0 0
  %1413 = vmatmul.mubr.bf16.gmra.mrb[0].mxu0 %v1305
  %v1414 = vpop.f32.mrb[0].mxu0
  %v1415 = vadd.f32 0.0, %v1414
  %v1416 = vpop.f32.mrb[0].mxu0
  %v1417 = vpop.f32.mrb[0].mxu0
  %v1418 = vadd.f32 0.0, %v1417
  %v1419 = vpop.f32.mrb[0].mxu0
  %1420 = vmatprep.mubr.bf16.mxu0 0
  %1421 = vmatmul.mubr.bf16.gmra.mrb[0].mxu0 %v1308
  %v1422 = vpop.f32.mrb[0].mxu0
  %v1423 = vadd.f32 0.0, %v1422
  %v1424 = vpop.f32.mrb[0].mxu0
  %v1425 = vpop.f32.mrb[0].mxu0
  %v1426 = vadd.f32 0.0, %v1425
  %v1427 = vpop.f32.mrb[0].mxu0
  %1428 = vmatprep.mubr.bf16.mxu0 0
  %1429 = vmatmul.mubr.bf16.gmra.mrb[0].mxu0 %v1311
  %v1430 = vpop.f32.mrb[0].mxu0
  %v1431 = vadd.f32 0.0, %v1430
  %v1432 = vpop.f32.mrb[0].mxu0
  %v1433 = vpop.f32.mrb[0].mxu0
  %v1434 = vpop.f32.mrb[0].mxu0
  %1435 = vdwg.mxu0
  %v1436 = vadd.f32 %v1225, %v1351
  %v1437 = vadd.f32 %v1226, %v1354
  %v1438 = vadd.f32 %v1227, %v1359
  %v1439 = vadd.f32 %v1228, %v1362
  %v1440 = vadd.f32 %v1229, %v1367
  %v1441 = vadd.f32 %v1230, %v1370
  %v1442 = vadd.f32 %v1231, %v1375
  %v1443 = vadd.f32 %v1232, %v1378
  %v1444 = vadd.f32 %v1233, %v1383
  %v1445 = vadd.f32 %v1234, %v1386
  %v1446 = vadd.f32 %v1235, %v1391
  %v1447 = vadd.f32 %v1236, %v1394
  %v1448 = vadd.f32 %v1237, %v1399
  %v1449 = vadd.f32 %v1238, %v1402
  %v1450 = vadd.f32 %v1239, %v1407
  %v1451 = vadd.f32 %v1240, %v1410
  %v1452 = vadd.f32 %v1241, %v1415
  %v1453 = vadd.f32 %v1242, %v1418
  %v1454 = vadd.f32 %v1243, %v1423
  %v1455 = vadd.f32 %v1244, %v1426
  %v1456 = vadd.f32 %v1245, %v1431
  %v1457 = vld [vmem:[%s48 + $0x9] sm:$0xff]
  %v1458 = vld [vmem:[%s48 + $0x11] sm:$0xff]
  %v1459 = vld [vmem:[%s48 + $0x19] sm:$0xff]
  %v1460 = vld [vmem:[%s48 + $0x21] sm:$0xff]
  %v1461 = vld [vmem:[%s48 + $0x29] sm:$0xff]
  %v1462 = vld [vmem:[%s48 + $0x31] sm:$0xff]
  %v1463 = vld [vmem:[%s48 + $0x39] sm:$0xff]
  %v1464 = vld [vmem:[%s48 + $0x41] sm:$0xff]
  %v1465 = vld [vmem:[%s48 + $0x49] sm:$0xff]
  %v1466 = vld [vmem:[%s48 + $0x51] sm:$0xff]
  %v1467 = vld [vmem:[%s48 + $0x59] sm:$0xff]
  %v1468 = vld [vmem:[%s48 + $0x61] sm:$0xff]
  %v1469 = vld [vmem:[%s48 + $0x69] sm:$0xff]
  %v1470 = vld [vmem:[%s48 + $0x71] sm:$0xff]
  %v1471 = vld [vmem:[%s48 + $0x79] sm:$0xff]
  %v1472 = vld [vmem:[%s48 + $0x81] sm:$0xff]
  %v1473 = vld [vmem:[%s48 + $0x89] sm:$0xff]
  %v1474 = vld [vmem:[%s48 + $0x91] sm:$0xff]
  %v1475 = vld [vmem:[%s48 + $0x99] sm:$0xff]
  %v1476 = vld [vmem:[%s48 + $0xa1] sm:$0xff]
  %v1477 = vld [vmem:[%s48 + $0xa9] sm:$0x3]
  %v1478 = vpack.c.bf16 %v1458, %v1457
  %v1479 = vpack.c.bf16 %v1460, %v1459
  %v1480 = vpack.c.bf16 %v1462, %v1461
  %v1481 = vpack.c.bf16 %v1464, %v1463
  %v1482 = vpack.c.bf16 %v1466, %v1465
  %v1483 = vpack.c.bf16 %v1468, %v1467
  %v1484 = vpack.c.bf16 %v1470, %v1469
  %v1485 = vpack.c.bf16 %v1472, %v1471
  %v1486 = vpack.c.bf16 %v1474, %v1473
  %v1487 = vpack.c.bf16 %v1476, %v1475
  %v1488 = vpack.c.bf16 %v1477, %v1477
  %s1489 = scalar_lea.vmem %s1, 14
  %v1490 = vld [vmem:[%s1489] sm:$0x3]
  %v1492 = vsel %vm83, %v1478, 0
  %v1495 = vsel %vm83, %v1479, 0
  %v1498 = vsel %vm83, %v1480, 0
  %v1501 = vsel %vm83, %v1481, 0
  %v1504 = vsel %vm83, %v1482, 0
  %v1507 = vsel %vm83, %v1483, 0
  %v1510 = vsel %vm83, %v1484, 0
  %v1513 = vsel %vm83, %v1485, 0
  %v1516 = vsel %vm83, %v1486, 0
  %v1519 = vsel %vm83, %v1487, 0
  %v1522 = vsel %vm83, %v1488, 0
  %v1525 = vand.u32 %v1490, %v120
  %1527 = vmatprep.subr.bf16.mxu0 0
  %1528 = vmatpush1.bf16.msra.mxu0 %v1525
  %1529 = vmatprep.subr.bf16.mxu0 0
  %1530 = vmatpush1.bf16.msra.mxu0 0
  %1531 = vmatprep.subr.bf16.mxu0 0
  %1532 = vmatpush1.bf16.msra.mxu0 0
  %1533 = vmatprep.subr.bf16.mxu0 0
  %1534 = vmatpush1.bf16.msra.mxu0 0
  %1535 = vmatprep.subr.bf16.mxu0 0
  %1536 = vmatpush1.bf16.msra.mxu0 0
  %1537 = vmatprep.subr.bf16.mxu0 0
  %1538 = vmatpush1.bf16.msra.mxu0 0
  %1539 = vmatprep.subr.bf16.mxu0 0
  %1540 = vmatpush1.bf16.msra.mxu0 0
  %1541 = vmatprep.subr.bf16.mxu0 0
  %1542 = vmatpush1.bf16.msra.mxu0 0
  %1543 = vmatprep.subr.bf16.mxu0 0
  %1544 = vmatpush1.bf16.msra.mxu0 0
  %1545 = vmatprep.subr.bf16.mxu0 0
  %1546 = vmatpush1.bf16.msra.mxu0 0
  %1547 = vmatprep.subr.bf16.mxu0 0
  %1548 = vmatpush1.bf16.msra.mxu0 0
  %1549 = vmatprep.subr.bf16.mxu0 0
  %1550 = vmatpush1.bf16.msra.mxu0 0
  %1551 = vmatprep.subr.bf16.mxu0 0
  %1552 = vmatpush1.bf16.msra.mxu0 0
  %1553 = vmatprep.subr.bf16.mxu0 0
  %1554 = vmatpush1.bf16.msra.mxu0 0
  %1555 = vmatprep.subr.bf16.mxu0 0
  %1556 = vmatpush1.bf16.msra.mxu0 0
  %1557 = vmatprep.subr.bf16.mxu0 0
  %1558 = vmatpush1.bf16.msra.mxu0 0
  %1559 = vmatprep.mubr.bf16.mxu0 0
  %1560 = vmatmul.mubr.bf16.gmra.mrb[0].mxu0 %v1492
  %v1561 = vpop.f32.mrb[0].mxu0
  %v1562 = vadd.f32 0.0, %v1561
  %v1563 = vpop.f32.mrb[0].mxu0
  %v1564 = vpop.f32.mrb[0].mxu0
  %v1565 = vadd.f32 0.0, %v1564
  %v1566 = vpop.f32.mrb[0].mxu0
  %1567 = vmatprep.mubr.bf16.mxu0 0
  %1568 = vmatmul.mubr.bf16.gmra.mrb[0].mxu0 %v1495
  %v1569 = vpop.f32.mrb[0].mxu0
  %v1570 = vadd.f32 0.0, %v1569
  %v1571 = vpop.f32.mrb[0].mxu0
  %v1572 = vpop.f32.mrb[0].mxu0
  %v1573 = vadd.f32 0.0, %v1572
  %v1574 = vpop.f32.mrb[0].mxu0
  %1575 = vmatprep.mubr.bf16.mxu0 0
  %1576 = vmatmul.mubr.bf16.gmra.mrb[0].mxu0 %v1498
  %v1577 = vpop.f32.mrb[0].mxu0
  %v1578 = vadd.f32 0.0, %v1577
  %v1579 = vpop.f32.mrb[0].mxu0
  %v1580 = vpop.f32.mrb[0].mxu0
  %v1581 = vadd.f32 0.0, %v1580
  %v1582 = vpop.f32.mrb[0].mxu0
  %1583 = vmatprep.mubr.bf16.mxu0 0
  %1584 = vmatmul.mubr.bf16.gmra.mrb[0].mxu0 %v1501
  %v1585 = vpop.f32.mrb[0].mxu0
  %v1586 = vadd.f32 0.0, %v1585
  %v1587 = vpop.f32.mrb[0].mxu0
  %v1588 = vpop.f32.mrb[0].mxu0
  %v1589 = vadd.f32 0.0, %v1588
  %v1590 = vpop.f32.mrb[0].mxu0
  %1591 = vmatprep.mubr.bf16.mxu0 0
  %1592 = vmatmul.mubr.bf16.gmra.mrb[0].mxu0 %v1504
  %v1593 = vpop.f32.mrb[0].mxu0
  %v1594 = vadd.f32 0.0, %v1593
  %v1595 = vpop.f32.mrb[0].mxu0
  %v1596 = vpop.f32.mrb[0].mxu0
  %v1597 = vadd.f32 0.0, %v1596
  %v1598 = vpop.f32.mrb[0].mxu0
  %1599 = vmatprep.mubr.bf16.mxu0 0
  %1600 = vmatmul.mubr.bf16.gmra.mrb[0].mxu0 %v1507
  %v1601 = vpop.f32.mrb[0].mxu0
  %v1602 = vadd.f32 0.0, %v1601
  %v1603 = vpop.f32.mrb[0].mxu0
  %v1604 = vpop.f32.mrb[0].mxu0
  %v1605 = vadd.f32 0.0, %v1604
  %v1606 = vpop.f32.mrb[0].mxu0
  %1607 = vmatprep.mubr.bf16.mxu0 0
  %1608 = vmatmul.mubr.bf16.gmra.mrb[0].mxu0 %v1510
  %v1609 = vpop.f32.mrb[0].mxu0
  %v1610 = vadd.f32 0.0, %v1609
  %v1611 = vpop.f32.mrb[0].mxu0
  %v1612 = vpop.f32.mrb[0].mxu0
  %v1613 = vadd.f32 0.0, %v1612
  %v1614 = vpop.f32.mrb[0].mxu0
  %1615 = vmatprep.mubr.bf16.mxu0 0
  %1616 = vmatmul.mubr.bf16.gmra.mrb[0].mxu0 %v1513
  %v1617 = vpop.f32.mrb[0].mxu0
  %v1618 = vadd.f32 0.0, %v1617
  %v1619 = vpop.f32.mrb[0].mxu0
  %v1620 = vpop.f32.mrb[0].mxu0
  %v1621 = vadd.f32 0.0, %v1620
  %v1622 = vpop.f32.mrb[0].mxu0
  %1623 = vmatprep.mubr.bf16.mxu0 0
  %1624 = vmatmul.mubr.bf16.gmra.mrb[0].mxu0 %v1516
  %v1625 = vpop.f32.mrb[0].mxu0
  %v1626 = vadd.f32 0.0, %v1625
  %v1627 = vpop.f32.mrb[0].mxu0
  %v1628 = vpop.f32.mrb[0].mxu0
  %v1629 = vadd.f32 0.0, %v1628
  %v1630 = vpop.f32.mrb[0].mxu0
  %1631 = vmatprep.mubr.bf16.mxu0 0
  %1632 = vmatmul.mubr.bf16.gmra.mrb[0].mxu0 %v1519
  %v1633 = vpop.f32.mrb[0].mxu0
  %v1634 = vadd.f32 0.0, %v1633
  %v1635 = vpop.f32.mrb[0].mxu0
  %v1636 = vpop.f32.mrb[0].mxu0
  %v1637 = vadd.f32 0.0, %v1636
  %v1638 = vpop.f32.mrb[0].mxu0
  %1639 = vmatprep.mubr.bf16.mxu0 0
  %1640 = vmatmul.mubr.bf16.gmra.mrb[0].mxu0 %v1522
  %v1641 = vpop.f32.mrb[0].mxu0
  %v1642 = vadd.f32 0.0, %v1641
  %v1643 = vpop.f32.mrb[0].mxu0
  %v1644 = vpop.f32.mrb[0].mxu0
  %v1645 = vpop.f32.mrb[0].mxu0
  %1646 = vdwg.mxu0
  %v1647 = vadd.f32 %v1436, %v1562
  %v1648 = vadd.f32 %v1437, %v1565
  %v1649 = vadd.f32 %v1438, %v1570
  %v1650 = vadd.f32 %v1439, %v1573
  %v1651 = vadd.f32 %v1440, %v1578
  %v1652 = vadd.f32 %v1441, %v1581
  %v1653 = vadd.f32 %v1442, %v1586
  %v1654 = vadd.f32 %v1443, %v1589
  %v1655 = vadd.f32 %v1444, %v1594
  %v1656 = vadd.f32 %v1445, %v1597
  %v1657 = vadd.f32 %v1446, %v1602
  %v1658 = vadd.f32 %v1447, %v1605
  %v1659 = vadd.f32 %v1448, %v1610
  %v1660 = vadd.f32 %v1449, %v1613
  %v1661 = vadd.f32 %v1450, %v1618
  %v1662 = vadd.f32 %v1451, %v1621
  %v1663 = vadd.f32 %v1452, %v1626
  %v1664 = vadd.f32 %v1453, %v1629
  %v1665 = vadd.f32 %v1454, %v1634
  %v1666 = vadd.f32 %v1455, %v1637
  %v1667 = vadd.f32 %v1456, %v1642
  %v1668 = vld [vmem:[%s0 + $0xa] sm:$0xff]
  %v1669 = vld [vmem:[%s0 + $0x12] sm:$0xff]
  %v1670 = vld [vmem:[%s0 + $0x1a] sm:$0xff]
  %v1671 = vld [vmem:[%s0 + $0x22] sm:$0xff]
  %v1672 = vld [vmem:[%s0 + $0x2a] sm:$0xff]
  %v1673 = vld [vmem:[%s0 + $0x32] sm:$0xff]
  %v1674 = vld [vmem:[%s0 + $0x3a] sm:$0xff]
  %v1675 = vld [vmem:[%s0 + $0x42] sm:$0xff]
  %v1676 = vld [vmem:[%s0 + $0x4a] sm:$0xff]
  %v1677 = vld [vmem:[%s0 + $0x52] sm:$0xff]
  %v1678 = vld [vmem:[%s0 + $0x5a] sm:$0xff]
  %v1679 = vld [vmem:[%s0 + $0x62] sm:$0xff]
  %v1680 = vld [vmem:[%s0 + $0x6a] sm:$0xff]
  %v1681 = vld [vmem:[%s0 + $0x72] sm:$0xff]
  %v1682 = vld [vmem:[%s0 + $0x7a] sm:$0xff]
  %v1683 = vld [vmem:[%s0 + $0x82] sm:$0xff]
  %v1684 = vld [vmem:[%s0 + $0x8a] sm:$0xff]
  %v1685 = vld [vmem:[%s0 + $0x92] sm:$0xff]
  %v1686 = vld [vmem:[%s0 + $0x9a] sm:$0xff]
  %v1687 = vld [vmem:[%s0 + $0xa2] sm:$0xff]
  %v1688 = vld [vmem:[%s0 + $0xaa] sm:$0x3]
  %v1689 = vpack.c.bf16 %v1669, %v1668
  %v1690 = vpack.c.bf16 %v1671, %v1670
  %v1691 = vpack.c.bf16 %v1673, %v1672
  %v1692 = vpack.c.bf16 %v1675, %v1674
  %v1693 = vpack.c.bf16 %v1677, %v1676
  %v1694 = vpack.c.bf16 %v1679, %v1678
  %v1695 = vpack.c.bf16 %v1681, %v1680
  %v1696 = vpack.c.bf16 %v1683, %v1682
  %v1697 = vpack.c.bf16 %v1685, %v1684
  %v1698 = vpack.c.bf16 %v1687, %v1686
  %v1699 = vpack.c.bf16 %v1688, %v1688
  %s1700 = scalar_lea.vmem %s1, 16
  %v1701 = vld [vmem:[%s1700] sm:$0x3]
  %v1703 = vsel %vm83, %v1689, 0
  %v1706 = vsel %vm83, %v1690, 0
  %v1709 = vsel %vm83, %v1691, 0
  %v1712 = vsel %vm83, %v1692, 0
  %v1715 = vsel %vm83, %v1693, 0
  %v1718 = vsel %vm83, %v1694, 0
  %v1721 = vsel %vm83, %v1695, 0
  %v1724 = vsel %vm83, %v1696, 0
  %v1727 = vsel %vm83, %v1697, 0
  %v1730 = vsel %vm83, %v1698, 0
  %v1733 = vsel %vm83, %v1699, 0
  %v1736 = vand.u32 %v1701, %v120
  %1738 = vmatprep.subr.bf16.mxu0 0
  %1739 = vmatpush1.bf16.msra.mxu0 %v1736
  %1740 = vmatprep.subr.bf16.mxu0 0
  %1741 = vmatpush1.bf16.msra.mxu0 0
  %1742 = vmatprep.subr.bf16.mxu0 0
  %1743 = vmatpush1.bf16.msra.mxu0 0
  %1744 = vmatprep.subr.bf16.mxu0 0
  %1745 = vmatpush1.bf16.msra.mxu0 0
  %1746 = vmatprep.subr.bf16.mxu0 0
  %1747 = vmatpush1.bf16.msra.mxu0 0
  %1748 = vmatprep.subr.bf16.mxu0 0
  %1749 = vmatpush1.bf16.msra.mxu0 0
  %1750 = vmatprep.subr.bf16.mxu0 0
  %1751 = vmatpush1.bf16.msra.mxu0 0
  %1752 = vmatprep.subr.bf16.mxu0 0
  %1753 = vmatpush1.bf16.msra.mxu0 0
  %1754 = vmatprep.subr.bf16.mxu0 0
  %1755 = vmatpush1.bf16.msra.mxu0 0
  %1756 = vmatprep.subr.bf16.mxu0 0
  %1757 = vmatpush1.bf16.msra.mxu0 0
  %1758 = vmatprep.subr.bf16.mxu0 0
  %1759 = vmatpush1.bf16.msra.mxu0 0
  %1760 = vmatprep.subr.bf16.mxu0 0
  %1761 = vmatpush1.bf16.msra.mxu0 0
  %1762 = vmatprep.subr.bf16.mxu0 0
  %1763 = vmatpush1.bf16.msra.mxu0 0
  %1764 = vmatprep.subr.bf16.mxu0 0
  %1765 = vmatpush1.bf16.msra.mxu0 0
  %1766 = vmatprep.subr.bf16.mxu0 0
  %1767 = vmatpush1.bf16.msra.mxu0 0
  %1768 = vmatprep.subr.bf16.mxu0 0
  %1769 = vmatpush1.bf16.msra.mxu0 0
  %1770 = vmatprep.mubr.bf16.mxu0 0
  %1771 = vmatmul.mubr.bf16.gmra.mrb[0].mxu0 %v1703
  %v1772 = vpop.f32.mrb[0].mxu0
  %v1773 = vadd.f32 0.0, %v1772
  %v1774 = vpop.f32.mrb[0].mxu0
  %v1775 = vpop.f32.mrb[0].mxu0
  %v1776 = vadd.f32 0.0, %v1775
  %v1777 = vpop.f32.mrb[0].mxu0
  %1778 = vmatprep.mubr.bf16.mxu0 0
  %1779 = vmatmul.mubr.bf16.gmra.mrb[0].mxu0 %v1706
  %v1780 = vpop.f32.mrb[0].mxu0
  %v1781 = vadd.f32 0.0, %v1780
  %v1782 = vpop.f32.mrb[0].mxu0
  %v1783 = vpop.f32.mrb[0].mxu0
  %v1784 = vadd.f32 0.0, %v1783
  %v1785 = vpop.f32.mrb[0].mxu0
  %1786 = vmatprep.mubr.bf16.mxu0 0
  %1787 = vmatmul.mubr.bf16.gmra.mrb[0].mxu0 %v1709
  %v1788 = vpop.f32.mrb[0].mxu0
  %v1789 = vadd.f32 0.0, %v1788
  %v1790 = vpop.f32.mrb[0].mxu0
  %v1791 = vpop.f32.mrb[0].mxu0
  %v1792 = vadd.f32 0.0, %v1791
  %v1793 = vpop.f32.mrb[0].mxu0
  %1794 = vmatprep.mubr.bf16.mxu0 0
  %1795 = vmatmul.mubr.bf16.gmra.mrb[0].mxu0 %v1712
  %v1796 = vpop.f32.mrb[0].mxu0
  %v1797 = vadd.f32 0.0, %v1796
  %v1798 = vpop.f32.mrb[0].mxu0
  %v1799 = vpop.f32.mrb[0].mxu0
  %v1800 = vadd.f32 0.0, %v1799
  %v1801 = vpop.f32.mrb[0].mxu0
  %1802 = vmatprep.mubr.bf16.mxu0 0
  %1803 = vmatmul.mubr.bf16.gmra.mrb[0].mxu0 %v1715
  %v1804 = vpop.f32.mrb[0].mxu0
  %v1805 = vadd.f32 0.0, %v1804
  %v1806 = vpop.f32.mrb[0].mxu0
  %v1807 = vpop.f32.mrb[0].mxu0
  %v1808 = vadd.f32 0.0, %v1807
  %v1809 = vpop.f32.mrb[0].mxu0
  %1810 = vmatprep.mubr.bf16.mxu0 0
  %1811 = vmatmul.mubr.bf16.gmra.mrb[0].mxu0 %v1718
  %v1812 = vpop.f32.mrb[0].mxu0
  %v1813 = vadd.f32 0.0, %v1812
  %v1814 = vpop.f32.mrb[0].mxu0
  %v1815 = vpop.f32.mrb[0].mxu0
  %v1816 = vadd.f32 0.0, %v1815
  %v1817 = vpop.f32.mrb[0].mxu0
  %1818 = vmatprep.mubr.bf16.mxu0 0
  %1819 = vmatmul.mubr.bf16.gmra.mrb[0].mxu0 %v1721
  %v1820 = vpop.f32.mrb[0].mxu0
  %v1821 = vadd.f32 0.0, %v1820
  %v1822 = vpop.f32.mrb[0].mxu0
  %v1823 = vpop.f32.mrb[0].mxu0
  %v1824 = vadd.f32 0.0, %v1823
  %v1825 = vpop.f32.mrb[0].mxu0
  %1826 = vmatprep.mubr.bf16.mxu0 0
  %1827 = vmatmul.mubr.bf16.gmra.mrb[0].mxu0 %v1724
  %v1828 = vpop.f32.mrb[0].mxu0
  %v1829 = vadd.f32 0.0, %v1828
  %v1830 = vpop.f32.mrb[0].mxu0
  %v1831 = vpop.f32.mrb[0].mxu0
  %v1832 = vadd.f32 0.0, %v1831
  %v1833 = vpop.f32.mrb[0].mxu0
  %1834 = vmatprep.mubr.bf16.mxu0 0
  %1835 = vmatmul.mubr.bf16.gmra.mrb[0].mxu0 %v1727
  %v1836 = vpop.f32.mrb[0].mxu0
  %v1837 = vadd.f32 0.0, %v1836
  %v1838 = vpop.f32.mrb[0].mxu0
  %v1839 = vpop.f32.mrb[0].mxu0
  %v1840 = vadd.f32 0.0, %v1839
  %v1841 = vpop.f32.mrb[0].mxu0
  %1842 = vmatprep.mubr.bf16.mxu0 0
  %1843 = vmatmul.mubr.bf16.gmra.mrb[0].mxu0 %v1730
  %v1844 = vpop.f32.mrb[0].mxu0
  %v1845 = vadd.f32 0.0, %v1844
  %v1846 = vpop.f32.mrb[0].mxu0
  %v1847 = vpop.f32.mrb[0].mxu0
  %v1848 = vadd.f32 0.0, %v1847
  %v1849 = vpop.f32.mrb[0].mxu0
  %1850 = vmatprep.mubr.bf16.mxu0 0
  %1851 = vmatmul.mubr.bf16.gmra.mrb[0].mxu0 %v1733
  %v1852 = vpop.f32.mrb[0].mxu0
  %v1853 = vadd.f32 0.0, %v1852
  %v1854 = vpop.f32.mrb[0].mxu0
  %v1855 = vpop.f32.mrb[0].mxu0
  %v1856 = vpop.f32.mrb[0].mxu0
  %1857 = vdwg.mxu0
  %v1858 = vadd.f32 %v1647, %v1773
  %v1859 = vadd.f32 %v1648, %v1776
  %v1860 = vadd.f32 %v1649, %v1781
  %v1861 = vadd.f32 %v1650, %v1784
  %v1862 = vadd.f32 %v1651, %v1789
  %v1863 = vadd.f32 %v1652, %v1792
  %v1864 = vadd.f32 %v1653, %v1797
  %v1865 = vadd.f32 %v1654, %v1800
  %v1866 = vadd.f32 %v1655, %v1805
  %v1867 = vadd.f32 %v1656, %v1808
  %v1868 = vadd.f32 %v1657, %v1813
  %v1869 = vadd.f32 %v1658, %v1816
  %v1870 = vadd.f32 %v1659, %v1821
  %v1871 = vadd.f32 %v1660, %v1824
  %v1872 = vadd.f32 %v1661, %v1829
  %v1873 = vadd.f32 %v1662, %v1832
  %v1874 = vadd.f32 %v1663, %v1837
  %v1875 = vadd.f32 %v1664, %v1840
  %v1876 = vadd.f32 %v1665, %v1845
  %v1877 = vadd.f32 %v1666, %v1848
  %v1878 = vadd.f32 %v1667, %v1853
  %v1879 = vld [vmem:[%s2] sm:$0x1]
  %v1881 = vlaneseq
  %v1882 = vshrl.u32 %v1881, 7
  %v1883 = vsub.s32 0, %v1882
  %v1884 = vrot.slane %v1879, %v1883
  %v1886 = vadd.f32 %v1858, %v1884
  %v1887 = vadd.f32 %v1859, %v1884
  %v1888 = vadd.f32 %v1860, %v1884
  %v1889 = vadd.f32 %v1861, %v1884
  %v1890 = vadd.f32 %v1862, %v1884
  %v1891 = vadd.f32 %v1863, %v1884
  %v1892 = vadd.f32 %v1864, %v1884
  %v1893 = vadd.f32 %v1865, %v1884
  %v1894 = vadd.f32 %v1866, %v1884
  %v1895 = vadd.f32 %v1867, %v1884
  %v1896 = vadd.f32 %v1868, %v1884
  %v1897 = vadd.f32 %v1869, %v1884
  %v1898 = vadd.f32 %v1870, %v1884
  %v1899 = vadd.f32 %v1871, %v1884
  %v1900 = vadd.f32 %v1872, %v1884
  %v1901 = vadd.f32 %v1873, %v1884
  %v1902 = vadd.f32 %v1874, %v1884
  %v1903 = vadd.f32 %v1875, %v1884
  %v1904 = vadd.f32 %v1876, %v1884
  %v1905 = vadd.f32 %v1877, %v1884
  %v1906 = vadd.f32 %v1878, %v1884
  %v1907 = vmax.f32 %v1886, 0.0
  %v1908 = vmax.f32 %v1887, 0.0
  %v1909 = vmax.f32 %v1888, 0.0
  %v1910 = vmax.f32 %v1889, 0.0
  %v1911 = vmax.f32 %v1890, 0.0
  %v1912 = vmax.f32 %v1891, 0.0
  %v1913 = vmax.f32 %v1892, 0.0
  %v1914 = vmax.f32 %v1893, 0.0
  %v1915 = vmax.f32 %v1894, 0.0
  %v1916 = vmax.f32 %v1895, 0.0
  %v1917 = vmax.f32 %v1896, 0.0
  %v1918 = vmax.f32 %v1897, 0.0
  %v1919 = vmax.f32 %v1898, 0.0
  %v1920 = vmax.f32 %v1899, 0.0
  %v1921 = vmax.f32 %v1900, 0.0
  %v1922 = vmax.f32 %v1901, 0.0
  %v1923 = vmax.f32 %v1902, 0.0
  %v1924 = vmax.f32 %v1903, 0.0
  %v1925 = vmax.f32 %v1904, 0.0
  %v1926 = vmax.f32 %v1905, 0.0
  %v1927 = vmax.f32 %v1906, 0.0
  %vm1928 = vcmask 261120
  %1929 = vst.msk [vmem:[%s3] sm:$0xff] %vm1928, %v1907
  %1930 = vst.msk [vmem:[%s3 + $0x8] sm:$0xff] %vm1928, %v1908
  %1931 = vst.msk [vmem:[%s3 + $0x10] sm:$0xff] %vm1928, %v1909
  %1932 = vst.msk [vmem:[%s3 + $0x18] sm:$0xff] %vm1928, %v1910
  %1933 = vst.msk [vmem:[%s3 + $0x20] sm:$0xff] %vm1928, %v1911
  %1934 = vst.msk [vmem:[%s3 + $0x28] sm:$0xff] %vm1928, %v1912
  %1935 = vst.msk [vmem:[%s3 + $0x30] sm:$0xff] %vm1928, %v1913
  %1936 = vst.msk [vmem:[%s3 + $0x38] sm:$0xff] %vm1928, %v1914
  %1937 = vst.msk [vmem:[%s3 + $0x40] sm:$0xff] %vm1928, %v1915
  %1938 = vst.msk [vmem:[%s3 + $0x48] sm:$0xff] %vm1928, %v1916
  %1939 = vst.msk [vmem:[%s3 + $0x50] sm:$0xff] %vm1928, %v1917
  %1940 = vst.msk [vmem:[%s3 + $0x58] sm:$0xff] %vm1928, %v1918
  %1941 = vst.msk [vmem:[%s3 + $0x60] sm:$0xff] %vm1928, %v1919
  %1942 = vst.msk [vmem:[%s3 + $0x68] sm:$0xff] %vm1928, %v1920
  %1943 = vst.msk [vmem:[%s3 + $0x70] sm:$0xff] %vm1928, %v1921
  %1944 = vst.msk [vmem:[%s3 + $0x78] sm:$0xff] %vm1928, %v1922
  %1945 = vst.msk [vmem:[%s3 + $0x80] sm:$0xff] %vm1928, %v1923
  %1946 = vst.msk [vmem:[%s3 + $0x88] sm:$0xff] %vm1928, %v1924
  %1947 = vst.msk [vmem:[%s3 + $0x90] sm:$0xff] %vm1928, %v1925
  %1948 = vst.msk [vmem:[%s3 + $0x98] sm:$0xff] %vm1928, %v1926
  %vm1949 = vcmask 254976
  %1950 = vst.msk [vmem:[%s3 + $0xa0] sm:$0x3] %vm1949, %v1927
  // Predicated region
  $region14: #{capsule_autoencoder_forward.6} parent=0 // pred_check
    _
  $region15: #{capsule_autoencoder_forward.6} parent=0 // pred_check_branch
    %1952 = sbr.rel (0) target = $region17
  $region16: #{capsule_autoencoder_forward.6} parent=0 // pred_region
    _
  $region17: #{capsule_autoencoder_forward.6} parent=0 // pred_fallthru
    _
  // Predicated region
  $region18: #{capsule_autoencoder_forward.6} parent=0 // pred_check
    _
  $region19: #{capsule_autoencoder_forward.6} parent=0 // pred_check_branch
    %1954 = sbr.rel (0) target = $region21
  $region20: #{capsule_autoencoder_forward.6} parent=0 // pred_region
    _
  $region21: #{capsule_autoencoder_forward.6} parent=0 // pred_fallthru
    _

// kernel: capsule_autoencoder_forward.7
$region0: #{capsule_autoencoder_forward.7}
  #allocation0 [shape = 'u32[]', space=smem, size = 0x4, offset = 0x4, fixed_abs, tag = 'smem constant byte address 0x4 - core index']
  #allocation1 [shape = 'u32[144,128]{1,0:T(1,128)}', space=vmem, size = 0x12000, scoped, tag = 'internal scratch']
  %s0 = inlined_call_operand.vmem [shape: f32[4,56,32], index: 0, kind: input, shape index: {}]
  %s1 = inlined_call_operand.vmem [shape: bf16[9,32,64], index: 1, kind: input, shape index: {}]
  %s2 = inlined_call_operand.vmem [shape: f32[1,64], index: 2, kind: input, shape index: {}]
  %s3 = inlined_call_operand.vmem [shape: f32[50,64], index: 3, kind: output, shape index: {}]
  %s4 = sld [smem:[#allocation0]]
  $region22: #{capsule_autoencoder_forward.7} parent=0
    _
  %s6 = ssub.s32 1, %s4
  %s7 = scalar_select 0, %s6, %s4
  // Predicated region
  $region2: #{capsule_autoencoder_forward.7} parent=0 // pred_check
    _
  $region3: #{capsule_autoencoder_forward.7} parent=0 // pred_check_branch
    %9 = sbr.rel (0) target = $region5
  $region4: #{capsule_autoencoder_forward.7} parent=0 // pred_region
    _
  $region5: #{capsule_autoencoder_forward.7} parent=0 // pred_fallthru
    _
  // Predicated region
  $region6: #{capsule_autoencoder_forward.7} parent=0 // pred_check
    _
  $region7: #{capsule_autoencoder_forward.7} parent=0 // pred_check_branch
    %11 = sbr.rel (0) target = $region9
  $region8: #{capsule_autoencoder_forward.7} parent=0 // pred_region
    _
  $region9: #{capsule_autoencoder_forward.7} parent=0 // pred_fallthru
    _
  // Predicated region
  $region10: #{capsule_autoencoder_forward.7} parent=0 // pred_check
    _
  $region11: #{capsule_autoencoder_forward.7} parent=0 // pred_check_branch
    %13 = sbr.rel (0) target = $region13
  $region12: #{capsule_autoencoder_forward.7} parent=0 // pred_region
    _
  $region13: #{capsule_autoencoder_forward.7} parent=0 // pred_fallthru
    _
  %v15 = vld [vmem:[%s0] sm:$0xff]
  %v16 = vld [vmem:[%s0 + $0x8] sm:$0xff]
  %v17 = vld [vmem:[%s0 + $0x10] sm:$0xff]
  %v18 = vld [vmem:[%s0 + $0x18] sm:$0xff]
  %v19 = vld [vmem:[%s0 + $0x20] sm:$0xff]
  %v20 = vld [vmem:[%s0 + $0x28] sm:$0xff]
  %v21 = vld [vmem:[%s0 + $0x30] sm:$0x3]
  %v22 = vpack.c.bf16 %v16, %v15
  %v23 = vpack.c.bf16 %v18, %v17
  %v24 = vpack.c.bf16 %v20, %v19
  %v25 = vpack.c.bf16 %v21, %v21
  %v26 = vld [vmem:[%s1] sm:$0xf]
  %v27 = vld [vmem:[%s1 + $0x4] sm:$0xf]
  %v28 = vld [vmem:[%s1 + $0x8] sm:$0xf]
  %v29 = vld [vmem:[%s1 + $0xc] sm:$0xf]
  %s30 = scalar_lea.vmem %s0, 56
  %v31 = vld [vmem:[%s30] sm:$0xff]
  %v32 = vld [vmem:[%s30 + $0x8] sm:$0xff]
  %v33 = vld [vmem:[%s30 + $0x10] sm:$0xff]
  %v34 = vld [vmem:[%s30 + $0x18] sm:$0xff]
  %v35 = vld [vmem:[%s30 + $0x20] sm:$0xff]
  %v36 = vld [vmem:[%s30 + $0x28] sm:$0xff]
  %v37 = vld [vmem:[%s30 + $0x30] sm:$0x3]
  %v38 = vpack.c.bf16 %v32, %v31
  %v39 = vpack.c.bf16 %v34, %v33
  %v40 = vpack.c.bf16 %v36, %v35
  %v41 = vpack.c.bf16 %v37, %v37
  %s42 = scalar_lea.vmem %s1, 16
  %v43 = vld [vmem:[%s42] sm:$0xf]
  %v44 = vld [vmem:[%s42 + $0x4] sm:$0xf]
  %v45 = vld [vmem:[%s42 + $0x8] sm:$0xf]
  %v46 = vld [vmem:[%s42 + $0xc] sm:$0xf]
  %v51 = vunpack.c.l.b16 %v43
  %v52 = vunpack.c.l.b16 %v44
  %v53 = vunpack.c.l.b16 %v45
  %v54 = vunpack.c.l.b16 %v46
  %v55 = vpack.c.b16 %v52, %v51
  %v56 = vpack.c.b16 %v54, %v53
  %vm59 = vcmask 261120
  %v61 = vsel %vm59, %v38, 0
  %v64 = vsel %vm59, %v39, 0
  %v67 = vsel %vm59, %v40, 0
  %v70 = vsel %vm59, %v41, 0
  %72 = vmatprep.subr.bf16.mxu0 0
  %73 = vmatpush1.bf16.msra.mxu0 %v55
  %74 = vmatprep.subr.bf16.mxu0 0
  %75 = vmatpush1.bf16.msra.mxu0 %v56
  %76 = vmatprep.subr.bf16.mxu0 0
  %77 = vmatpush1.bf16.msra.mxu0 0
  %78 = vmatprep.subr.bf16.mxu0 0
  %79 = vmatpush1.bf16.msra.mxu0 0
  %80 = vmatprep.subr.bf16.mxu0 0
  %81 = vmatpush1.bf16.msra.mxu0 0
  %82 = vmatprep.subr.bf16.mxu0 0
  %83 = vmatpush1.bf16.msra.mxu0 0
  %84 = vmatprep.subr.bf16.mxu0 0
  %85 = vmatpush1.bf16.msra.mxu0 0
  %86 = vmatprep.subr.bf16.mxu0 0
  %87 = vmatpush1.bf16.msra.mxu0 0
  %88 = vmatprep.subr.bf16.mxu0 0
  %89 = vmatpush1.bf16.msra.mxu0 0
  %90 = vmatprep.subr.bf16.mxu0 0
  %91 = vmatpush1.bf16.msra.mxu0 0
  %92 = vmatprep.subr.bf16.mxu0 0
  %93 = vmatpush1.bf16.msra.mxu0 0
  %94 = vmatprep.subr.bf16.mxu0 0
  %95 = vmatpush1.bf16.msra.mxu0 0
  %96 = vmatprep.subr.bf16.mxu0 0
  %97 = vmatpush1.bf16.msra.mxu0 0
  %98 = vmatprep.subr.bf16.mxu0 0
  %99 = vmatpush1.bf16.msra.mxu0 0
  %100 = vmatprep.subr.bf16.mxu0 0
  %101 = vmatpush1.bf16.msra.mxu0 0
  %102 = vmatprep.subr.bf16.mxu0 0
  %103 = vmatpush1.bf16.msra.mxu0 0
  %104 = vmatprep.mubr.bf16.mxu0 0
  %105 = vmatmul.mubr.bf16.gmra.mrb[0].mxu0 %v61
  %v106 = vpop.f32.mrb[0].mxu0
  %v107 = vadd.f32 0.0, %v106
  %v108 = vpop.f32.mrb[0].mxu0
  %v109 = vpop.f32.mrb[0].mxu0
  %v110 = vadd.f32 0.0, %v109
  %v111 = vpop.f32.mrb[0].mxu0
  %112 = vmatprep.mubr.bf16.mxu0 0
  %113 = vmatmul.mubr.bf16.gmra.mrb[0].mxu0 %v64
  %v114 = vpop.f32.mrb[0].mxu0
  %v115 = vadd.f32 0.0, %v114
  %v116 = vpop.f32.mrb[0].mxu0
  %v117 = vpop.f32.mrb[0].mxu0
  %v118 = vadd.f32 0.0, %v117
  %v119 = vpop.f32.mrb[0].mxu0
  %120 = vmatprep.mubr.bf16.mxu0 0
  %121 = vmatmul.mubr.bf16.gmra.mrb[0].mxu0 %v67
  %v122 = vpop.f32.mrb[0].mxu0
  %v123 = vadd.f32 0.0, %v122
  %v124 = vpop.f32.mrb[0].mxu0
  %v125 = vpop.f32.mrb[0].mxu0
  %v126 = vadd.f32 0.0, %v125
  %v127 = vpop.f32.mrb[0].mxu0
  %128 = vmatprep.mubr.bf16.mxu0 0
  %129 = vmatmul.mubr.bf16.gmra.mrb[0].mxu0 %v70
  %v130 = vpop.f32.mrb[0].mxu0
  %v131 = vadd.f32 0.0, %v130
  %v132 = vpop.f32.mrb[0].mxu0
  %v133 = vpop.f32.mrb[0].mxu0
  %v134 = vpop.f32.mrb[0].mxu0
  %135 = vdwg.mxu0
  %v140 = vunpack.c.l.b16 %v26
  %v141 = vunpack.c.l.b16 %v27
  %v142 = vunpack.c.l.b16 %v28
  %v143 = vunpack.c.l.b16 %v29
  %v144 = vpack.c.b16 %v141, %v140
  %v145 = vpack.c.b16 %v143, %v142
  %v149 = vsel %vm59, %v22, 0
  %v152 = vsel %vm59, %v23, 0
  %v155 = vsel %vm59, %v24, 0
  %v158 = vsel %vm59, %v25, 0
  %160 = vmatprep.subr.bf16.mxu0 0
  %161 = vmatpush1.bf16.msra.mxu0 %v144
  %162 = vmatprep.subr.bf16.mxu0 0
  %163 = vmatpush1.bf16.msra.mxu0 %v145
  %164 = vmatprep.subr.bf16.mxu0 0
  %165 = vmatpush1.bf16.msra.mxu0 0
  %166 = vmatprep.subr.bf16.mxu0 0
  %167 = vmatpush1.bf16.msra.mxu0 0
  %168 = vmatprep.subr.bf16.mxu0 0
  %169 = vmatpush1.bf16.msra.mxu0 0
  %170 = vmatprep.subr.bf16.mxu0 0
  %171 = vmatpush1.bf16.msra.mxu0 0
  %172 = vmatprep.subr.bf16.mxu0 0
  %173 = vmatpush1.bf16.msra.mxu0 0
  %174 = vmatprep.subr.bf16.mxu0 0
  %175 = vmatpush1.bf16.msra.mxu0 0
  %176 = vmatprep.subr.bf16.mxu0 0
  %177 = vmatpush1.bf16.msra.mxu0 0
  %178 = vmatprep.subr.bf16.mxu0 0
  %179 = vmatpush1.bf16.msra.mxu0 0
  %180 = vmatprep.subr.bf16.mxu0 0
  %181 = vmatpush1.bf16.msra.mxu0 0
  %182 = vmatprep.subr.bf16.mxu0 0
  %183 = vmatpush1.bf16.msra.mxu0 0
  %184 = vmatprep.subr.bf16.mxu0 0
  %185 = vmatpush1.bf16.msra.mxu0 0
  %186 = vmatprep.subr.bf16.mxu0 0
  %187 = vmatpush1.bf16.msra.mxu0 0
  %188 = vmatprep.subr.bf16.mxu0 0
  %189 = vmatpush1.bf16.msra.mxu0 0
  %190 = vmatprep.subr.bf16.mxu0 0
  %191 = vmatpush1.bf16.msra.mxu0 0
  %192 = vmatprep.mubr.bf16.mxu0 0
  %193 = vmatmul.mubr.bf16.gmra.mrb[0].mxu0 %v149
  %v194 = vpop.f32.mrb[0].mxu0
  %v195 = vadd.f32 %v107, %v194
  %v196 = vpop.f32.mrb[0].mxu0
  %v197 = vpop.f32.mrb[0].mxu0
  %v198 = vadd.f32 %v110, %v197
  %v199 = vpop.f32.mrb[0].mxu0
  %200 = vmatprep.mubr.bf16.mxu0 0
  %201 = vmatmul.mubr.bf16.gmra.mrb[0].mxu0 %v152
  %v202 = vpop.f32.mrb[0].mxu0
  %v203 = vadd.f32 %v115, %v202
  %v204 = vpop.f32.mrb[0].mxu0
  %v205 = vpop.f32.mrb[0].mxu0
  %v206 = vadd.f32 %v118, %v205
  %v207 = vpop.f32.mrb[0].mxu0
  %208 = vmatprep.mubr.bf16.mxu0 0
  %209 = vmatmul.mubr.bf16.gmra.mrb[0].mxu0 %v155
  %v210 = vpop.f32.mrb[0].mxu0
  %v211 = vadd.f32 %v123, %v210
  %v212 = vpop.f32.mrb[0].mxu0
  %v213 = vpop.f32.mrb[0].mxu0
  %v214 = vadd.f32 %v126, %v213
  %v215 = vpop.f32.mrb[0].mxu0
  %216 = vmatprep.mubr.bf16.mxu0 0
  %217 = vmatmul.mubr.bf16.gmra.mrb[0].mxu0 %v158
  %v218 = vpop.f32.mrb[0].mxu0
  %v219 = vadd.f32 %v131, %v218
  %v220 = vpop.f32.mrb[0].mxu0
  %v221 = vpop.f32.mrb[0].mxu0
  %v222 = vpop.f32.mrb[0].mxu0
  %223 = vdwg.mxu0
  %v224 = vld [vmem:[%s0 + $0x1] sm:$0xff]
  %v225 = vld [vmem:[%s0 + $0x9] sm:$0xff]
  %v226 = vld [vmem:[%s0 + $0x11] sm:$0xff]
  %v227 = vld [vmem:[%s0 + $0x19] sm:$0xff]
  %v228 = vld [vmem:[%s0 + $0x21] sm:$0xff]
  %v229 = vld [vmem:[%s0 + $0x29] sm:$0xff]
  %v230 = vld [vmem:[%s0 + $0x31] sm:$0x3]
  %v231 = vpack.c.bf16 %v225, %v224
  %v232 = vpack.c.bf16 %v227, %v226
  %v233 = vpack.c.bf16 %v229, %v228
  %v234 = vpack.c.bf16 %v230, %v230
  %s235 = scalar_lea.vmem %s1, 32
  %v236 = vld [vmem:[%s235] sm:$0xf]
  %v237 = vld [vmem:[%s235 + $0x4] sm:$0xf]
  %v238 = vld [vmem:[%s235 + $0x8] sm:$0xf]
  %v239 = vld [vmem:[%s235 + $0xc] sm:$0xf]
  %v244 = vunpack.c.l.b16 %v236
  %v245 = vunpack.c.l.b16 %v237
  %v246 = vunpack.c.l.b16 %v238
  %v247 = vunpack.c.l.b16 %v239
  %v248 = vpack.c.b16 %v245, %v244
  %v249 = vpack.c.b16 %v247, %v246
  %v253 = vsel %vm59, %v231, 0
  %v256 = vsel %vm59, %v232, 0
  %v259 = vsel %vm59, %v233, 0
  %v262 = vsel %vm59, %v234, 0
  %264 = vmatprep.subr.bf16.mxu0 0
  %265 = vmatpush1.bf16.msra.mxu0 %v248
  %266 = vmatprep.subr.bf16.mxu0 0
  %267 = vmatpush1.bf16.msra.mxu0 %v249
  %268 = vmatprep.subr.bf16.mxu0 0
  %269 = vmatpush1.bf16.msra.mxu0 0
  %270 = vmatprep.subr.bf16.mxu0 0
  %271 = vmatpush1.bf16.msra.mxu0 0
  %272 = vmatprep.subr.bf16.mxu0 0
  %273 = vmatpush1.bf16.msra.mxu0 0
  %274 = vmatprep.subr.bf16.mxu0 0
  %275 = vmatpush1.bf16.msra.mxu0 0
  %276 = vmatprep.subr.bf16.mxu0 0
  %277 = vmatpush1.bf16.msra.mxu0 0
  %278 = vmatprep.subr.bf16.mxu0 0
  %279 = vmatpush1.bf16.msra.mxu0 0
  %280 = vmatprep.subr.bf16.mxu0 0
  %281 = vmatpush1.bf16.msra.mxu0 0
  %282 = vmatprep.subr.bf16.mxu0 0
  %283 = vmatpush1.bf16.msra.mxu0 0
  %284 = vmatprep.subr.bf16.mxu0 0
  %285 = vmatpush1.bf16.msra.mxu0 0
  %286 = vmatprep.subr.bf16.mxu0 0
  %287 = vmatpush1.bf16.msra.mxu0 0
  %288 = vmatprep.subr.bf16.mxu0 0
  %289 = vmatpush1.bf16.msra.mxu0 0
  %290 = vmatprep.subr.bf16.mxu0 0
  %291 = vmatpush1.bf16.msra.mxu0 0
  %292 = vmatprep.subr.bf16.mxu0 0
  %293 = vmatpush1.bf16.msra.mxu0 0
  %294 = vmatprep.subr.bf16.mxu0 0
  %295 = vmatpush1.bf16.msra.mxu0 0
  %296 = vmatprep.mubr.bf16.mxu0 0
  %297 = vmatmul.mubr.bf16.gmra.mrb[0].mxu0 %v253
  %v298 = vpop.f32.mrb[0].mxu0
  %v299 = vadd.f32 0.0, %v298
  %v300 = vpop.f32.mrb[0].mxu0
  %v301 = vpop.f32.mrb[0].mxu0
  %v302 = vadd.f32 0.0, %v301
  %v303 = vpop.f32.mrb[0].mxu0
  %304 = vmatprep.mubr.bf16.mxu0 0
  %305 = vmatmul.mubr.bf16.gmra.mrb[0].mxu0 %v256
  %v306 = vpop.f32.mrb[0].mxu0
  %v307 = vadd.f32 0.0, %v306
  %v308 = vpop.f32.mrb[0].mxu0
  %v309 = vpop.f32.mrb[0].mxu0
  %v310 = vadd.f32 0.0, %v309
  %v311 = vpop.f32.mrb[0].mxu0
  %312 = vmatprep.mubr.bf16.mxu0 0
  %313 = vmatmul.mubr.bf16.gmra.mrb[0].mxu0 %v259
  %v314 = vpop.f32.mrb[0].mxu0
  %v315 = vadd.f32 0.0, %v314
  %v316 = vpop.f32.mrb[0].mxu0
  %v317 = vpop.f32.mrb[0].mxu0
  %v318 = vadd.f32 0.0, %v317
  %v319 = vpop.f32.mrb[0].mxu0
  %320 = vmatprep.mubr.bf16.mxu0 0
  %321 = vmatmul.mubr.bf16.gmra.mrb[0].mxu0 %v262
  %v322 = vpop.f32.mrb[0].mxu0
  %v323 = vadd.f32 0.0, %v322
  %v324 = vpop.f32.mrb[0].mxu0
  %v325 = vpop.f32.mrb[0].mxu0
  %v326 = vpop.f32.mrb[0].mxu0
  %327 = vdwg.mxu0
  %v328 = vadd.f32 %v195, %v299
  %v329 = vadd.f32 %v198, %v302
  %v330 = vadd.f32 %v203, %v307
  %v331 = vadd.f32 %v206, %v310
  %v332 = vadd.f32 %v211, %v315
  %v333 = vadd.f32 %v214, %v318
  %v334 = vadd.f32 %v219, %v323
  %s335 = scalar_lea.vmem %s0, 112
  %v336 = vld [vmem:[%s335] sm:$0xff]
  %v337 = vld [vmem:[%s335 + $0x8] sm:$0xff]
  %v338 = vld [vmem:[%s335 + $0x10] sm:$0xff]
  %v339 = vld [vmem:[%s335 + $0x18] sm:$0xff]
  %v340 = vld [vmem:[%s335 + $0x20] sm:$0xff]
  %v341 = vld [vmem:[%s335 + $0x28] sm:$0xff]
  %v342 = vld [vmem:[%s335 + $0x30] sm:$0x3]
  %v343 = vpack.c.bf16 %v337, %v336
  %v344 = vpack.c.bf16 %v339, %v338
  %v345 = vpack.c.bf16 %v341, %v340
  %v346 = vpack.c.bf16 %v342, %v342
  %s347 = scalar_lea.vmem %s1, 48
  %v348 = vld [vmem:[%s347] sm:$0xf]
  %v349 = vld [vmem:[%s347 + $0x4] sm:$0xf]
  %v350 = vld [vmem:[%s347 + $0x8] sm:$0xf]
  %v351 = vld [vmem:[%s347 + $0xc] sm:$0xf]
  %v356 = vunpack.c.l.b16 %v348
  %v357 = vunpack.c.l.b16 %v349
  %v358 = vunpack.c.l.b16 %v350
  %v359 = vunpack.c.l.b16 %v351
  %v360 = vpack.c.b16 %v357, %v356
  %v361 = vpack.c.b16 %v359, %v358
  %v365 = vsel %vm59, %v343, 0
  %v368 = vsel %vm59, %v344, 0
  %v371 = vsel %vm59, %v345, 0
  %v374 = vsel %vm59, %v346, 0
  %376 = vmatprep.subr.bf16.mxu0 0
  %377 = vmatpush1.bf16.msra.mxu0 %v360
  %378 = vmatprep.subr.bf16.mxu0 0
  %379 = vmatpush1.bf16.msra.mxu0 %v361
  %380 = vmatprep.subr.bf16.mxu0 0
  %381 = vmatpush1.bf16.msra.mxu0 0
  %382 = vmatprep.subr.bf16.mxu0 0
  %383 = vmatpush1.bf16.msra.mxu0 0
  %384 = vmatprep.subr.bf16.mxu0 0
  %385 = vmatpush1.bf16.msra.mxu0 0
  %386 = vmatprep.subr.bf16.mxu0 0
  %387 = vmatpush1.bf16.msra.mxu0 0
  %388 = vmatprep.subr.bf16.mxu0 0
  %389 = vmatpush1.bf16.msra.mxu0 0
  %390 = vmatprep.subr.bf16.mxu0 0
  %391 = vmatpush1.bf16.msra.mxu0 0
  %392 = vmatprep.subr.bf16.mxu0 0
  %393 = vmatpush1.bf16.msra.mxu0 0
  %394 = vmatprep.subr.bf16.mxu0 0
  %395 = vmatpush1.bf16.msra.mxu0 0
  %396 = vmatprep.subr.bf16.mxu0 0
  %397 = vmatpush1.bf16.msra.mxu0 0
  %398 = vmatprep.subr.bf16.mxu0 0
  %399 = vmatpush1.bf16.msra.mxu0 0
  %400 = vmatprep.subr.bf16.mxu0 0
  %401 = vmatpush1.bf16.msra.mxu0 0
  %402 = vmatprep.subr.bf16.mxu0 0
  %403 = vmatpush1.bf16.msra.mxu0 0
  %404 = vmatprep.subr.bf16.mxu0 0
  %405 = vmatpush1.bf16.msra.mxu0 0
  %406 = vmatprep.subr.bf16.mxu0 0
  %407 = vmatpush1.bf16.msra.mxu0 0
  %408 = vmatprep.mubr.bf16.mxu0 0
  %409 = vmatmul.mubr.bf16.gmra.mrb[0].mxu0 %v365
  %v410 = vpop.f32.mrb[0].mxu0
  %v411 = vadd.f32 0.0, %v410
  %v412 = vpop.f32.mrb[0].mxu0
  %v413 = vpop.f32.mrb[0].mxu0
  %v414 = vadd.f32 0.0, %v413
  %v415 = vpop.f32.mrb[0].mxu0
  %416 = vmatprep.mubr.bf16.mxu0 0
  %417 = vmatmul.mubr.bf16.gmra.mrb[0].mxu0 %v368
  %v418 = vpop.f32.mrb[0].mxu0
  %v419 = vadd.f32 0.0, %v418
  %v420 = vpop.f32.mrb[0].mxu0
  %v421 = vpop.f32.mrb[0].mxu0
  %v422 = vadd.f32 0.0, %v421
  %v423 = vpop.f32.mrb[0].mxu0
  %424 = vmatprep.mubr.bf16.mxu0 0
  %425 = vmatmul.mubr.bf16.gmra.mrb[0].mxu0 %v371
  %v426 = vpop.f32.mrb[0].mxu0
  %v427 = vadd.f32 0.0, %v426
  %v428 = vpop.f32.mrb[0].mxu0
  %v429 = vpop.f32.mrb[0].mxu0
  %v430 = vadd.f32 0.0, %v429
  %v431 = vpop.f32.mrb[0].mxu0
  %432 = vmatprep.mubr.bf16.mxu0 0
  %433 = vmatmul.mubr.bf16.gmra.mrb[0].mxu0 %v374
  %v434 = vpop.f32.mrb[0].mxu0
  %v435 = vadd.f32 0.0, %v434
  %v436 = vpop.f32.mrb[0].mxu0
  %v437 = vpop.f32.mrb[0].mxu0
  %v438 = vpop.f32.mrb[0].mxu0
  %439 = vdwg.mxu0
  %v440 = vadd.f32 %v328, %v411
  %v441 = vadd.f32 %v329, %v414
  %v442 = vadd.f32 %v330, %v419
  %v443 = vadd.f32 %v331, %v422
  %v444 = vadd.f32 %v332, %v427
  %v445 = vadd.f32 %v333, %v430
  %v446 = vadd.f32 %v334, %v435
  %s447 = scalar_lea.vmem %s0, 168
  %v448 = vld [vmem:[%s447] sm:$0xff]
  %v449 = vld [vmem:[%s447 + $0x8] sm:$0xff]
  %v450 = vld [vmem:[%s447 + $0x10] sm:$0xff]
  %v451 = vld [vmem:[%s447 + $0x18] sm:$0xff]
  %v452 = vld [vmem:[%s447 + $0x20] sm:$0xff]
  %v453 = vld [vmem:[%s447 + $0x28] sm:$0xff]
  %v454 = vld [vmem:[%s447 + $0x30] sm:$0x3]
  %v455 = vpack.c.bf16 %v449, %v448
  %v456 = vpack.c.bf16 %v451, %v450
  %v457 = vpack.c.bf16 %v453, %v452
  %v458 = vpack.c.bf16 %v454, %v454
  %s459 = scalar_lea.vmem %s1, 64
  %v460 = vld [vmem:[%s459] sm:$0xf]
  %v461 = vld [vmem:[%s459 + $0x4] sm:$0xf]
  %v462 = vld [vmem:[%s459 + $0x8] sm:$0xf]
  %v463 = vld [vmem:[%s459 + $0xc] sm:$0xf]
  %v468 = vunpack.c.l.b16 %v460
  %v469 = vunpack.c.l.b16 %v461
  %v470 = vunpack.c.l.b16 %v462
  %v471 = vunpack.c.l.b16 %v463
  %v472 = vpack.c.b16 %v469, %v468
  %v473 = vpack.c.b16 %v471, %v470
  %v477 = vsel %vm59, %v455, 0
  %v480 = vsel %vm59, %v456, 0
  %v483 = vsel %vm59, %v457, 0
  %v486 = vsel %vm59, %v458, 0
  %488 = vmatprep.subr.bf16.mxu0 0
  %489 = vmatpush1.bf16.msra.mxu0 %v472
  %490 = vmatprep.subr.bf16.mxu0 0
  %491 = vmatpush1.bf16.msra.mxu0 %v473
  %492 = vmatprep.subr.bf16.mxu0 0
  %493 = vmatpush1.bf16.msra.mxu0 0
  %494 = vmatprep.subr.bf16.mxu0 0
  %495 = vmatpush1.bf16.msra.mxu0 0
  %496 = vmatprep.subr.bf16.mxu0 0
  %497 = vmatpush1.bf16.msra.mxu0 0
  %498 = vmatprep.subr.bf16.mxu0 0
  %499 = vmatpush1.bf16.msra.mxu0 0
  %500 = vmatprep.subr.bf16.mxu0 0
  %501 = vmatpush1.bf16.msra.mxu0 0
  %502 = vmatprep.subr.bf16.mxu0 0
  %503 = vmatpush1.bf16.msra.mxu0 0
  %504 = vmatprep.subr.bf16.mxu0 0
  %505 = vmatpush1.bf16.msra.mxu0 0
  %506 = vmatprep.subr.bf16.mxu0 0
  %507 = vmatpush1.bf16.msra.mxu0 0
  %508 = vmatprep.subr.bf16.mxu0 0
  %509 = vmatpush1.bf16.msra.mxu0 0
  %510 = vmatprep.subr.bf16.mxu0 0
  %511 = vmatpush1.bf16.msra.mxu0 0
  %512 = vmatprep.subr.bf16.mxu0 0
  %513 = vmatpush1.bf16.msra.mxu0 0
  %514 = vmatprep.subr.bf16.mxu0 0
  %515 = vmatpush1.bf16.msra.mxu0 0
  %516 = vmatprep.subr.bf16.mxu0 0
  %517 = vmatpush1.bf16.msra.mxu0 0
  %518 = vmatprep.subr.bf16.mxu0 0
  %519 = vmatpush1.bf16.msra.mxu0 0
  %520 = vmatprep.mubr.bf16.mxu0 0
  %521 = vmatmul.mubr.bf16.gmra.mrb[0].mxu0 %v477
  %v522 = vpop.f32.mrb[0].mxu0
  %v523 = vadd.f32 0.0, %v522
  %v524 = vpop.f32.mrb[0].mxu0
  %v525 = vpop.f32.mrb[0].mxu0
  %v526 = vadd.f32 0.0, %v525
  %v527 = vpop.f32.mrb[0].mxu0
  %528 = vmatprep.mubr.bf16.mxu0 0
  %529 = vmatmul.mubr.bf16.gmra.mrb[0].mxu0 %v480
  %v530 = vpop.f32.mrb[0].mxu0
  %v531 = vadd.f32 0.0, %v530
  %v532 = vpop.f32.mrb[0].mxu0
  %v533 = vpop.f32.mrb[0].mxu0
  %v534 = vadd.f32 0.0, %v533
  %v535 = vpop.f32.mrb[0].mxu0
  %536 = vmatprep.mubr.bf16.mxu0 0
  %537 = vmatmul.mubr.bf16.gmra.mrb[0].mxu0 %v483
  %v538 = vpop.f32.mrb[0].mxu0
  %v539 = vadd.f32 0.0, %v538
  %v540 = vpop.f32.mrb[0].mxu0
  %v541 = vpop.f32.mrb[0].mxu0
  %v542 = vadd.f32 0.0, %v541
  %v543 = vpop.f32.mrb[0].mxu0
  %544 = vmatprep.mubr.bf16.mxu0 0
  %545 = vmatmul.mubr.bf16.gmra.mrb[0].mxu0 %v486
  %v546 = vpop.f32.mrb[0].mxu0
  %v547 = vadd.f32 0.0, %v546
  %v548 = vpop.f32.mrb[0].mxu0
  %v549 = vpop.f32.mrb[0].mxu0
  %v550 = vpop.f32.mrb[0].mxu0
  %551 = vdwg.mxu0
  %v552 = vadd.f32 %v440, %v523
  %v553 = vadd.f32 %v441, %v526
  %v554 = vadd.f32 %v442, %v531
  %v555 = vadd.f32 %v443, %v534
  %v556 = vadd.f32 %v444, %v539
  %v557 = vadd.f32 %v445, %v542
  %v558 = vadd.f32 %v446, %v547
  %v559 = vld [vmem:[%s335 + $0x1] sm:$0xff]
  %v560 = vld [vmem:[%s335 + $0x9] sm:$0xff]
  %v561 = vld [vmem:[%s335 + $0x11] sm:$0xff]
  %v562 = vld [vmem:[%s335 + $0x19] sm:$0xff]
  %v563 = vld [vmem:[%s335 + $0x21] sm:$0xff]
  %v564 = vld [vmem:[%s335 + $0x29] sm:$0xff]
  %v565 = vld [vmem:[%s335 + $0x31] sm:$0x3]
  %v566 = vpack.c.bf16 %v560, %v559
  %v567 = vpack.c.bf16 %v562, %v561
  %v568 = vpack.c.bf16 %v564, %v563
  %v569 = vpack.c.bf16 %v565, %v565
  %s570 = scalar_lea.vmem %s1, 80
  %v571 = vld [vmem:[%s570] sm:$0xf]
  %v572 = vld [vmem:[%s570 + $0x4] sm:$0xf]
  %v573 = vld [vmem:[%s570 + $0x8] sm:$0xf]
  %v574 = vld [vmem:[%s570 + $0xc] sm:$0xf]
  %v579 = vunpack.c.l.b16 %v571
  %v580 = vunpack.c.l.b16 %v572
  %v581 = vunpack.c.l.b16 %v573
  %v582 = vunpack.c.l.b16 %v574
  %v583 = vpack.c.b16 %v580, %v579
  %v584 = vpack.c.b16 %v582, %v581
  %v588 = vsel %vm59, %v566, 0
  %v591 = vsel %vm59, %v567, 0
  %v594 = vsel %vm59, %v568, 0
  %v597 = vsel %vm59, %v569, 0
  %599 = vmatprep.subr.bf16.mxu0 0
  %600 = vmatpush1.bf16.msra.mxu0 %v583
  %601 = vmatprep.subr.bf16.mxu0 0
  %602 = vmatpush1.bf16.msra.mxu0 %v584
  %603 = vmatprep.subr.bf16.mxu0 0
  %604 = vmatpush1.bf16.msra.mxu0 0
  %605 = vmatprep.subr.bf16.mxu0 0
  %606 = vmatpush1.bf16.msra.mxu0 0
  %607 = vmatprep.subr.bf16.mxu0 0
  %608 = vmatpush1.bf16.msra.mxu0 0
  %609 = vmatprep.subr.bf16.mxu0 0
  %610 = vmatpush1.bf16.msra.mxu0 0
  %611 = vmatprep.subr.bf16.mxu0 0
  %612 = vmatpush1.bf16.msra.mxu0 0
  %613 = vmatprep.subr.bf16.mxu0 0
  %614 = vmatpush1.bf16.msra.mxu0 0
  %615 = vmatprep.subr.bf16.mxu0 0
  %616 = vmatpush1.bf16.msra.mxu0 0
  %617 = vmatprep.subr.bf16.mxu0 0
  %618 = vmatpush1.bf16.msra.mxu0 0
  %619 = vmatprep.subr.bf16.mxu0 0
  %620 = vmatpush1.bf16.msra.mxu0 0
  %621 = vmatprep.subr.bf16.mxu0 0
  %622 = vmatpush1.bf16.msra.mxu0 0
  %623 = vmatprep.subr.bf16.mxu0 0
  %624 = vmatpush1.bf16.msra.mxu0 0
  %625 = vmatprep.subr.bf16.mxu0 0
  %626 = vmatpush1.bf16.msra.mxu0 0
  %627 = vmatprep.subr.bf16.mxu0 0
  %628 = vmatpush1.bf16.msra.mxu0 0
  %629 = vmatprep.subr.bf16.mxu0 0
  %630 = vmatpush1.bf16.msra.mxu0 0
  %631 = vmatprep.mubr.bf16.mxu0 0
  %632 = vmatmul.mubr.bf16.gmra.mrb[0].mxu0 %v588
  %v633 = vpop.f32.mrb[0].mxu0
  %v634 = vadd.f32 0.0, %v633
  %v635 = vpop.f32.mrb[0].mxu0
  %v636 = vpop.f32.mrb[0].mxu0
  %v637 = vadd.f32 0.0, %v636
  %v638 = vpop.f32.mrb[0].mxu0
  %639 = vmatprep.mubr.bf16.mxu0 0
  %640 = vmatmul.mubr.bf16.gmra.mrb[0].mxu0 %v591
  %v641 = vpop.f32.mrb[0].mxu0
  %v642 = vadd.f32 0.0, %v641
  %v643 = vpop.f32.mrb[0].mxu0
  %v644 = vpop.f32.mrb[0].mxu0
  %v645 = vadd.f32 0.0, %v644
  %v646 = vpop.f32.mrb[0].mxu0
  %647 = vmatprep.mubr.bf16.mxu0 0
  %648 = vmatmul.mubr.bf16.gmra.mrb[0].mxu0 %v594
  %v649 = vpop.f32.mrb[0].mxu0
  %v650 = vadd.f32 0.0, %v649
  %v651 = vpop.f32.mrb[0].mxu0
  %v652 = vpop.f32.mrb[0].mxu0
  %v653 = vadd.f32 0.0, %v652
  %v654 = vpop.f32.mrb[0].mxu0
  %655 = vmatprep.mubr.bf16.mxu0 0
  %656 = vmatmul.mubr.bf16.gmra.mrb[0].mxu0 %v597
  %v657 = vpop.f32.mrb[0].mxu0
  %v658 = vadd.f32 0.0, %v657
  %v659 = vpop.f32.mrb[0].mxu0
  %v660 = vpop.f32.mrb[0].mxu0
  %v661 = vpop.f32.mrb[0].mxu0
  %662 = vdwg.mxu0
  %v663 = vadd.f32 %v552, %v634
  %v664 = vadd.f32 %v553, %v637
  %v665 = vadd.f32 %v554, %v642
  %v666 = vadd.f32 %v555, %v645
  %v667 = vadd.f32 %v556, %v650
  %v668 = vadd.f32 %v557, %v653
  %v669 = vadd.f32 %v558, %v658
  %v670 = vld [vmem:[%s0 + $0x5] sm:$0xff]
  %v671 = vld [vmem:[%s0 + $0xd] sm:$0xff]
  %v672 = vld [vmem:[%s0 + $0x15] sm:$0xff]
  %v673 = vld [vmem:[%s0 + $0x1d] sm:$0xff]
  %v674 = vld [vmem:[%s0 + $0x25] sm:$0xff]
  %v675 = vld [vmem:[%s0 + $0x2d] sm:$0xff]
  %v676 = vld [vmem:[%s0 + $0x35] sm:$0x3]
  %v677 = vpack.c.bf16 %v671, %v670
  %v678 = vpack.c.bf16 %v673, %v672
  %v679 = vpack.c.bf16 %v675, %v674
  %v680 = vpack.c.bf16 %v676, %v676
  %s681 = scalar_lea.vmem %s1, 96
  %v682 = vld [vmem:[%s681] sm:$0xf]
  %v683 = vld [vmem:[%s681 + $0x4] sm:$0xf]
  %v684 = vld [vmem:[%s681 + $0x8] sm:$0xf]
  %v685 = vld [vmem:[%s681 + $0xc] sm:$0xf]
  %v690 = vunpack.c.l.b16 %v682
  %v691 = vunpack.c.l.b16 %v683
  %v692 = vunpack.c.l.b16 %v684
  %v693 = vunpack.c.l.b16 %v685
  %v694 = vpack.c.b16 %v691, %v690
  %v695 = vpack.c.b16 %v693, %v692
  %v699 = vsel %vm59, %v677, 0
  %v702 = vsel %vm59, %v678, 0
  %v705 = vsel %vm59, %v679, 0
  %v708 = vsel %vm59, %v680, 0
  %710 = vmatprep.subr.bf16.mxu0 0
  %711 = vmatpush1.bf16.msra.mxu0 %v694
  %712 = vmatprep.subr.bf16.mxu0 0
  %713 = vmatpush1.bf16.msra.mxu0 %v695
  %714 = vmatprep.subr.bf16.mxu0 0
  %715 = vmatpush1.bf16.msra.mxu0 0
  %716 = vmatprep.subr.bf16.mxu0 0
  %717 = vmatpush1.bf16.msra.mxu0 0
  %718 = vmatprep.subr.bf16.mxu0 0
  %719 = vmatpush1.bf16.msra.mxu0 0
  %720 = vmatprep.subr.bf16.mxu0 0
  %721 = vmatpush1.bf16.msra.mxu0 0
  %722 = vmatprep.subr.bf16.mxu0 0
  %723 = vmatpush1.bf16.msra.mxu0 0
  %724 = vmatprep.subr.bf16.mxu0 0
  %725 = vmatpush1.bf16.msra.mxu0 0
  %726 = vmatprep.subr.bf16.mxu0 0
  %727 = vmatpush1.bf16.msra.mxu0 0
  %728 = vmatprep.subr.bf16.mxu0 0
  %729 = vmatpush1.bf16.msra.mxu0 0
  %730 = vmatprep.subr.bf16.mxu0 0
  %731 = vmatpush1.bf16.msra.mxu0 0
  %732 = vmatprep.subr.bf16.mxu0 0
  %733 = vmatpush1.bf16.msra.mxu0 0
  %734 = vmatprep.subr.bf16.mxu0 0
  %735 = vmatpush1.bf16.msra.mxu0 0
  %736 = vmatprep.subr.bf16.mxu0 0
  %737 = vmatpush1.bf16.msra.mxu0 0
  %738 = vmatprep.subr.bf16.mxu0 0
  %739 = vmatpush1.bf16.msra.mxu0 0
  %740 = vmatprep.subr.bf16.mxu0 0
  %741 = vmatpush1.bf16.msra.mxu0 0
  %742 = vmatprep.mubr.bf16.mxu0 0
  %743 = vmatmul.mubr.bf16.gmra.mrb[0].mxu0 %v699
  %v744 = vpop.f32.mrb[0].mxu0
  %v745 = vadd.f32 0.0, %v744
  %v746 = vpop.f32.mrb[0].mxu0
  %v747 = vpop.f32.mrb[0].mxu0
  %v748 = vadd.f32 0.0, %v747
  %v749 = vpop.f32.mrb[0].mxu0
  %750 = vmatprep.mubr.bf16.mxu0 0
  %751 = vmatmul.mubr.bf16.gmra.mrb[0].mxu0 %v702
  %v752 = vpop.f32.mrb[0].mxu0
  %v753 = vadd.f32 0.0, %v752
  %v754 = vpop.f32.mrb[0].mxu0
  %v755 = vpop.f32.mrb[0].mxu0
  %v756 = vadd.f32 0.0, %v755
  %v757 = vpop.f32.mrb[0].mxu0
  %758 = vmatprep.mubr.bf16.mxu0 0
  %759 = vmatmul.mubr.bf16.gmra.mrb[0].mxu0 %v705
  %v760 = vpop.f32.mrb[0].mxu0
  %v761 = vadd.f32 0.0, %v760
  %v762 = vpop.f32.mrb[0].mxu0
  %v763 = vpop.f32.mrb[0].mxu0
  %v764 = vadd.f32 0.0, %v763
  %v765 = vpop.f32.mrb[0].mxu0
  %766 = vmatprep.mubr.bf16.mxu0 0
  %767 = vmatmul.mubr.bf16.gmra.mrb[0].mxu0 %v708
  %v768 = vpop.f32.mrb[0].mxu0
  %v769 = vadd.f32 0.0, %v768
  %v770 = vpop.f32.mrb[0].mxu0
  %v771 = vpop.f32.mrb[0].mxu0
  %v772 = vpop.f32.mrb[0].mxu0
  %773 = vdwg.mxu0
  %v774 = vadd.f32 %v663, %v745
  %v775 = vadd.f32 %v664, %v748
  %v776 = vadd.f32 %v665, %v753
  %v777 = vadd.f32 %v666, %v756
  %v778 = vadd.f32 %v667, %v761
  %v779 = vadd.f32 %v668, %v764
  %v780 = vadd.f32 %v669, %v769
  %v781 = vld [vmem:[%s30 + $0x5] sm:$0xff]
  %v782 = vld [vmem:[%s30 + $0xd] sm:$0xff]
  %v783 = vld [vmem:[%s30 + $0x15] sm:$0xff]
  %v784 = vld [vmem:[%s30 + $0x1d] sm:$0xff]
  %v785 = vld [vmem:[%s30 + $0x25] sm:$0xff]
  %v786 = vld [vmem:[%s30 + $0x2d] sm:$0xff]
  %v787 = vld [vmem:[%s30 + $0x35] sm:$0x3]
  %v788 = vpack.c.bf16 %v782, %v781
  %v789 = vpack.c.bf16 %v784, %v783
  %v790 = vpack.c.bf16 %v786, %v785
  %v791 = vpack.c.bf16 %v787, %v787
  %s792 = scalar_lea.vmem %s1, 112
  %v793 = vld [vmem:[%s792] sm:$0xf]
  %v794 = vld [vmem:[%s792 + $0x4] sm:$0xf]
  %v795 = vld [vmem:[%s792 + $0x8] sm:$0xf]
  %v796 = vld [vmem:[%s792 + $0xc] sm:$0xf]
  %v801 = vunpack.c.l.b16 %v793
  %v802 = vunpack.c.l.b16 %v794
  %v803 = vunpack.c.l.b16 %v795
  %v804 = vunpack.c.l.b16 %v796
  %v805 = vpack.c.b16 %v802, %v801
  %v806 = vpack.c.b16 %v804, %v803
  %v810 = vsel %vm59, %v788, 0
  %v813 = vsel %vm59, %v789, 0
  %v816 = vsel %vm59, %v790, 0
  %v819 = vsel %vm59, %v791, 0
  %821 = vmatprep.subr.bf16.mxu0 0
  %822 = vmatpush1.bf16.msra.mxu0 %v805
  %823 = vmatprep.subr.bf16.mxu0 0
  %824 = vmatpush1.bf16.msra.mxu0 %v806
  %825 = vmatprep.subr.bf16.mxu0 0
  %826 = vmatpush1.bf16.msra.mxu0 0
  %827 = vmatprep.subr.bf16.mxu0 0
  %828 = vmatpush1.bf16.msra.mxu0 0
  %829 = vmatprep.subr.bf16.mxu0 0
  %830 = vmatpush1.bf16.msra.mxu0 0
  %831 = vmatprep.subr.bf16.mxu0 0
  %832 = vmatpush1.bf16.msra.mxu0 0
  %833 = vmatprep.subr.bf16.mxu0 0
  %834 = vmatpush1.bf16.msra.mxu0 0
  %835 = vmatprep.subr.bf16.mxu0 0
  %836 = vmatpush1.bf16.msra.mxu0 0
  %837 = vmatprep.subr.bf16.mxu0 0
  %838 = vmatpush1.bf16.msra.mxu0 0
  %839 = vmatprep.subr.bf16.mxu0 0
  %840 = vmatpush1.bf16.msra.mxu0 0
  %841 = vmatprep.subr.bf16.mxu0 0
  %842 = vmatpush1.bf16.msra.mxu0 0
  %843 = vmatprep.subr.bf16.mxu0 0
  %844 = vmatpush1.bf16.msra.mxu0 0
  %845 = vmatprep.subr.bf16.mxu0 0
  %846 = vmatpush1.bf16.msra.mxu0 0
  %847 = vmatprep.subr.bf16.mxu0 0
  %848 = vmatpush1.bf16.msra.mxu0 0
  %849 = vmatprep.subr.bf16.mxu0 0
  %850 = vmatpush1.bf16.msra.mxu0 0
  %851 = vmatprep.subr.bf16.mxu0 0
  %852 = vmatpush1.bf16.msra.mxu0 0
  %853 = vmatprep.mubr.bf16.mxu0 0
  %854 = vmatmul.mubr.bf16.gmra.mrb[0].mxu0 %v810
  %v855 = vpop.f32.mrb[0].mxu0
  %v856 = vadd.f32 0.0, %v855
  %v857 = vpop.f32.mrb[0].mxu0
  %v858 = vpop.f32.mrb[0].mxu0
  %v859 = vadd.f32 0.0, %v858
  %v860 = vpop.f32.mrb[0].mxu0
  %861 = vmatprep.mubr.bf16.mxu0 0
  %862 = vmatmul.mubr.bf16.gmra.mrb[0].mxu0 %v813
  %v863 = vpop.f32.mrb[0].mxu0
  %v864 = vadd.f32 0.0, %v863
  %v865 = vpop.f32.mrb[0].mxu0
  %v866 = vpop.f32.mrb[0].mxu0
  %v867 = vadd.f32 0.0, %v866
  %v868 = vpop.f32.mrb[0].mxu0
  %869 = vmatprep.mubr.bf16.mxu0 0
  %870 = vmatmul.mubr.bf16.gmra.mrb[0].mxu0 %v816
  %v871 = vpop.f32.mrb[0].mxu0
  %v872 = vadd.f32 0.0, %v871
  %v873 = vpop.f32.mrb[0].mxu0
  %v874 = vpop.f32.mrb[0].mxu0
  %v875 = vadd.f32 0.0, %v874
  %v876 = vpop.f32.mrb[0].mxu0
  %877 = vmatprep.mubr.bf16.mxu0 0
  %878 = vmatmul.mubr.bf16.gmra.mrb[0].mxu0 %v819
  %v879 = vpop.f32.mrb[0].mxu0
  %v880 = vadd.f32 0.0, %v879
  %v881 = vpop.f32.mrb[0].mxu0
  %v882 = vpop.f32.mrb[0].mxu0
  %v883 = vpop.f32.mrb[0].mxu0
  %884 = vdwg.mxu0
  %v885 = vadd.f32 %v774, %v856
  %v886 = vadd.f32 %v775, %v859
  %v887 = vadd.f32 %v776, %v864
  %v888 = vadd.f32 %v777, %v867
  %v889 = vadd.f32 %v778, %v872
  %v890 = vadd.f32 %v779, %v875
  %v891 = vadd.f32 %v780, %v880
  %v892 = vld [vmem:[%s0 + $0x6] sm:$0xff]
  %v893 = vld [vmem:[%s0 + $0xe] sm:$0xff]
  %v894 = vld [vmem:[%s0 + $0x16] sm:$0xff]
  %v895 = vld [vmem:[%s0 + $0x1e] sm:$0xff]
  %v896 = vld [vmem:[%s0 + $0x26] sm:$0xff]
  %v897 = vld [vmem:[%s0 + $0x2e] sm:$0xff]
  %v898 = vld [vmem:[%s0 + $0x36] sm:$0x3]
  %v899 = vpack.c.bf16 %v893, %v892
  %v900 = vpack.c.bf16 %v895, %v894
  %v901 = vpack.c.bf16 %v897, %v896
  %v902 = vpack.c.bf16 %v898, %v898
  %s903 = scalar_lea.vmem %s1, 128
  %v904 = vld [vmem:[%s903] sm:$0xf]
  %v905 = vld [vmem:[%s903 + $0x4] sm:$0xf]
  %v906 = vld [vmem:[%s903 + $0x8] sm:$0xf]
  %v907 = vld [vmem:[%s903 + $0xc] sm:$0xf]
  %v912 = vunpack.c.l.b16 %v904
  %v913 = vunpack.c.l.b16 %v905
  %v914 = vunpack.c.l.b16 %v906
  %v915 = vunpack.c.l.b16 %v907
  %v916 = vpack.c.b16 %v913, %v912
  %v917 = vpack.c.b16 %v915, %v914
  %v921 = vsel %vm59, %v899, 0
  %v924 = vsel %vm59, %v900, 0
  %v927 = vsel %vm59, %v901, 0
  %v930 = vsel %vm59, %v902, 0
  %932 = vmatprep.subr.bf16.mxu0 0
  %933 = vmatpush1.bf16.msra.mxu0 %v916
  %934 = vmatprep.subr.bf16.mxu0 0
  %935 = vmatpush1.bf16.msra.mxu0 %v917
  %936 = vmatprep.subr.bf16.mxu0 0
  %937 = vmatpush1.bf16.msra.mxu0 0
  %938 = vmatprep.subr.bf16.mxu0 0
  %939 = vmatpush1.bf16.msra.mxu0 0
  %940 = vmatprep.subr.bf16.mxu0 0
  %941 = vmatpush1.bf16.msra.mxu0 0
  %942 = vmatprep.subr.bf16.mxu0 0
  %943 = vmatpush1.bf16.msra.mxu0 0
  %944 = vmatprep.subr.bf16.mxu0 0
  %945 = vmatpush1.bf16.msra.mxu0 0
  %946 = vmatprep.subr.bf16.mxu0 0
  %947 = vmatpush1.bf16.msra.mxu0 0
  %948 = vmatprep.subr.bf16.mxu0 0
  %949 = vmatpush1.bf16.msra.mxu0 0
  %950 = vmatprep.subr.bf16.mxu0 0
  %951 = vmatpush1.bf16.msra.mxu0 0
  %952 = vmatprep.subr.bf16.mxu0 0
  %953 = vmatpush1.bf16.msra.mxu0 0
  %954 = vmatprep.subr.bf16.mxu0 0
  %955 = vmatpush1.bf16.msra.mxu0 0
  %956 = vmatprep.subr.bf16.mxu0 0
  %957 = vmatpush1.bf16.msra.mxu0 0
  %958 = vmatprep.subr.bf16.mxu0 0
  %959 = vmatpush1.bf16.msra.mxu0 0
  %960 = vmatprep.subr.bf16.mxu0 0
  %961 = vmatpush1.bf16.msra.mxu0 0
  %962 = vmatprep.subr.bf16.mxu0 0
  %963 = vmatpush1.bf16.msra.mxu0 0
  %964 = vmatprep.mubr.bf16.mxu0 0
  %965 = vmatmul.mubr.bf16.gmra.mrb[0].mxu0 %v921
  %v966 = vpop.f32.mrb[0].mxu0
  %v967 = vadd.f32 0.0, %v966
  %v968 = vpop.f32.mrb[0].mxu0
  %v969 = vpop.f32.mrb[0].mxu0
  %v970 = vadd.f32 0.0, %v969
  %v971 = vpop.f32.mrb[0].mxu0
  %972 = vmatprep.mubr.bf16.mxu0 0
  %973 = vmatmul.mubr.bf16.gmra.mrb[0].mxu0 %v924
  %v974 = vpop.f32.mrb[0].mxu0
  %v975 = vadd.f32 0.0, %v974
  %v976 = vpop.f32.mrb[0].mxu0
  %v977 = vpop.f32.mrb[0].mxu0
  %v978 = vadd.f32 0.0, %v977
  %v979 = vpop.f32.mrb[0].mxu0
  %980 = vmatprep.mubr.bf16.mxu0 0
  %981 = vmatmul.mubr.bf16.gmra.mrb[0].mxu0 %v927
  %v982 = vpop.f32.mrb[0].mxu0
  %v983 = vadd.f32 0.0, %v982
  %v984 = vpop.f32.mrb[0].mxu0
  %v985 = vpop.f32.mrb[0].mxu0
  %v986 = vadd.f32 0.0, %v985
  %v987 = vpop.f32.mrb[0].mxu0
  %988 = vmatprep.mubr.bf16.mxu0 0
  %989 = vmatmul.mubr.bf16.gmra.mrb[0].mxu0 %v930
  %v990 = vpop.f32.mrb[0].mxu0
  %v991 = vadd.f32 0.0, %v990
  %v992 = vpop.f32.mrb[0].mxu0
  %v993 = vpop.f32.mrb[0].mxu0
  %v994 = vpop.f32.mrb[0].mxu0
  %995 = vdwg.mxu0
  %v996 = vadd.f32 %v885, %v967
  %v997 = vadd.f32 %v886, %v970
  %v998 = vadd.f32 %v887, %v975
  %v999 = vadd.f32 %v888, %v978
  %v1000 = vadd.f32 %v889, %v983
  %v1001 = vadd.f32 %v890, %v986
  %v1002 = vadd.f32 %v891, %v991
  %v1003 = vld [vmem:[%s2] sm:$0x1]
  %v1005 = vlaneseq
  %v1006 = vshrl.u32 %v1005, 7
  %v1007 = vsub.s32 0, %v1006
  %v1008 = vrot.slane %v1003, %v1007
  %v1010 = vadd.f32 %v996, %v1008
  %v1011 = vadd.f32 %v997, %v1008
  %v1012 = vadd.f32 %v998, %v1008
  %v1013 = vadd.f32 %v999, %v1008
  %v1014 = vadd.f32 %v1000, %v1008
  %v1015 = vadd.f32 %v1001, %v1008
  %v1016 = vadd.f32 %v1002, %v1008
  %v1017 = vmax.f32 %v1010, 0.0
  %v1018 = vmax.f32 %v1011, 0.0
  %v1019 = vmax.f32 %v1012, 0.0
  %v1020 = vmax.f32 %v1013, 0.0
  %v1021 = vmax.f32 %v1014, 0.0
  %v1022 = vmax.f32 %v1015, 0.0
  %v1023 = vmax.f32 %v1016, 0.0
  %vm1024 = vcmask 523264
  %1025 = vst.msk [vmem:[%s3] sm:$0xff] %vm1024, %v1017
  %1026 = vst.msk [vmem:[%s3 + $0x8] sm:$0xff] %vm1024, %v1018
  %1027 = vst.msk [vmem:[%s3 + $0x10] sm:$0xff] %vm1024, %v1019
  %1028 = vst.msk [vmem:[%s3 + $0x18] sm:$0xff] %vm1024, %v1020
  %1029 = vst.msk [vmem:[%s3 + $0x20] sm:$0xff] %vm1024, %v1021
  %1030 = vst.msk [vmem:[%s3 + $0x28] sm:$0xff] %vm1024, %v1022
  %vm1031 = vcmask 517120
  %1032 = vst.msk [vmem:[%s3 + $0x30] sm:$0x3] %vm1031, %v1023
  // Predicated region
  $region14: #{capsule_autoencoder_forward.7} parent=0 // pred_check
    _
  $region15: #{capsule_autoencoder_forward.7} parent=0 // pred_check_branch
    %1034 = sbr.rel (0) target = $region17
  $region16: #{capsule_autoencoder_forward.7} parent=0 // pred_region
    _
  $region17: #{capsule_autoencoder_forward.7} parent=0 // pred_fallthru
    _
  // Predicated region
  $region18: #{capsule_autoencoder_forward.7} parent=0 // pred_check
    _
  $region19: #{capsule_autoencoder_forward.7} parent=0 // pred_check_branch
    %1036 = sbr.rel (0) target = $region21
  $region20: #{capsule_autoencoder_forward.7} parent=0 // pred_region
    _
  $region21: #{capsule_autoencoder_forward.7} parent=0 // pred_fallthru
    _

// kernel: capsule_autoencoder_forward.8
$region0: #{capsule_autoencoder_forward.8}
  #allocation0 [shape = 'u32[]', space=smem, size = 0x4, offset = 0x4, fixed_abs, tag = 'smem constant byte address 0x4 - core index']
  #allocation1 [shape = 'u32[144,128]{1,0:T(1,128)}', space=vmem, size = 0x12000, scoped, tag = 'internal scratch']
  %s0 = inlined_call_operand.vmem [shape: f32[4,22,64], index: 0, kind: input, shape index: {}]
  %s1 = inlined_call_operand.vmem [shape: bf16[9,64,128], index: 1, kind: input, shape index: {}]
  %s2 = inlined_call_operand.vmem [shape: f32[1,128], index: 2, kind: input, shape index: {}]
  %s3 = inlined_call_operand.vmem [shape: f32[18,128], index: 3, kind: output, shape index: {}]
  %s4 = sld [smem:[#allocation0]]
  $region22: #{capsule_autoencoder_forward.8} parent=0
    _
  %s6 = ssub.s32 1, %s4
  %s7 = scalar_select 0, %s6, %s4
  // Predicated region
  $region2: #{capsule_autoencoder_forward.8} parent=0 // pred_check
    _
  $region3: #{capsule_autoencoder_forward.8} parent=0 // pred_check_branch
    %9 = sbr.rel (0) target = $region5
  $region4: #{capsule_autoencoder_forward.8} parent=0 // pred_region
    _
  $region5: #{capsule_autoencoder_forward.8} parent=0 // pred_fallthru
    _
  // Predicated region
  $region6: #{capsule_autoencoder_forward.8} parent=0 // pred_check
    _
  $region7: #{capsule_autoencoder_forward.8} parent=0 // pred_check_branch
    %11 = sbr.rel (0) target = $region9
  $region8: #{capsule_autoencoder_forward.8} parent=0 // pred_region
    _
  $region9: #{capsule_autoencoder_forward.8} parent=0 // pred_fallthru
    _
  // Predicated region
  $region10: #{capsule_autoencoder_forward.8} parent=0 // pred_check
    _
  $region11: #{capsule_autoencoder_forward.8} parent=0 // pred_check_branch
    %13 = sbr.rel (0) target = $region13
  $region12: #{capsule_autoencoder_forward.8} parent=0 // pred_region
    _
  $region13: #{capsule_autoencoder_forward.8} parent=0 // pred_fallthru
    _
  %v15 = vld [vmem:[%s0] sm:$0xff]
  %v16 = vld [vmem:[%s0 + $0x8] sm:$0xff]
  %v17 = vld [vmem:[%s0 + $0x10] sm:$0x3]
  %v18 = vpack.c.bf16 %v16, %v15
  %v19 = vpack.c.bf16 %v17, %v17
  %v20 = vld [vmem:[%s1] sm:$0xf]
  %v21 = vld [vmem:[%s1 + $0x4] sm:$0xf]
  %v22 = vld [vmem:[%s1 + $0x8] sm:$0xf]
  %v23 = vld [vmem:[%s1 + $0xc] sm:$0xf]
  %v24 = vld [vmem:[%s1 + $0x10] sm:$0xf]
  %v25 = vld [vmem:[%s1 + $0x14] sm:$0xf]
  %v26 = vld [vmem:[%s1 + $0x18] sm:$0xf]
  %v27 = vld [vmem:[%s1 + $0x1c] sm:$0xf]
  %s28 = scalar_lea.vmem %s0, 24
  %v29 = vld [vmem:[%s28] sm:$0xff]
  %v30 = vld [vmem:[%s28 + $0x8] sm:$0xff]
  %v31 = vld [vmem:[%s28 + $0x10] sm:$0x3]
  %v32 = vpack.c.bf16 %v30, %v29
  %v33 = vpack.c.bf16 %v31, %v31
  %s34 = scalar_lea.vmem %s1, 32
  %v35 = vld [vmem:[%s34] sm:$0xf]
  %v36 = vld [vmem:[%s34 + $0x4] sm:$0xf]
  %v37 = vld [vmem:[%s34 + $0x8] sm:$0xf]
  %v38 = vld [vmem:[%s34 + $0xc] sm:$0xf]
  %v39 = vld [vmem:[%s34 + $0x10] sm:$0xf]
  %v40 = vld [vmem:[%s34 + $0x14] sm:$0xf]
  %v41 = vld [vmem:[%s34 + $0x18] sm:$0xf]
  %v42 = vld [vmem:[%s34 + $0x1c] sm:$0xf]
  %v51 = vunpack.c.l.b16 %v35
  %v52 = vunpack.c.l.b16 %v36
  %v53 = vunpack.c.l.b16 %v37
  %v54 = vunpack.c.l.b16 %v38
  %v55 = vunpack.c.l.b16 %v39
  %v56 = vunpack.c.l.b16 %v40
  %v57 = vunpack.c.l.b16 %v41
  %v58 = vunpack.c.l.b16 %v42
  %v59 = vpack.c.b16 %v52, %v51
  %v60 = vpack.c.b16 %v54, %v53
  %v61 = vpack.c.b16 %v56, %v55
  %v62 = vpack.c.b16 %v58, %v57
  %vm67 = vcmask 523264
  %v69 = vsel %vm67, %v32, 0
  %v72 = vsel %vm67, %v33, 0
  %74 = vmatprep.subr.bf16.mxu0 0
  %75 = vmatpush1.bf16.msra.mxu0 %v59
  %76 = vmatprep.subr.bf16.mxu0 0
  %77 = vmatpush1.bf16.msra.mxu0 %v60
  %78 = vmatprep.subr.bf16.mxu0 0
  %79 = vmatpush1.bf16.msra.mxu0 %v61
  %80 = vmatprep.subr.bf16.mxu0 0
  %81 = vmatpush1.bf16.msra.mxu0 %v62
  %82 = vmatprep.subr.bf16.mxu0 0
  %83 = vmatpush1.bf16.msra.mxu0 0
  %84 = vmatprep.subr.bf16.mxu0 0
  %85 = vmatpush1.bf16.msra.mxu0 0
  %86 = vmatprep.subr.bf16.mxu0 0
  %87 = vmatpush1.bf16.msra.mxu0 0
  %88 = vmatprep.subr.bf16.mxu0 0
  %89 = vmatpush1.bf16.msra.mxu0 0
  %90 = vmatprep.subr.bf16.mxu0 0
  %91 = vmatpush1.bf16.msra.mxu0 0
  %92 = vmatprep.subr.bf16.mxu0 0
  %93 = vmatpush1.bf16.msra.mxu0 0
  %94 = vmatprep.subr.bf16.mxu0 0
  %95 = vmatpush1.bf16.msra.mxu0 0
  %96 = vmatprep.subr.bf16.mxu0 0
  %97 = vmatpush1.bf16.msra.mxu0 0
  %98 = vmatprep.subr.bf16.mxu0 0
  %99 = vmatpush1.bf16.msra.mxu0 0
  %100 = vmatprep.subr.bf16.mxu0 0
  %101 = vmatpush1.bf16.msra.mxu0 0
  %102 = vmatprep.subr.bf16.mxu0 0
  %103 = vmatpush1.bf16.msra.mxu0 0
  %104 = vmatprep.subr.bf16.mxu0 0
  %105 = vmatpush1.bf16.msra.mxu0 0
  %106 = vmatprep.mubr.bf16.mxu0 0
  %107 = vmatmul.mubr.bf16.gmra.mrb[0].mxu0 %v69
  %v108 = vpop.f32.mrb[0].mxu0
  %v109 = vadd.f32 0.0, %v108
  %v110 = vpop.f32.mrb[0].mxu0
  %v111 = vpop.f32.mrb[0].mxu0
  %v112 = vadd.f32 0.0, %v111
  %v113 = vpop.f32.mrb[0].mxu0
  %114 = vmatprep.mubr.bf16.mxu0 0
  %115 = vmatmul.mubr.bf16.gmra.mrb[0].mxu0 %v72
  %v116 = vpop.f32.mrb[0].mxu0
  %v117 = vadd.f32 0.0, %v116
  %v118 = vpop.f32.mrb[0].mxu0
  %v119 = vpop.f32.mrb[0].mxu0
  %v120 = vpop.f32.mrb[0].mxu0
  %121 = vdwg.mxu0
  %v130 = vunpack.c.l.b16 %v20
  %v131 = vunpack.c.l.b16 %v21
  %v132 = vunpack.c.l.b16 %v22
  %v133 = vunpack.c.l.b16 %v23
  %v134 = vunpack.c.l.b16 %v24
  %v135 = vunpack.c.l.b16 %v25
  %v136 = vunpack.c.l.b16 %v26
  %v137 = vunpack.c.l.b16 %v27
  %v138 = vpack.c.b16 %v131, %v130
  %v139 = vpack.c.b16 %v133, %v132
  %v140 = vpack.c.b16 %v135, %v134
  %v141 = vpack.c.b16 %v137, %v136
  %v147 = vsel %vm67, %v18, 0
  %v150 = vsel %vm67, %v19, 0
  %152 = vmatprep.subr.bf16.mxu0 0
  %153 = vmatpush1.bf16.msra.mxu0 %v138
  %154 = vmatprep.subr.bf16.mxu0 0
  %155 = vmatpush1.bf16.msra.mxu0 %v139
  %156 = vmatprep.subr.bf16.mxu0 0
  %157 = vmatpush1.bf16.msra.mxu0 %v140
  %158 = vmatprep.subr.bf16.mxu0 0
  %159 = vmatpush1.bf16.msra.mxu0 %v141
  %160 = vmatprep.subr.bf16.mxu0 0
  %161 = vmatpush1.bf16.msra.mxu0 0
  %162 = vmatprep.subr.bf16.mxu0 0
  %163 = vmatpush1.bf16.msra.mxu0 0
  %164 = vmatprep.subr.bf16.mxu0 0
  %165 = vmatpush1.bf16.msra.mxu0 0
  %166 = vmatprep.subr.bf16.mxu0 0
  %167 = vmatpush1.bf16.msra.mxu0 0
  %168 = vmatprep.subr.bf16.mxu0 0
  %169 = vmatpush1.bf16.msra.mxu0 0
  %170 = vmatprep.subr.bf16.mxu0 0
  %171 = vmatpush1.bf16.msra.mxu0 0
  %172 = vmatprep.subr.bf16.mxu0 0
  %173 = vmatpush1.bf16.msra.mxu0 0
  %174 = vmatprep.subr.bf16.mxu0 0
  %175 = vmatpush1.bf16.msra.mxu0 0
  %176 = vmatprep.subr.bf16.mxu0 0
  %177 = vmatpush1.bf16.msra.mxu0 0
  %178 = vmatprep.subr.bf16.mxu0 0
  %179 = vmatpush1.bf16.msra.mxu0 0
  %180 = vmatprep.subr.bf16.mxu0 0
  %181 = vmatpush1.bf16.msra.mxu0 0
  %182 = vmatprep.subr.bf16.mxu0 0
  %183 = vmatpush1.bf16.msra.mxu0 0
  %184 = vmatprep.mubr.bf16.mxu0 0
  %185 = vmatmul.mubr.bf16.gmra.mrb[0].mxu0 %v147
  %v186 = vpop.f32.mrb[0].mxu0
  %v187 = vadd.f32 %v109, %v186
  %v188 = vpop.f32.mrb[0].mxu0
  %v189 = vpop.f32.mrb[0].mxu0
  %v190 = vadd.f32 %v112, %v189
  %v191 = vpop.f32.mrb[0].mxu0
  %192 = vmatprep.mubr.bf16.mxu0 0
  %193 = vmatmul.mubr.bf16.gmra.mrb[0].mxu0 %v150
  %v194 = vpop.f32.mrb[0].mxu0
  %v195 = vadd.f32 %v117, %v194
  %v196 = vpop.f32.mrb[0].mxu0
  %v197 = vpop.f32.mrb[0].mxu0
  %v198 = vpop.f32.mrb[0].mxu0
  %199 = vdwg.mxu0
  %v200 = vld [vmem:[%s0 + $0x1] sm:$0xff]
  %v201 = vld [vmem:[%s0 + $0x9] sm:$0xff]
  %v202 = vld [vmem:[%s0 + $0x11] sm:$0x3]
  %v203 = vpack.c.bf16 %v201, %v200
  %v204 = vpack.c.bf16 %v202, %v202
  %s205 = scalar_lea.vmem %s1, 64
  %v206 = vld [vmem:[%s205] sm:$0xf]
  %v207 = vld [vmem:[%s205 + $0x4] sm:$0xf]
  %v208 = vld [vmem:[%s205 + $0x8] sm:$0xf]
  %v209 = vld [vmem:[%s205 + $0xc] sm:$0xf]
  %v210 = vld [vmem:[%s205 + $0x10] sm:$0xf]
  %v211 = vld [vmem:[%s205 + $0x14] sm:$0xf]
  %v212 = vld [vmem:[%s205 + $0x18] sm:$0xf]
  %v213 = vld [vmem:[%s205 + $0x1c] sm:$0xf]
  %v222 = vunpack.c.l.b16 %v206
  %v223 = vunpack.c.l.b16 %v207
  %v224 = vunpack.c.l.b16 %v208
  %v225 = vunpack.c.l.b16 %v209
  %v226 = vunpack.c.l.b16 %v210
  %v227 = vunpack.c.l.b16 %v211
  %v228 = vunpack.c.l.b16 %v212
  %v229 = vunpack.c.l.b16 %v213
  %v230 = vpack.c.b16 %v223, %v222
  %v231 = vpack.c.b16 %v225, %v224
  %v232 = vpack.c.b16 %v227, %v226
  %v233 = vpack.c.b16 %v229, %v228
  %v239 = vsel %vm67, %v203, 0
  %v242 = vsel %vm67, %v204, 0
  %244 = vmatprep.subr.bf16.mxu0 0
  %245 = vmatpush1.bf16.msra.mxu0 %v230
  %246 = vmatprep.subr.bf16.mxu0 0
  %247 = vmatpush1.bf16.msra.mxu0 %v231
  %248 = vmatprep.subr.bf16.mxu0 0
  %249 = vmatpush1.bf16.msra.mxu0 %v232
  %250 = vmatprep.subr.bf16.mxu0 0
  %251 = vmatpush1.bf16.msra.mxu0 %v233
  %252 = vmatprep.subr.bf16.mxu0 0
  %253 = vmatpush1.bf16.msra.mxu0 0
  %254 = vmatprep.subr.bf16.mxu0 0
  %255 = vmatpush1.bf16.msra.mxu0 0
  %256 = vmatprep.subr.bf16.mxu0 0
  %257 = vmatpush1.bf16.msra.mxu0 0
  %258 = vmatprep.subr.bf16.mxu0 0
  %259 = vmatpush1.bf16.msra.mxu0 0
  %260 = vmatprep.subr.bf16.mxu0 0
  %261 = vmatpush1.bf16.msra.mxu0 0
  %262 = vmatprep.subr.bf16.mxu0 0
  %263 = vmatpush1.bf16.msra.mxu0 0
  %264 = vmatprep.subr.bf16.mxu0 0
  %265 = vmatpush1.bf16.msra.mxu0 0
  %266 = vmatprep.subr.bf16.mxu0 0
  %267 = vmatpush1.bf16.msra.mxu0 0
  %268 = vmatprep.subr.bf16.mxu0 0
  %269 = vmatpush1.bf16.msra.mxu0 0
  %270 = vmatprep.subr.bf16.mxu0 0
  %271 = vmatpush1.bf16.msra.mxu0 0
  %272 = vmatprep.subr.bf16.mxu0 0
  %273 = vmatpush1.bf16.msra.mxu0 0
  %274 = vmatprep.subr.bf16.mxu0 0
  %275 = vmatpush1.bf16.msra.mxu0 0
  %276 = vmatprep.mubr.bf16.mxu0 0
  %277 = vmatmul.mubr.bf16.gmra.mrb[0].mxu0 %v239
  %v278 = vpop.f32.mrb[0].mxu0
  %v279 = vadd.f32 0.0, %v278
  %v280 = vpop.f32.mrb[0].mxu0
  %v281 = vpop.f32.mrb[0].mxu0
  %v282 = vadd.f32 0.0, %v281
  %v283 = vpop.f32.mrb[0].mxu0
  %284 = vmatprep.mubr.bf16.mxu0 0
  %285 = vmatmul.mubr.bf16.gmra.mrb[0].mxu0 %v242
  %v286 = vpop.f32.mrb[0].mxu0
  %v287 = vadd.f32 0.0, %v286
  %v288 = vpop.f32.mrb[0].mxu0
  %v289 = vpop.f32.mrb[0].mxu0
  %v290 = vpop.f32.mrb[0].mxu0
  %291 = vdwg.mxu0
  %v292 = vadd.f32 %v187, %v279
  %v293 = vadd.f32 %v190, %v282
  %v294 = vadd.f32 %v195, %v287
  %s295 = scalar_lea.vmem %s0, 48
  %v296 = vld [vmem:[%s295] sm:$0xff]
  %v297 = vld [vmem:[%s295 + $0x8] sm:$0xff]
  %v298 = vld [vmem:[%s295 + $0x10] sm:$0x3]
  %v299 = vpack.c.bf16 %v297, %v296
  %v300 = vpack.c.bf16 %v298, %v298
  %s301 = scalar_lea.vmem %s1, 96
  %v302 = vld [vmem:[%s301] sm:$0xf]
  %v303 = vld [vmem:[%s301 + $0x4] sm:$0xf]
  %v304 = vld [vmem:[%s301 + $0x8] sm:$0xf]
  %v305 = vld [vmem:[%s301 + $0xc] sm:$0xf]
  %v306 = vld [vmem:[%s301 + $0x10] sm:$0xf]
  %v307 = vld [vmem:[%s301 + $0x14] sm:$0xf]
  %v308 = vld [vmem:[%s301 + $0x18] sm:$0xf]
  %v309 = vld [vmem:[%s301 + $0x1c] sm:$0xf]
  %v318 = vunpack.c.l.b16 %v302
  %v319 = vunpack.c.l.b16 %v303
  %v320 = vunpack.c.l.b16 %v304
  %v321 = vunpack.c.l.b16 %v305
  %v322 = vunpack.c.l.b16 %v306
  %v323 = vunpack.c.l.b16 %v307
  %v324 = vunpack.c.l.b16 %v308
  %v325 = vunpack.c.l.b16 %v309
  %v326 = vpack.c.b16 %v319, %v318
  %v327 = vpack.c.b16 %v321, %v320
  %v328 = vpack.c.b16 %v323, %v322
  %v329 = vpack.c.b16 %v325, %v324
  %v335 = vsel %vm67, %v299, 0
  %v338 = vsel %vm67, %v300, 0
  %340 = vmatprep.subr.bf16.mxu0 0
  %341 = vmatpush1.bf16.msra.mxu0 %v326
  %342 = vmatprep.subr.bf16.mxu0 0
  %343 = vmatpush1.bf16.msra.mxu0 %v327
  %344 = vmatprep.subr.bf16.mxu0 0
  %345 = vmatpush1.bf16.msra.mxu0 %v328
  %346 = vmatprep.subr.bf16.mxu0 0
  %347 = vmatpush1.bf16.msra.mxu0 %v329
  %348 = vmatprep.subr.bf16.mxu0 0
  %349 = vmatpush1.bf16.msra.mxu0 0
  %350 = vmatprep.subr.bf16.mxu0 0
  %351 = vmatpush1.bf16.msra.mxu0 0
  %352 = vmatprep.subr.bf16.mxu0 0
  %353 = vmatpush1.bf16.msra.mxu0 0
  %354 = vmatprep.subr.bf16.mxu0 0
  %355 = vmatpush1.bf16.msra.mxu0 0
  %356 = vmatprep.subr.bf16.mxu0 0
  %357 = vmatpush1.bf16.msra.mxu0 0
  %358 = vmatprep.subr.bf16.mxu0 0
  %359 = vmatpush1.bf16.msra.mxu0 0
  %360 = vmatprep.subr.bf16.mxu0 0
  %361 = vmatpush1.bf16.msra.mxu0 0
  %362 = vmatprep.subr.bf16.mxu0 0
  %363 = vmatpush1.bf16.msra.mxu0 0
  %364 = vmatprep.subr.bf16.mxu0 0
  %365 = vmatpush1.bf16.msra.mxu0 0
  %366 = vmatprep.subr.bf16.mxu0 0
  %367 = vmatpush1.bf16.msra.mxu0 0
  %368 = vmatprep.subr.bf16.mxu0 0
  %369 = vmatpush1.bf16.msra.mxu0 0
  %370 = vmatprep.subr.bf16.mxu0 0
  %371 = vmatpush1.bf16.msra.mxu0 0
  %372 = vmatprep.mubr.bf16.mxu0 0
  %373 = vmatmul.mubr.bf16.gmra.mrb[0].mxu0 %v335
  %v374 = vpop.f32.mrb[0].mxu0
  %v375 = vadd.f32 0.0, %v374
  %v376 = vpop.f32.mrb[0].mxu0
  %v377 = vpop.f32.mrb[0].mxu0
  %v378 = vadd.f32 0.0, %v377
  %v379 = vpop.f32.mrb[0].mxu0
  %380 = vmatprep.mubr.bf16.mxu0 0
  %381 = vmatmul.mubr.bf16.gmra.mrb[0].mxu0 %v338
  %v382 = vpop.f32.mrb[0].mxu0
  %v383 = vadd.f32 0.0, %v382
  %v384 = vpop.f32.mrb[0].mxu0
  %v385 = vpop.f32.mrb[0].mxu0
  %v386 = vpop.f32.mrb[0].mxu0
  %387 = vdwg.mxu0
  %v388 = vadd.f32 %v292, %v375
  %v389 = vadd.f32 %v293, %v378
  %v390 = vadd.f32 %v294, %v383
  %s391 = scalar_lea.vmem %s0, 72
  %v392 = vld [vmem:[%s391] sm:$0xff]
  %v393 = vld [vmem:[%s391 + $0x8] sm:$0xff]
  %v394 = vld [vmem:[%s391 + $0x10] sm:$0x3]
  %v395 = vpack.c.bf16 %v393, %v392
  %v396 = vpack.c.bf16 %v394, %v394
  %s397 = scalar_lea.vmem %s1, 128
  %v398 = vld [vmem:[%s397] sm:$0xf]
  %v399 = vld [vmem:[%s397 + $0x4] sm:$0xf]
  %v400 = vld [vmem:[%s397 + $0x8] sm:$0xf]
  %v401 = vld [vmem:[%s397 + $0xc] sm:$0xf]
  %v402 = vld [vmem:[%s397 + $0x10] sm:$0xf]
  %v403 = vld [vmem:[%s397 + $0x14] sm:$0xf]
  %v404 = vld [vmem:[%s397 + $0x18] sm:$0xf]
  %v405 = vld [vmem:[%s397 + $0x1c] sm:$0xf]
  %v414 = vunpack.c.l.b16 %v398
  %v415 = vunpack.c.l.b16 %v399
  %v416 = vunpack.c.l.b16 %v400
  %v417 = vunpack.c.l.b16 %v401
  %v418 = vunpack.c.l.b16 %v402
  %v419 = vunpack.c.l.b16 %v403
  %v420 = vunpack.c.l.b16 %v404
  %v421 = vunpack.c.l.b16 %v405
  %v422 = vpack.c.b16 %v415, %v414
  %v423 = vpack.c.b16 %v417, %v416
  %v424 = vpack.c.b16 %v419, %v418
  %v425 = vpack.c.b16 %v421, %v420
  %v431 = vsel %vm67, %v395, 0
  %v434 = vsel %vm67, %v396, 0
  %436 = vmatprep.subr.bf16.mxu0 0
  %437 = vmatpush1.bf16.msra.mxu0 %v422
  %438 = vmatprep.subr.bf16.mxu0 0
  %439 = vmatpush1.bf16.msra.mxu0 %v423
  %440 = vmatprep.subr.bf16.mxu0 0
  %441 = vmatpush1.bf16.msra.mxu0 %v424
  %442 = vmatprep.subr.bf16.mxu0 0
  %443 = vmatpush1.bf16.msra.mxu0 %v425
  %444 = vmatprep.subr.bf16.mxu0 0
  %445 = vmatpush1.bf16.msra.mxu0 0
  %446 = vmatprep.subr.bf16.mxu0 0
  %447 = vmatpush1.bf16.msra.mxu0 0
  %448 = vmatprep.subr.bf16.mxu0 0
  %449 = vmatpush1.bf16.msra.mxu0 0
  %450 = vmatprep.subr.bf16.mxu0 0
  %451 = vmatpush1.bf16.msra.mxu0 0
  %452 = vmatprep.subr.bf16.mxu0 0
  %453 = vmatpush1.bf16.msra.mxu0 0
  %454 = vmatprep.subr.bf16.mxu0 0
  %455 = vmatpush1.bf16.msra.mxu0 0
  %456 = vmatprep.subr.bf16.mxu0 0
  %457 = vmatpush1.bf16.msra.mxu0 0
  %458 = vmatprep.subr.bf16.mxu0 0
  %459 = vmatpush1.bf16.msra.mxu0 0
  %460 = vmatprep.subr.bf16.mxu0 0
  %461 = vmatpush1.bf16.msra.mxu0 0
  %462 = vmatprep.subr.bf16.mxu0 0
  %463 = vmatpush1.bf16.msra.mxu0 0
  %464 = vmatprep.subr.bf16.mxu0 0
  %465 = vmatpush1.bf16.msra.mxu0 0
  %466 = vmatprep.subr.bf16.mxu0 0
  %467 = vmatpush1.bf16.msra.mxu0 0
  %468 = vmatprep.mubr.bf16.mxu0 0
  %469 = vmatmul.mubr.bf16.gmra.mrb[0].mxu0 %v431
  %v470 = vpop.f32.mrb[0].mxu0
  %v471 = vadd.f32 0.0, %v470
  %v472 = vpop.f32.mrb[0].mxu0
  %v473 = vpop.f32.mrb[0].mxu0
  %v474 = vadd.f32 0.0, %v473
  %v475 = vpop.f32.mrb[0].mxu0
  %476 = vmatprep.mubr.bf16.mxu0 0
  %477 = vmatmul.mubr.bf16.gmra.mrb[0].mxu0 %v434
  %v478 = vpop.f32.mrb[0].mxu0
  %v479 = vadd.f32 0.0, %v478
  %v480 = vpop.f32.mrb[0].mxu0
  %v481 = vpop.f32.mrb[0].mxu0
  %v482 = vpop.f32.mrb[0].mxu0
  %483 = vdwg.mxu0
  %v484 = vadd.f32 %v388, %v471
  %v485 = vadd.f32 %v389, %v474
  %v486 = vadd.f32 %v390, %v479
  %v487 = vld [vmem:[%s295 + $0x1] sm:$0xff]
  %v488 = vld [vmem:[%s295 + $0x9] sm:$0xff]
  %v489 = vld [vmem:[%s295 + $0x11] sm:$0x3]
  %v490 = vpack.c.bf16 %v488, %v487
  %v491 = vpack.c.bf16 %v489, %v489
  %s492 = scalar_lea.vmem %s1, 160
  %v493 = vld [vmem:[%s492] sm:$0xf]
  %v494 = vld [vmem:[%s492 + $0x4] sm:$0xf]
  %v495 = vld [vmem:[%s492 + $0x8] sm:$0xf]
  %v496 = vld [vmem:[%s492 + $0xc] sm:$0xf]
  %v497 = vld [vmem:[%s492 + $0x10] sm:$0xf]
  %v498 = vld [vmem:[%s492 + $0x14] sm:$0xf]
  %v499 = vld [vmem:[%s492 + $0x18] sm:$0xf]
  %v500 = vld [vmem:[%s492 + $0x1c] sm:$0xf]
  %v509 = vunpack.c.l.b16 %v493
  %v510 = vunpack.c.l.b16 %v494
  %v511 = vunpack.c.l.b16 %v495
  %v512 = vunpack.c.l.b16 %v496
  %v513 = vunpack.c.l.b16 %v497
  %v514 = vunpack.c.l.b16 %v498
  %v515 = vunpack.c.l.b16 %v499
  %v516 = vunpack.c.l.b16 %v500
  %v517 = vpack.c.b16 %v510, %v509
  %v518 = vpack.c.b16 %v512, %v511
  %v519 = vpack.c.b16 %v514, %v513
  %v520 = vpack.c.b16 %v516, %v515
  %v526 = vsel %vm67, %v490, 0
  %v529 = vsel %vm67, %v491, 0
  %531 = vmatprep.subr.bf16.mxu0 0
  %532 = vmatpush1.bf16.msra.mxu0 %v517
  %533 = vmatprep.subr.bf16.mxu0 0
  %534 = vmatpush1.bf16.msra.mxu0 %v518
  %535 = vmatprep.subr.bf16.mxu0 0
  %536 = vmatpush1.bf16.msra.mxu0 %v519
  %537 = vmatprep.subr.bf16.mxu0 0
  %538 = vmatpush1.bf16.msra.mxu0 %v520
  %539 = vmatprep.subr.bf16.mxu0 0
  %540 = vmatpush1.bf16.msra.mxu0 0
  %541 = vmatprep.subr.bf16.mxu0 0
  %542 = vmatpush1.bf16.msra.mxu0 0
  %543 = vmatprep.subr.bf16.mxu0 0
  %544 = vmatpush1.bf16.msra.mxu0 0
  %545 = vmatprep.subr.bf16.mxu0 0
  %546 = vmatpush1.bf16.msra.mxu0 0
  %547 = vmatprep.subr.bf16.mxu0 0
  %548 = vmatpush1.bf16.msra.mxu0 0
  %549 = vmatprep.subr.bf16.mxu0 0
  %550 = vmatpush1.bf16.msra.mxu0 0
  %551 = vmatprep.subr.bf16.mxu0 0
  %552 = vmatpush1.bf16.msra.mxu0 0
  %553 = vmatprep.subr.bf16.mxu0 0
  %554 = vmatpush1.bf16.msra.mxu0 0
  %555 = vmatprep.subr.bf16.mxu0 0
  %556 = vmatpush1.bf16.msra.mxu0 0
  %557 = vmatprep.subr.bf16.mxu0 0
  %558 = vmatpush1.bf16.msra.mxu0 0
  %559 = vmatprep.subr.bf16.mxu0 0
  %560 = vmatpush1.bf16.msra.mxu0 0
  %561 = vmatprep.subr.bf16.mxu0 0
  %562 = vmatpush1.bf16.msra.mxu0 0
  %563 = vmatprep.mubr.bf16.mxu0 0
  %564 = vmatmul.mubr.bf16.gmra.mrb[0].mxu0 %v526
  %v565 = vpop.f32.mrb[0].mxu0
  %v566 = vadd.f32 0.0, %v565
  %v567 = vpop.f32.mrb[0].mxu0
  %v568 = vpop.f32.mrb[0].mxu0
  %v569 = vadd.f32 0.0, %v568
  %v570 = vpop.f32.mrb[0].mxu0
  %571 = vmatprep.mubr.bf16.mxu0 0
  %572 = vmatmul.mubr.bf16.gmra.mrb[0].mxu0 %v529
  %v573 = vpop.f32.mrb[0].mxu0
  %v574 = vadd.f32 0.0, %v573
  %v575 = vpop.f32.mrb[0].mxu0
  %v576 = vpop.f32.mrb[0].mxu0
  %v577 = vpop.f32.mrb[0].mxu0
  %578 = vdwg.mxu0
  %v579 = vadd.f32 %v484, %v566
  %v580 = vadd.f32 %v485, %v569
  %v581 = vadd.f32 %v486, %v574
  %v582 = vld [vmem:[%s0 + $0x3] sm:$0xff]
  %v583 = vld [vmem:[%s0 + $0xb] sm:$0xff]
  %v584 = vld [vmem:[%s0 + $0x13] sm:$0x3]
  %v585 = vpack.c.bf16 %v583, %v582
  %v586 = vpack.c.bf16 %v584, %v584
  %s587 = scalar_lea.vmem %s1, 192
  %v588 = vld [vmem:[%s587] sm:$0xf]
  %v589 = vld [vmem:[%s587 + $0x4] sm:$0xf]
  %v590 = vld [vmem:[%s587 + $0x8] sm:$0xf]
  %v591 = vld [vmem:[%s587 + $0xc] sm:$0xf]
  %v592 = vld [vmem:[%s587 + $0x10] sm:$0xf]
  %v593 = vld [vmem:[%s587 + $0x14] sm:$0xf]
  %v594 = vld [vmem:[%s587 + $0x18] sm:$0xf]
  %v595 = vld [vmem:[%s587 + $0x1c] sm:$0xf]
  %v604 = vunpack.c.l.b16 %v588
  %v605 = vunpack.c.l.b16 %v589
  %v606 = vunpack.c.l.b16 %v590
  %v607 = vunpack.c.l.b16 %v591
  %v608 = vunpack.c.l.b16 %v592
  %v609 = vunpack.c.l.b16 %v593
  %v610 = vunpack.c.l.b16 %v594
  %v611 = vunpack.c.l.b16 %v595
  %v612 = vpack.c.b16 %v605, %v604
  %v613 = vpack.c.b16 %v607, %v606
  %v614 = vpack.c.b16 %v609, %v608
  %v615 = vpack.c.b16 %v611, %v610
  %v621 = vsel %vm67, %v585, 0
  %v624 = vsel %vm67, %v586, 0
  %626 = vmatprep.subr.bf16.mxu0 0
  %627 = vmatpush1.bf16.msra.mxu0 %v612
  %628 = vmatprep.subr.bf16.mxu0 0
  %629 = vmatpush1.bf16.msra.mxu0 %v613
  %630 = vmatprep.subr.bf16.mxu0 0
  %631 = vmatpush1.bf16.msra.mxu0 %v614
  %632 = vmatprep.subr.bf16.mxu0 0
  %633 = vmatpush1.bf16.msra.mxu0 %v615
  %634 = vmatprep.subr.bf16.mxu0 0
  %635 = vmatpush1.bf16.msra.mxu0 0
  %636 = vmatprep.subr.bf16.mxu0 0
  %637 = vmatpush1.bf16.msra.mxu0 0
  %638 = vmatprep.subr.bf16.mxu0 0
  %639 = vmatpush1.bf16.msra.mxu0 0
  %640 = vmatprep.subr.bf16.mxu0 0
  %641 = vmatpush1.bf16.msra.mxu0 0
  %642 = vmatprep.subr.bf16.mxu0 0
  %643 = vmatpush1.bf16.msra.mxu0 0
  %644 = vmatprep.subr.bf16.mxu0 0
  %645 = vmatpush1.bf16.msra.mxu0 0
  %646 = vmatprep.subr.bf16.mxu0 0
  %647 = vmatpush1.bf16.msra.mxu0 0
  %648 = vmatprep.subr.bf16.mxu0 0
  %649 = vmatpush1.bf16.msra.mxu0 0
  %650 = vmatprep.subr.bf16.mxu0 0
  %651 = vmatpush1.bf16.msra.mxu0 0
  %652 = vmatprep.subr.bf16.mxu0 0
  %653 = vmatpush1.bf16.msra.mxu0 0
  %654 = vmatprep.subr.bf16.mxu0 0
  %655 = vmatpush1.bf16.msra.mxu0 0
  %656 = vmatprep.subr.bf16.mxu0 0
  %657 = vmatpush1.bf16.msra.mxu0 0
  %658 = vmatprep.mubr.bf16.mxu0 0
  %659 = vmatmul.mubr.bf16.gmra.mrb[0].mxu0 %v621
  %v660 = vpop.f32.mrb[0].mxu0
  %v661 = vadd.f32 0.0, %v660
  %v662 = vpop.f32.mrb[0].mxu0
  %v663 = vpop.f32.mrb[0].mxu0
  %v664 = vadd.f32 0.0, %v663
  %v665 = vpop.f32.mrb[0].mxu0
  %666 = vmatprep.mubr.bf16.mxu0 0
  %667 = vmatmul.mubr.bf16.gmra.mrb[0].mxu0 %v624
  %v668 = vpop.f32.mrb[0].mxu0
  %v669 = vadd.f32 0.0, %v668
  %v670 = vpop.f32.mrb[0].mxu0
  %v671 = vpop.f32.mrb[0].mxu0
  %v672 = vpop.f32.mrb[0].mxu0
  %673 = vdwg.mxu0
  %v674 = vadd.f32 %v579, %v661
  %v675 = vadd.f32 %v580, %v664
  %v676 = vadd.f32 %v581, %v669
  %v677 = vld [vmem:[%s28 + $0x3] sm:$0xff]
  %v678 = vld [vmem:[%s28 + $0xb] sm:$0xff]
  %v679 = vld [vmem:[%s28 + $0x13] sm:$0x3]
  %v680 = vpack.c.bf16 %v678, %v677
  %v681 = vpack.c.bf16 %v679, %v679
  %s682 = scalar_lea.vmem %s1, 224
  %v683 = vld [vmem:[%s682] sm:$0xf]
  %v684 = vld [vmem:[%s682 + $0x4] sm:$0xf]
  %v685 = vld [vmem:[%s682 + $0x8] sm:$0xf]
  %v686 = vld [vmem:[%s682 + $0xc] sm:$0xf]
  %v687 = vld [vmem:[%s682 + $0x10] sm:$0xf]
  %v688 = vld [vmem:[%s682 + $0x14] sm:$0xf]
  %v689 = vld [vmem:[%s682 + $0x18] sm:$0xf]
  %v690 = vld [vmem:[%s682 + $0x1c] sm:$0xf]
  %v699 = vunpack.c.l.b16 %v683
  %v700 = vunpack.c.l.b16 %v684
  %v701 = vunpack.c.l.b16 %v685
  %v702 = vunpack.c.l.b16 %v686
  %v703 = vunpack.c.l.b16 %v687
  %v704 = vunpack.c.l.b16 %v688
  %v705 = vunpack.c.l.b16 %v689
  %v706 = vunpack.c.l.b16 %v690
  %v707 = vpack.c.b16 %v700, %v699
  %v708 = vpack.c.b16 %v702, %v701
  %v709 = vpack.c.b16 %v704, %v703
  %v710 = vpack.c.b16 %v706, %v705
  %v716 = vsel %vm67, %v680, 0
  %v719 = vsel %vm67, %v681, 0
  %721 = vmatprep.subr.bf16.mxu0 0
  %722 = vmatpush1.bf16.msra.mxu0 %v707
  %723 = vmatprep.subr.bf16.mxu0 0
  %724 = vmatpush1.bf16.msra.mxu0 %v708
  %725 = vmatprep.subr.bf16.mxu0 0
  %726 = vmatpush1.bf16.msra.mxu0 %v709
  %727 = vmatprep.subr.bf16.mxu0 0
  %728 = vmatpush1.bf16.msra.mxu0 %v710
  %729 = vmatprep.subr.bf16.mxu0 0
  %730 = vmatpush1.bf16.msra.mxu0 0
  %731 = vmatprep.subr.bf16.mxu0 0
  %732 = vmatpush1.bf16.msra.mxu0 0
  %733 = vmatprep.subr.bf16.mxu0 0
  %734 = vmatpush1.bf16.msra.mxu0 0
  %735 = vmatprep.subr.bf16.mxu0 0
  %736 = vmatpush1.bf16.msra.mxu0 0
  %737 = vmatprep.subr.bf16.mxu0 0
  %738 = vmatpush1.bf16.msra.mxu0 0
  %739 = vmatprep.subr.bf16.mxu0 0
  %740 = vmatpush1.bf16.msra.mxu0 0
  %741 = vmatprep.subr.bf16.mxu0 0
  %742 = vmatpush1.bf16.msra.mxu0 0
  %743 = vmatprep.subr.bf16.mxu0 0
  %744 = vmatpush1.bf16.msra.mxu0 0
  %745 = vmatprep.subr.bf16.mxu0 0
  %746 = vmatpush1.bf16.msra.mxu0 0
  %747 = vmatprep.subr.bf16.mxu0 0
  %748 = vmatpush1.bf16.msra.mxu0 0
  %749 = vmatprep.subr.bf16.mxu0 0
  %750 = vmatpush1.bf16.msra.mxu0 0
  %751 = vmatprep.subr.bf16.mxu0 0
  %752 = vmatpush1.bf16.msra.mxu0 0
  %753 = vmatprep.mubr.bf16.mxu0 0
  %754 = vmatmul.mubr.bf16.gmra.mrb[0].mxu0 %v716
  %v755 = vpop.f32.mrb[0].mxu0
  %v756 = vadd.f32 0.0, %v755
  %v757 = vpop.f32.mrb[0].mxu0
  %v758 = vpop.f32.mrb[0].mxu0
  %v759 = vadd.f32 0.0, %v758
  %v760 = vpop.f32.mrb[0].mxu0
  %761 = vmatprep.mubr.bf16.mxu0 0
  %762 = vmatmul.mubr.bf16.gmra.mrb[0].mxu0 %v719
  %v763 = vpop.f32.mrb[0].mxu0
  %v764 = vadd.f32 0.0, %v763
  %v765 = vpop.f32.mrb[0].mxu0
  %v766 = vpop.f32.mrb[0].mxu0
  %v767 = vpop.f32.mrb[0].mxu0
  %768 = vdwg.mxu0
  %v769 = vadd.f32 %v674, %v756
  %v770 = vadd.f32 %v675, %v759
  %v771 = vadd.f32 %v676, %v764
  %v772 = vld [vmem:[%s0 + $0x4] sm:$0xff]
  %v773 = vld [vmem:[%s0 + $0xc] sm:$0xff]
  %v774 = vld [vmem:[%s0 + $0x14] sm:$0x3]
  %v775 = vpack.c.bf16 %v773, %v772
  %v776 = vpack.c.bf16 %v774, %v774
  %s777 = scalar_lea.vmem %s1, 256
  %v778 = vld [vmem:[%s777] sm:$0xf]
  %v779 = vld [vmem:[%s777 + $0x4] sm:$0xf]
  %v780 = vld [vmem:[%s777 + $0x8] sm:$0xf]
  %v781 = vld [vmem:[%s777 + $0xc] sm:$0xf]
  %v782 = vld [vmem:[%s777 + $0x10] sm:$0xf]
  %v783 = vld [vmem:[%s777 + $0x14] sm:$0xf]
  %v784 = vld [vmem:[%s777 + $0x18] sm:$0xf]
  %v785 = vld [vmem:[%s777 + $0x1c] sm:$0xf]
  %v794 = vunpack.c.l.b16 %v778
  %v795 = vunpack.c.l.b16 %v779
  %v796 = vunpack.c.l.b16 %v780
  %v797 = vunpack.c.l.b16 %v781
  %v798 = vunpack.c.l.b16 %v782
  %v799 = vunpack.c.l.b16 %v783
  %v800 = vunpack.c.l.b16 %v784
  %v801 = vunpack.c.l.b16 %v785
  %v802 = vpack.c.b16 %v795, %v794
  %v803 = vpack.c.b16 %v797, %v796
  %v804 = vpack.c.b16 %v799, %v798
  %v805 = vpack.c.b16 %v801, %v800
  %v811 = vsel %vm67, %v775, 0
  %v814 = vsel %vm67, %v776, 0
  %816 = vmatprep.subr.bf16.mxu0 0
  %817 = vmatpush1.bf16.msra.mxu0 %v802
  %818 = vmatprep.subr.bf16.mxu0 0
  %819 = vmatpush1.bf16.msra.mxu0 %v803
  %820 = vmatprep.subr.bf16.mxu0 0
  %821 = vmatpush1.bf16.msra.mxu0 %v804
  %822 = vmatprep.subr.bf16.mxu0 0
  %823 = vmatpush1.bf16.msra.mxu0 %v805
  %824 = vmatprep.subr.bf16.mxu0 0
  %825 = vmatpush1.bf16.msra.mxu0 0
  %826 = vmatprep.subr.bf16.mxu0 0
  %827 = vmatpush1.bf16.msra.mxu0 0
  %828 = vmatprep.subr.bf16.mxu0 0
  %829 = vmatpush1.bf16.msra.mxu0 0
  %830 = vmatprep.subr.bf16.mxu0 0
  %831 = vmatpush1.bf16.msra.mxu0 0
  %832 = vmatprep.subr.bf16.mxu0 0
  %833 = vmatpush1.bf16.msra.mxu0 0
  %834 = vmatprep.subr.bf16.mxu0 0
  %835 = vmatpush1.bf16.msra.mxu0 0
  %836 = vmatprep.subr.bf16.mxu0 0
  %837 = vmatpush1.bf16.msra.mxu0 0
  %838 = vmatprep.subr.bf16.mxu0 0
  %839 = vmatpush1.bf16.msra.mxu0 0
  %840 = vmatprep.subr.bf16.mxu0 0
  %841 = vmatpush1.bf16.msra.mxu0 0
  %842 = vmatprep.subr.bf16.mxu0 0
  %843 = vmatpush1.bf16.msra.mxu0 0
  %844 = vmatprep.subr.bf16.mxu0 0
  %845 = vmatpush1.bf16.msra.mxu0 0
  %846 = vmatprep.subr.bf16.mxu0 0
  %847 = vmatpush1.bf16.msra.mxu0 0
  %848 = vmatprep.mubr.bf16.mxu0 0
  %849 = vmatmul.mubr.bf16.gmra.mrb[0].mxu0 %v811
  %v850 = vpop.f32.mrb[0].mxu0
  %v851 = vadd.f32 0.0, %v850
  %v852 = vpop.f32.mrb[0].mxu0
  %v853 = vpop.f32.mrb[0].mxu0
  %v854 = vadd.f32 0.0, %v853
  %v855 = vpop.f32.mrb[0].mxu0
  %856 = vmatprep.mubr.bf16.mxu0 0
  %857 = vmatmul.mubr.bf16.gmra.mrb[0].mxu0 %v814
  %v858 = vpop.f32.mrb[0].mxu0
  %v859 = vadd.f32 0.0, %v858
  %v860 = vpop.f32.mrb[0].mxu0
  %v861 = vpop.f32.mrb[0].mxu0
  %v862 = vpop.f32.mrb[0].mxu0
  %863 = vdwg.mxu0
  %v864 = vadd.f32 %v769, %v851
  %v865 = vadd.f32 %v770, %v854
  %v866 = vadd.f32 %v771, %v859
  %v867 = vld [vmem:[%s2] sm:$0x1]
  %v869 = vlaneseq
  %v870 = vshrl.u32 %v869, 7
  %v871 = vsub.s32 0, %v870
  %v872 = vrot.slane %v867, %v871
  %v874 = vadd.f32 %v864, %v872
  %v875 = vadd.f32 %v865, %v872
  %v876 = vadd.f32 %v866, %v872
  %v877 = vmax.f32 %v874, 0.0
  %v878 = vmax.f32 %v875, 0.0
  %v879 = vmax.f32 %v876, 0.0
  %880 = vst [vmem:[%s3] sm:$0xff] %v877
  %881 = vst [vmem:[%s3 + $0x8] sm:$0xff] %v878
  %882 = vst [vmem:[%s3 + $0x10] sm:$0x3] %v879
  // Predicated region
  $region14: #{capsule_autoencoder_forward.8} parent=0 // pred_check
    _
  $region15: #{capsule_autoencoder_forward.8} parent=0 // pred_check_branch
    %884 = sbr.rel (0) target = $region17
  $region16: #{capsule_autoencoder_forward.8} parent=0 // pred_region
    _
  $region17: #{capsule_autoencoder_forward.8} parent=0 // pred_fallthru
    _
  // Predicated region
  $region18: #{capsule_autoencoder_forward.8} parent=0 // pred_check
    _
  $region19: #{capsule_autoencoder_forward.8} parent=0 // pred_check_branch
    %886 = sbr.rel (0) target = $region21
  $region20: #{capsule_autoencoder_forward.8} parent=0 // pred_region
    _
  $region21: #{capsule_autoencoder_forward.8} parent=0 // pred_fallthru
    _

// kernel: capsule_autoencoder_forward.9
$region0: #{capsule_autoencoder_forward.9}
  #allocation0 [shape = 'u32[]', space=smem, size = 0x4, offset = 0x4, fixed_abs, tag = 'smem constant byte address 0x4 - core index']
  #allocation1 [shape = 'u32[144,128]{1,0:T(1,128)}', space=vmem, size = 0x12000, scoped, tag = 'internal scratch']
  %s0 = inlined_call_operand.vmem [shape: f32[22,128], index: 0, kind: input, shape index: {}]
  %s1 = inlined_call_operand.vmem [shape: bf16[9,128,64], index: 1, kind: input, shape index: {}]
  %s2 = inlined_call_operand.vmem [shape: f32[1,64], index: 2, kind: input, shape index: {}]
  %s3 = inlined_call_operand.vmem [shape: f32[4,18,64], index: 3, kind: output, shape index: {}]
  %s4 = sld [smem:[#allocation0]]
  $region22: #{capsule_autoencoder_forward.9} parent=0
    _
  %s6 = ssub.s32 1, %s4
  %s7 = scalar_select 0, %s6, %s4
  // Predicated region
  $region2: #{capsule_autoencoder_forward.9} parent=0 // pred_check
    _
  $region3: #{capsule_autoencoder_forward.9} parent=0 // pred_check_branch
    %9 = sbr.rel (0) target = $region5
  $region4: #{capsule_autoencoder_forward.9} parent=0 // pred_region
    _
  $region5: #{capsule_autoencoder_forward.9} parent=0 // pred_fallthru
    _
  // Predicated region
  $region6: #{capsule_autoencoder_forward.9} parent=0 // pred_check
    _
  $region7: #{capsule_autoencoder_forward.9} parent=0 // pred_check_branch
    %11 = sbr.rel (0) target = $region9
  $region8: #{capsule_autoencoder_forward.9} parent=0 // pred_region
    _
  $region9: #{capsule_autoencoder_forward.9} parent=0 // pred_fallthru
    _
  // Predicated region
  $region10: #{capsule_autoencoder_forward.9} parent=0 // pred_check
    _
  $region11: #{capsule_autoencoder_forward.9} parent=0 // pred_check_branch
    %13 = sbr.rel (0) target = $region13
  $region12: #{capsule_autoencoder_forward.9} parent=0 // pred_region
    _
  $region13: #{capsule_autoencoder_forward.9} parent=0 // pred_fallthru
    _
  %v15 = vld [vmem:[%s0] sm:$0xff]
  %v16 = vld [vmem:[%s0 + $0x8] sm:$0xff]
  %v17 = vld [vmem:[%s0 + $0x10] sm:$0x3]
  %v18 = vpack.c.bf16 %v16, %v15
  %v19 = vpack.c.bf16 %v17, %v17
  %v20 = vld [vmem:[%s0 + $0x1] sm:$0xff]
  %v21 = vld [vmem:[%s0 + $0x9] sm:$0xff]
  %v22 = vld [vmem:[%s0 + $0x11] sm:$0x3]
  %v23 = vpack.c.bf16 %v21, %v20
  %v24 = vpack.c.bf16 %v22, %v22
  %v25 = vld [vmem:[%s0 + $0x3] sm:$0xff]
  %v26 = vld [vmem:[%s0 + $0xb] sm:$0xff]
  %v27 = vld [vmem:[%s0 + $0x13] sm:$0x3]
  %v28 = vpack.c.bf16 %v26, %v25
  %v29 = vpack.c.bf16 %v27, %v27
  %v30 = vld [vmem:[%s0 + $0x4] sm:$0xff]
  %v31 = vld [vmem:[%s0 + $0xc] sm:$0xff]
  %v32 = vld [vmem:[%s0 + $0x14] sm:$0x3]
  %v33 = vpack.c.bf16 %v31, %v30
  %v34 = vpack.c.bf16 %v32, %v32
  %s35 = scalar_lea.vmem %s1, 256
  %v36 = vld [vmem:[%s35] sm:$0xf]
  %v37 = vld [vmem:[%s35 + $0x4] sm:$0xf]
  %v38 = vld [vmem:[%s35 + $0x8] sm:$0xf]
  %v39 = vld [vmem:[%s35 + $0xc] sm:$0xf]
  %v40 = vld [vmem:[%s35 + $0x10] sm:$0xf]
  %v41 = vld [vmem:[%s35 + $0x14] sm:$0xf]
  %v42 = vld [vmem:[%s35 + $0x18] sm:$0xf]
  %v43 = vld [vmem:[%s35 + $0x1c] sm:$0xf]
  %v44 = vld [vmem:[%s35 + $0x20] sm:$0xf]
  %v45 = vld [vmem:[%s35 + $0x24] sm:$0xf]
  %v46 = vld [vmem:[%s35 + $0x28] sm:$0xf]
  %v47 = vld [vmem:[%s35 + $0x2c] sm:$0xf]
  %v48 = vld [vmem:[%s35 + $0x30] sm:$0xf]
  %v49 = vld [vmem:[%s35 + $0x34] sm:$0xf]
  %v50 = vld [vmem:[%s35 + $0x38] sm:$0xf]
  %v51 = vld [vmem:[%s35 + $0x3c] sm:$0xf]
  %s52 = scalar_lea.vmem %s1, 192
  %v53 = vld [vmem:[%s52] sm:$0xf]
  %v54 = vld [vmem:[%s52 + $0x4] sm:$0xf]
  %v55 = vld [vmem:[%s52 + $0x8] sm:$0xf]
  %v56 = vld [vmem:[%s52 + $0xc] sm:$0xf]
  %v57 = vld [vmem:[%s52 + $0x10] sm:$0xf]
  %v58 = vld [vmem:[%s52 + $0x14] sm:$0xf]
  %v59 = vld [vmem:[%s52 + $0x18] sm:$0xf]
  %v60 = vld [vmem:[%s52 + $0x1c] sm:$0xf]
  %v61 = vld [vmem:[%s52 + $0x20] sm:$0xf]
  %v62 = vld [vmem:[%s52 + $0x24] sm:$0xf]
  %v63 = vld [vmem:[%s52 + $0x28] sm:$0xf]
  %v64 = vld [vmem:[%s52 + $0x2c] sm:$0xf]
  %v65 = vld [vmem:[%s52 + $0x30] sm:$0xf]
  %v66 = vld [vmem:[%s52 + $0x34] sm:$0xf]
  %v67 = vld [vmem:[%s52 + $0x38] sm:$0xf]
  %v68 = vld [vmem:[%s52 + $0x3c] sm:$0xf]
  %s69 = scalar_lea.vmem %s1, 320
  %v70 = vld [vmem:[%s69] sm:$0xf]
  %v71 = vld [vmem:[%s69 + $0x4] sm:$0xf]
  %v72 = vld [vmem:[%s69 + $0x8] sm:$0xf]
  %v73 = vld [vmem:[%s69 + $0xc] sm:$0xf]
  %v74 = vld [vmem:[%s69 + $0x10] sm:$0xf]
  %v75 = vld [vmem:[%s69 + $0x14] sm:$0xf]
  %v76 = vld [vmem:[%s69 + $0x18] sm:$0xf]
  %v77 = vld [vmem:[%s69 + $0x1c] sm:$0xf]
  %v78 = vld [vmem:[%s69 + $0x20] sm:$0xf]
  %v79 = vld [vmem:[%s69 + $0x24] sm:$0xf]
  %v80 = vld [vmem:[%s69 + $0x28] sm:$0xf]
  %v81 = vld [vmem:[%s69 + $0x2c] sm:$0xf]
  %v82 = vld [vmem:[%s69 + $0x30] sm:$0xf]
  %v83 = vld [vmem:[%s69 + $0x34] sm:$0xf]
  %v84 = vld [vmem:[%s69 + $0x38] sm:$0xf]
  %v85 = vld [vmem:[%s69 + $0x3c] sm:$0xf]
  %v102 = vunpack.c.l.b16 %v70
  %v103 = vunpack.c.l.b16 %v71
  %v104 = vunpack.c.l.b16 %v72
  %v105 = vunpack.c.l.b16 %v73
  %v106 = vunpack.c.l.b16 %v74
  %v107 = vunpack.c.l.b16 %v75
  %v108 = vunpack.c.l.b16 %v76
  %v109 = vunpack.c.l.b16 %v77
  %v110 = vunpack.c.l.b16 %v78
  %v111 = vunpack.c.l.b16 %v79
  %v112 = vunpack.c.l.b16 %v80
  %v113 = vunpack.c.l.b16 %v81
  %v114 = vunpack.c.l.b16 %v82
  %v115 = vunpack.c.l.b16 %v83
  %v116 = vunpack.c.l.b16 %v84
  %v117 = vunpack.c.l.b16 %v85
  %v118 = vpack.c.b16 %v103, %v102
  %v119 = vpack.c.b16 %v105, %v104
  %v120 = vpack.c.b16 %v107, %v106
  %v121 = vpack.c.b16 %v109, %v108
  %v122 = vpack.c.b16 %v111, %v110
  %v123 = vpack.c.b16 %v113, %v112
  %v124 = vpack.c.b16 %v115, %v114
  %v125 = vpack.c.b16 %v117, %v116
  %134 = vmatprep.subr.bf16.mxu0 0
  %135 = vmatpush1.bf16.msra.mxu0 %v118
  %136 = vmatprep.subr.bf16.mxu0 0
  %137 = vmatpush1.bf16.msra.mxu0 %v119
  %138 = vmatprep.subr.bf16.mxu0 0
  %139 = vmatpush1.bf16.msra.mxu0 %v120
  %140 = vmatprep.subr.bf16.mxu0 0
  %141 = vmatpush1.bf16.msra.mxu0 %v121
  %142 = vmatprep.subr.bf16.mxu0 0
  %143 = vmatpush1.bf16.msra.mxu0 %v122
  %144 = vmatprep.subr.bf16.mxu0 0
  %145 = vmatpush1.bf16.msra.mxu0 %v123
  %146 = vmatprep.subr.bf16.mxu0 0
  %147 = vmatpush1.bf16.msra.mxu0 %v124
  %148 = vmatprep.subr.bf16.mxu0 0
  %149 = vmatpush1.bf16.msra.mxu0 %v125
  %150 = vmatprep.subr.bf16.mxu0 0
  %151 = vmatpush1.bf16.msra.mxu0 0
  %152 = vmatprep.subr.bf16.mxu0 0
  %153 = vmatpush1.bf16.msra.mxu0 0
  %154 = vmatprep.subr.bf16.mxu0 0
  %155 = vmatpush1.bf16.msra.mxu0 0
  %156 = vmatprep.subr.bf16.mxu0 0
  %157 = vmatpush1.bf16.msra.mxu0 0
  %158 = vmatprep.subr.bf16.mxu0 0
  %159 = vmatpush1.bf16.msra.mxu0 0
  %160 = vmatprep.subr.bf16.mxu0 0
  %161 = vmatpush1.bf16.msra.mxu0 0
  %162 = vmatprep.subr.bf16.mxu0 0
  %163 = vmatpush1.bf16.msra.mxu0 0
  %164 = vmatprep.subr.bf16.mxu0 0
  %165 = vmatpush1.bf16.msra.mxu0 0
  %166 = vmatprep.mubr.bf16.mxu0 0
  %167 = vmatmul.mubr.bf16.gmra.mrb[0].mxu0 %v18
  %v168 = vpop.f32.mrb[0].mxu0
  %v169 = vadd.f32 0.0, %v168
  %v170 = vpop.f32.mrb[0].mxu0
  %v171 = vpop.f32.mrb[0].mxu0
  %v172 = vadd.f32 0.0, %v171
  %v173 = vpop.f32.mrb[0].mxu0
  %174 = vmatprep.mubr.bf16.mxu0 0
  %175 = vmatmul.mubr.bf16.gmra.mrb[0].mxu0 %v19
  %v176 = vpop.f32.mrb[0].mxu0
  %v177 = vadd.f32 0.0, %v176
  %v178 = vpop.f32.mrb[0].mxu0
  %v179 = vpop.f32.mrb[0].mxu0
  %v180 = vpop.f32.mrb[0].mxu0
  %181 = vdwg.mxu0
  %v198 = vunpack.c.l.b16 %v53
  %v199 = vunpack.c.l.b16 %v54
  %v200 = vunpack.c.l.b16 %v55
  %v201 = vunpack.c.l.b16 %v56
  %v202 = vunpack.c.l.b16 %v57
  %v203 = vunpack.c.l.b16 %v58
  %v204 = vunpack.c.l.b16 %v59
  %v205 = vunpack.c.l.b16 %v60
  %v206 = vunpack.c.l.b16 %v61
  %v207 = vunpack.c.l.b16 %v62
  %v208 = vunpack.c.l.b16 %v63
  %v209 = vunpack.c.l.b16 %v64
  %v210 = vunpack.c.l.b16 %v65
  %v211 = vunpack.c.l.b16 %v66
  %v212 = vunpack.c.l.b16 %v67
  %v213 = vunpack.c.l.b16 %v68
  %v214 = vpack.c.b16 %v199, %v198
  %v215 = vpack.c.b16 %v201, %v200
  %v216 = vpack.c.b16 %v203, %v202
  %v217 = vpack.c.b16 %v205, %v204
  %v218 = vpack.c.b16 %v207, %v206
  %v219 = vpack.c.b16 %v209, %v208
  %v220 = vpack.c.b16 %v211, %v210
  %v221 = vpack.c.b16 %v213, %v212
  %230 = vmatprep.subr.bf16.mxu0 0
  %231 = vmatpush1.bf16.msra.mxu0 %v214
  %232 = vmatprep.subr.bf16.mxu0 0
  %233 = vmatpush1.bf16.msra.mxu0 %v215
  %234 = vmatprep.subr.bf16.mxu0 0
  %235 = vmatpush1.bf16.msra.mxu0 %v216
  %236 = vmatprep.subr.bf16.mxu0 0
  %237 = vmatpush1.bf16.msra.mxu0 %v217
  %238 = vmatprep.subr.bf16.mxu0 0
  %239 = vmatpush1.bf16.msra.mxu0 %v218
  %240 = vmatprep.subr.bf16.mxu0 0
  %241 = vmatpush1.bf16.msra.mxu0 %v219
  %242 = vmatprep.subr.bf16.mxu0 0
  %243 = vmatpush1.bf16.msra.mxu0 %v220
  %244 = vmatprep.subr.bf16.mxu0 0
  %245 = vmatpush1.bf16.msra.mxu0 %v221
  %246 = vmatprep.subr.bf16.mxu0 0
  %247 = vmatpush1.bf16.msra.mxu0 0
  %248 = vmatprep.subr.bf16.mxu0 0
  %249 = vmatpush1.bf16.msra.mxu0 0
  %250 = vmatprep.subr.bf16.mxu0 0
  %251 = vmatpush1.bf16.msra.mxu0 0
  %252 = vmatprep.subr.bf16.mxu0 0
  %253 = vmatpush1.bf16.msra.mxu0 0
  %254 = vmatprep.subr.bf16.mxu0 0
  %255 = vmatpush1.bf16.msra.mxu0 0
  %256 = vmatprep.subr.bf16.mxu0 0
  %257 = vmatpush1.bf16.msra.mxu0 0
  %258 = vmatprep.subr.bf16.mxu0 0
  %259 = vmatpush1.bf16.msra.mxu0 0
  %260 = vmatprep.subr.bf16.mxu0 0
  %261 = vmatpush1.bf16.msra.mxu0 0
  %262 = vmatprep.mubr.bf16.mxu0 0
  %263 = vmatmul.mubr.bf16.gmra.mrb[0].mxu0 %v23
  %v264 = vpop.f32.mrb[0].mxu0
  %v265 = vadd.f32 %v169, %v264
  %v266 = vpop.f32.mrb[0].mxu0
  %v267 = vpop.f32.mrb[0].mxu0
  %v268 = vadd.f32 %v172, %v267
  %v269 = vpop.f32.mrb[0].mxu0
  %270 = vmatprep.mubr.bf16.mxu0 0
  %271 = vmatmul.mubr.bf16.gmra.mrb[0].mxu0 %v24
  %v272 = vpop.f32.mrb[0].mxu0
  %v273 = vadd.f32 %v177, %v272
  %v274 = vpop.f32.mrb[0].mxu0
  %v275 = vpop.f32.mrb[0].mxu0
  %v276 = vpop.f32.mrb[0].mxu0
  %277 = vdwg.mxu0
  %s278 = scalar_lea.vmem %s1, 64
  %v279 = vld [vmem:[%s278] sm:$0xf]
  %v280 = vld [vmem:[%s278 + $0x4] sm:$0xf]
  %v281 = vld [vmem:[%s278 + $0x8] sm:$0xf]
  %v282 = vld [vmem:[%s278 + $0xc] sm:$0xf]
  %v283 = vld [vmem:[%s278 + $0x10] sm:$0xf]
  %v284 = vld [vmem:[%s278 + $0x14] sm:$0xf]
  %v285 = vld [vmem:[%s278 + $0x18] sm:$0xf]
  %v286 = vld [vmem:[%s278 + $0x1c] sm:$0xf]
  %v287 = vld [vmem:[%s278 + $0x20] sm:$0xf]
  %v288 = vld [vmem:[%s278 + $0x24] sm:$0xf]
  %v289 = vld [vmem:[%s278 + $0x28] sm:$0xf]
  %v290 = vld [vmem:[%s278 + $0x2c] sm:$0xf]
  %v291 = vld [vmem:[%s278 + $0x30] sm:$0xf]
  %v292 = vld [vmem:[%s278 + $0x34] sm:$0xf]
  %v293 = vld [vmem:[%s278 + $0x38] sm:$0xf]
  %v294 = vld [vmem:[%s278 + $0x3c] sm:$0xf]
  %s295 = scalar_lea.vmem %s1, 448
  %v296 = vld [vmem:[%s295] sm:$0xf]
  %v297 = vld [vmem:[%s295 + $0x4] sm:$0xf]
  %v298 = vld [vmem:[%s295 + $0x8] sm:$0xf]
  %v299 = vld [vmem:[%s295 + $0xc] sm:$0xf]
  %v300 = vld [vmem:[%s295 + $0x10] sm:$0xf]
  %v301 = vld [vmem:[%s295 + $0x14] sm:$0xf]
  %v302 = vld [vmem:[%s295 + $0x18] sm:$0xf]
  %v303 = vld [vmem:[%s295 + $0x1c] sm:$0xf]
  %v304 = vld [vmem:[%s295 + $0x20] sm:$0xf]
  %v305 = vld [vmem:[%s295 + $0x24] sm:$0xf]
  %v306 = vld [vmem:[%s295 + $0x28] sm:$0xf]
  %v307 = vld [vmem:[%s295 + $0x2c] sm:$0xf]
  %v308 = vld [vmem:[%s295 + $0x30] sm:$0xf]
  %v309 = vld [vmem:[%s295 + $0x34] sm:$0xf]
  %v310 = vld [vmem:[%s295 + $0x38] sm:$0xf]
  %v311 = vld [vmem:[%s295 + $0x3c] sm:$0xf]
  %v328 = vunpack.c.l.b16 %v296
  %v329 = vunpack.c.l.b16 %v297
  %v330 = vunpack.c.l.b16 %v298
  %v331 = vunpack.c.l.b16 %v299
  %v332 = vunpack.c.l.b16 %v300
  %v333 = vunpack.c.l.b16 %v301
  %v334 = vunpack.c.l.b16 %v302
  %v335 = vunpack.c.l.b16 %v303
  %v336 = vunpack.c.l.b16 %v304
  %v337 = vunpack.c.l.b16 %v305
  %v338 = vunpack.c.l.b16 %v306
  %v339 = vunpack.c.l.b16 %v307
  %v340 = vunpack.c.l.b16 %v308
  %v341 = vunpack.c.l.b16 %v309
  %v342 = vunpack.c.l.b16 %v310
  %v343 = vunpack.c.l.b16 %v311
  %v344 = vpack.c.b16 %v329, %v328
  %v345 = vpack.c.b16 %v331, %v330
  %v346 = vpack.c.b16 %v333, %v332
  %v347 = vpack.c.b16 %v335, %v334
  %v348 = vpack.c.b16 %v337, %v336
  %v349 = vpack.c.b16 %v339, %v338
  %v350 = vpack.c.b16 %v341, %v340
  %v351 = vpack.c.b16 %v343, %v342
  %360 = vmatprep.subr.bf16.mxu0 0
  %361 = vmatpush1.bf16.msra.mxu0 %v344
  %362 = vmatprep.subr.bf16.mxu0 0
  %363 = vmatpush1.bf16.msra.mxu0 %v345
  %364 = vmatprep.subr.bf16.mxu0 0
  %365 = vmatpush1.bf16.msra.mxu0 %v346
  %366 = vmatprep.subr.bf16.mxu0 0
  %367 = vmatpush1.bf16.msra.mxu0 %v347
  %368 = vmatprep.subr.bf16.mxu0 0
  %369 = vmatpush1.bf16.msra.mxu0 %v348
  %370 = vmatprep.subr.bf16.mxu0 0
  %371 = vmatpush1.bf16.msra.mxu0 %v349
  %372 = vmatprep.subr.bf16.mxu0 0
  %373 = vmatpush1.bf16.msra.mxu0 %v350
  %374 = vmatprep.subr.bf16.mxu0 0
  %375 = vmatpush1.bf16.msra.mxu0 %v351
  %376 = vmatprep.subr.bf16.mxu0 0
  %377 = vmatpush1.bf16.msra.mxu0 0
  %378 = vmatprep.subr.bf16.mxu0 0
  %379 = vmatpush1.bf16.msra.mxu0 0
  %380 = vmatprep.subr.bf16.mxu0 0
  %381 = vmatpush1.bf16.msra.mxu0 0
  %382 = vmatprep.subr.bf16.mxu0 0
  %383 = vmatpush1.bf16.msra.mxu0 0
  %384 = vmatprep.subr.bf16.mxu0 0
  %385 = vmatpush1.bf16.msra.mxu0 0
  %386 = vmatprep.subr.bf16.mxu0 0
  %387 = vmatpush1.bf16.msra.mxu0 0
  %388 = vmatprep.subr.bf16.mxu0 0
  %389 = vmatpush1.bf16.msra.mxu0 0
  %390 = vmatprep.subr.bf16.mxu0 0
  %391 = vmatpush1.bf16.msra.mxu0 0
  %392 = vmatprep.mubr.bf16.mxu0 0
  %393 = vmatmul.mubr.bf16.gmra.mrb[0].mxu0 %v18
  %v394 = vpop.f32.mrb[0].mxu0
  %v395 = vadd.f32 0.0, %v394
  %v396 = vpop.f32.mrb[0].mxu0
  %v397 = vpop.f32.mrb[0].mxu0
  %v398 = vadd.f32 0.0, %v397
  %v399 = vpop.f32.mrb[0].mxu0
  %400 = vmatprep.mubr.bf16.mxu0 0
  %401 = vmatmul.mubr.bf16.gmra.mrb[0].mxu0 %v19
  %v402 = vpop.f32.mrb[0].mxu0
  %v403 = vadd.f32 0.0, %v402
  %v404 = vpop.f32.mrb[0].mxu0
  %v405 = vpop.f32.mrb[0].mxu0
  %v406 = vpop.f32.mrb[0].mxu0
  %407 = vdwg.mxu0
  %v424 = vunpack.c.l.b16 %v279
  %v425 = vunpack.c.l.b16 %v280
  %v426 = vunpack.c.l.b16 %v281
  %v427 = vunpack.c.l.b16 %v282
  %v428 = vunpack.c.l.b16 %v283
  %v429 = vunpack.c.l.b16 %v284
  %v430 = vunpack.c.l.b16 %v285
  %v431 = vunpack.c.l.b16 %v286
  %v432 = vunpack.c.l.b16 %v287
  %v433 = vunpack.c.l.b16 %v288
  %v434 = vunpack.c.l.b16 %v289
  %v435 = vunpack.c.l.b16 %v290
  %v436 = vunpack.c.l.b16 %v291
  %v437 = vunpack.c.l.b16 %v292
  %v438 = vunpack.c.l.b16 %v293
  %v439 = vunpack.c.l.b16 %v294
  %v440 = vpack.c.b16 %v425, %v424
  %v441 = vpack.c.b16 %v427, %v426
  %v442 = vpack.c.b16 %v429, %v428
  %v443 = vpack.c.b16 %v431, %v430
  %v444 = vpack.c.b16 %v433, %v432
  %v445 = vpack.c.b16 %v435, %v434
  %v446 = vpack.c.b16 %v437, %v436
  %v447 = vpack.c.b16 %v439, %v438
  %456 = vmatprep.subr.bf16.mxu0 0
  %457 = vmatpush1.bf16.msra.mxu0 %v440
  %458 = vmatprep.subr.bf16.mxu0 0
  %459 = vmatpush1.bf16.msra.mxu0 %v441
  %460 = vmatprep.subr.bf16.mxu0 0
  %461 = vmatpush1.bf16.msra.mxu0 %v442
  %462 = vmatprep.subr.bf16.mxu0 0
  %463 = vmatpush1.bf16.msra.mxu0 %v443
  %464 = vmatprep.subr.bf16.mxu0 0
  %465 = vmatpush1.bf16.msra.mxu0 %v444
  %466 = vmatprep.subr.bf16.mxu0 0
  %467 = vmatpush1.bf16.msra.mxu0 %v445
  %468 = vmatprep.subr.bf16.mxu0 0
  %469 = vmatpush1.bf16.msra.mxu0 %v446
  %470 = vmatprep.subr.bf16.mxu0 0
  %471 = vmatpush1.bf16.msra.mxu0 %v447
  %472 = vmatprep.subr.bf16.mxu0 0
  %473 = vmatpush1.bf16.msra.mxu0 0
  %474 = vmatprep.subr.bf16.mxu0 0
  %475 = vmatpush1.bf16.msra.mxu0 0
  %476 = vmatprep.subr.bf16.mxu0 0
  %477 = vmatpush1.bf16.msra.mxu0 0
  %478 = vmatprep.subr.bf16.mxu0 0
  %479 = vmatpush1.bf16.msra.mxu0 0
  %480 = vmatprep.subr.bf16.mxu0 0
  %481 = vmatpush1.bf16.msra.mxu0 0
  %482 = vmatprep.subr.bf16.mxu0 0
  %483 = vmatpush1.bf16.msra.mxu0 0
  %484 = vmatprep.subr.bf16.mxu0 0
  %485 = vmatpush1.bf16.msra.mxu0 0
  %486 = vmatprep.subr.bf16.mxu0 0
  %487 = vmatpush1.bf16.msra.mxu0 0
  %488 = vmatprep.mubr.bf16.mxu0 0
  %489 = vmatmul.mubr.bf16.gmra.mrb[0].mxu0 %v28
  %v490 = vpop.f32.mrb[0].mxu0
  %v491 = vadd.f32 %v395, %v490
  %v492 = vpop.f32.mrb[0].mxu0
  %v493 = vpop.f32.mrb[0].mxu0
  %v494 = vadd.f32 %v398, %v493
  %v495 = vpop.f32.mrb[0].mxu0
  %496 = vmatprep.mubr.bf16.mxu0 0
  %497 = vmatmul.mubr.bf16.gmra.mrb[0].mxu0 %v29
  %v498 = vpop.f32.mrb[0].mxu0
  %v499 = vadd.f32 %v403, %v498
  %v500 = vpop.f32.mrb[0].mxu0
  %v501 = vpop.f32.mrb[0].mxu0
  %v502 = vpop.f32.mrb[0].mxu0
  %503 = vdwg.mxu0
  %v504 = vld [vmem:[%s1] sm:$0xf]
  %v505 = vld [vmem:[%s1 + $0x4] sm:$0xf]
  %v506 = vld [vmem:[%s1 + $0x8] sm:$0xf]
  %v507 = vld [vmem:[%s1 + $0xc] sm:$0xf]
  %v508 = vld [vmem:[%s1 + $0x10] sm:$0xf]
  %v509 = vld [vmem:[%s1 + $0x14] sm:$0xf]
  %v510 = vld [vmem:[%s1 + $0x18] sm:$0xf]
  %v511 = vld [vmem:[%s1 + $0x1c] sm:$0xf]
  %v512 = vld [vmem:[%s1 + $0x20] sm:$0xf]
  %v513 = vld [vmem:[%s1 + $0x24] sm:$0xf]
  %v514 = vld [vmem:[%s1 + $0x28] sm:$0xf]
  %v515 = vld [vmem:[%s1 + $0x2c] sm:$0xf]
  %v516 = vld [vmem:[%s1 + $0x30] sm:$0xf]
  %v517 = vld [vmem:[%s1 + $0x34] sm:$0xf]
  %v518 = vld [vmem:[%s1 + $0x38] sm:$0xf]
  %v519 = vld [vmem:[%s1 + $0x3c] sm:$0xf]
  %s520 = scalar_lea.vmem %s1, 128
  %v521 = vld [vmem:[%s520] sm:$0xf]
  %v522 = vld [vmem:[%s520 + $0x4] sm:$0xf]
  %v523 = vld [vmem:[%s520 + $0x8] sm:$0xf]
  %v524 = vld [vmem:[%s520 + $0xc] sm:$0xf]
  %v525 = vld [vmem:[%s520 + $0x10] sm:$0xf]
  %v526 = vld [vmem:[%s520 + $0x14] sm:$0xf]
  %v527 = vld [vmem:[%s520 + $0x18] sm:$0xf]
  %v528 = vld [vmem:[%s520 + $0x1c] sm:$0xf]
  %v529 = vld [vmem:[%s520 + $0x20] sm:$0xf]
  %v530 = vld [vmem:[%s520 + $0x24] sm:$0xf]
  %v531 = vld [vmem:[%s520 + $0x28] sm:$0xf]
  %v532 = vld [vmem:[%s520 + $0x2c] sm:$0xf]
  %v533 = vld [vmem:[%s520 + $0x30] sm:$0xf]
  %v534 = vld [vmem:[%s520 + $0x34] sm:$0xf]
  %v535 = vld [vmem:[%s520 + $0x38] sm:$0xf]
  %v536 = vld [vmem:[%s520 + $0x3c] sm:$0xf]
  %v553 = vunpack.c.l.b16 %v521
  %v554 = vunpack.c.l.b16 %v522
  %v555 = vunpack.c.l.b16 %v523
  %v556 = vunpack.c.l.b16 %v524
  %v557 = vunpack.c.l.b16 %v525
  %v558 = vunpack.c.l.b16 %v526
  %v559 = vunpack.c.l.b16 %v527
  %v560 = vunpack.c.l.b16 %v528
  %v561 = vunpack.c.l.b16 %v529
  %v562 = vunpack.c.l.b16 %v530
  %v563 = vunpack.c.l.b16 %v531
  %v564 = vunpack.c.l.b16 %v532
  %v565 = vunpack.c.l.b16 %v533
  %v566 = vunpack.c.l.b16 %v534
  %v567 = vunpack.c.l.b16 %v535
  %v568 = vunpack.c.l.b16 %v536
  %v569 = vpack.c.b16 %v554, %v553
  %v570 = vpack.c.b16 %v556, %v555
  %v571 = vpack.c.b16 %v558, %v557
  %v572 = vpack.c.b16 %v560, %v559
  %v573 = vpack.c.b16 %v562, %v561
  %v574 = vpack.c.b16 %v564, %v563
  %v575 = vpack.c.b16 %v566, %v565
  %v576 = vpack.c.b16 %v568, %v567
  %585 = vmatprep.subr.bf16.mxu0 0
  %586 = vmatpush1.bf16.msra.mxu0 %v569
  %587 = vmatprep.subr.bf16.mxu0 0
  %588 = vmatpush1.bf16.msra.mxu0 %v570
  %589 = vmatprep.subr.bf16.mxu0 0
  %590 = vmatpush1.bf16.msra.mxu0 %v571
  %591 = vmatprep.subr.bf16.mxu0 0
  %592 = vmatpush1.bf16.msra.mxu0 %v572
  %593 = vmatprep.subr.bf16.mxu0 0
  %594 = vmatpush1.bf16.msra.mxu0 %v573
  %595 = vmatprep.subr.bf16.mxu0 0
  %596 = vmatpush1.bf16.msra.mxu0 %v574
  %597 = vmatprep.subr.bf16.mxu0 0
  %598 = vmatpush1.bf16.msra.mxu0 %v575
  %599 = vmatprep.subr.bf16.mxu0 0
  %600 = vmatpush1.bf16.msra.mxu0 %v576
  %601 = vmatprep.subr.bf16.mxu0 0
  %602 = vmatpush1.bf16.msra.mxu0 0
  %603 = vmatprep.subr.bf16.mxu0 0
  %604 = vmatpush1.bf16.msra.mxu0 0
  %605 = vmatprep.subr.bf16.mxu0 0
  %606 = vmatpush1.bf16.msra.mxu0 0
  %607 = vmatprep.subr.bf16.mxu0 0
  %608 = vmatpush1.bf16.msra.mxu0 0
  %609 = vmatprep.subr.bf16.mxu0 0
  %610 = vmatpush1.bf16.msra.mxu0 0
  %611 = vmatprep.subr.bf16.mxu0 0
  %612 = vmatpush1.bf16.msra.mxu0 0
  %613 = vmatprep.subr.bf16.mxu0 0
  %614 = vmatpush1.bf16.msra.mxu0 0
  %615 = vmatprep.subr.bf16.mxu0 0
  %616 = vmatpush1.bf16.msra.mxu0 0
  %617 = vmatprep.mubr.bf16.mxu0 0
  %618 = vmatmul.mubr.bf16.gmra.mrb[0].mxu0 %v28
  %v619 = vpop.f32.mrb[0].mxu0
  %v620 = vadd.f32 0.0, %v619
  %v621 = vpop.f32.mrb[0].mxu0
  %v622 = vpop.f32.mrb[0].mxu0
  %v623 = vadd.f32 0.0, %v622
  %v624 = vpop.f32.mrb[0].mxu0
  %625 = vmatprep.mubr.bf16.mxu0 0
  %626 = vmatmul.mubr.bf16.gmra.mrb[0].mxu0 %v29
  %v627 = vpop.f32.mrb[0].mxu0
  %v628 = vadd.f32 0.0, %v627
  %v629 = vpop.f32.mrb[0].mxu0
  %v630 = vpop.f32.mrb[0].mxu0
  %v631 = vpop.f32.mrb[0].mxu0
  %632 = vdwg.mxu0
  %v649 = vunpack.c.l.b16 %v504
  %v650 = vunpack.c.l.b16 %v505
  %v651 = vunpack.c.l.b16 %v506
  %v652 = vunpack.c.l.b16 %v507
  %v653 = vunpack.c.l.b16 %v508
  %v654 = vunpack.c.l.b16 %v509
  %v655 = vunpack.c.l.b16 %v510
  %v656 = vunpack.c.l.b16 %v511
  %v657 = vunpack.c.l.b16 %v512
  %v658 = vunpack.c.l.b16 %v513
  %v659 = vunpack.c.l.b16 %v514
  %v660 = vunpack.c.l.b16 %v515
  %v661 = vunpack.c.l.b16 %v516
  %v662 = vunpack.c.l.b16 %v517
  %v663 = vunpack.c.l.b16 %v518
  %v664 = vunpack.c.l.b16 %v519
  %v665 = vpack.c.b16 %v650, %v649
  %v666 = vpack.c.b16 %v652, %v651
  %v667 = vpack.c.b16 %v654, %v653
  %v668 = vpack.c.b16 %v656, %v655
  %v669 = vpack.c.b16 %v658, %v657
  %v670 = vpack.c.b16 %v660, %v659
  %v671 = vpack.c.b16 %v662, %v661
  %v672 = vpack.c.b16 %v664, %v663
  %681 = vmatprep.subr.bf16.mxu0 0
  %682 = vmatpush1.bf16.msra.mxu0 %v665
  %683 = vmatprep.subr.bf16.mxu0 0
  %684 = vmatpush1.bf16.msra.mxu0 %v666
  %685 = vmatprep.subr.bf16.mxu0 0
  %686 = vmatpush1.bf16.msra.mxu0 %v667
  %687 = vmatprep.subr.bf16.mxu0 0
  %688 = vmatpush1.bf16.msra.mxu0 %v668
  %689 = vmatprep.subr.bf16.mxu0 0
  %690 = vmatpush1.bf16.msra.mxu0 %v669
  %691 = vmatprep.subr.bf16.mxu0 0
  %692 = vmatpush1.bf16.msra.mxu0 %v670
  %693 = vmatprep.subr.bf16.mxu0 0
  %694 = vmatpush1.bf16.msra.mxu0 %v671
  %695 = vmatprep.subr.bf16.mxu0 0
  %696 = vmatpush1.bf16.msra.mxu0 %v672
  %697 = vmatprep.subr.bf16.mxu0 0
  %698 = vmatpush1.bf16.msra.mxu0 0
  %699 = vmatprep.subr.bf16.mxu0 0
  %700 = vmatpush1.bf16.msra.mxu0 0
  %701 = vmatprep.subr.bf16.mxu0 0
  %702 = vmatpush1.bf16.msra.mxu0 0
  %703 = vmatprep.subr.bf16.mxu0 0
  %704 = vmatpush1.bf16.msra.mxu0 0
  %705 = vmatprep.subr.bf16.mxu0 0
  %706 = vmatpush1.bf16.msra.mxu0 0
  %707 = vmatprep.subr.bf16.mxu0 0
  %708 = vmatpush1.bf16.msra.mxu0 0
  %709 = vmatprep.subr.bf16.mxu0 0
  %710 = vmatpush1.bf16.msra.mxu0 0
  %711 = vmatprep.subr.bf16.mxu0 0
  %712 = vmatpush1.bf16.msra.mxu0 0
  %713 = vmatprep.mubr.bf16.mxu0 0
  %714 = vmatmul.mubr.bf16.gmra.mrb[0].mxu0 %v33
  %v715 = vpop.f32.mrb[0].mxu0
  %v716 = vadd.f32 %v620, %v715
  %v717 = vpop.f32.mrb[0].mxu0
  %v718 = vpop.f32.mrb[0].mxu0
  %v719 = vadd.f32 %v623, %v718
  %v720 = vpop.f32.mrb[0].mxu0
  %721 = vmatprep.mubr.bf16.mxu0 0
  %722 = vmatmul.mubr.bf16.gmra.mrb[0].mxu0 %v34
  %v723 = vpop.f32.mrb[0].mxu0
  %v724 = vadd.f32 %v628, %v723
  %v725 = vpop.f32.mrb[0].mxu0
  %v726 = vpop.f32.mrb[0].mxu0
  %v727 = vpop.f32.mrb[0].mxu0
  %728 = vdwg.mxu0
  %s729 = scalar_lea.vmem %s1, 384
  %v730 = vld [vmem:[%s729] sm:$0xf]
  %v731 = vld [vmem:[%s729 + $0x4] sm:$0xf]
  %v732 = vld [vmem:[%s729 + $0x8] sm:$0xf]
  %v733 = vld [vmem:[%s729 + $0xc] sm:$0xf]
  %v734 = vld [vmem:[%s729 + $0x10] sm:$0xf]
  %v735 = vld [vmem:[%s729 + $0x14] sm:$0xf]
  %v736 = vld [vmem:[%s729 + $0x18] sm:$0xf]
  %v737 = vld [vmem:[%s729 + $0x1c] sm:$0xf]
  %v738 = vld [vmem:[%s729 + $0x20] sm:$0xf]
  %v739 = vld [vmem:[%s729 + $0x24] sm:$0xf]
  %v740 = vld [vmem:[%s729 + $0x28] sm:$0xf]
  %v741 = vld [vmem:[%s729 + $0x2c] sm:$0xf]
  %v742 = vld [vmem:[%s729 + $0x30] sm:$0xf]
  %v743 = vld [vmem:[%s729 + $0x34] sm:$0xf]
  %v744 = vld [vmem:[%s729 + $0x38] sm:$0xf]
  %v745 = vld [vmem:[%s729 + $0x3c] sm:$0xf]
  %v762 = vunpack.c.l.b16 %v730
  %v763 = vunpack.c.l.b16 %v731
  %v764 = vunpack.c.l.b16 %v732
  %v765 = vunpack.c.l.b16 %v733
  %v766 = vunpack.c.l.b16 %v734
  %v767 = vunpack.c.l.b16 %v735
  %v768 = vunpack.c.l.b16 %v736
  %v769 = vunpack.c.l.b16 %v737
  %v770 = vunpack.c.l.b16 %v738
  %v771 = vunpack.c.l.b16 %v739
  %v772 = vunpack.c.l.b16 %v740
  %v773 = vunpack.c.l.b16 %v741
  %v774 = vunpack.c.l.b16 %v742
  %v775 = vunpack.c.l.b16 %v743
  %v776 = vunpack.c.l.b16 %v744
  %v777 = vunpack.c.l.b16 %v745
  %v778 = vpack.c.b16 %v763, %v762
  %v779 = vpack.c.b16 %v765, %v764
  %v780 = vpack.c.b16 %v767, %v766
  %v781 = vpack.c.b16 %v769, %v768
  %v782 = vpack.c.b16 %v771, %v770
  %v783 = vpack.c.b16 %v773, %v772
  %v784 = vpack.c.b16 %v775, %v774
  %v785 = vpack.c.b16 %v777, %v776
  %794 = vmatprep.subr.bf16.mxu0 0
  %795 = vmatpush1.bf16.msra.mxu0 %v778
  %796 = vmatprep.subr.bf16.mxu0 0
  %797 = vmatpush1.bf16.msra.mxu0 %v779
  %798 = vmatprep.subr.bf16.mxu0 0
  %799 = vmatpush1.bf16.msra.mxu0 %v780
  %800 = vmatprep.subr.bf16.mxu0 0
  %801 = vmatpush1.bf16.msra.mxu0 %v781
  %802 = vmatprep.subr.bf16.mxu0 0
  %803 = vmatpush1.bf16.msra.mxu0 %v782
  %804 = vmatprep.subr.bf16.mxu0 0
  %805 = vmatpush1.bf16.msra.mxu0 %v783
  %806 = vmatprep.subr.bf16.mxu0 0
  %807 = vmatpush1.bf16.msra.mxu0 %v784
  %808 = vmatprep.subr.bf16.mxu0 0
  %809 = vmatpush1.bf16.msra.mxu0 %v785
  %810 = vmatprep.subr.bf16.mxu0 0
  %811 = vmatpush1.bf16.msra.mxu0 0
  %812 = vmatprep.subr.bf16.mxu0 0
  %813 = vmatpush1.bf16.msra.mxu0 0
  %814 = vmatprep.subr.bf16.mxu0 0
  %815 = vmatpush1.bf16.msra.mxu0 0
  %816 = vmatprep.subr.bf16.mxu0 0
  %817 = vmatpush1.bf16.msra.mxu0 0
  %818 = vmatprep.subr.bf16.mxu0 0
  %819 = vmatpush1.bf16.msra.mxu0 0
  %820 = vmatprep.subr.bf16.mxu0 0
  %821 = vmatpush1.bf16.msra.mxu0 0
  %822 = vmatprep.subr.bf16.mxu0 0
  %823 = vmatpush1.bf16.msra.mxu0 0
  %824 = vmatprep.subr.bf16.mxu0 0
  %825 = vmatpush1.bf16.msra.mxu0 0
  %826 = vmatprep.mubr.bf16.mxu0 0
  %827 = vmatmul.mubr.bf16.gmra.mrb[0].mxu0 %v23
  %v828 = vpop.f32.mrb[0].mxu0
  %v829 = vadd.f32 0.0, %v828
  %v830 = vpop.f32.mrb[0].mxu0
  %v831 = vpop.f32.mrb[0].mxu0
  %v832 = vadd.f32 0.0, %v831
  %v833 = vpop.f32.mrb[0].mxu0
  %834 = vmatprep.mubr.bf16.mxu0 0
  %835 = vmatmul.mubr.bf16.gmra.mrb[0].mxu0 %v24
  %v836 = vpop.f32.mrb[0].mxu0
  %v837 = vadd.f32 0.0, %v836
  %v838 = vpop.f32.mrb[0].mxu0
  %v839 = vpop.f32.mrb[0].mxu0
  %v840 = vpop.f32.mrb[0].mxu0
  %841 = vdwg.mxu0
  %v842 = vadd.f32 %v716, %v829
  %v843 = vadd.f32 %v719, %v832
  %v844 = vadd.f32 %v724, %v837
  %s845 = scalar_lea.vmem %s1, 512
  %v846 = vld [vmem:[%s845] sm:$0xf]
  %v847 = vld [vmem:[%s845 + $0x4] sm:$0xf]
  %v848 = vld [vmem:[%s845 + $0x8] sm:$0xf]
  %v849 = vld [vmem:[%s845 + $0xc] sm:$0xf]
  %v850 = vld [vmem:[%s845 + $0x10] sm:$0xf]
  %v851 = vld [vmem:[%s845 + $0x14] sm:$0xf]
  %v852 = vld [vmem:[%s845 + $0x18] sm:$0xf]
  %v853 = vld [vmem:[%s845 + $0x1c] sm:$0xf]
  %v854 = vld [vmem:[%s845 + $0x20] sm:$0xf]
  %v855 = vld [vmem:[%s845 + $0x24] sm:$0xf]
  %v856 = vld [vmem:[%s845 + $0x28] sm:$0xf]
  %v857 = vld [vmem:[%s845 + $0x2c] sm:$0xf]
  %v858 = vld [vmem:[%s845 + $0x30] sm:$0xf]
  %v859 = vld [vmem:[%s845 + $0x34] sm:$0xf]
  %v860 = vld [vmem:[%s845 + $0x38] sm:$0xf]
  %v861 = vld [vmem:[%s845 + $0x3c] sm:$0xf]
  %v878 = vunpack.c.l.b16 %v846
  %v879 = vunpack.c.l.b16 %v847
  %v880 = vunpack.c.l.b16 %v848
  %v881 = vunpack.c.l.b16 %v849
  %v882 = vunpack.c.l.b16 %v850
  %v883 = vunpack.c.l.b16 %v851
  %v884 = vunpack.c.l.b16 %v852
  %v885 = vunpack.c.l.b16 %v853
  %v886 = vunpack.c.l.b16 %v854
  %v887 = vunpack.c.l.b16 %v855
  %v888 = vunpack.c.l.b16 %v856
  %v889 = vunpack.c.l.b16 %v857
  %v890 = vunpack.c.l.b16 %v858
  %v891 = vunpack.c.l.b16 %v859
  %v892 = vunpack.c.l.b16 %v860
  %v893 = vunpack.c.l.b16 %v861
  %v894 = vpack.c.b16 %v879, %v878
  %v895 = vpack.c.b16 %v881, %v880
  %v896 = vpack.c.b16 %v883, %v882
  %v897 = vpack.c.b16 %v885, %v884
  %v898 = vpack.c.b16 %v887, %v886
  %v899 = vpack.c.b16 %v889, %v888
  %v900 = vpack.c.b16 %v891, %v890
  %v901 = vpack.c.b16 %v893, %v892
  %910 = vmatprep.subr.bf16.mxu0 0
  %911 = vmatpush1.bf16.msra.mxu0 %v894
  %912 = vmatprep.subr.bf16.mxu0 0
  %913 = vmatpush1.bf16.msra.mxu0 %v895
  %914 = vmatprep.subr.bf16.mxu0 0
  %915 = vmatpush1.bf16.msra.mxu0 %v896
  %916 = vmatprep.subr.bf16.mxu0 0
  %917 = vmatpush1.bf16.msra.mxu0 %v897
  %918 = vmatprep.subr.bf16.mxu0 0
  %919 = vmatpush1.bf16.msra.mxu0 %v898
  %920 = vmatprep.subr.bf16.mxu0 0
  %921 = vmatpush1.bf16.msra.mxu0 %v899
  %922 = vmatprep.subr.bf16.mxu0 0
  %923 = vmatpush1.bf16.msra.mxu0 %v900
  %924 = vmatprep.subr.bf16.mxu0 0
  %925 = vmatpush1.bf16.msra.mxu0 %v901
  %926 = vmatprep.subr.bf16.mxu0 0
  %927 = vmatpush1.bf16.msra.mxu0 0
  %928 = vmatprep.subr.bf16.mxu0 0
  %929 = vmatpush1.bf16.msra.mxu0 0
  %930 = vmatprep.subr.bf16.mxu0 0
  %931 = vmatpush1.bf16.msra.mxu0 0
  %932 = vmatprep.subr.bf16.mxu0 0
  %933 = vmatpush1.bf16.msra.mxu0 0
  %934 = vmatprep.subr.bf16.mxu0 0
  %935 = vmatpush1.bf16.msra.mxu0 0
  %936 = vmatprep.subr.bf16.mxu0 0
  %937 = vmatpush1.bf16.msra.mxu0 0
  %938 = vmatprep.subr.bf16.mxu0 0
  %939 = vmatpush1.bf16.msra.mxu0 0
  %940 = vmatprep.subr.bf16.mxu0 0
  %941 = vmatpush1.bf16.msra.mxu0 0
  %942 = vmatprep.mubr.bf16.mxu0 0
  %943 = vmatmul.mubr.bf16.gmra.mrb[0].mxu0 %v18
  %v944 = vpop.f32.mrb[0].mxu0
  %v945 = vadd.f32 0.0, %v944
  %v946 = vpop.f32.mrb[0].mxu0
  %v947 = vpop.f32.mrb[0].mxu0
  %v948 = vadd.f32 0.0, %v947
  %v949 = vpop.f32.mrb[0].mxu0
  %950 = vmatprep.mubr.bf16.mxu0 0
  %951 = vmatmul.mubr.bf16.gmra.mrb[0].mxu0 %v19
  %v952 = vpop.f32.mrb[0].mxu0
  %v953 = vadd.f32 0.0, %v952
  %v954 = vpop.f32.mrb[0].mxu0
  %v955 = vpop.f32.mrb[0].mxu0
  %v956 = vpop.f32.mrb[0].mxu0
  %957 = vdwg.mxu0
  %v958 = vadd.f32 %v842, %v945
  %v959 = vadd.f32 %v843, %v948
  %v960 = vadd.f32 %v844, %v953
  %v961 = vld [vmem:[%s2] sm:$0x1]
  %v963 = vlaneseq
  %v964 = vshrl.u32 %v963, 7
  %v965 = vsub.s32 0, %v964
  %v966 = vrot.slane %v961, %v965
  %v984 = vunpack.c.l.b16 %v36
  %v985 = vunpack.c.l.b16 %v37
  %v986 = vunpack.c.l.b16 %v38
  %v987 = vunpack.c.l.b16 %v39
  %v988 = vunpack.c.l.b16 %v40
  %v989 = vunpack.c.l.b16 %v41
  %v990 = vunpack.c.l.b16 %v42
  %v991 = vunpack.c.l.b16 %v43
  %v992 = vunpack.c.l.b16 %v44
  %v993 = vunpack.c.l.b16 %v45
  %v994 = vunpack.c.l.b16 %v46
  %v995 = vunpack.c.l.b16 %v47
  %v996 = vunpack.c.l.b16 %v48
  %v997 = vunpack.c.l.b16 %v49
  %v998 = vunpack.c.l.b16 %v50
  %v999 = vunpack.c.l.b16 %v51
  %v1000 = vpack.c.b16 %v985, %v984
  %v1001 = vpack.c.b16 %v987, %v986
  %v1002 = vpack.c.b16 %v989, %v988
  %v1003 = vpack.c.b16 %v991, %v990
  %v1004 = vpack.c.b16 %v993, %v992
  %v1005 = vpack.c.b16 %v995, %v994
  %v1006 = vpack.c.b16 %v997, %v996
  %v1007 = vpack.c.b16 %v999, %v998
  %1016 = vmatprep.subr.bf16.mxu0 0
  %1017 = vmatpush1.bf16.msra.mxu0 %v1000
  %1018 = vmatprep.subr.bf16.mxu0 0
  %1019 = vmatpush1.bf16.msra.mxu0 %v1001
  %1020 = vmatprep.subr.bf16.mxu0 0
  %1021 = vmatpush1.bf16.msra.mxu0 %v1002
  %1022 = vmatprep.subr.bf16.mxu0 0
  %1023 = vmatpush1.bf16.msra.mxu0 %v1003
  %1024 = vmatprep.subr.bf16.mxu0 0
  %1025 = vmatpush1.bf16.msra.mxu0 %v1004
  %1026 = vmatprep.subr.bf16.mxu0 0
  %1027 = vmatpush1.bf16.msra.mxu0 %v1005
  %1028 = vmatprep.subr.bf16.mxu0 0
  %1029 = vmatpush1.bf16.msra.mxu0 %v1006
  %1030 = vmatprep.subr.bf16.mxu0 0
  %1031 = vmatpush1.bf16.msra.mxu0 %v1007
  %1032 = vmatprep.subr.bf16.mxu0 0
  %1033 = vmatpush1.bf16.msra.mxu0 0
  %1034 = vmatprep.subr.bf16.mxu0 0
  %1035 = vmatpush1.bf16.msra.mxu0 0
  %1036 = vmatprep.subr.bf16.mxu0 0
  %1037 = vmatpush1.bf16.msra.mxu0 0
  %1038 = vmatprep.subr.bf16.mxu0 0
  %1039 = vmatpush1.bf16.msra.mxu0 0
  %1040 = vmatprep.subr.bf16.mxu0 0
  %1041 = vmatpush1.bf16.msra.mxu0 0
  %1042 = vmatprep.subr.bf16.mxu0 0
  %1043 = vmatpush1.bf16.msra.mxu0 0
  %1044 = vmatprep.subr.bf16.mxu0 0
  %1045 = vmatpush1.bf16.msra.mxu0 0
  %1046 = vmatprep.subr.bf16.mxu0 0
  %1047 = vmatpush1.bf16.msra.mxu0 0
  %1048 = vmatprep.mubr.bf16.mxu0 0
  %1049 = vmatmul.mubr.bf16.gmra.mrb[0].mxu0 %v18
  %v1050 = vpop.f32.mrb[0].mxu0
  %v1051 = vadd.f32 %v966, %v1050
  %v1052 = vpop.f32.mrb[0].mxu0
  %v1053 = vpop.f32.mrb[0].mxu0
  %v1054 = vadd.f32 %v966, %v1053
  %v1055 = vpop.f32.mrb[0].mxu0
  %1056 = vmatprep.mubr.bf16.mxu0 0
  %1057 = vmatmul.mubr.bf16.gmra.mrb[0].mxu0 %v19
  %v1058 = vpop.f32.mrb[0].mxu0
  %v1059 = vadd.f32 %v966, %v1058
  %v1060 = vpop.f32.mrb[0].mxu0
  %v1061 = vpop.f32.mrb[0].mxu0
  %v1062 = vpop.f32.mrb[0].mxu0
  %1063 = vdwg.mxu0
  %v1064 = vmax.f32 %v1051, 0.0
  %v1065 = vmax.f32 %v1054, 0.0
  %v1066 = vmax.f32 %v1059, 0.0
  %vm1067 = vcmask 523264
  %1068 = vst.msk [vmem:[%s3] sm:$0xff] %vm1067, %v1064
  %1069 = vst.msk [vmem:[%s3 + $0x8] sm:$0xff] %vm1067, %v1065
  %vm1070 = vcmask 517120
  %1071 = vst.msk [vmem:[%s3 + $0x10] sm:$0x3] %vm1070, %v1066
  %v1072 = vld [vmem:[%s2] sm:$0x1]
  %v1074 = vlaneseq
  %v1075 = vshrl.u32 %v1074, 7
  %v1076 = vsub.s32 0, %v1075
  %v1077 = vrot.slane %v1072, %v1076
  %v1079 = vadd.f32 %v265, %v1077
  %v1080 = vadd.f32 %v268, %v1077
  %v1081 = vadd.f32 %v273, %v1077
  %v1082 = vmax.f32 %v1079, 0.0
  %v1083 = vmax.f32 %v1080, 0.0
  %v1084 = vmax.f32 %v1081, 0.0
  %s1085 = scalar_lea.vmem %s3, 24
  %1086 = vst.msk [vmem:[%s1085] sm:$0xff] %vm1067, %v1082
  %1087 = vst.msk [vmem:[%s1085 + $0x8] sm:$0xff] %vm1067, %v1083
  %1088 = vst.msk [vmem:[%s1085 + $0x10] sm:$0x3] %vm1070, %v1084
  %v1089 = vld [vmem:[%s2] sm:$0x1]
  %v1091 = vlaneseq
  %v1092 = vshrl.u32 %v1091, 7
  %v1093 = vsub.s32 0, %v1092
  %v1094 = vrot.slane %v1089, %v1093
  %v1096 = vadd.f32 %v491, %v1094
  %v1097 = vadd.f32 %v494, %v1094
  %v1098 = vadd.f32 %v499, %v1094
  %v1099 = vmax.f32 %v1096, 0.0
  %v1100 = vmax.f32 %v1097, 0.0
  %v1101 = vmax.f32 %v1098, 0.0
  %s1102 = scalar_lea.vmem %s3, 48
  %1103 = vst.msk [vmem:[%s1102] sm:$0xff] %vm1067, %v1099
  %1104 = vst.msk [vmem:[%s1102 + $0x8] sm:$0xff] %vm1067, %v1100
  %1105 = vst.msk [vmem:[%s1102 + $0x10] sm:$0x3] %vm1070, %v1101
  %v1106 = vld [vmem:[%s2] sm:$0x1]
  %v1108 = vlaneseq
  %v1109 = vshrl.u32 %v1108, 7
  %v1110 = vsub.s32 0, %v1109
  %v1111 = vrot.slane %v1106, %v1110
  %v1113 = vadd.f32 %v958, %v1111
  %v1114 = vadd.f32 %v959, %v1111
  %v1115 = vadd.f32 %v960, %v1111
  %v1116 = vmax.f32 %v1113, 0.0
  %v1117 = vmax.f32 %v1114, 0.0
  %v1118 = vmax.f32 %v1115, 0.0
  %s1119 = scalar_lea.vmem %s3, 72
  %1120 = vst.msk [vmem:[%s1119] sm:$0xff] %vm1067, %v1116
  %1121 = vst.msk [vmem:[%s1119 + $0x8] sm:$0xff] %vm1067, %v1117
  %1122 = vst.msk [vmem:[%s1119 + $0x10] sm:$0x3] %vm1070, %v1118
  // Predicated region
  $region14: #{capsule_autoencoder_forward.9} parent=0 // pred_check
    _
  $region15: #{capsule_autoencoder_forward.9} parent=0 // pred_check_branch
    %1124 = sbr.rel (0) target = $region17
  $region16: #{capsule_autoencoder_forward.9} parent=0 // pred_region
    _
  $region17: #{capsule_autoencoder_forward.9} parent=0 // pred_fallthru
    _
  // Predicated region
  $region18: #{capsule_autoencoder_forward.9} parent=0 // pred_check
    _
  $region19: #{capsule_autoencoder_forward.9} parent=0 // pred_check_branch
    %1126 = sbr.rel (0) target = $region21
  $region20: #{capsule_autoencoder_forward.9} parent=0 // pred_region
    _
  $region21: #{capsule_autoencoder_forward.9} parent=0 // pred_fallthru
    _

// kernel: capsule_autoencoder_forward.10
$region0: #{capsule_autoencoder_forward.10}
  #allocation0 [shape = 'u32[]', space=smem, size = 0x4, offset = 0x4, fixed_abs, tag = 'smem constant byte address 0x4 - core index']
  #allocation1 [shape = 'u32[144,128]{1,0:T(1,128)}', space=vmem, size = 0x12000, scoped, tag = 'internal scratch']
  %s0 = inlined_call_operand.vmem [shape: f32[56,64], index: 0, kind: input, shape index: {}]
  %s1 = inlined_call_operand.vmem [shape: bf16[9,64,32], index: 1, kind: input, shape index: {}]
  %s2 = inlined_call_operand.vmem [shape: f32[1,32], index: 2, kind: input, shape index: {}]
  %s3 = inlined_call_operand.vmem [shape: f32[4,50,32], index: 3, kind: output, shape index: {}]
  %s4 = sld [smem:[#allocation0]]
  $region22: #{capsule_autoencoder_forward.10} parent=0
    _
  %s6 = ssub.s32 1, %s4
  %s7 = scalar_select 0, %s6, %s4
  // Predicated region
  $region2: #{capsule_autoencoder_forward.10} parent=0 // pred_check
    _
  $region3: #{capsule_autoencoder_forward.10} parent=0 // pred_check_branch
    %9 = sbr.rel (0) target = $region5
  $region4: #{capsule_autoencoder_forward.10} parent=0 // pred_region
    _
  $region5: #{capsule_autoencoder_forward.10} parent=0 // pred_fallthru
    _
  // Predicated region
  $region6: #{capsule_autoencoder_forward.10} parent=0 // pred_check
    _
  $region7: #{capsule_autoencoder_forward.10} parent=0 // pred_check_branch
    %11 = sbr.rel (0) target = $region9
  $region8: #{capsule_autoencoder_forward.10} parent=0 // pred_region
    _
  $region9: #{capsule_autoencoder_forward.10} parent=0 // pred_fallthru
    _
  // Predicated region
  $region10: #{capsule_autoencoder_forward.10} parent=0 // pred_check
    _
  $region11: #{capsule_autoencoder_forward.10} parent=0 // pred_check_branch
    %13 = sbr.rel (0) target = $region13
  $region12: #{capsule_autoencoder_forward.10} parent=0 // pred_region
    _
  $region13: #{capsule_autoencoder_forward.10} parent=0 // pred_fallthru
    _
  %v15 = vld [vmem:[%s0] sm:$0xff]
  %v16 = vld [vmem:[%s0 + $0x8] sm:$0xff]
  %v17 = vld [vmem:[%s0 + $0x10] sm:$0xff]
  %v18 = vld [vmem:[%s0 + $0x18] sm:$0xff]
  %v19 = vld [vmem:[%s0 + $0x20] sm:$0xff]
  %v20 = vld [vmem:[%s0 + $0x28] sm:$0xff]
  %v21 = vld [vmem:[%s0 + $0x30] sm:$0x3]
  %v22 = vpack.c.bf16 %v16, %v15
  %v23 = vpack.c.bf16 %v18, %v17
  %v24 = vpack.c.bf16 %v20, %v19
  %v25 = vpack.c.bf16 %v21, %v21
  %v26 = vld [vmem:[%s0 + $0x1] sm:$0xff]
  %v27 = vld [vmem:[%s0 + $0x9] sm:$0xff]
  %v28 = vld [vmem:[%s0 + $0x11] sm:$0xff]
  %v29 = vld [vmem:[%s0 + $0x19] sm:$0xff]
  %v30 = vld [vmem:[%s0 + $0x21] sm:$0xff]
  %v31 = vld [vmem:[%s0 + $0x29] sm:$0xff]
  %v32 = vld [vmem:[%s0 + $0x31] sm:$0x3]
  %v33 = vpack.c.bf16 %v27, %v26
  %v34 = vpack.c.bf16 %v29, %v28
  %v35 = vpack.c.bf16 %v31, %v30
  %v36 = vpack.c.bf16 %v32, %v32
  %v37 = vld [vmem:[%s0 + $0x5] sm:$0xff]
  %v38 = vld [vmem:[%s0 + $0xd] sm:$0xff]
  %v39 = vld [vmem:[%s0 + $0x15] sm:$0xff]
  %v40 = vld [vmem:[%s0 + $0x1d] sm:$0xff]
  %v41 = vld [vmem:[%s0 + $0x25] sm:$0xff]
  %v42 = vld [vmem:[%s0 + $0x2d] sm:$0xff]
  %v43 = vld [vmem:[%s0 + $0x35] sm:$0x3]
  %v44 = vpack.c.bf16 %v38, %v37
  %v45 = vpack.c.bf16 %v40, %v39
  %v46 = vpack.c.bf16 %v42, %v41
  %v47 = vpack.c.bf16 %v43, %v43
  %v48 = vld [vmem:[%s0 + $0x6] sm:$0xff]
  %v49 = vld [vmem:[%s0 + $0xe] sm:$0xff]
  %v50 = vld [vmem:[%s0 + $0x16] sm:$0xff]
  %v51 = vld [vmem:[%s0 + $0x1e] sm:$0xff]
  %v52 = vld [vmem:[%s0 + $0x26] sm:$0xff]
  %v53 = vld [vmem:[%s0 + $0x2e] sm:$0xff]
  %v54 = vld [vmem:[%s0 + $0x36] sm:$0x3]
  %v55 = vpack.c.bf16 %v49, %v48
  %v56 = vpack.c.bf16 %v51, %v50
  %v57 = vpack.c.bf16 %v53, %v52
  %v58 = vpack.c.bf16 %v54, %v54
  %s59 = scalar_lea.vmem %s1, 128
  %v60 = vld [vmem:[%s59] sm:$0xf]
  %v61 = vld [vmem:[%s59 + $0x4] sm:$0xf]
  %v62 = vld [vmem:[%s59 + $0x8] sm:$0xf]
  %v63 = vld [vmem:[%s59 + $0xc] sm:$0xf]
  %v64 = vld [vmem:[%s59 + $0x10] sm:$0xf]
  %v65 = vld [vmem:[%s59 + $0x14] sm:$0xf]
  %v66 = vld [vmem:[%s59 + $0x18] sm:$0xf]
  %v67 = vld [vmem:[%s59 + $0x1c] sm:$0xf]
  %s68 = scalar_lea.vmem %s1, 96
  %v69 = vld [vmem:[%s68] sm:$0xf]
  %v70 = vld [vmem:[%s68 + $0x4] sm:$0xf]
  %v71 = vld [vmem:[%s68 + $0x8] sm:$0xf]
  %v72 = vld [vmem:[%s68 + $0xc] sm:$0xf]
  %v73 = vld [vmem:[%s68 + $0x10] sm:$0xf]
  %v74 = vld [vmem:[%s68 + $0x14] sm:$0xf]
  %v75 = vld [vmem:[%s68 + $0x18] sm:$0xf]
  %v76 = vld [vmem:[%s68 + $0x1c] sm:$0xf]
  %s77 = scalar_lea.vmem %s1, 160
  %v78 = vld [vmem:[%s77] sm:$0xf]
  %v79 = vld [vmem:[%s77 + $0x4] sm:$0xf]
  %v80 = vld [vmem:[%s77 + $0x8] sm:$0xf]
  %v81 = vld [vmem:[%s77 + $0xc] sm:$0xf]
  %v82 = vld [vmem:[%s77 + $0x10] sm:$0xf]
  %v83 = vld [vmem:[%s77 + $0x14] sm:$0xf]
  %v84 = vld [vmem:[%s77 + $0x18] sm:$0xf]
  %v85 = vld [vmem:[%s77 + $0x1c] sm:$0xf]
  %v94 = vunpack.c.l.b16 %v78
  %v95 = vunpack.c.l.b16 %v79
  %v96 = vunpack.c.l.b16 %v80
  %v97 = vunpack.c.l.b16 %v81
  %v98 = vunpack.c.l.b16 %v82
  %v99 = vunpack.c.l.b16 %v83
  %v100 = vunpack.c.l.b16 %v84
  %v101 = vunpack.c.l.b16 %v85
  %v102 = vpack.c.b16 %v95, %v94
  %v103 = vpack.c.b16 %v97, %v96
  %v104 = vpack.c.b16 %v99, %v98
  %v105 = vpack.c.b16 %v101, %v100
  %vm110 = vcmask 523264
  %v112 = vsel %vm110, %v22, 0
  %v115 = vsel %vm110, %v23, 0
  %v118 = vsel %vm110, %v24, 0
  %v121 = vsel %vm110, %v25, 0
  %123 = vmatprep.subr.bf16.mxu0 0
  %124 = vmatpush1.bf16.msra.mxu0 %v102
  %125 = vmatprep.subr.bf16.mxu0 0
  %126 = vmatpush1.bf16.msra.mxu0 %v103
  %127 = vmatprep.subr.bf16.mxu0 0
  %128 = vmatpush1.bf16.msra.mxu0 %v104
  %129 = vmatprep.subr.bf16.mxu0 0
  %130 = vmatpush1.bf16.msra.mxu0 %v105
  %131 = vmatprep.subr.bf16.mxu0 0
  %132 = vmatpush1.bf16.msra.mxu0 0
  %133 = vmatprep.subr.bf16.mxu0 0
  %134 = vmatpush1.bf16.msra.mxu0 0
  %135 = vmatprep.subr.bf16.mxu0 0
  %136 = vmatpush1.bf16.msra.mxu0 0
  %137 = vmatprep.subr.bf16.mxu0 0
  %138 = vmatpush1.bf16.msra.mxu0 0
  %139 = vmatprep.subr.bf16.mxu0 0
  %140 = vmatpush1.bf16.msra.mxu0 0
  %141 = vmatprep.subr.bf16.mxu0 0
  %142 = vmatpush1.bf16.msra.mxu0 0
  %143 = vmatprep.subr.bf16.mxu0 0
  %144 = vmatpush1.bf16.msra.mxu0 0
  %145 = vmatprep.subr.bf16.mxu0 0
  %146 = vmatpush1.bf16.msra.mxu0 0
  %147 = vmatprep.subr.bf16.mxu0 0
  %148 = vmatpush1.bf16.msra.mxu0 0
  %149 = vmatprep.subr.bf16.mxu0 0
  %150 = vmatpush1.bf16.msra.mxu0 0
  %151 = vmatprep.subr.bf16.mxu0 0
  %152 = vmatpush1.bf16.msra.mxu0 0
  %153 = vmatprep.subr.bf16.mxu0 0
  %154 = vmatpush1.bf16.msra.mxu0 0
  %155 = vmatprep.mubr.bf16.mxu0 0
  %156 = vmatmul.mubr.bf16.gmra.mrb[0].mxu0 %v112
  %v157 = vpop.f32.mrb[0].mxu0
  %v158 = vadd.f32 0.0, %v157
  %v159 = vpop.f32.mrb[0].mxu0
  %v160 = vpop.f32.mrb[0].mxu0
  %v161 = vadd.f32 0.0, %v160
  %v162 = vpop.f32.mrb[0].mxu0
  %163 = vmatprep.mubr.bf16.mxu0 0
  %164 = vmatmul.mubr.bf16.gmra.mrb[0].mxu0 %v115
  %v165 = vpop.f32.mrb[0].mxu0
  %v166 = vadd.f32 0.0, %v165
  %v167 = vpop.f32.mrb[0].mxu0
  %v168 = vpop.f32.mrb[0].mxu0
  %v169 = vadd.f32 0.0, %v168
  %v170 = vpop.f32.mrb[0].mxu0
  %171 = vmatprep.mubr.bf16.mxu0 0
  %172 = vmatmul.mubr.bf16.gmra.mrb[0].mxu0 %v118
  %v173 = vpop.f32.mrb[0].mxu0
  %v174 = vadd.f32 0.0, %v173
  %v175 = vpop.f32.mrb[0].mxu0
  %v176 = vpop.f32.mrb[0].mxu0
  %v177 = vadd.f32 0.0, %v176
  %v178 = vpop.f32.mrb[0].mxu0
  %179 = vmatprep.mubr.bf16.mxu0 0
  %180 = vmatmul.mubr.bf16.gmra.mrb[0].mxu0 %v121
  %v181 = vpop.f32.mrb[0].mxu0
  %v182 = vadd.f32 0.0, %v181
  %v183 = vpop.f32.mrb[0].mxu0
  %v184 = vpop.f32.mrb[0].mxu0
  %v185 = vpop.f32.mrb[0].mxu0
  %186 = vdwg.mxu0
  %v195 = vunpack.c.l.b16 %v69
  %v196 = vunpack.c.l.b16 %v70
  %v197 = vunpack.c.l.b16 %v71
  %v198 = vunpack.c.l.b16 %v72
  %v199 = vunpack.c.l.b16 %v73
  %v200 = vunpack.c.l.b16 %v74
  %v201 = vunpack.c.l.b16 %v75
  %v202 = vunpack.c.l.b16 %v76
  %v203 = vpack.c.b16 %v196, %v195
  %v204 = vpack.c.b16 %v198, %v197
  %v205 = vpack.c.b16 %v200, %v199
  %v206 = vpack.c.b16 %v202, %v201
  %v212 = vsel %vm110, %v33, 0
  %v215 = vsel %vm110, %v34, 0
  %v218 = vsel %vm110, %v35, 0
  %v221 = vsel %vm110, %v36, 0
  %223 = vmatprep.subr.bf16.mxu0 0
  %224 = vmatpush1.bf16.msra.mxu0 %v203
  %225 = vmatprep.subr.bf16.mxu0 0
  %226 = vmatpush1.bf16.msra.mxu0 %v204
  %227 = vmatprep.subr.bf16.mxu0 0
  %228 = vmatpush1.bf16.msra.mxu0 %v205
  %229 = vmatprep.subr.bf16.mxu0 0
  %230 = vmatpush1.bf16.msra.mxu0 %v206
  %231 = vmatprep.subr.bf16.mxu0 0
  %232 = vmatpush1.bf16.msra.mxu0 0
  %233 = vmatprep.subr.bf16.mxu0 0
  %234 = vmatpush1.bf16.msra.mxu0 0
  %235 = vmatprep.subr.bf16.mxu0 0
  %236 = vmatpush1.bf16.msra.mxu0 0
  %237 = vmatprep.subr.bf16.mxu0 0
  %238 = vmatpush1.bf16.msra.mxu0 0
  %239 = vmatprep.subr.bf16.mxu0 0
  %240 = vmatpush1.bf16.msra.mxu0 0
  %241 = vmatprep.subr.bf16.mxu0 0
  %242 = vmatpush1.bf16.msra.mxu0 0
  %243 = vmatprep.subr.bf16.mxu0 0
  %244 = vmatpush1.bf16.msra.mxu0 0
  %245 = vmatprep.subr.bf16.mxu0 0
  %246 = vmatpush1.bf16.msra.mxu0 0
  %247 = vmatprep.subr.bf16.mxu0 0
  %248 = vmatpush1.bf16.msra.mxu0 0
  %249 = vmatprep.subr.bf16.mxu0 0
  %250 = vmatpush1.bf16.msra.mxu0 0
  %251 = vmatprep.subr.bf16.mxu0 0
  %252 = vmatpush1.bf16.msra.mxu0 0
  %253 = vmatprep.subr.bf16.mxu0 0
  %254 = vmatpush1.bf16.msra.mxu0 0
  %255 = vmatprep.mubr.bf16.mxu0 0
  %256 = vmatmul.mubr.bf16.gmra.mrb[0].mxu0 %v212
  %v257 = vpop.f32.mrb[0].mxu0
  %v258 = vadd.f32 %v158, %v257
  %v259 = vpop.f32.mrb[0].mxu0
  %v260 = vpop.f32.mrb[0].mxu0
  %v261 = vadd.f32 %v161, %v260
  %v262 = vpop.f32.mrb[0].mxu0
  %263 = vmatprep.mubr.bf16.mxu0 0
  %264 = vmatmul.mubr.bf16.gmra.mrb[0].mxu0 %v215
  %v265 = vpop.f32.mrb[0].mxu0
  %v266 = vadd.f32 %v166, %v265
  %v267 = vpop.f32.mrb[0].mxu0
  %v268 = vpop.f32.mrb[0].mxu0
  %v269 = vadd.f32 %v169, %v268
  %v270 = vpop.f32.mrb[0].mxu0
  %271 = vmatprep.mubr.bf16.mxu0 0
  %272 = vmatmul.mubr.bf16.gmra.mrb[0].mxu0 %v218
  %v273 = vpop.f32.mrb[0].mxu0
  %v274 = vadd.f32 %v174, %v273
  %v275 = vpop.f32.mrb[0].mxu0
  %v276 = vpop.f32.mrb[0].mxu0
  %v277 = vadd.f32 %v177, %v276
  %v278 = vpop.f32.mrb[0].mxu0
  %279 = vmatprep.mubr.bf16.mxu0 0
  %280 = vmatmul.mubr.bf16.gmra.mrb[0].mxu0 %v221
  %v281 = vpop.f32.mrb[0].mxu0
  %v282 = vadd.f32 %v182, %v281
  %v283 = vpop.f32.mrb[0].mxu0
  %v284 = vpop.f32.mrb[0].mxu0
  %v285 = vpop.f32.mrb[0].mxu0
  %286 = vdwg.mxu0
  %s287 = scalar_lea.vmem %s1, 32
  %v288 = vld [vmem:[%s287] sm:$0xf]
  %v289 = vld [vmem:[%s287 + $0x4] sm:$0xf]
  %v290 = vld [vmem:[%s287 + $0x8] sm:$0xf]
  %v291 = vld [vmem:[%s287 + $0xc] sm:$0xf]
  %v292 = vld [vmem:[%s287 + $0x10] sm:$0xf]
  %v293 = vld [vmem:[%s287 + $0x14] sm:$0xf]
  %v294 = vld [vmem:[%s287 + $0x18] sm:$0xf]
  %v295 = vld [vmem:[%s287 + $0x1c] sm:$0xf]
  %s296 = scalar_lea.vmem %s1, 224
  %v297 = vld [vmem:[%s296] sm:$0xf]
  %v298 = vld [vmem:[%s296 + $0x4] sm:$0xf]
  %v299 = vld [vmem:[%s296 + $0x8] sm:$0xf]
  %v300 = vld [vmem:[%s296 + $0xc] sm:$0xf]
  %v301 = vld [vmem:[%s296 + $0x10] sm:$0xf]
  %v302 = vld [vmem:[%s296 + $0x14] sm:$0xf]
  %v303 = vld [vmem:[%s296 + $0x18] sm:$0xf]
  %v304 = vld [vmem:[%s296 + $0x1c] sm:$0xf]
  %v313 = vunpack.c.l.b16 %v297
  %v314 = vunpack.c.l.b16 %v298
  %v315 = vunpack.c.l.b16 %v299
  %v316 = vunpack.c.l.b16 %v300
  %v317 = vunpack.c.l.b16 %v301
  %v318 = vunpack.c.l.b16 %v302
  %v319 = vunpack.c.l.b16 %v303
  %v320 = vunpack.c.l.b16 %v304
  %v321 = vpack.c.b16 %v314, %v313
  %v322 = vpack.c.b16 %v316, %v315
  %v323 = vpack.c.b16 %v318, %v317
  %v324 = vpack.c.b16 %v320, %v319
  %329 = vmatprep.subr.bf16.mxu0 0
  %330 = vmatpush1.bf16.msra.mxu0 %v321
  %331 = vmatprep.subr.bf16.mxu0 0
  %332 = vmatpush1.bf16.msra.mxu0 %v322
  %333 = vmatprep.subr.bf16.mxu0 0
  %334 = vmatpush1.bf16.msra.mxu0 %v323
  %335 = vmatprep.subr.bf16.mxu0 0
  %336 = vmatpush1.bf16.msra.mxu0 %v324
  %337 = vmatprep.subr.bf16.mxu0 0
  %338 = vmatpush1.bf16.msra.mxu0 0
  %339 = vmatprep.subr.bf16.mxu0 0
  %340 = vmatpush1.bf16.msra.mxu0 0
  %341 = vmatprep.subr.bf16.mxu0 0
  %342 = vmatpush1.bf16.msra.mxu0 0
  %343 = vmatprep.subr.bf16.mxu0 0
  %344 = vmatpush1.bf16.msra.mxu0 0
  %345 = vmatprep.subr.bf16.mxu0 0
  %346 = vmatpush1.bf16.msra.mxu0 0
  %347 = vmatprep.subr.bf16.mxu0 0
  %348 = vmatpush1.bf16.msra.mxu0 0
  %349 = vmatprep.subr.bf16.mxu0 0
  %350 = vmatpush1.bf16.msra.mxu0 0
  %351 = vmatprep.subr.bf16.mxu0 0
  %352 = vmatpush1.bf16.msra.mxu0 0
  %353 = vmatprep.subr.bf16.mxu0 0
  %354 = vmatpush1.bf16.msra.mxu0 0
  %355 = vmatprep.subr.bf16.mxu0 0
  %356 = vmatpush1.bf16.msra.mxu0 0
  %357 = vmatprep.subr.bf16.mxu0 0
  %358 = vmatpush1.bf16.msra.mxu0 0
  %359 = vmatprep.subr.bf16.mxu0 0
  %360 = vmatpush1.bf16.msra.mxu0 0
  %361 = vmatprep.mubr.bf16.mxu0 0
  %362 = vmatmul.mubr.bf16.gmra.mrb[0].mxu0 %v112
  %v363 = vpop.f32.mrb[0].mxu0
  %v364 = vadd.f32 0.0, %v363
  %v365 = vpop.f32.mrb[0].mxu0
  %v366 = vpop.f32.mrb[0].mxu0
  %v367 = vadd.f32 0.0, %v366
  %v368 = vpop.f32.mrb[0].mxu0
  %369 = vmatprep.mubr.bf16.mxu0 0
  %370 = vmatmul.mubr.bf16.gmra.mrb[0].mxu0 %v115
  %v371 = vpop.f32.mrb[0].mxu0
  %v372 = vadd.f32 0.0, %v371
  %v373 = vpop.f32.mrb[0].mxu0
  %v374 = vpop.f32.mrb[0].mxu0
  %v375 = vadd.f32 0.0, %v374
  %v376 = vpop.f32.mrb[0].mxu0
  %377 = vmatprep.mubr.bf16.mxu0 0
  %378 = vmatmul.mubr.bf16.gmra.mrb[0].mxu0 %v118
  %v379 = vpop.f32.mrb[0].mxu0
  %v380 = vadd.f32 0.0, %v379
  %v381 = vpop.f32.mrb[0].mxu0
  %v382 = vpop.f32.mrb[0].mxu0
  %v383 = vadd.f32 0.0, %v382
  %v384 = vpop.f32.mrb[0].mxu0
  %385 = vmatprep.mubr.bf16.mxu0 0
  %386 = vmatmul.mubr.bf16.gmra.mrb[0].mxu0 %v121
  %v387 = vpop.f32.mrb[0].mxu0
  %v388 = vadd.f32 0.0, %v387
  %v389 = vpop.f32.mrb[0].mxu0
  %v390 = vpop.f32.mrb[0].mxu0
  %v391 = vpop.f32.mrb[0].mxu0
  %392 = vdwg.mxu0
  %v401 = vunpack.c.l.b16 %v288
  %v402 = vunpack.c.l.b16 %v289
  %v403 = vunpack.c.l.b16 %v290
  %v404 = vunpack.c.l.b16 %v291
  %v405 = vunpack.c.l.b16 %v292
  %v406 = vunpack.c.l.b16 %v293
  %v407 = vunpack.c.l.b16 %v294
  %v408 = vunpack.c.l.b16 %v295
  %v409 = vpack.c.b16 %v402, %v401
  %v410 = vpack.c.b16 %v404, %v403
  %v411 = vpack.c.b16 %v406, %v405
  %v412 = vpack.c.b16 %v408, %v407
  %v418 = vsel %vm110, %v44, 0
  %v421 = vsel %vm110, %v45, 0
  %v424 = vsel %vm110, %v46, 0
  %v427 = vsel %vm110, %v47, 0
  %429 = vmatprep.subr.bf16.mxu0 0
  %430 = vmatpush1.bf16.msra.mxu0 %v409
  %431 = vmatprep.subr.bf16.mxu0 0
  %432 = vmatpush1.bf16.msra.mxu0 %v410
  %433 = vmatprep.subr.bf16.mxu0 0
  %434 = vmatpush1.bf16.msra.mxu0 %v411
  %435 = vmatprep.subr.bf16.mxu0 0
  %436 = vmatpush1.bf16.msra.mxu0 %v412
  %437 = vmatprep.subr.bf16.mxu0 0
  %438 = vmatpush1.bf16.msra.mxu0 0
  %439 = vmatprep.subr.bf16.mxu0 0
  %440 = vmatpush1.bf16.msra.mxu0 0
  %441 = vmatprep.subr.bf16.mxu0 0
  %442 = vmatpush1.bf16.msra.mxu0 0
  %443 = vmatprep.subr.bf16.mxu0 0
  %444 = vmatpush1.bf16.msra.mxu0 0
  %445 = vmatprep.subr.bf16.mxu0 0
  %446 = vmatpush1.bf16.msra.mxu0 0
  %447 = vmatprep.subr.bf16.mxu0 0
  %448 = vmatpush1.bf16.msra.mxu0 0
  %449 = vmatprep.subr.bf16.mxu0 0
  %450 = vmatpush1.bf16.msra.mxu0 0
  %451 = vmatprep.subr.bf16.mxu0 0
  %452 = vmatpush1.bf16.msra.mxu0 0
  %453 = vmatprep.subr.bf16.mxu0 0
  %454 = vmatpush1.bf16.msra.mxu0 0
  %455 = vmatprep.subr.bf16.mxu0 0
  %456 = vmatpush1.bf16.msra.mxu0 0
  %457 = vmatprep.subr.bf16.mxu0 0
  %458 = vmatpush1.bf16.msra.mxu0 0
  %459 = vmatprep.subr.bf16.mxu0 0
  %460 = vmatpush1.bf16.msra.mxu0 0
  %461 = vmatprep.mubr.bf16.mxu0 0
  %462 = vmatmul.mubr.bf16.gmra.mrb[0].mxu0 %v418
  %v463 = vpop.f32.mrb[0].mxu0
  %v464 = vadd.f32 %v364, %v463
  %v465 = vpop.f32.mrb[0].mxu0
  %v466 = vpop.f32.mrb[0].mxu0
  %v467 = vadd.f32 %v367, %v466
  %v468 = vpop.f32.mrb[0].mxu0
  %469 = vmatprep.mubr.bf16.mxu0 0
  %470 = vmatmul.mubr.bf16.gmra.mrb[0].mxu0 %v421
  %v471 = vpop.f32.mrb[0].mxu0
  %v472 = vadd.f32 %v372, %v471
  %v473 = vpop.f32.mrb[0].mxu0
  %v474 = vpop.f32.mrb[0].mxu0
  %v475 = vadd.f32 %v375, %v474
  %v476 = vpop.f32.mrb[0].mxu0
  %477 = vmatprep.mubr.bf16.mxu0 0
  %478 = vmatmul.mubr.bf16.gmra.mrb[0].mxu0 %v424
  %v479 = vpop.f32.mrb[0].mxu0
  %v480 = vadd.f32 %v380, %v479
  %v481 = vpop.f32.mrb[0].mxu0
  %v482 = vpop.f32.mrb[0].mxu0
  %v483 = vadd.f32 %v383, %v482
  %v484 = vpop.f32.mrb[0].mxu0
  %485 = vmatprep.mubr.bf16.mxu0 0
  %486 = vmatmul.mubr.bf16.gmra.mrb[0].mxu0 %v427
  %v487 = vpop.f32.mrb[0].mxu0
  %v488 = vadd.f32 %v388, %v487
  %v489 = vpop.f32.mrb[0].mxu0
  %v490 = vpop.f32.mrb[0].mxu0
  %v491 = vpop.f32.mrb[0].mxu0
  %492 = vdwg.mxu0
  %v493 = vld [vmem:[%s1] sm:$0xf]
  %v494 = vld [vmem:[%s1 + $0x4] sm:$0xf]
  %v495 = vld [vmem:[%s1 + $0x8] sm:$0xf]
  %v496 = vld [vmem:[%s1 + $0xc] sm:$0xf]
  %v497 = vld [vmem:[%s1 + $0x10] sm:$0xf]
  %v498 = vld [vmem:[%s1 + $0x14] sm:$0xf]
  %v499 = vld [vmem:[%s1 + $0x18] sm:$0xf]
  %v500 = vld [vmem:[%s1 + $0x1c] sm:$0xf]
  %s501 = scalar_lea.vmem %s1, 64
  %v502 = vld [vmem:[%s501] sm:$0xf]
  %v503 = vld [vmem:[%s501 + $0x4] sm:$0xf]
  %v504 = vld [vmem:[%s501 + $0x8] sm:$0xf]
  %v505 = vld [vmem:[%s501 + $0xc] sm:$0xf]
  %v506 = vld [vmem:[%s501 + $0x10] sm:$0xf]
  %v507 = vld [vmem:[%s501 + $0x14] sm:$0xf]
  %v508 = vld [vmem:[%s501 + $0x18] sm:$0xf]
  %v509 = vld [vmem:[%s501 + $0x1c] sm:$0xf]
  %v518 = vunpack.c.l.b16 %v502
  %v519 = vunpack.c.l.b16 %v503
  %v520 = vunpack.c.l.b16 %v504
  %v521 = vunpack.c.l.b16 %v505
  %v522 = vunpack.c.l.b16 %v506
  %v523 = vunpack.c.l.b16 %v507
  %v524 = vunpack.c.l.b16 %v508
  %v525 = vunpack.c.l.b16 %v509
  %v526 = vpack.c.b16 %v519, %v518
  %v527 = vpack.c.b16 %v521, %v520
  %v528 = vpack.c.b16 %v523, %v522
  %v529 = vpack.c.b16 %v525, %v524
  %534 = vmatprep.subr.bf16.mxu0 0
  %535 = vmatpush1.bf16.msra.mxu0 %v526
  %536 = vmatprep.subr.bf16.mxu0 0
  %537 = vmatpush1.bf16.msra.mxu0 %v527
  %538 = vmatprep.subr.bf16.mxu0 0
  %539 = vmatpush1.bf16.msra.mxu0 %v528
  %540 = vmatprep.subr.bf16.mxu0 0
  %541 = vmatpush1.bf16.msra.mxu0 %v529
  %542 = vmatprep.subr.bf16.mxu0 0
  %543 = vmatpush1.bf16.msra.mxu0 0
  %544 = vmatprep.subr.bf16.mxu0 0
  %545 = vmatpush1.bf16.msra.mxu0 0
  %546 = vmatprep.subr.bf16.mxu0 0
  %547 = vmatpush1.bf16.msra.mxu0 0
  %548 = vmatprep.subr.bf16.mxu0 0
  %549 = vmatpush1.bf16.msra.mxu0 0
  %550 = vmatprep.subr.bf16.mxu0 0
  %551 = vmatpush1.bf16.msra.mxu0 0
  %552 = vmatprep.subr.bf16.mxu0 0
  %553 = vmatpush1.bf16.msra.mxu0 0
  %554 = vmatprep.subr.bf16.mxu0 0
  %555 = vmatpush1.bf16.msra.mxu0 0
  %556 = vmatprep.subr.bf16.mxu0 0
  %557 = vmatpush1.bf16.msra.mxu0 0
  %558 = vmatprep.subr.bf16.mxu0 0
  %559 = vmatpush1.bf16.msra.mxu0 0
  %560 = vmatprep.subr.bf16.mxu0 0
  %561 = vmatpush1.bf16.msra.mxu0 0
  %562 = vmatprep.subr.bf16.mxu0 0
  %563 = vmatpush1.bf16.msra.mxu0 0
  %564 = vmatprep.subr.bf16.mxu0 0
  %565 = vmatpush1.bf16.msra.mxu0 0
  %566 = vmatprep.mubr.bf16.mxu0 0
  %567 = vmatmul.mubr.bf16.gmra.mrb[0].mxu0 %v418
  %v568 = vpop.f32.mrb[0].mxu0
  %v569 = vadd.f32 0.0, %v568
  %v570 = vpop.f32.mrb[0].mxu0
  %v571 = vpop.f32.mrb[0].mxu0
  %v572 = vadd.f32 0.0, %v571
  %v573 = vpop.f32.mrb[0].mxu0
  %574 = vmatprep.mubr.bf16.mxu0 0
  %575 = vmatmul.mubr.bf16.gmra.mrb[0].mxu0 %v421
  %v576 = vpop.f32.mrb[0].mxu0
  %v577 = vadd.f32 0.0, %v576
  %v578 = vpop.f32.mrb[0].mxu0
  %v579 = vpop.f32.mrb[0].mxu0
  %v580 = vadd.f32 0.0, %v579
  %v581 = vpop.f32.mrb[0].mxu0
  %582 = vmatprep.mubr.bf16.mxu0 0
  %583 = vmatmul.mubr.bf16.gmra.mrb[0].mxu0 %v424
  %v584 = vpop.f32.mrb[0].mxu0
  %v585 = vadd.f32 0.0, %v584
  %v586 = vpop.f32.mrb[0].mxu0
  %v587 = vpop.f32.mrb[0].mxu0
  %v588 = vadd.f32 0.0, %v587
  %v589 = vpop.f32.mrb[0].mxu0
  %590 = vmatprep.mubr.bf16.mxu0 0
  %591 = vmatmul.mubr.bf16.gmra.mrb[0].mxu0 %v427
  %v592 = vpop.f32.mrb[0].mxu0
  %v593 = vadd.f32 0.0, %v592
  %v594 = vpop.f32.mrb[0].mxu0
  %v595 = vpop.f32.mrb[0].mxu0
  %v596 = vpop.f32.mrb[0].mxu0
  %597 = vdwg.mxu0
  %v606 = vunpack.c.l.b16 %v493
  %v607 = vunpack.c.l.b16 %v494
  %v608 = vunpack.c.l.b16 %v495
  %v609 = vunpack.c.l.b16 %v496
  %v610 = vunpack.c.l.b16 %v497
  %v611 = vunpack.c.l.b16 %v498
  %v612 = vunpack.c.l.b16 %v499
  %v613 = vunpack.c.l.b16 %v500
  %v614 = vpack.c.b16 %v607, %v606
  %v615 = vpack.c.b16 %v609, %v608
  %v616 = vpack.c.b16 %v611, %v610
  %v617 = vpack.c.b16 %v613, %v612
  %v623 = vsel %vm110, %v55, 0
  %v626 = vsel %vm110, %v56, 0
  %v629 = vsel %vm110, %v57, 0
  %v632 = vsel %vm110, %v58, 0
  %634 = vmatprep.subr.bf16.mxu0 0
  %635 = vmatpush1.bf16.msra.mxu0 %v614
  %636 = vmatprep.subr.bf16.mxu0 0
  %637 = vmatpush1.bf16.msra.mxu0 %v615
  %638 = vmatprep.subr.bf16.mxu0 0
  %639 = vmatpush1.bf16.msra.mxu0 %v616
  %640 = vmatprep.subr.bf16.mxu0 0
  %641 = vmatpush1.bf16.msra.mxu0 %v617
  %642 = vmatprep.subr.bf16.mxu0 0
  %643 = vmatpush1.bf16.msra.mxu0 0
  %644 = vmatprep.subr.bf16.mxu0 0
  %645 = vmatpush1.bf16.msra.mxu0 0
  %646 = vmatprep.subr.bf16.mxu0 0
  %647 = vmatpush1.bf16.msra.mxu0 0
  %648 = vmatprep.subr.bf16.mxu0 0
  %649 = vmatpush1.bf16.msra.mxu0 0
  %650 = vmatprep.subr.bf16.mxu0 0
  %651 = vmatpush1.bf16.msra.mxu0 0
  %652 = vmatprep.subr.bf16.mxu0 0
  %653 = vmatpush1.bf16.msra.mxu0 0
  %654 = vmatprep.subr.bf16.mxu0 0
  %655 = vmatpush1.bf16.msra.mxu0 0
  %656 = vmatprep.subr.bf16.mxu0 0
  %657 = vmatpush1.bf16.msra.mxu0 0
  %658 = vmatprep.subr.bf16.mxu0 0
  %659 = vmatpush1.bf16.msra.mxu0 0
  %660 = vmatprep.subr.bf16.mxu0 0
  %661 = vmatpush1.bf16.msra.mxu0 0
  %662 = vmatprep.subr.bf16.mxu0 0
  %663 = vmatpush1.bf16.msra.mxu0 0
  %664 = vmatprep.subr.bf16.mxu0 0
  %665 = vmatpush1.bf16.msra.mxu0 0
  %666 = vmatprep.mubr.bf16.mxu0 0
  %667 = vmatmul.mubr.bf16.gmra.mrb[0].mxu0 %v623
  %v668 = vpop.f32.mrb[0].mxu0
  %v669 = vadd.f32 %v569, %v668
  %v670 = vpop.f32.mrb[0].mxu0
  %v671 = vpop.f32.mrb[0].mxu0
  %v672 = vadd.f32 %v572, %v671
  %v673 = vpop.f32.mrb[0].mxu0
  %674 = vmatprep.mubr.bf16.mxu0 0
  %675 = vmatmul.mubr.bf16.gmra.mrb[0].mxu0 %v626
  %v676 = vpop.f32.mrb[0].mxu0
  %v677 = vadd.f32 %v577, %v676
  %v678 = vpop.f32.mrb[0].mxu0
  %v679 = vpop.f32.mrb[0].mxu0
  %v680 = vadd.f32 %v580, %v679
  %v681 = vpop.f32.mrb[0].mxu0
  %682 = vmatprep.mubr.bf16.mxu0 0
  %683 = vmatmul.mubr.bf16.gmra.mrb[0].mxu0 %v629
  %v684 = vpop.f32.mrb[0].mxu0
  %v685 = vadd.f32 %v585, %v684
  %v686 = vpop.f32.mrb[0].mxu0
  %v687 = vpop.f32.mrb[0].mxu0
  %v688 = vadd.f32 %v588, %v687
  %v689 = vpop.f32.mrb[0].mxu0
  %690 = vmatprep.mubr.bf16.mxu0 0
  %691 = vmatmul.mubr.bf16.gmra.mrb[0].mxu0 %v632
  %v692 = vpop.f32.mrb[0].mxu0
  %v693 = vadd.f32 %v593, %v692
  %v694 = vpop.f32.mrb[0].mxu0
  %v695 = vpop.f32.mrb[0].mxu0
  %v696 = vpop.f32.mrb[0].mxu0
  %697 = vdwg.mxu0
  %s698 = scalar_lea.vmem %s1, 192
  %v699 = vld [vmem:[%s698] sm:$0xf]
  %v700 = vld [vmem:[%s698 + $0x4] sm:$0xf]
  %v701 = vld [vmem:[%s698 + $0x8] sm:$0xf]
  %v702 = vld [vmem:[%s698 + $0xc] sm:$0xf]
  %v703 = vld [vmem:[%s698 + $0x10] sm:$0xf]
  %v704 = vld [vmem:[%s698 + $0x14] sm:$0xf]
  %v705 = vld [vmem:[%s698 + $0x18] sm:$0xf]
  %v706 = vld [vmem:[%s698 + $0x1c] sm:$0xf]
  %v715 = vunpack.c.l.b16 %v699
  %v716 = vunpack.c.l.b16 %v700
  %v717 = vunpack.c.l.b16 %v701
  %v718 = vunpack.c.l.b16 %v702
  %v719 = vunpack.c.l.b16 %v703
  %v720 = vunpack.c.l.b16 %v704
  %v721 = vunpack.c.l.b16 %v705
  %v722 = vunpack.c.l.b16 %v706
  %v723 = vpack.c.b16 %v716, %v715
  %v724 = vpack.c.b16 %v718, %v717
  %v725 = vpack.c.b16 %v720, %v719
  %v726 = vpack.c.b16 %v722, %v721
  %731 = vmatprep.subr.bf16.mxu0 0
  %732 = vmatpush1.bf16.msra.mxu0 %v723
  %733 = vmatprep.subr.bf16.mxu0 0
  %734 = vmatpush1.bf16.msra.mxu0 %v724
  %735 = vmatprep.subr.bf16.mxu0 0
  %736 = vmatpush1.bf16.msra.mxu0 %v725
  %737 = vmatprep.subr.bf16.mxu0 0
  %738 = vmatpush1.bf16.msra.mxu0 %v726
  %739 = vmatprep.subr.bf16.mxu0 0
  %740 = vmatpush1.bf16.msra.mxu0 0
  %741 = vmatprep.subr.bf16.mxu0 0
  %742 = vmatpush1.bf16.msra.mxu0 0
  %743 = vmatprep.subr.bf16.mxu0 0
  %744 = vmatpush1.bf16.msra.mxu0 0
  %745 = vmatprep.subr.bf16.mxu0 0
  %746 = vmatpush1.bf16.msra.mxu0 0
  %747 = vmatprep.subr.bf16.mxu0 0
  %748 = vmatpush1.bf16.msra.mxu0 0
  %749 = vmatprep.subr.bf16.mxu0 0
  %750 = vmatpush1.bf16.msra.mxu0 0
  %751 = vmatprep.subr.bf16.mxu0 0
  %752 = vmatpush1.bf16.msra.mxu0 0
  %753 = vmatprep.subr.bf16.mxu0 0
  %754 = vmatpush1.bf16.msra.mxu0 0
  %755 = vmatprep.subr.bf16.mxu0 0
  %756 = vmatpush1.bf16.msra.mxu0 0
  %757 = vmatprep.subr.bf16.mxu0 0
  %758 = vmatpush1.bf16.msra.mxu0 0
  %759 = vmatprep.subr.bf16.mxu0 0
  %760 = vmatpush1.bf16.msra.mxu0 0
  %761 = vmatprep.subr.bf16.mxu0 0
  %762 = vmatpush1.bf16.msra.mxu0 0
  %763 = vmatprep.mubr.bf16.mxu0 0
  %764 = vmatmul.mubr.bf16.gmra.mrb[0].mxu0 %v212
  %v765 = vpop.f32.mrb[0].mxu0
  %v766 = vadd.f32 0.0, %v765
  %v767 = vpop.f32.mrb[0].mxu0
  %v768 = vpop.f32.mrb[0].mxu0
  %v769 = vadd.f32 0.0, %v768
  %v770 = vpop.f32.mrb[0].mxu0
  %771 = vmatprep.mubr.bf16.mxu0 0
  %772 = vmatmul.mubr.bf16.gmra.mrb[0].mxu0 %v215
  %v773 = vpop.f32.mrb[0].mxu0
  %v774 = vadd.f32 0.0, %v773
  %v775 = vpop.f32.mrb[0].mxu0
  %v776 = vpop.f32.mrb[0].mxu0
  %v777 = vadd.f32 0.0, %v776
  %v778 = vpop.f32.mrb[0].mxu0
  %779 = vmatprep.mubr.bf16.mxu0 0
  %780 = vmatmul.mubr.bf16.gmra.mrb[0].mxu0 %v218
  %v781 = vpop.f32.mrb[0].mxu0
  %v782 = vadd.f32 0.0, %v781
  %v783 = vpop.f32.mrb[0].mxu0
  %v784 = vpop.f32.mrb[0].mxu0
  %v785 = vadd.f32 0.0, %v784
  %v786 = vpop.f32.mrb[0].mxu0
  %787 = vmatprep.mubr.bf16.mxu0 0
  %788 = vmatmul.mubr.bf16.gmra.mrb[0].mxu0 %v221
  %v789 = vpop.f32.mrb[0].mxu0
  %v790 = vadd.f32 0.0, %v789
  %v791 = vpop.f32.mrb[0].mxu0
  %v792 = vpop.f32.mrb[0].mxu0
  %v793 = vpop.f32.mrb[0].mxu0
  %794 = vdwg.mxu0
  %v795 = vadd.f32 %v669, %v766
  %v796 = vadd.f32 %v672, %v769
  %v797 = vadd.f32 %v677, %v774
  %v798 = vadd.f32 %v680, %v777
  %v799 = vadd.f32 %v685, %v782
  %v800 = vadd.f32 %v688, %v785
  %v801 = vadd.f32 %v693, %v790
  %s802 = scalar_lea.vmem %s1, 256
  %v803 = vld [vmem:[%s802] sm:$0xf]
  %v804 = vld [vmem:[%s802 + $0x4] sm:$0xf]
  %v805 = vld [vmem:[%s802 + $0x8] sm:$0xf]
  %v806 = vld [vmem:[%s802 + $0xc] sm:$0xf]
  %v807 = vld [vmem:[%s802 + $0x10] sm:$0xf]
  %v808 = vld [vmem:[%s802 + $0x14] sm:$0xf]
  %v809 = vld [vmem:[%s802 + $0x18] sm:$0xf]
  %v810 = vld [vmem:[%s802 + $0x1c] sm:$0xf]
  %v819 = vunpack.c.l.b16 %v803
  %v820 = vunpack.c.l.b16 %v804
  %v821 = vunpack.c.l.b16 %v805
  %v822 = vunpack.c.l.b16 %v806
  %v823 = vunpack.c.l.b16 %v807
  %v824 = vunpack.c.l.b16 %v808
  %v825 = vunpack.c.l.b16 %v809
  %v826 = vunpack.c.l.b16 %v810
  %v827 = vpack.c.b16 %v820, %v819
  %v828 = vpack.c.b16 %v822, %v821
  %v829 = vpack.c.b16 %v824, %v823
  %v830 = vpack.c.b16 %v826, %v825
  %835 = vmatprep.subr.bf16.mxu0 0
  %836 = vmatpush1.bf16.msra.mxu0 %v827
  %837 = vmatprep.subr.bf16.mxu0 0
  %838 = vmatpush1.bf16.msra.mxu0 %v828
  %839 = vmatprep.subr.bf16.mxu0 0
  %840 = vmatpush1.bf16.msra.mxu0 %v829
  %841 = vmatprep.subr.bf16.mxu0 0
  %842 = vmatpush1.bf16.msra.mxu0 %v830
  %843 = vmatprep.subr.bf16.mxu0 0
  %844 = vmatpush1.bf16.msra.mxu0 0
  %845 = vmatprep.subr.bf16.mxu0 0
  %846 = vmatpush1.bf16.msra.mxu0 0
  %847 = vmatprep.subr.bf16.mxu0 0
  %848 = vmatpush1.bf16.msra.mxu0 0
  %849 = vmatprep.subr.bf16.mxu0 0
  %850 = vmatpush1.bf16.msra.mxu0 0
  %851 = vmatprep.subr.bf16.mxu0 0
  %852 = vmatpush1.bf16.msra.mxu0 0
  %853 = vmatprep.subr.bf16.mxu0 0
  %854 = vmatpush1.bf16.msra.mxu0 0
  %855 = vmatprep.subr.bf16.mxu0 0
  %856 = vmatpush1.bf16.msra.mxu0 0
  %857 = vmatprep.subr.bf16.mxu0 0
  %858 = vmatpush1.bf16.msra.mxu0 0
  %859 = vmatprep.subr.bf16.mxu0 0
  %860 = vmatpush1.bf16.msra.mxu0 0
  %861 = vmatprep.subr.bf16.mxu0 0
  %862 = vmatpush1.bf16.msra.mxu0 0
  %863 = vmatprep.subr.bf16.mxu0 0
  %864 = vmatpush1.bf16.msra.mxu0 0
  %865 = vmatprep.subr.bf16.mxu0 0
  %866 = vmatpush1.bf16.msra.mxu0 0
  %867 = vmatprep.mubr.bf16.mxu0 0
  %868 = vmatmul.mubr.bf16.gmra.mrb[0].mxu0 %v112
  %v869 = vpop.f32.mrb[0].mxu0
  %v870 = vadd.f32 0.0, %v869
  %v871 = vpop.f32.mrb[0].mxu0
  %v872 = vpop.f32.mrb[0].mxu0
  %v873 = vadd.f32 0.0, %v872
  %v874 = vpop.f32.mrb[0].mxu0
  %875 = vmatprep.mubr.bf16.mxu0 0
  %876 = vmatmul.mubr.bf16.gmra.mrb[0].mxu0 %v115
  %v877 = vpop.f32.mrb[0].mxu0
  %v878 = vadd.f32 0.0, %v877
  %v879 = vpop.f32.mrb[0].mxu0
  %v880 = vpop.f32.mrb[0].mxu0
  %v881 = vadd.f32 0.0, %v880
  %v882 = vpop.f32.mrb[0].mxu0
  %883 = vmatprep.mubr.bf16.mxu0 0
  %884 = vmatmul.mubr.bf16.gmra.mrb[0].mxu0 %v118
  %v885 = vpop.f32.mrb[0].mxu0
  %v886 = vadd.f32 0.0, %v885
  %v887 = vpop.f32.mrb[0].mxu0
  %v888 = vpop.f32.mrb[0].mxu0
  %v889 = vadd.f32 0.0, %v888
  %v890 = vpop.f32.mrb[0].mxu0
  %891 = vmatprep.mubr.bf16.mxu0 0
  %892 = vmatmul.mubr.bf16.gmra.mrb[0].mxu0 %v121
  %v893 = vpop.f32.mrb[0].mxu0
  %v894 = vadd.f32 0.0, %v893
  %v895 = vpop.f32.mrb[0].mxu0
  %v896 = vpop.f32.mrb[0].mxu0
  %v897 = vpop.f32.mrb[0].mxu0
  %898 = vdwg.mxu0
  %v899 = vadd.f32 %v795, %v870
  %v900 = vadd.f32 %v796, %v873
  %v901 = vadd.f32 %v797, %v878
  %v902 = vadd.f32 %v798, %v881
  %v903 = vadd.f32 %v799, %v886
  %v904 = vadd.f32 %v800, %v889
  %v905 = vadd.f32 %v801, %v894
  %v906 = vld [vmem:[%s2] sm:$0x1]
  %v908 = vlaneseq
  %v909 = vshrl.u32 %v908, 7
  %v910 = vsub.s32 0, %v909
  %v911 = vrot.slane %v906, %v910
  %v921 = vunpack.c.l.b16 %v60
  %v922 = vunpack.c.l.b16 %v61
  %v923 = vunpack.c.l.b16 %v62
  %v924 = vunpack.c.l.b16 %v63
  %v925 = vunpack.c.l.b16 %v64
  %v926 = vunpack.c.l.b16 %v65
  %v927 = vunpack.c.l.b16 %v66
  %v928 = vunpack.c.l.b16 %v67
  %v929 = vpack.c.b16 %v922, %v921
  %v930 = vpack.c.b16 %v924, %v923
  %v931 = vpack.c.b16 %v926, %v925
  %v932 = vpack.c.b16 %v928, %v927
  %937 = vmatprep.subr.bf16.mxu0 0
  %938 = vmatpush1.bf16.msra.mxu0 %v929
  %939 = vmatprep.subr.bf16.mxu0 0
  %940 = vmatpush1.bf16.msra.mxu0 %v930
  %941 = vmatprep.subr.bf16.mxu0 0
  %942 = vmatpush1.bf16.msra.mxu0 %v931
  %943 = vmatprep.subr.bf16.mxu0 0
  %944 = vmatpush1.bf16.msra.mxu0 %v932
  %945 = vmatprep.subr.bf16.mxu0 0
  %946 = vmatpush1.bf16.msra.mxu0 0
  %947 = vmatprep.subr.bf16.mxu0 0
  %948 = vmatpush1.bf16.msra.mxu0 0
  %949 = vmatprep.subr.bf16.mxu0 0
  %950 = vmatpush1.bf16.msra.mxu0 0
  %951 = vmatprep.subr.bf16.mxu0 0
  %952 = vmatpush1.bf16.msra.mxu0 0
  %953 = vmatprep.subr.bf16.mxu0 0
  %954 = vmatpush1.bf16.msra.mxu0 0
  %955 = vmatprep.subr.bf16.mxu0 0
  %956 = vmatpush1.bf16.msra.mxu0 0
  %957 = vmatprep.subr.bf16.mxu0 0
  %958 = vmatpush1.bf16.msra.mxu0 0
  %959 = vmatprep.subr.bf16.mxu0 0
  %960 = vmatpush1.bf16.msra.mxu0 0
  %961 = vmatprep.subr.bf16.mxu0 0
  %962 = vmatpush1.bf16.msra.mxu0 0
  %963 = vmatprep.subr.bf16.mxu0 0
  %964 = vmatpush1.bf16.msra.mxu0 0
  %965 = vmatprep.subr.bf16.mxu0 0
  %966 = vmatpush1.bf16.msra.mxu0 0
  %967 = vmatprep.subr.bf16.mxu0 0
  %968 = vmatpush1.bf16.msra.mxu0 0
  %969 = vmatprep.mubr.bf16.mxu0 0
  %970 = vmatmul.mubr.bf16.gmra.mrb[0].mxu0 %v112
  %v971 = vpop.f32.mrb[0].mxu0
  %v972 = vadd.f32 %v911, %v971
  %v973 = vpop.f32.mrb[0].mxu0
  %v974 = vpop.f32.mrb[0].mxu0
  %v975 = vadd.f32 %v911, %v974
  %v976 = vpop.f32.mrb[0].mxu0
  %977 = vmatprep.mubr.bf16.mxu0 0
  %978 = vmatmul.mubr.bf16.gmra.mrb[0].mxu0 %v115
  %v979 = vpop.f32.mrb[0].mxu0
  %v980 = vadd.f32 %v911, %v979
  %v981 = vpop.f32.mrb[0].mxu0
  %v982 = vpop.f32.mrb[0].mxu0
  %v983 = vadd.f32 %v911, %v982
  %v984 = vpop.f32.mrb[0].mxu0
  %985 = vmatprep.mubr.bf16.mxu0 0
  %986 = vmatmul.mubr.bf16.gmra.mrb[0].mxu0 %v118
  %v987 = vpop.f32.mrb[0].mxu0
  %v988 = vadd.f32 %v911, %v987
  %v989 = vpop.f32.mrb[0].mxu0
  %v990 = vpop.f32.mrb[0].mxu0
  %v991 = vadd.f32 %v911, %v990
  %v992 = vpop.f32.mrb[0].mxu0
  %993 = vmatprep.mubr.bf16.mxu0 0
  %994 = vmatmul.mubr.bf16.gmra.mrb[0].mxu0 %v121
  %v995 = vpop.f32.mrb[0].mxu0
  %v996 = vadd.f32 %v911, %v995
  %v997 = vpop.f32.mrb[0].mxu0
  %v998 = vpop.f32.mrb[0].mxu0
  %v999 = vpop.f32.mrb[0].mxu0
  %1000 = vdwg.mxu0
  %v1001 = vmax.f32 %v972, 0.0
  %v1002 = vmax.f32 %v975, 0.0
  %v1003 = vmax.f32 %v980, 0.0
  %v1004 = vmax.f32 %v983, 0.0
  %v1005 = vmax.f32 %v988, 0.0
  %v1006 = vmax.f32 %v991, 0.0
  %v1007 = vmax.f32 %v996, 0.0
  %vm1008 = vcmask 261120
  %1009 = vst.msk [vmem:[%s3] sm:$0xff] %vm1008, %v1001
  %1010 = vst.msk [vmem:[%s3 + $0x8] sm:$0xff] %vm1008, %v1002
  %1011 = vst.msk [vmem:[%s3 + $0x10] sm:$0xff] %vm1008, %v1003
  %1012 = vst.msk [vmem:[%s3 + $0x18] sm:$0xff] %vm1008, %v1004
  %1013 = vst.msk [vmem:[%s3 + $0x20] sm:$0xff] %vm1008, %v1005
  %1014 = vst.msk [vmem:[%s3 + $0x28] sm:$0xff] %vm1008, %v1006
  %vm1015 = vcmask 254976
  %1016 = vst.msk [vmem:[%s3 + $0x30] sm:$0x3] %vm1015, %v1007
  %v1017 = vld [vmem:[%s2] sm:$0x1]
  %v1019 = vlaneseq
  %v1020 = vshrl.u32 %v1019, 7
  %v1021 = vsub.s32 0, %v1020
  %v1022 = vrot.slane %v1017, %v1021
  %v1024 = vadd.f32 %v258, %v1022
  %v1025 = vadd.f32 %v261, %v1022
  %v1026 = vadd.f32 %v266, %v1022
  %v1027 = vadd.f32 %v269, %v1022
  %v1028 = vadd.f32 %v274, %v1022
  %v1029 = vadd.f32 %v277, %v1022
  %v1030 = vadd.f32 %v282, %v1022
  %v1031 = vmax.f32 %v1024, 0.0
  %v1032 = vmax.f32 %v1025, 0.0
  %v1033 = vmax.f32 %v1026, 0.0
  %v1034 = vmax.f32 %v1027, 0.0
  %v1035 = vmax.f32 %v1028, 0.0
  %v1036 = vmax.f32 %v1029, 0.0
  %v1037 = vmax.f32 %v1030, 0.0
  %s1038 = scalar_lea.vmem %s3, 56
  %1039 = vst.msk [vmem:[%s1038] sm:$0xff] %vm1008, %v1031
  %1040 = vst.msk [vmem:[%s1038 + $0x8] sm:$0xff] %vm1008, %v1032
  %1041 = vst.msk [vmem:[%s1038 + $0x10] sm:$0xff] %vm1008, %v1033
  %1042 = vst.msk [vmem:[%s1038 + $0x18] sm:$0xff] %vm1008, %v1034
  %1043 = vst.msk [vmem:[%s1038 + $0x20] sm:$0xff] %vm1008, %v1035
  %1044 = vst.msk [vmem:[%s1038 + $0x28] sm:$0xff] %vm1008, %v1036
  %1045 = vst.msk [vmem:[%s1038 + $0x30] sm:$0x3] %vm1015, %v1037
  %v1046 = vld [vmem:[%s2] sm:$0x1]
  %v1048 = vlaneseq
  %v1049 = vshrl.u32 %v1048, 7
  %v1050 = vsub.s32 0, %v1049
  %v1051 = vrot.slane %v1046, %v1050
  %v1053 = vadd.f32 %v464, %v1051
  %v1054 = vadd.f32 %v467, %v1051
  %v1055 = vadd.f32 %v472, %v1051
  %v1056 = vadd.f32 %v475, %v1051
  %v1057 = vadd.f32 %v480, %v1051
  %v1058 = vadd.f32 %v483, %v1051
  %v1059 = vadd.f32 %v488, %v1051
  %v1060 = vmax.f32 %v1053, 0.0
  %v1061 = vmax.f32 %v1054, 0.0
  %v1062 = vmax.f32 %v1055, 0.0
  %v1063 = vmax.f32 %v1056, 0.0
  %v1064 = vmax.f32 %v1057, 0.0
  %v1065 = vmax.f32 %v1058, 0.0
  %v1066 = vmax.f32 %v1059, 0.0
  %s1067 = scalar_lea.vmem %s3, 112
  %1068 = vst.msk [vmem:[%s1067] sm:$0xff] %vm1008, %v1060
  %1069 = vst.msk [vmem:[%s1067 + $0x8] sm:$0xff] %vm1008, %v1061
  %1070 = vst.msk [vmem:[%s1067 + $0x10] sm:$0xff] %vm1008, %v1062
  %1071 = vst.msk [vmem:[%s1067 + $0x18] sm:$0xff] %vm1008, %v1063
  %1072 = vst.msk [vmem:[%s1067 + $0x20] sm:$0xff] %vm1008, %v1064
  %1073 = vst.msk [vmem:[%s1067 + $0x28] sm:$0xff] %vm1008, %v1065
  %1074 = vst.msk [vmem:[%s1067 + $0x30] sm:$0x3] %vm1015, %v1066
  %v1075 = vld [vmem:[%s2] sm:$0x1]
  %v1077 = vlaneseq
  %v1078 = vshrl.u32 %v1077, 7
  %v1079 = vsub.s32 0, %v1078
  %v1080 = vrot.slane %v1075, %v1079
  %v1082 = vadd.f32 %v899, %v1080
  %v1083 = vadd.f32 %v900, %v1080
  %v1084 = vadd.f32 %v901, %v1080
  %v1085 = vadd.f32 %v902, %v1080
  %v1086 = vadd.f32 %v903, %v1080
  %v1087 = vadd.f32 %v904, %v1080
  %v1088 = vadd.f32 %v905, %v1080
  %v1089 = vmax.f32 %v1082, 0.0
  %v1090 = vmax.f32 %v1083, 0.0
  %v1091 = vmax.f32 %v1084, 0.0
  %v1092 = vmax.f32 %v1085, 0.0
  %v1093 = vmax.f32 %v1086, 0.0
  %v1094 = vmax.f32 %v1087, 0.0
  %v1095 = vmax.f32 %v1088, 0.0
  %s1096 = scalar_lea.vmem %s3, 168
  %1097 = vst.msk [vmem:[%s1096] sm:$0xff] %vm1008, %v1089
  %1098 = vst.msk [vmem:[%s1096 + $0x8] sm:$0xff] %vm1008, %v1090
  %1099 = vst.msk [vmem:[%s1096 + $0x10] sm:$0xff] %vm1008, %v1091
  %1100 = vst.msk [vmem:[%s1096 + $0x18] sm:$0xff] %vm1008, %v1092
  %1101 = vst.msk [vmem:[%s1096 + $0x20] sm:$0xff] %vm1008, %v1093
  %1102 = vst.msk [vmem:[%s1096 + $0x28] sm:$0xff] %vm1008, %v1094
  %1103 = vst.msk [vmem:[%s1096 + $0x30] sm:$0x3] %vm1015, %v1095
  // Predicated region
  $region14: #{capsule_autoencoder_forward.10} parent=0 // pred_check
    _
  $region15: #{capsule_autoencoder_forward.10} parent=0 // pred_check_branch
    %1105 = sbr.rel (0) target = $region17
  $region16: #{capsule_autoencoder_forward.10} parent=0 // pred_region
    _
  $region17: #{capsule_autoencoder_forward.10} parent=0 // pred_fallthru
    _
  // Predicated region
  $region18: #{capsule_autoencoder_forward.10} parent=0 // pred_check
    _
  $region19: #{capsule_autoencoder_forward.10} parent=0 // pred_check_branch
    %1107 = sbr.rel (0) target = $region21
  $region20: #{capsule_autoencoder_forward.10} parent=0 // pred_region
    _
  $region21: #{capsule_autoencoder_forward.10} parent=0 // pred_fallthru
    _

// kernel: capsule_autoencoder_forward.11
$region0: #{capsule_autoencoder_forward.11}
  #allocation0 [shape = 'u32[]', space=smem, size = 0x4, offset = 0x4, fixed_abs, tag = 'smem constant byte address 0x4 - core index']
  #allocation1 [shape = 'u32[144,128]{1,0:T(1,128)}', space=vmem, size = 0x12000, scoped, tag = 'internal scratch']
  %s0 = inlined_call_operand.vmem [shape: f32[172,32], index: 0, kind: input, shape index: {}]
  %s1 = inlined_call_operand.vmem [shape: bf16[9,32,128], index: 1, kind: input, shape index: {}]
  %s2 = inlined_call_operand.vmem [shape: f32[1,128], index: 2, kind: input, shape index: {}]
  %s3 = inlined_call_operand.vmem [shape: f32[4,162,128], index: 3, kind: output, shape index: {}]
  %s4 = sld [smem:[#allocation0]]
  $region22: #{capsule_autoencoder_forward.11} parent=0
    _
  %s6 = ssub.s32 1, %s4
  %s7 = scalar_select 0, %s6, %s4
  // Predicated region
  $region2: #{capsule_autoencoder_forward.11} parent=0 // pred_check
    _
  $region3: #{capsule_autoencoder_forward.11} parent=0 // pred_check_branch
    %9 = sbr.rel (0) target = $region5
  $region4: #{capsule_autoencoder_forward.11} parent=0 // pred_region
    _
  $region5: #{capsule_autoencoder_forward.11} parent=0 // pred_fallthru
    _
  // Predicated region
  $region6: #{capsule_autoencoder_forward.11} parent=0 // pred_check
    _
  $region7: #{capsule_autoencoder_forward.11} parent=0 // pred_check_branch
    %11 = sbr.rel (0) target = $region9
  $region8: #{capsule_autoencoder_forward.11} parent=0 // pred_region
    _
  $region9: #{capsule_autoencoder_forward.11} parent=0 // pred_fallthru
    _
  // Predicated region
  $region10: #{capsule_autoencoder_forward.11} parent=0 // pred_check
    _
  $region11: #{capsule_autoencoder_forward.11} parent=0 // pred_check_branch
    %13 = sbr.rel (0) target = $region13
  $region12: #{capsule_autoencoder_forward.11} parent=0 // pred_region
    _
  $region13: #{capsule_autoencoder_forward.11} parent=0 // pred_fallthru
    _
  %v15 = vld [vmem:[%s0] sm:$0xff]
  %v16 = vld [vmem:[%s0 + $0x8] sm:$0xff]
  %v17 = vld [vmem:[%s0 + $0x10] sm:$0xff]
  %v18 = vld [vmem:[%s0 + $0x18] sm:$0xff]
  %v19 = vld [vmem:[%s0 + $0x20] sm:$0xff]
  %v20 = vld [vmem:[%s0 + $0x28] sm:$0xff]
  %v21 = vld [vmem:[%s0 + $0x30] sm:$0xff]
  %v22 = vld [vmem:[%s0 + $0x38] sm:$0xff]
  %v23 = vld [vmem:[%s0 + $0x40] sm:$0xff]
  %v24 = vld [vmem:[%s0 + $0x48] sm:$0xff]
  %v25 = vld [vmem:[%s0 + $0x50] sm:$0xff]
  %v26 = vld [vmem:[%s0 + $0x58] sm:$0xff]
  %v27 = vld [vmem:[%s0 + $0x60] sm:$0xff]
  %v28 = vld [vmem:[%s0 + $0x68] sm:$0xff]
  %v29 = vld [vmem:[%s0 + $0x70] sm:$0xff]
  %v30 = vld [vmem:[%s0 + $0x78] sm:$0xff]
  %v31 = vld [vmem:[%s0 + $0x80] sm:$0xff]
  %v32 = vld [vmem:[%s0 + $0x88] sm:$0xff]
  %v33 = vld [vmem:[%s0 + $0x90] sm:$0xff]
  %v34 = vld [vmem:[%s0 + $0x98] sm:$0xff]
  %v35 = vld [vmem:[%s0 + $0xa0] sm:$0x3]
  %v36 = vpack.c.bf16 %v16, %v15
  %v37 = vpack.c.bf16 %v18, %v17
  %v38 = vpack.c.bf16 %v20, %v19
  %v39 = vpack.c.bf16 %v22, %v21
  %v40 = vpack.c.bf16 %v24, %v23
  %v41 = vpack.c.bf16 %v26, %v25
  %v42 = vpack.c.bf16 %v28, %v27
  %v43 = vpack.c.bf16 %v30, %v29
  %v44 = vpack.c.bf16 %v32, %v31
  %v45 = vpack.c.bf16 %v34, %v33
  %v46 = vpack.c.bf16 %v35, %v35
  %v47 = vld [vmem:[%s0 + $0x1] sm:$0xff]
  %v48 = vld [vmem:[%s0 + $0x9] sm:$0xff]
  %v49 = vld [vmem:[%s0 + $0x11] sm:$0xff]
  %v50 = vld [vmem:[%s0 + $0x19] sm:$0xff]
  %v51 = vld [vmem:[%s0 + $0x21] sm:$0xff]
  %v52 = vld [vmem:[%s0 + $0x29] sm:$0xff]
  %v53 = vld [vmem:[%s0 + $0x31] sm:$0xff]
  %v54 = vld [vmem:[%s0 + $0x39] sm:$0xff]
  %v55 = vld [vmem:[%s0 + $0x41] sm:$0xff]
  %v56 = vld [vmem:[%s0 + $0x49] sm:$0xff]
  %v57 = vld [vmem:[%s0 + $0x51] sm:$0xff]
  %v58 = vld [vmem:[%s0 + $0x59] sm:$0xff]
  %v59 = vld [vmem:[%s0 + $0x61] sm:$0xff]
  %v60 = vld [vmem:[%s0 + $0x69] sm:$0xff]
  %v61 = vld [vmem:[%s0 + $0x71] sm:$0xff]
  %v62 = vld [vmem:[%s0 + $0x79] sm:$0xff]
  %v63 = vld [vmem:[%s0 + $0x81] sm:$0xff]
  %v64 = vld [vmem:[%s0 + $0x89] sm:$0xff]
  %v65 = vld [vmem:[%s0 + $0x91] sm:$0xff]
  %v66 = vld [vmem:[%s0 + $0x99] sm:$0xff]
  %v67 = vld [vmem:[%s0 + $0xa1] sm:$0x3]
  %v68 = vpack.c.bf16 %v48, %v47
  %v69 = vpack.c.bf16 %v50, %v49
  %v70 = vpack.c.bf16 %v52, %v51
  %v71 = vpack.c.bf16 %v54, %v53
  %v72 = vpack.c.bf16 %v56, %v55
  %v73 = vpack.c.bf16 %v58, %v57
  %v74 = vpack.c.bf16 %v60, %v59
  %v75 = vpack.c.bf16 %v62, %v61
  %v76 = vpack.c.bf16 %v64, %v63
  %v77 = vpack.c.bf16 %v66, %v65
  %v78 = vpack.c.bf16 %v67, %v67
  %v79 = vld [vmem:[%s0 + $0xa1] sm:$0xff]
  %v80 = vld [vmem:[%s0 + $0xa9] sm:$0x3]
  %v81 = vpack.c.bf16 %v49, %v48
  %v82 = vpack.c.bf16 %v51, %v50
  %v83 = vpack.c.bf16 %v53, %v52
  %v84 = vpack.c.bf16 %v55, %v54
  %v85 = vpack.c.bf16 %v57, %v56
  %v86 = vpack.c.bf16 %v59, %v58
  %v87 = vpack.c.bf16 %v61, %v60
  %v88 = vpack.c.bf16 %v63, %v62
  %v89 = vpack.c.bf16 %v65, %v64
  %v90 = vpack.c.bf16 %v79, %v66
  %v91 = vpack.c.bf16 %v80, %v80
  %v92 = vld [vmem:[%s0 + $0xa] sm:$0xff]
  %v93 = vld [vmem:[%s0 + $0x12] sm:$0xff]
  %v94 = vld [vmem:[%s0 + $0x1a] sm:$0xff]
  %v95 = vld [vmem:[%s0 + $0x22] sm:$0xff]
  %v96 = vld [vmem:[%s0 + $0x2a] sm:$0xff]
  %v97 = vld [vmem:[%s0 + $0x32] sm:$0xff]
  %v98 = vld [vmem:[%s0 + $0x3a] sm:$0xff]
  %v99 = vld [vmem:[%s0 + $0x42] sm:$0xff]
  %v100 = vld [vmem:[%s0 + $0x4a] sm:$0xff]
  %v101 = vld [vmem:[%s0 + $0x52] sm:$0xff]
  %v102 = vld [vmem:[%s0 + $0x5a] sm:$0xff]
  %v103 = vld [vmem:[%s0 + $0x62] sm:$0xff]
  %v104 = vld [vmem:[%s0 + $0x6a] sm:$0xff]
  %v105 = vld [vmem:[%s0 + $0x72] sm:$0xff]
  %v106 = vld [vmem:[%s0 + $0x7a] sm:$0xff]
  %v107 = vld [vmem:[%s0 + $0x82] sm:$0xff]
  %v108 = vld [vmem:[%s0 + $0x8a] sm:$0xff]
  %v109 = vld [vmem:[%s0 + $0x92] sm:$0xff]
  %v110 = vld [vmem:[%s0 + $0x9a] sm:$0xff]
  %v111 = vld [vmem:[%s0 + $0xa2] sm:$0xff]
  %v112 = vld [vmem:[%s0 + $0xaa] sm:$0x3]
  %v113 = vpack.c.bf16 %v93, %v92
  %v114 = vpack.c.bf16 %v95, %v94
  %v115 = vpack.c.bf16 %v97, %v96
  %v116 = vpack.c.bf16 %v99, %v98
  %v117 = vpack.c.bf16 %v101, %v100
  %v118 = vpack.c.bf16 %v103, %v102
  %v119 = vpack.c.bf16 %v105, %v104
  %v120 = vpack.c.bf16 %v107, %v106
  %v121 = vpack.c.bf16 %v109, %v108
  %v122 = vpack.c.bf16 %v111, %v110
  %v123 = vpack.c.bf16 %v112, %v112
  %s124 = scalar_lea.vmem %s1, 64
  %v125 = vld [vmem:[%s124] sm:$0xf]
  %v126 = vld [vmem:[%s124 + $0x4] sm:$0xf]
  %v127 = vld [vmem:[%s124 + $0x8] sm:$0xf]
  %v128 = vld [vmem:[%s124 + $0xc] sm:$0xf]
  %s129 = scalar_lea.vmem %s1, 48
  %v130 = vld [vmem:[%s129] sm:$0xf]
  %v131 = vld [vmem:[%s129 + $0x4] sm:$0xf]
  %v132 = vld [vmem:[%s129 + $0x8] sm:$0xf]
  %v133 = vld [vmem:[%s129 + $0xc] sm:$0xf]
  %s134 = scalar_lea.vmem %s1, 80
  %v135 = vld [vmem:[%s134] sm:$0xf]
  %v136 = vld [vmem:[%s134 + $0x4] sm:$0xf]
  %v137 = vld [vmem:[%s134 + $0x8] sm:$0xf]
  %v138 = vld [vmem:[%s134 + $0xc] sm:$0xf]
  %v143 = vunpack.c.l.b16 %v135
  %v144 = vunpack.c.l.b16 %v136
  %v145 = vunpack.c.l.b16 %v137
  %v146 = vunpack.c.l.b16 %v138
  %v147 = vpack.c.b16 %v144, %v143
  %v148 = vpack.c.b16 %v146, %v145
  %vm151 = vcmask 261120
  %v153 = vsel %vm151, %v36, 0
  %v156 = vsel %vm151, %v37, 0
  %v159 = vsel %vm151, %v38, 0
  %v162 = vsel %vm151, %v39, 0
  %v165 = vsel %vm151, %v40, 0
  %v168 = vsel %vm151, %v41, 0
  %v171 = vsel %vm151, %v42, 0
  %v174 = vsel %vm151, %v43, 0
  %v177 = vsel %vm151, %v44, 0
  %v180 = vsel %vm151, %v45, 0
  %v183 = vsel %vm151, %v46, 0
  %185 = vmatprep.subr.bf16.mxu0 0
  %186 = vmatpush1.bf16.msra.mxu0 %v147
  %187 = vmatprep.subr.bf16.mxu0 0
  %188 = vmatpush1.bf16.msra.mxu0 %v148
  %189 = vmatprep.subr.bf16.mxu0 0
  %190 = vmatpush1.bf16.msra.mxu0 0
  %191 = vmatprep.subr.bf16.mxu0 0
  %192 = vmatpush1.bf16.msra.mxu0 0
  %193 = vmatprep.subr.bf16.mxu0 0
  %194 = vmatpush1.bf16.msra.mxu0 0
  %195 = vmatprep.subr.bf16.mxu0 0
  %196 = vmatpush1.bf16.msra.mxu0 0
  %197 = vmatprep.subr.bf16.mxu0 0
  %198 = vmatpush1.bf16.msra.mxu0 0
  %199 = vmatprep.subr.bf16.mxu0 0
  %200 = vmatpush1.bf16.msra.mxu0 0
  %201 = vmatprep.subr.bf16.mxu0 0
  %202 = vmatpush1.bf16.msra.mxu0 0
  %203 = vmatprep.subr.bf16.mxu0 0
  %204 = vmatpush1.bf16.msra.mxu0 0
  %205 = vmatprep.subr.bf16.mxu0 0
  %206 = vmatpush1.bf16.msra.mxu0 0
  %207 = vmatprep.subr.bf16.mxu0 0
  %208 = vmatpush1.bf16.msra.mxu0 0
  %209 = vmatprep.subr.bf16.mxu0 0
  %210 = vmatpush1.bf16.msra.mxu0 0
  %211 = vmatprep.subr.bf16.mxu0 0
  %212 = vmatpush1.bf16.msra.mxu0 0
  %213 = vmatprep.subr.bf16.mxu0 0
  %214 = vmatpush1.bf16.msra.mxu0 0
  %215 = vmatprep.subr.bf16.mxu0 0
  %216 = vmatpush1.bf16.msra.mxu0 0
  %217 = vmatprep.mubr.bf16.mxu0 0
  %218 = vmatmul.mubr.bf16.gmra.mrb[0].mxu0 %v153
  %v219 = vpop.f32.mrb[0].mxu0
  %v220 = vadd.f32 0.0, %v219
  %v221 = vpop.f32.mrb[0].mxu0
  %v222 = vpop.f32.mrb[0].mxu0
  %v223 = vadd.f32 0.0, %v222
  %v224 = vpop.f32.mrb[0].mxu0
  %225 = vmatprep.mubr.bf16.mxu0 0
  %226 = vmatmul.mubr.bf16.gmra.mrb[0].mxu0 %v156
  %v227 = vpop.f32.mrb[0].mxu0
  %v228 = vadd.f32 0.0, %v227
  %v229 = vpop.f32.mrb[0].mxu0
  %v230 = vpop.f32.mrb[0].mxu0
  %v231 = vadd.f32 0.0, %v230
  %v232 = vpop.f32.mrb[0].mxu0
  %233 = vmatprep.mubr.bf16.mxu0 0
  %234 = vmatmul.mubr.bf16.gmra.mrb[0].mxu0 %v159
  %v235 = vpop.f32.mrb[0].mxu0
  %v236 = vadd.f32 0.0, %v235
  %v237 = vpop.f32.mrb[0].mxu0
  %v238 = vpop.f32.mrb[0].mxu0
  %v239 = vadd.f32 0.0, %v238
  %v240 = vpop.f32.mrb[0].mxu0
  %241 = vmatprep.mubr.bf16.mxu0 0
  %242 = vmatmul.mubr.bf16.gmra.mrb[0].mxu0 %v162
  %v243 = vpop.f32.mrb[0].mxu0
  %v244 = vadd.f32 0.0, %v243
  %v245 = vpop.f32.mrb[0].mxu0
  %v246 = vpop.f32.mrb[0].mxu0
  %v247 = vadd.f32 0.0, %v246
  %v248 = vpop.f32.mrb[0].mxu0
  %249 = vmatprep.mubr.bf16.mxu0 0
  %250 = vmatmul.mubr.bf16.gmra.mrb[0].mxu0 %v165
  %v251 = vpop.f32.mrb[0].mxu0
  %v252 = vadd.f32 0.0, %v251
  %v253 = vpop.f32.mrb[0].mxu0
  %v254 = vpop.f32.mrb[0].mxu0
  %v255 = vadd.f32 0.0, %v254
  %v256 = vpop.f32.mrb[0].mxu0
  %257 = vmatprep.mubr.bf16.mxu0 0
  %258 = vmatmul.mubr.bf16.gmra.mrb[0].mxu0 %v168
  %v259 = vpop.f32.mrb[0].mxu0
  %v260 = vadd.f32 0.0, %v259
  %v261 = vpop.f32.mrb[0].mxu0
  %v262 = vpop.f32.mrb[0].mxu0
  %v263 = vadd.f32 0.0, %v262
  %v264 = vpop.f32.mrb[0].mxu0
  %265 = vmatprep.mubr.bf16.mxu0 0
  %266 = vmatmul.mubr.bf16.gmra.mrb[0].mxu0 %v171
  %v267 = vpop.f32.mrb[0].mxu0
  %v268 = vadd.f32 0.0, %v267
  %v269 = vpop.f32.mrb[0].mxu0
  %v270 = vpop.f32.mrb[0].mxu0
  %v271 = vadd.f32 0.0, %v270
  %v272 = vpop.f32.mrb[0].mxu0
  %273 = vmatprep.mubr.bf16.mxu0 0
  %274 = vmatmul.mubr.bf16.gmra.mrb[0].mxu0 %v174
  %v275 = vpop.f32.mrb[0].mxu0
  %v276 = vadd.f32 0.0, %v275
  %v277 = vpop.f32.mrb[0].mxu0
  %v278 = vpop.f32.mrb[0].mxu0
  %v279 = vadd.f32 0.0, %v278
  %v280 = vpop.f32.mrb[0].mxu0
  %281 = vmatprep.mubr.bf16.mxu0 0
  %282 = vmatmul.mubr.bf16.gmra.mrb[0].mxu0 %v177
  %v283 = vpop.f32.mrb[0].mxu0
  %v284 = vadd.f32 0.0, %v283
  %v285 = vpop.f32.mrb[0].mxu0
  %v286 = vpop.f32.mrb[0].mxu0
  %v287 = vadd.f32 0.0, %v286
  %v288 = vpop.f32.mrb[0].mxu0
  %289 = vmatprep.mubr.bf16.mxu0 0
  %290 = vmatmul.mubr.bf16.gmra.mrb[0].mxu0 %v180
  %v291 = vpop.f32.mrb[0].mxu0
  %v292 = vadd.f32 0.0, %v291
  %v293 = vpop.f32.mrb[0].mxu0
  %v294 = vpop.f32.mrb[0].mxu0
  %v295 = vadd.f32 0.0, %v294
  %v296 = vpop.f32.mrb[0].mxu0
  %297 = vmatprep.mubr.bf16.mxu0 0
  %298 = vmatmul.mubr.bf16.gmra.mrb[0].mxu0 %v183
  %v299 = vpop.f32.mrb[0].mxu0
  %v300 = vadd.f32 0.0, %v299
  %v301 = vpop.f32.mrb[0].mxu0
  %v302 = vpop.f32.mrb[0].mxu0
  %v303 = vpop.f32.mrb[0].mxu0
  %304 = vdwg.mxu0
  %v309 = vunpack.c.l.b16 %v130
  %v310 = vunpack.c.l.b16 %v131
  %v311 = vunpack.c.l.b16 %v132
  %v312 = vunpack.c.l.b16 %v133
  %v313 = vpack.c.b16 %v310, %v309
  %v314 = vpack.c.b16 %v312, %v311
  %v318 = vsel %vm151, %v68, 0
  %v321 = vsel %vm151, %v69, 0
  %v324 = vsel %vm151, %v70, 0
  %v327 = vsel %vm151, %v71, 0
  %v330 = vsel %vm151, %v72, 0
  %v333 = vsel %vm151, %v73, 0
  %v336 = vsel %vm151, %v74, 0
  %v339 = vsel %vm151, %v75, 0
  %v342 = vsel %vm151, %v76, 0
  %v345 = vsel %vm151, %v77, 0
  %v348 = vsel %vm151, %v78, 0
  %350 = vmatprep.subr.bf16.mxu0 0
  %351 = vmatpush1.bf16.msra.mxu0 %v313
  %352 = vmatprep.subr.bf16.mxu0 0
  %353 = vmatpush1.bf16.msra.mxu0 %v314
  %354 = vmatprep.subr.bf16.mxu0 0
  %355 = vmatpush1.bf16.msra.mxu0 0
  %356 = vmatprep.subr.bf16.mxu0 0
  %357 = vmatpush1.bf16.msra.mxu0 0
  %358 = vmatprep.subr.bf16.mxu0 0
  %359 = vmatpush1.bf16.msra.mxu0 0
  %360 = vmatprep.subr.bf16.mxu0 0
  %361 = vmatpush1.bf16.msra.mxu0 0
  %362 = vmatprep.subr.bf16.mxu0 0
  %363 = vmatpush1.bf16.msra.mxu0 0
  %364 = vmatprep.subr.bf16.mxu0 0
  %365 = vmatpush1.bf16.msra.mxu0 0
  %366 = vmatprep.subr.bf16.mxu0 0
  %367 = vmatpush1.bf16.msra.mxu0 0
  %368 = vmatprep.subr.bf16.mxu0 0
  %369 = vmatpush1.bf16.msra.mxu0 0
  %370 = vmatprep.subr.bf16.mxu0 0
  %371 = vmatpush1.bf16.msra.mxu0 0
  %372 = vmatprep.subr.bf16.mxu0 0
  %373 = vmatpush1.bf16.msra.mxu0 0
  %374 = vmatprep.subr.bf16.mxu0 0
  %375 = vmatpush1.bf16.msra.mxu0 0
  %376 = vmatprep.subr.bf16.mxu0 0
  %377 = vmatpush1.bf16.msra.mxu0 0
  %378 = vmatprep.subr.bf16.mxu0 0
  %379 = vmatpush1.bf16.msra.mxu0 0
  %380 = vmatprep.subr.bf16.mxu0 0
  %381 = vmatpush1.bf16.msra.mxu0 0
  %382 = vmatprep.mubr.bf16.mxu0 0
  %383 = vmatmul.mubr.bf16.gmra.mrb[0].mxu0 %v318
  %v384 = vpop.f32.mrb[0].mxu0
  %v385 = vadd.f32 %v220, %v384
  %v386 = vpop.f32.mrb[0].mxu0
  %v387 = vpop.f32.mrb[0].mxu0
  %v388 = vadd.f32 %v223, %v387
  %v389 = vpop.f32.mrb[0].mxu0
  %390 = vmatprep.mubr.bf16.mxu0 0
  %391 = vmatmul.mubr.bf16.gmra.mrb[0].mxu0 %v321
  %v392 = vpop.f32.mrb[0].mxu0
  %v393 = vadd.f32 %v228, %v392
  %v394 = vpop.f32.mrb[0].mxu0
  %v395 = vpop.f32.mrb[0].mxu0
  %v396 = vadd.f32 %v231, %v395
  %v397 = vpop.f32.mrb[0].mxu0
  %398 = vmatprep.mubr.bf16.mxu0 0
  %399 = vmatmul.mubr.bf16.gmra.mrb[0].mxu0 %v324
  %v400 = vpop.f32.mrb[0].mxu0
  %v401 = vadd.f32 %v236, %v400
  %v402 = vpop.f32.mrb[0].mxu0
  %v403 = vpop.f32.mrb[0].mxu0
  %v404 = vadd.f32 %v239, %v403
  %v405 = vpop.f32.mrb[0].mxu0
  %406 = vmatprep.mubr.bf16.mxu0 0
  %407 = vmatmul.mubr.bf16.gmra.mrb[0].mxu0 %v327
  %v408 = vpop.f32.mrb[0].mxu0
  %v409 = vadd.f32 %v244, %v408
  %v410 = vpop.f32.mrb[0].mxu0
  %v411 = vpop.f32.mrb[0].mxu0
  %v412 = vadd.f32 %v247, %v411
  %v413 = vpop.f32.mrb[0].mxu0
  %414 = vmatprep.mubr.bf16.mxu0 0
  %415 = vmatmul.mubr.bf16.gmra.mrb[0].mxu0 %v330
  %v416 = vpop.f32.mrb[0].mxu0
  %v417 = vadd.f32 %v252, %v416
  %v418 = vpop.f32.mrb[0].mxu0
  %v419 = vpop.f32.mrb[0].mxu0
  %v420 = vadd.f32 %v255, %v419
  %v421 = vpop.f32.mrb[0].mxu0
  %422 = vmatprep.mubr.bf16.mxu0 0
  %423 = vmatmul.mubr.bf16.gmra.mrb[0].mxu0 %v333
  %v424 = vpop.f32.mrb[0].mxu0
  %v425 = vadd.f32 %v260, %v424
  %v426 = vpop.f32.mrb[0].mxu0
  %v427 = vpop.f32.mrb[0].mxu0
  %v428 = vadd.f32 %v263, %v427
  %v429 = vpop.f32.mrb[0].mxu0
  %430 = vmatprep.mubr.bf16.mxu0 0
  %431 = vmatmul.mubr.bf16.gmra.mrb[0].mxu0 %v336
  %v432 = vpop.f32.mrb[0].mxu0
  %v433 = vadd.f32 %v268, %v432
  %v434 = vpop.f32.mrb[0].mxu0
  %v435 = vpop.f32.mrb[0].mxu0
  %v436 = vadd.f32 %v271, %v435
  %v437 = vpop.f32.mrb[0].mxu0
  %438 = vmatprep.mubr.bf16.mxu0 0
  %439 = vmatmul.mubr.bf16.gmra.mrb[0].mxu0 %v339
  %v440 = vpop.f32.mrb[0].mxu0
  %v441 = vadd.f32 %v276, %v440
  %v442 = vpop.f32.mrb[0].mxu0
  %v443 = vpop.f32.mrb[0].mxu0
  %v444 = vadd.f32 %v279, %v443
  %v445 = vpop.f32.mrb[0].mxu0
  %446 = vmatprep.mubr.bf16.mxu0 0
  %447 = vmatmul.mubr.bf16.gmra.mrb[0].mxu0 %v342
  %v448 = vpop.f32.mrb[0].mxu0
  %v449 = vadd.f32 %v284, %v448
  %v450 = vpop.f32.mrb[0].mxu0
  %v451 = vpop.f32.mrb[0].mxu0
  %v452 = vadd.f32 %v287, %v451
  %v453 = vpop.f32.mrb[0].mxu0
  %454 = vmatprep.mubr.bf16.mxu0 0
  %455 = vmatmul.mubr.bf16.gmra.mrb[0].mxu0 %v345
  %v456 = vpop.f32.mrb[0].mxu0
  %v457 = vadd.f32 %v292, %v456
  %v458 = vpop.f32.mrb[0].mxu0
  %v459 = vpop.f32.mrb[0].mxu0
  %v460 = vadd.f32 %v295, %v459
  %v461 = vpop.f32.mrb[0].mxu0
  %462 = vmatprep.mubr.bf16.mxu0 0
  %463 = vmatmul.mubr.bf16.gmra.mrb[0].mxu0 %v348
  %v464 = vpop.f32.mrb[0].mxu0
  %v465 = vadd.f32 %v300, %v464
  %v466 = vpop.f32.mrb[0].mxu0
  %v467 = vpop.f32.mrb[0].mxu0
  %v468 = vpop.f32.mrb[0].mxu0
  %469 = vdwg.mxu0
  %s470 = scalar_lea.vmem %s1, 16
  %v471 = vld [vmem:[%s470] sm:$0xf]
  %v472 = vld [vmem:[%s470 + $0x4] sm:$0xf]
  %v473 = vld [vmem:[%s470 + $0x8] sm:$0xf]
  %v474 = vld [vmem:[%s470 + $0xc] sm:$0xf]
  %s475 = scalar_lea.vmem %s1, 112
  %v476 = vld [vmem:[%s475] sm:$0xf]
  %v477 = vld [vmem:[%s475 + $0x4] sm:$0xf]
  %v478 = vld [vmem:[%s475 + $0x8] sm:$0xf]
  %v479 = vld [vmem:[%s475 + $0xc] sm:$0xf]
  %v484 = vunpack.c.l.b16 %v476
  %v485 = vunpack.c.l.b16 %v477
  %v486 = vunpack.c.l.b16 %v478
  %v487 = vunpack.c.l.b16 %v479
  %v488 = vpack.c.b16 %v485, %v484
  %v489 = vpack.c.b16 %v487, %v486
  %492 = vmatprep.subr.bf16.mxu0 0
  %493 = vmatpush1.bf16.msra.mxu0 %v488
  %494 = vmatprep.subr.bf16.mxu0 0
  %495 = vmatpush1.bf16.msra.mxu0 %v489
  %496 = vmatprep.subr.bf16.mxu0 0
  %497 = vmatpush1.bf16.msra.mxu0 0
  %498 = vmatprep.subr.bf16.mxu0 0
  %499 = vmatpush1.bf16.msra.mxu0 0
  %500 = vmatprep.subr.bf16.mxu0 0
  %501 = vmatpush1.bf16.msra.mxu0 0
  %502 = vmatprep.subr.bf16.mxu0 0
  %503 = vmatpush1.bf16.msra.mxu0 0
  %504 = vmatprep.subr.bf16.mxu0 0
  %505 = vmatpush1.bf16.msra.mxu0 0
  %506 = vmatprep.subr.bf16.mxu0 0
  %507 = vmatpush1.bf16.msra.mxu0 0
  %508 = vmatprep.subr.bf16.mxu0 0
  %509 = vmatpush1.bf16.msra.mxu0 0
  %510 = vmatprep.subr.bf16.mxu0 0
  %511 = vmatpush1.bf16.msra.mxu0 0
  %512 = vmatprep.subr.bf16.mxu0 0
  %513 = vmatpush1.bf16.msra.mxu0 0
  %514 = vmatprep.subr.bf16.mxu0 0
  %515 = vmatpush1.bf16.msra.mxu0 0
  %516 = vmatprep.subr.bf16.mxu0 0
  %517 = vmatpush1.bf16.msra.mxu0 0
  %518 = vmatprep.subr.bf16.mxu0 0
  %519 = vmatpush1.bf16.msra.mxu0 0
  %520 = vmatprep.subr.bf16.mxu0 0
  %521 = vmatpush1.bf16.msra.mxu0 0
  %522 = vmatprep.subr.bf16.mxu0 0
  %523 = vmatpush1.bf16.msra.mxu0 0
  %524 = vmatprep.mubr.bf16.mxu0 0
  %525 = vmatmul.mubr.bf16.gmra.mrb[0].mxu0 %v153
  %v526 = vpop.f32.mrb[0].mxu0
  %v527 = vadd.f32 0.0, %v526
  %v528 = vpop.f32.mrb[0].mxu0
  %v529 = vpop.f32.mrb[0].mxu0
  %v530 = vadd.f32 0.0, %v529
  %v531 = vpop.f32.mrb[0].mxu0
  %532 = vmatprep.mubr.bf16.mxu0 0
  %533 = vmatmul.mubr.bf16.gmra.mrb[0].mxu0 %v156
  %v534 = vpop.f32.mrb[0].mxu0
  %v535 = vadd.f32 0.0, %v534
  %v536 = vpop.f32.mrb[0].mxu0
  %v537 = vpop.f32.mrb[0].mxu0
  %v538 = vadd.f32 0.0, %v537
  %v539 = vpop.f32.mrb[0].mxu0
  %540 = vmatprep.mubr.bf16.mxu0 0
  %541 = vmatmul.mubr.bf16.gmra.mrb[0].mxu0 %v159
  %v542 = vpop.f32.mrb[0].mxu0
  %v543 = vadd.f32 0.0, %v542
  %v544 = vpop.f32.mrb[0].mxu0
  %v545 = vpop.f32.mrb[0].mxu0
  %v546 = vadd.f32 0.0, %v545
  %v547 = vpop.f32.mrb[0].mxu0
  %548 = vmatprep.mubr.bf16.mxu0 0
  %549 = vmatmul.mubr.bf16.gmra.mrb[0].mxu0 %v162
  %v550 = vpop.f32.mrb[0].mxu0
  %v551 = vadd.f32 0.0, %v550
  %v552 = vpop.f32.mrb[0].mxu0
  %v553 = vpop.f32.mrb[0].mxu0
  %v554 = vadd.f32 0.0, %v553
  %v555 = vpop.f32.mrb[0].mxu0
  %556 = vmatprep.mubr.bf16.mxu0 0
  %557 = vmatmul.mubr.bf16.gmra.mrb[0].mxu0 %v165
  %v558 = vpop.f32.mrb[0].mxu0
  %v559 = vadd.f32 0.0, %v558
  %v560 = vpop.f32.mrb[0].mxu0
  %v561 = vpop.f32.mrb[0].mxu0
  %v562 = vadd.f32 0.0, %v561
  %v563 = vpop.f32.mrb[0].mxu0
  %564 = vmatprep.mubr.bf16.mxu0 0
  %565 = vmatmul.mubr.bf16.gmra.mrb[0].mxu0 %v168
  %v566 = vpop.f32.mrb[0].mxu0
  %v567 = vadd.f32 0.0, %v566
  %v568 = vpop.f32.mrb[0].mxu0
  %v569 = vpop.f32.mrb[0].mxu0
  %v570 = vadd.f32 0.0, %v569
  %v571 = vpop.f32.mrb[0].mxu0
  %572 = vmatprep.mubr.bf16.mxu0 0
  %573 = vmatmul.mubr.bf16.gmra.mrb[0].mxu0 %v171
  %v574 = vpop.f32.mrb[0].mxu0
  %v575 = vadd.f32 0.0, %v574
  %v576 = vpop.f32.mrb[0].mxu0
  %v577 = vpop.f32.mrb[0].mxu0
  %v578 = vadd.f32 0.0, %v577
  %v579 = vpop.f32.mrb[0].mxu0
  %580 = vmatprep.mubr.bf16.mxu0 0
  %581 = vmatmul.mubr.bf16.gmra.mrb[0].mxu0 %v174
  %v582 = vpop.f32.mrb[0].mxu0
  %v583 = vadd.f32 0.0, %v582
  %v584 = vpop.f32.mrb[0].mxu0
  %v585 = vpop.f32.mrb[0].mxu0
  %v586 = vadd.f32 0.0, %v585
  %v587 = vpop.f32.mrb[0].mxu0
  %588 = vmatprep.mubr.bf16.mxu0 0
  %589 = vmatmul.mubr.bf16.gmra.mrb[0].mxu0 %v177
  %v590 = vpop.f32.mrb[0].mxu0
  %v591 = vadd.f32 0.0, %v590
  %v592 = vpop.f32.mrb[0].mxu0
  %v593 = vpop.f32.mrb[0].mxu0
  %v594 = vadd.f32 0.0, %v593
  %v595 = vpop.f32.mrb[0].mxu0
  %596 = vmatprep.mubr.bf16.mxu0 0
  %597 = vmatmul.mubr.bf16.gmra.mrb[0].mxu0 %v180
  %v598 = vpop.f32.mrb[0].mxu0
  %v599 = vadd.f32 0.0, %v598
  %v600 = vpop.f32.mrb[0].mxu0
  %v601 = vpop.f32.mrb[0].mxu0
  %v602 = vadd.f32 0.0, %v601
  %v603 = vpop.f32.mrb[0].mxu0
  %604 = vmatprep.mubr.bf16.mxu0 0
  %605 = vmatmul.mubr.bf16.gmra.mrb[0].mxu0 %v183
  %v606 = vpop.f32.mrb[0].mxu0
  %v607 = vadd.f32 0.0, %v606
  %v608 = vpop.f32.mrb[0].mxu0
  %v609 = vpop.f32.mrb[0].mxu0
  %v610 = vpop.f32.mrb[0].mxu0
  %611 = vdwg.mxu0
  %v616 = vunpack.c.l.b16 %v471
  %v617 = vunpack.c.l.b16 %v472
  %v618 = vunpack.c.l.b16 %v473
  %v619 = vunpack.c.l.b16 %v474
  %v620 = vpack.c.b16 %v617, %v616
  %v621 = vpack.c.b16 %v619, %v618
  %v625 = vsel %vm151, %v81, 0
  %v628 = vsel %vm151, %v82, 0
  %v631 = vsel %vm151, %v83, 0
  %v634 = vsel %vm151, %v84, 0
  %v637 = vsel %vm151, %v85, 0
  %v640 = vsel %vm151, %v86, 0
  %v643 = vsel %vm151, %v87, 0
  %v646 = vsel %vm151, %v88, 0
  %v649 = vsel %vm151, %v89, 0
  %v652 = vsel %vm151, %v90, 0
  %v655 = vsel %vm151, %v91, 0
  %657 = vmatprep.subr.bf16.mxu0 0
  %658 = vmatpush1.bf16.msra.mxu0 %v620
  %659 = vmatprep.subr.bf16.mxu0 0
  %660 = vmatpush1.bf16.msra.mxu0 %v621
  %661 = vmatprep.subr.bf16.mxu0 0
  %662 = vmatpush1.bf16.msra.mxu0 0
  %663 = vmatprep.subr.bf16.mxu0 0
  %664 = vmatpush1.bf16.msra.mxu0 0
  %665 = vmatprep.subr.bf16.mxu0 0
  %666 = vmatpush1.bf16.msra.mxu0 0
  %667 = vmatprep.subr.bf16.mxu0 0
  %668 = vmatpush1.bf16.msra.mxu0 0
  %669 = vmatprep.subr.bf16.mxu0 0
  %670 = vmatpush1.bf16.msra.mxu0 0
  %671 = vmatprep.subr.bf16.mxu0 0
  %672 = vmatpush1.bf16.msra.mxu0 0
  %673 = vmatprep.subr.bf16.mxu0 0
  %674 = vmatpush1.bf16.msra.mxu0 0
  %675 = vmatprep.subr.bf16.mxu0 0
  %676 = vmatpush1.bf16.msra.mxu0 0
  %677 = vmatprep.subr.bf16.mxu0 0
  %678 = vmatpush1.bf16.msra.mxu0 0
  %679 = vmatprep.subr.bf16.mxu0 0
  %680 = vmatpush1.bf16.msra.mxu0 0
  %681 = vmatprep.subr.bf16.mxu0 0
  %682 = vmatpush1.bf16.msra.mxu0 0
  %683 = vmatprep.subr.bf16.mxu0 0
  %684 = vmatpush1.bf16.msra.mxu0 0
  %685 = vmatprep.subr.bf16.mxu0 0
  %686 = vmatpush1.bf16.msra.mxu0 0
  %687 = vmatprep.subr.bf16.mxu0 0
  %688 = vmatpush1.bf16.msra.mxu0 0
  %689 = vmatprep.mubr.bf16.mxu0 0
  %690 = vmatmul.mubr.bf16.gmra.mrb[0].mxu0 %v625
  %v691 = vpop.f32.mrb[0].mxu0
  %v692 = vadd.f32 %v527, %v691
  %v693 = vpop.f32.mrb[0].mxu0
  %v694 = vpop.f32.mrb[0].mxu0
  %v695 = vadd.f32 %v530, %v694
  %v696 = vpop.f32.mrb[0].mxu0
  %697 = vmatprep.mubr.bf16.mxu0 0
  %698 = vmatmul.mubr.bf16.gmra.mrb[0].mxu0 %v628
  %v699 = vpop.f32.mrb[0].mxu0
  %v700 = vadd.f32 %v535, %v699
  %v701 = vpop.f32.mrb[0].mxu0
  %v702 = vpop.f32.mrb[0].mxu0
  %v703 = vadd.f32 %v538, %v702
  %v704 = vpop.f32.mrb[0].mxu0
  %705 = vmatprep.mubr.bf16.mxu0 0
  %706 = vmatmul.mubr.bf16.gmra.mrb[0].mxu0 %v631
  %v707 = vpop.f32.mrb[0].mxu0
  %v708 = vadd.f32 %v543, %v707
  %v709 = vpop.f32.mrb[0].mxu0
  %v710 = vpop.f32.mrb[0].mxu0
  %v711 = vadd.f32 %v546, %v710
  %v712 = vpop.f32.mrb[0].mxu0
  %713 = vmatprep.mubr.bf16.mxu0 0
  %714 = vmatmul.mubr.bf16.gmra.mrb[0].mxu0 %v634
  %v715 = vpop.f32.mrb[0].mxu0
  %v716 = vadd.f32 %v551, %v715
  %v717 = vpop.f32.mrb[0].mxu0
  %v718 = vpop.f32.mrb[0].mxu0
  %v719 = vadd.f32 %v554, %v718
  %v720 = vpop.f32.mrb[0].mxu0
  %721 = vmatprep.mubr.bf16.mxu0 0
  %722 = vmatmul.mubr.bf16.gmra.mrb[0].mxu0 %v637
  %v723 = vpop.f32.mrb[0].mxu0
  %v724 = vadd.f32 %v559, %v723
  %v725 = vpop.f32.mrb[0].mxu0
  %v726 = vpop.f32.mrb[0].mxu0
  %v727 = vadd.f32 %v562, %v726
  %v728 = vpop.f32.mrb[0].mxu0
  %729 = vmatprep.mubr.bf16.mxu0 0
  %730 = vmatmul.mubr.bf16.gmra.mrb[0].mxu0 %v640
  %v731 = vpop.f32.mrb[0].mxu0
  %v732 = vadd.f32 %v567, %v731
  %v733 = vpop.f32.mrb[0].mxu0
  %v734 = vpop.f32.mrb[0].mxu0
  %v735 = vadd.f32 %v570, %v734
  %v736 = vpop.f32.mrb[0].mxu0
  %737 = vmatprep.mubr.bf16.mxu0 0
  %738 = vmatmul.mubr.bf16.gmra.mrb[0].mxu0 %v643
  %v739 = vpop.f32.mrb[0].mxu0
  %v740 = vadd.f32 %v575, %v739
  %v741 = vpop.f32.mrb[0].mxu0
  %v742 = vpop.f32.mrb[0].mxu0
  %v743 = vadd.f32 %v578, %v742
  %v744 = vpop.f32.mrb[0].mxu0
  %745 = vmatprep.mubr.bf16.mxu0 0
  %746 = vmatmul.mubr.bf16.gmra.mrb[0].mxu0 %v646
  %v747 = vpop.f32.mrb[0].mxu0
  %v748 = vadd.f32 %v583, %v747
  %v749 = vpop.f32.mrb[0].mxu0
  %v750 = vpop.f32.mrb[0].mxu0
  %v751 = vadd.f32 %v586, %v750
  %v752 = vpop.f32.mrb[0].mxu0
  %753 = vmatprep.mubr.bf16.mxu0 0
  %754 = vmatmul.mubr.bf16.gmra.mrb[0].mxu0 %v649
  %v755 = vpop.f32.mrb[0].mxu0
  %v756 = vadd.f32 %v591, %v755
  %v757 = vpop.f32.mrb[0].mxu0
  %v758 = vpop.f32.mrb[0].mxu0
  %v759 = vadd.f32 %v594, %v758
  %v760 = vpop.f32.mrb[0].mxu0
  %761 = vmatprep.mubr.bf16.mxu0 0
  %762 = vmatmul.mubr.bf16.gmra.mrb[0].mxu0 %v652
  %v763 = vpop.f32.mrb[0].mxu0
  %v764 = vadd.f32 %v599, %v763
  %v765 = vpop.f32.mrb[0].mxu0
  %v766 = vpop.f32.mrb[0].mxu0
  %v767 = vadd.f32 %v602, %v766
  %v768 = vpop.f32.mrb[0].mxu0
  %769 = vmatprep.mubr.bf16.mxu0 0
  %770 = vmatmul.mubr.bf16.gmra.mrb[0].mxu0 %v655
  %v771 = vpop.f32.mrb[0].mxu0
  %v772 = vadd.f32 %v607, %v771
  %v773 = vpop.f32.mrb[0].mxu0
  %v774 = vpop.f32.mrb[0].mxu0
  %v775 = vpop.f32.mrb[0].mxu0
  %776 = vdwg.mxu0
  %v777 = vld [vmem:[%s1] sm:$0xf]
  %v778 = vld [vmem:[%s1 + $0x4] sm:$0xf]
  %v779 = vld [vmem:[%s1 + $0x8] sm:$0xf]
  %v780 = vld [vmem:[%s1 + $0xc] sm:$0xf]
  %s781 = scalar_lea.vmem %s1, 32
  %v782 = vld [vmem:[%s781] sm:$0xf]
  %v783 = vld [vmem:[%s781 + $0x4] sm:$0xf]
  %v784 = vld [vmem:[%s781 + $0x8] sm:$0xf]
  %v785 = vld [vmem:[%s781 + $0xc] sm:$0xf]
  %v790 = vunpack.c.l.b16 %v782
  %v791 = vunpack.c.l.b16 %v783
  %v792 = vunpack.c.l.b16 %v784
  %v793 = vunpack.c.l.b16 %v785
  %v794 = vpack.c.b16 %v791, %v790
  %v795 = vpack.c.b16 %v793, %v792
  %798 = vmatprep.subr.bf16.mxu0 0
  %799 = vmatpush1.bf16.msra.mxu0 %v794
  %800 = vmatprep.subr.bf16.mxu0 0
  %801 = vmatpush1.bf16.msra.mxu0 %v795
  %802 = vmatprep.subr.bf16.mxu0 0
  %803 = vmatpush1.bf16.msra.mxu0 0
  %804 = vmatprep.subr.bf16.mxu0 0
  %805 = vmatpush1.bf16.msra.mxu0 0
  %806 = vmatprep.subr.bf16.mxu0 0
  %807 = vmatpush1.bf16.msra.mxu0 0
  %808 = vmatprep.subr.bf16.mxu0 0
  %809 = vmatpush1.bf16.msra.mxu0 0
  %810 = vmatprep.subr.bf16.mxu0 0
  %811 = vmatpush1.bf16.msra.mxu0 0
  %812 = vmatprep.subr.bf16.mxu0 0
  %813 = vmatpush1.bf16.msra.mxu0 0
  %814 = vmatprep.subr.bf16.mxu0 0
  %815 = vmatpush1.bf16.msra.mxu0 0
  %816 = vmatprep.subr.bf16.mxu0 0
  %817 = vmatpush1.bf16.msra.mxu0 0
  %818 = vmatprep.subr.bf16.mxu0 0
  %819 = vmatpush1.bf16.msra.mxu0 0
  %820 = vmatprep.subr.bf16.mxu0 0
  %821 = vmatpush1.bf16.msra.mxu0 0
  %822 = vmatprep.subr.bf16.mxu0 0
  %823 = vmatpush1.bf16.msra.mxu0 0
  %824 = vmatprep.subr.bf16.mxu0 0
  %825 = vmatpush1.bf16.msra.mxu0 0
  %826 = vmatprep.subr.bf16.mxu0 0
  %827 = vmatpush1.bf16.msra.mxu0 0
  %828 = vmatprep.subr.bf16.mxu0 0
  %829 = vmatpush1.bf16.msra.mxu0 0
  %830 = vmatprep.mubr.bf16.mxu0 0
  %831 = vmatmul.mubr.bf16.gmra.mrb[0].mxu0 %v625
  %v832 = vpop.f32.mrb[0].mxu0
  %v833 = vadd.f32 0.0, %v832
  %v834 = vpop.f32.mrb[0].mxu0
  %v835 = vpop.f32.mrb[0].mxu0
  %v836 = vadd.f32 0.0, %v835
  %v837 = vpop.f32.mrb[0].mxu0
  %838 = vmatprep.mubr.bf16.mxu0 0
  %839 = vmatmul.mubr.bf16.gmra.mrb[0].mxu0 %v628
  %v840 = vpop.f32.mrb[0].mxu0
  %v841 = vadd.f32 0.0, %v840
  %v842 = vpop.f32.mrb[0].mxu0
  %v843 = vpop.f32.mrb[0].mxu0
  %v844 = vadd.f32 0.0, %v843
  %v845 = vpop.f32.mrb[0].mxu0
  %846 = vmatprep.mubr.bf16.mxu0 0
  %847 = vmatmul.mubr.bf16.gmra.mrb[0].mxu0 %v631
  %v848 = vpop.f32.mrb[0].mxu0
  %v849 = vadd.f32 0.0, %v848
  %v850 = vpop.f32.mrb[0].mxu0
  %v851 = vpop.f32.mrb[0].mxu0
  %v852 = vadd.f32 0.0, %v851
  %v853 = vpop.f32.mrb[0].mxu0
  %854 = vmatprep.mubr.bf16.mxu0 0
  %855 = vmatmul.mubr.bf16.gmra.mrb[0].mxu0 %v634
  %v856 = vpop.f32.mrb[0].mxu0
  %v857 = vadd.f32 0.0, %v856
  %v858 = vpop.f32.mrb[0].mxu0
  %v859 = vpop.f32.mrb[0].mxu0
  %v860 = vadd.f32 0.0, %v859
  %v861 = vpop.f32.mrb[0].mxu0
  %862 = vmatprep.mubr.bf16.mxu0 0
  %863 = vmatmul.mubr.bf16.gmra.mrb[0].mxu0 %v637
  %v864 = vpop.f32.mrb[0].mxu0
  %v865 = vadd.f32 0.0, %v864
  %v866 = vpop.f32.mrb[0].mxu0
  %v867 = vpop.f32.mrb[0].mxu0
  %v868 = vadd.f32 0.0, %v867
  %v869 = vpop.f32.mrb[0].mxu0
  %870 = vmatprep.mubr.bf16.mxu0 0
  %871 = vmatmul.mubr.bf16.gmra.mrb[0].mxu0 %v640
  %v872 = vpop.f32.mrb[0].mxu0
  %v873 = vadd.f32 0.0, %v872
  %v874 = vpop.f32.mrb[0].mxu0
  %v875 = vpop.f32.mrb[0].mxu0
  %v876 = vadd.f32 0.0, %v875
  %v877 = vpop.f32.mrb[0].mxu0
  %878 = vmatprep.mubr.bf16.mxu0 0
  %879 = vmatmul.mubr.bf16.gmra.mrb[0].mxu0 %v643
  %v880 = vpop.f32.mrb[0].mxu0
  %v881 = vadd.f32 0.0, %v880
  %v882 = vpop.f32.mrb[0].mxu0
  %v883 = vpop.f32.mrb[0].mxu0
  %v884 = vadd.f32 0.0, %v883
  %v885 = vpop.f32.mrb[0].mxu0
  %886 = vmatprep.mubr.bf16.mxu0 0
  %887 = vmatmul.mubr.bf16.gmra.mrb[0].mxu0 %v646
  %v888 = vpop.f32.mrb[0].mxu0
  %v889 = vadd.f32 0.0, %v888
  %v890 = vpop.f32.mrb[0].mxu0
  %v891 = vpop.f32.mrb[0].mxu0
  %v892 = vadd.f32 0.0, %v891
  %v893 = vpop.f32.mrb[0].mxu0
  %894 = vmatprep.mubr.bf16.mxu0 0
  %895 = vmatmul.mubr.bf16.gmra.mrb[0].mxu0 %v649
  %v896 = vpop.f32.mrb[0].mxu0
  %v897 = vadd.f32 0.0, %v896
  %v898 = vpop.f32.mrb[0].mxu0
  %v899 = vpop.f32.mrb[0].mxu0
  %v900 = vadd.f32 0.0, %v899
  %v901 = vpop.f32.mrb[0].mxu0
  %902 = vmatprep.mubr.bf16.mxu0 0
  %903 = vmatmul.mubr.bf16.gmra.mrb[0].mxu0 %v652
  %v904 = vpop.f32.mrb[0].mxu0
  %v905 = vadd.f32 0.0, %v904
  %v906 = vpop.f32.mrb[0].mxu0
  %v907 = vpop.f32.mrb[0].mxu0
  %v908 = vadd.f32 0.0, %v907
  %v909 = vpop.f32.mrb[0].mxu0
  %910 = vmatprep.mubr.bf16.mxu0 0
  %911 = vmatmul.mubr.bf16.gmra.mrb[0].mxu0 %v655
  %v912 = vpop.f32.mrb[0].mxu0
  %v913 = vadd.f32 0.0, %v912
  %v914 = vpop.f32.mrb[0].mxu0
  %v915 = vpop.f32.mrb[0].mxu0
  %v916 = vpop.f32.mrb[0].mxu0
  %917 = vdwg.mxu0
  %v922 = vunpack.c.l.b16 %v777
  %v923 = vunpack.c.l.b16 %v778
  %v924 = vunpack.c.l.b16 %v779
  %v925 = vunpack.c.l.b16 %v780
  %v926 = vpack.c.b16 %v923, %v922
  %v927 = vpack.c.b16 %v925, %v924
  %v931 = vsel %vm151, %v113, 0
  %v934 = vsel %vm151, %v114, 0
  %v937 = vsel %vm151, %v115, 0
  %v940 = vsel %vm151, %v116, 0
  %v943 = vsel %vm151, %v117, 0
  %v946 = vsel %vm151, %v118, 0
  %v949 = vsel %vm151, %v119, 0
  %v952 = vsel %vm151, %v120, 0
  %v955 = vsel %vm151, %v121, 0
  %v958 = vsel %vm151, %v122, 0
  %v961 = vsel %vm151, %v123, 0
  %963 = vmatprep.subr.bf16.mxu0 0
  %964 = vmatpush1.bf16.msra.mxu0 %v926
  %965 = vmatprep.subr.bf16.mxu0 0
  %966 = vmatpush1.bf16.msra.mxu0 %v927
  %967 = vmatprep.subr.bf16.mxu0 0
  %968 = vmatpush1.bf16.msra.mxu0 0
  %969 = vmatprep.subr.bf16.mxu0 0
  %970 = vmatpush1.bf16.msra.mxu0 0
  %971 = vmatprep.subr.bf16.mxu0 0
  %972 = vmatpush1.bf16.msra.mxu0 0
  %973 = vmatprep.subr.bf16.mxu0 0
  %974 = vmatpush1.bf16.msra.mxu0 0
  %975 = vmatprep.subr.bf16.mxu0 0
  %976 = vmatpush1.bf16.msra.mxu0 0
  %977 = vmatprep.subr.bf16.mxu0 0
  %978 = vmatpush1.bf16.msra.mxu0 0
  %979 = vmatprep.subr.bf16.mxu0 0
  %980 = vmatpush1.bf16.msra.mxu0 0
  %981 = vmatprep.subr.bf16.mxu0 0
  %982 = vmatpush1.bf16.msra.mxu0 0
  %983 = vmatprep.subr.bf16.mxu0 0
  %984 = vmatpush1.bf16.msra.mxu0 0
  %985 = vmatprep.subr.bf16.mxu0 0
  %986 = vmatpush1.bf16.msra.mxu0 0
  %987 = vmatprep.subr.bf16.mxu0 0
  %988 = vmatpush1.bf16.msra.mxu0 0
  %989 = vmatprep.subr.bf16.mxu0 0
  %990 = vmatpush1.bf16.msra.mxu0 0
  %991 = vmatprep.subr.bf16.mxu0 0
  %992 = vmatpush1.bf16.msra.mxu0 0
  %993 = vmatprep.subr.bf16.mxu0 0
  %994 = vmatpush1.bf16.msra.mxu0 0
  %995 = vmatprep.mubr.bf16.mxu0 0
  %996 = vmatmul.mubr.bf16.gmra.mrb[0].mxu0 %v931
  %v997 = vpop.f32.mrb[0].mxu0
  %v998 = vadd.f32 %v833, %v997
  %v999 = vpop.f32.mrb[0].mxu0
  %v1000 = vpop.f32.mrb[0].mxu0
  %v1001 = vadd.f32 %v836, %v1000
  %v1002 = vpop.f32.mrb[0].mxu0
  %1003 = vmatprep.mubr.bf16.mxu0 0
  %1004 = vmatmul.mubr.bf16.gmra.mrb[0].mxu0 %v934
  %v1005 = vpop.f32.mrb[0].mxu0
  %v1006 = vadd.f32 %v841, %v1005
  %v1007 = vpop.f32.mrb[0].mxu0
  %v1008 = vpop.f32.mrb[0].mxu0
  %v1009 = vadd.f32 %v844, %v1008
  %v1010 = vpop.f32.mrb[0].mxu0
  %1011 = vmatprep.mubr.bf16.mxu0 0
  %1012 = vmatmul.mubr.bf16.gmra.mrb[0].mxu0 %v937
  %v1013 = vpop.f32.mrb[0].mxu0
  %v1014 = vadd.f32 %v849, %v1013
  %v1015 = vpop.f32.mrb[0].mxu0
  %v1016 = vpop.f32.mrb[0].mxu0
  %v1017 = vadd.f32 %v852, %v1016
  %v1018 = vpop.f32.mrb[0].mxu0
  %1019 = vmatprep.mubr.bf16.mxu0 0
  %1020 = vmatmul.mubr.bf16.gmra.mrb[0].mxu0 %v940
  %v1021 = vpop.f32.mrb[0].mxu0
  %v1022 = vadd.f32 %v857, %v1021
  %v1023 = vpop.f32.mrb[0].mxu0
  %v1024 = vpop.f32.mrb[0].mxu0
  %v1025 = vadd.f32 %v860, %v1024
  %v1026 = vpop.f32.mrb[0].mxu0
  %1027 = vmatprep.mubr.bf16.mxu0 0
  %1028 = vmatmul.mubr.bf16.gmra.mrb[0].mxu0 %v943
  %v1029 = vpop.f32.mrb[0].mxu0
  %v1030 = vadd.f32 %v865, %v1029
  %v1031 = vpop.f32.mrb[0].mxu0
  %v1032 = vpop.f32.mrb[0].mxu0
  %v1033 = vadd.f32 %v868, %v1032
  %v1034 = vpop.f32.mrb[0].mxu0
  %1035 = vmatprep.mubr.bf16.mxu0 0
  %1036 = vmatmul.mubr.bf16.gmra.mrb[0].mxu0 %v946
  %v1037 = vpop.f32.mrb[0].mxu0
  %v1038 = vadd.f32 %v873, %v1037
  %v1039 = vpop.f32.mrb[0].mxu0
  %v1040 = vpop.f32.mrb[0].mxu0
  %v1041 = vadd.f32 %v876, %v1040
  %v1042 = vpop.f32.mrb[0].mxu0
  %1043 = vmatprep.mubr.bf16.mxu0 0
  %1044 = vmatmul.mubr.bf16.gmra.mrb[0].mxu0 %v949
  %v1045 = vpop.f32.mrb[0].mxu0
  %v1046 = vadd.f32 %v881, %v1045
  %v1047 = vpop.f32.mrb[0].mxu0
  %v1048 = vpop.f32.mrb[0].mxu0
  %v1049 = vadd.f32 %v884, %v1048
  %v1050 = vpop.f32.mrb[0].mxu0
  %1051 = vmatprep.mubr.bf16.mxu0 0
  %1052 = vmatmul.mubr.bf16.gmra.mrb[0].mxu0 %v952
  %v1053 = vpop.f32.mrb[0].mxu0
  %v1054 = vadd.f32 %v889, %v1053
  %v1055 = vpop.f32.mrb[0].mxu0
  %v1056 = vpop.f32.mrb[0].mxu0
  %v1057 = vadd.f32 %v892, %v1056
  %v1058 = vpop.f32.mrb[0].mxu0
  %1059 = vmatprep.mubr.bf16.mxu0 0
  %1060 = vmatmul.mubr.bf16.gmra.mrb[0].mxu0 %v955
  %v1061 = vpop.f32.mrb[0].mxu0
  %v1062 = vadd.f32 %v897, %v1061
  %v1063 = vpop.f32.mrb[0].mxu0
  %v1064 = vpop.f32.mrb[0].mxu0
  %v1065 = vadd.f32 %v900, %v1064
  %v1066 = vpop.f32.mrb[0].mxu0
  %1067 = vmatprep.mubr.bf16.mxu0 0
  %1068 = vmatmul.mubr.bf16.gmra.mrb[0].mxu0 %v958
  %v1069 = vpop.f32.mrb[0].mxu0
  %v1070 = vadd.f32 %v905, %v1069
  %v1071 = vpop.f32.mrb[0].mxu0
  %v1072 = vpop.f32.mrb[0].mxu0
  %v1073 = vadd.f32 %v908, %v1072
  %v1074 = vpop.f32.mrb[0].mxu0
  %1075 = vmatprep.mubr.bf16.mxu0 0
  %1076 = vmatmul.mubr.bf16.gmra.mrb[0].mxu0 %v961
  %v1077 = vpop.f32.mrb[0].mxu0
  %v1078 = vadd.f32 %v913, %v1077
  %v1079 = vpop.f32.mrb[0].mxu0
  %v1080 = vpop.f32.mrb[0].mxu0
  %v1081 = vpop.f32.mrb[0].mxu0
  %1082 = vdwg.mxu0
  %s1083 = scalar_lea.vmem %s1, 96
  %v1084 = vld [vmem:[%s1083] sm:$0xf]
  %v1085 = vld [vmem:[%s1083 + $0x4] sm:$0xf]
  %v1086 = vld [vmem:[%s1083 + $0x8] sm:$0xf]
  %v1087 = vld [vmem:[%s1083 + $0xc] sm:$0xf]
  %v1092 = vunpack.c.l.b16 %v1084
  %v1093 = vunpack.c.l.b16 %v1085
  %v1094 = vunpack.c.l.b16 %v1086
  %v1095 = vunpack.c.l.b16 %v1087
  %v1096 = vpack.c.b16 %v1093, %v1092
  %v1097 = vpack.c.b16 %v1095, %v1094
  %1100 = vmatprep.subr.bf16.mxu0 0
  %1101 = vmatpush1.bf16.msra.mxu0 %v1096
  %1102 = vmatprep.subr.bf16.mxu0 0
  %1103 = vmatpush1.bf16.msra.mxu0 %v1097
  %1104 = vmatprep.subr.bf16.mxu0 0
  %1105 = vmatpush1.bf16.msra.mxu0 0
  %1106 = vmatprep.subr.bf16.mxu0 0
  %1107 = vmatpush1.bf16.msra.mxu0 0
  %1108 = vmatprep.subr.bf16.mxu0 0
  %1109 = vmatpush1.bf16.msra.mxu0 0
  %1110 = vmatprep.subr.bf16.mxu0 0
  %1111 = vmatpush1.bf16.msra.mxu0 0
  %1112 = vmatprep.subr.bf16.mxu0 0
  %1113 = vmatpush1.bf16.msra.mxu0 0
  %1114 = vmatprep.subr.bf16.mxu0 0
  %1115 = vmatpush1.bf16.msra.mxu0 0
  %1116 = vmatprep.subr.bf16.mxu0 0
  %1117 = vmatpush1.bf16.msra.mxu0 0
  %1118 = vmatprep.subr.bf16.mxu0 0
  %1119 = vmatpush1.bf16.msra.mxu0 0
  %1120 = vmatprep.subr.bf16.mxu0 0
  %1121 = vmatpush1.bf16.msra.mxu0 0
  %1122 = vmatprep.subr.bf16.mxu0 0
  %1123 = vmatpush1.bf16.msra.mxu0 0
  %1124 = vmatprep.subr.bf16.mxu0 0
  %1125 = vmatpush1.bf16.msra.mxu0 0
  %1126 = vmatprep.subr.bf16.mxu0 0
  %1127 = vmatpush1.bf16.msra.mxu0 0
  %1128 = vmatprep.subr.bf16.mxu0 0
  %1129 = vmatpush1.bf16.msra.mxu0 0
  %1130 = vmatprep.subr.bf16.mxu0 0
  %1131 = vmatpush1.bf16.msra.mxu0 0
  %1132 = vmatprep.mubr.bf16.mxu0 0
  %1133 = vmatmul.mubr.bf16.gmra.mrb[0].mxu0 %v318
  %v1134 = vpop.f32.mrb[0].mxu0
  %v1135 = vadd.f32 0.0, %v1134
  %v1136 = vpop.f32.mrb[0].mxu0
  %v1137 = vpop.f32.mrb[0].mxu0
  %v1138 = vadd.f32 0.0, %v1137
  %v1139 = vpop.f32.mrb[0].mxu0
  %1140 = vmatprep.mubr.bf16.mxu0 0
  %1141 = vmatmul.mubr.bf16.gmra.mrb[0].mxu0 %v321
  %v1142 = vpop.f32.mrb[0].mxu0
  %v1143 = vadd.f32 0.0, %v1142
  %v1144 = vpop.f32.mrb[0].mxu0
  %v1145 = vpop.f32.mrb[0].mxu0
  %v1146 = vadd.f32 0.0, %v1145
  %v1147 = vpop.f32.mrb[0].mxu0
  %1148 = vmatprep.mubr.bf16.mxu0 0
  %1149 = vmatmul.mubr.bf16.gmra.mrb[0].mxu0 %v324
  %v1150 = vpop.f32.mrb[0].mxu0
  %v1151 = vadd.f32 0.0, %v1150
  %v1152 = vpop.f32.mrb[0].mxu0
  %v1153 = vpop.f32.mrb[0].mxu0
  %v1154 = vadd.f32 0.0, %v1153
  %v1155 = vpop.f32.mrb[0].mxu0
  %1156 = vmatprep.mubr.bf16.mxu0 0
  %1157 = vmatmul.mubr.bf16.gmra.mrb[0].mxu0 %v327
  %v1158 = vpop.f32.mrb[0].mxu0
  %v1159 = vadd.f32 0.0, %v1158
  %v1160 = vpop.f32.mrb[0].mxu0
  %v1161 = vpop.f32.mrb[0].mxu0
  %v1162 = vadd.f32 0.0, %v1161
  %v1163 = vpop.f32.mrb[0].mxu0
  %1164 = vmatprep.mubr.bf16.mxu0 0
  %1165 = vmatmul.mubr.bf16.gmra.mrb[0].mxu0 %v330
  %v1166 = vpop.f32.mrb[0].mxu0
  %v1167 = vadd.f32 0.0, %v1166
  %v1168 = vpop.f32.mrb[0].mxu0
  %v1169 = vpop.f32.mrb[0].mxu0
  %v1170 = vadd.f32 0.0, %v1169
  %v1171 = vpop.f32.mrb[0].mxu0
  %1172 = vmatprep.mubr.bf16.mxu0 0
  %1173 = vmatmul.mubr.bf16.gmra.mrb[0].mxu0 %v333
  %v1174 = vpop.f32.mrb[0].mxu0
  %v1175 = vadd.f32 0.0, %v1174
  %v1176 = vpop.f32.mrb[0].mxu0
  %v1177 = vpop.f32.mrb[0].mxu0
  %v1178 = vadd.f32 0.0, %v1177
  %v1179 = vpop.f32.mrb[0].mxu0
  %1180 = vmatprep.mubr.bf16.mxu0 0
  %1181 = vmatmul.mubr.bf16.gmra.mrb[0].mxu0 %v336
  %v1182 = vpop.f32.mrb[0].mxu0
  %v1183 = vadd.f32 0.0, %v1182
  %v1184 = vpop.f32.mrb[0].mxu0
  %v1185 = vpop.f32.mrb[0].mxu0
  %v1186 = vadd.f32 0.0, %v1185
  %v1187 = vpop.f32.mrb[0].mxu0
  %1188 = vmatprep.mubr.bf16.mxu0 0
  %1189 = vmatmul.mubr.bf16.gmra.mrb[0].mxu0 %v339
  %v1190 = vpop.f32.mrb[0].mxu0
  %v1191 = vadd.f32 0.0, %v1190
  %v1192 = vpop.f32.mrb[0].mxu0
  %v1193 = vpop.f32.mrb[0].mxu0
  %v1194 = vadd.f32 0.0, %v1193
  %v1195 = vpop.f32.mrb[0].mxu0
  %1196 = vmatprep.mubr.bf16.mxu0 0
  %1197 = vmatmul.mubr.bf16.gmra.mrb[0].mxu0 %v342
  %v1198 = vpop.f32.mrb[0].mxu0
  %v1199 = vadd.f32 0.0, %v1198
  %v1200 = vpop.f32.mrb[0].mxu0
  %v1201 = vpop.f32.mrb[0].mxu0
  %v1202 = vadd.f32 0.0, %v1201
  %v1203 = vpop.f32.mrb[0].mxu0
  %1204 = vmatprep.mubr.bf16.mxu0 0
  %1205 = vmatmul.mubr.bf16.gmra.mrb[0].mxu0 %v345
  %v1206 = vpop.f32.mrb[0].mxu0
  %v1207 = vadd.f32 0.0, %v1206
  %v1208 = vpop.f32.mrb[0].mxu0
  %v1209 = vpop.f32.mrb[0].mxu0
  %v1210 = vadd.f32 0.0, %v1209
  %v1211 = vpop.f32.mrb[0].mxu0
  %1212 = vmatprep.mubr.bf16.mxu0 0
  %1213 = vmatmul.mubr.bf16.gmra.mrb[0].mxu0 %v348
  %v1214 = vpop.f32.mrb[0].mxu0
  %v1215 = vadd.f32 0.0, %v1214
  %v1216 = vpop.f32.mrb[0].mxu0
  %v1217 = vpop.f32.mrb[0].mxu0
  %v1218 = vpop.f32.mrb[0].mxu0
  %1219 = vdwg.mxu0
  %v1220 = vadd.f32 %v998, %v1135
  %v1221 = vadd.f32 %v1001, %v1138
  %v1222 = vadd.f32 %v1006, %v1143
  %v1223 = vadd.f32 %v1009, %v1146
  %v1224 = vadd.f32 %v1014, %v1151
  %v1225 = vadd.f32 %v1017, %v1154
  %v1226 = vadd.f32 %v1022, %v1159
  %v1227 = vadd.f32 %v1025, %v1162
  %v1228 = vadd.f32 %v1030, %v1167
  %v1229 = vadd.f32 %v1033, %v1170
  %v1230 = vadd.f32 %v1038, %v1175
  %v1231 = vadd.f32 %v1041, %v1178
  %v1232 = vadd.f32 %v1046, %v1183
  %v1233 = vadd.f32 %v1049, %v1186
  %v1234 = vadd.f32 %v1054, %v1191
  %v1235 = vadd.f32 %v1057, %v1194
  %v1236 = vadd.f32 %v1062, %v1199
  %v1237 = vadd.f32 %v1065, %v1202
  %v1238 = vadd.f32 %v1070, %v1207
  %v1239 = vadd.f32 %v1073, %v1210
  %v1240 = vadd.f32 %v1078, %v1215
  %s1241 = scalar_lea.vmem %s1, 128
  %v1242 = vld [vmem:[%s1241] sm:$0xf]
  %v1243 = vld [vmem:[%s1241 + $0x4] sm:$0xf]
  %v1244 = vld [vmem:[%s1241 + $0x8] sm:$0xf]
  %v1245 = vld [vmem:[%s1241 + $0xc] sm:$0xf]
  %v1250 = vunpack.c.l.b16 %v1242
  %v1251 = vunpack.c.l.b16 %v1243
  %v1252 = vunpack.c.l.b16 %v1244
  %v1253 = vunpack.c.l.b16 %v1245
  %v1254 = vpack.c.b16 %v1251, %v1250
  %v1255 = vpack.c.b16 %v1253, %v1252
  %1258 = vmatprep.subr.bf16.mxu0 0
  %1259 = vmatpush1.bf16.msra.mxu0 %v1254
  %1260 = vmatprep.subr.bf16.mxu0 0
  %1261 = vmatpush1.bf16.msra.mxu0 %v1255
  %1262 = vmatprep.subr.bf16.mxu0 0
  %1263 = vmatpush1.bf16.msra.mxu0 0
  %1264 = vmatprep.subr.bf16.mxu0 0
  %1265 = vmatpush1.bf16.msra.mxu0 0
  %1266 = vmatprep.subr.bf16.mxu0 0
  %1267 = vmatpush1.bf16.msra.mxu0 0
  %1268 = vmatprep.subr.bf16.mxu0 0
  %1269 = vmatpush1.bf16.msra.mxu0 0
  %1270 = vmatprep.subr.bf16.mxu0 0
  %1271 = vmatpush1.bf16.msra.mxu0 0
  %1272 = vmatprep.subr.bf16.mxu0 0
  %1273 = vmatpush1.bf16.msra.mxu0 0
  %1274 = vmatprep.subr.bf16.mxu0 0
  %1275 = vmatpush1.bf16.msra.mxu0 0
  %1276 = vmatprep.subr.bf16.mxu0 0
  %1277 = vmatpush1.bf16.msra.mxu0 0
  %1278 = vmatprep.subr.bf16.mxu0 0
  %1279 = vmatpush1.bf16.msra.mxu0 0
  %1280 = vmatprep.subr.bf16.mxu0 0
  %1281 = vmatpush1.bf16.msra.mxu0 0
  %1282 = vmatprep.subr.bf16.mxu0 0
  %1283 = vmatpush1.bf16.msra.mxu0 0
  %1284 = vmatprep.subr.bf16.mxu0 0
  %1285 = vmatpush1.bf16.msra.mxu0 0
  %1286 = vmatprep.subr.bf16.mxu0 0
  %1287 = vmatpush1.bf16.msra.mxu0 0
  %1288 = vmatprep.subr.bf16.mxu0 0
  %1289 = vmatpush1.bf16.msra.mxu0 0
  %1290 = vmatprep.mubr.bf16.mxu0 0
  %1291 = vmatmul.mubr.bf16.gmra.mrb[0].mxu0 %v153
  %v1292 = vpop.f32.mrb[0].mxu0
  %v1293 = vadd.f32 0.0, %v1292
  %v1294 = vpop.f32.mrb[0].mxu0
  %v1295 = vpop.f32.mrb[0].mxu0
  %v1296 = vadd.f32 0.0, %v1295
  %v1297 = vpop.f32.mrb[0].mxu0
  %1298 = vmatprep.mubr.bf16.mxu0 0
  %1299 = vmatmul.mubr.bf16.gmra.mrb[0].mxu0 %v156
  %v1300 = vpop.f32.mrb[0].mxu0
  %v1301 = vadd.f32 0.0, %v1300
  %v1302 = vpop.f32.mrb[0].mxu0
  %v1303 = vpop.f32.mrb[0].mxu0
  %v1304 = vadd.f32 0.0, %v1303
  %v1305 = vpop.f32.mrb[0].mxu0
  %1306 = vmatprep.mubr.bf16.mxu0 0
  %1307 = vmatmul.mubr.bf16.gmra.mrb[0].mxu0 %v159
  %v1308 = vpop.f32.mrb[0].mxu0
  %v1309 = vadd.f32 0.0, %v1308
  %v1310 = vpop.f32.mrb[0].mxu0
  %v1311 = vpop.f32.mrb[0].mxu0
  %v1312 = vadd.f32 0.0, %v1311
  %v1313 = vpop.f32.mrb[0].mxu0
  %1314 = vmatprep.mubr.bf16.mxu0 0
  %1315 = vmatmul.mubr.bf16.gmra.mrb[0].mxu0 %v162
  %v1316 = vpop.f32.mrb[0].mxu0
  %v1317 = vadd.f32 0.0, %v1316
  %v1318 = vpop.f32.mrb[0].mxu0
  %v1319 = vpop.f32.mrb[0].mxu0
  %v1320 = vadd.f32 0.0, %v1319
  %v1321 = vpop.f32.mrb[0].mxu0
  %1322 = vmatprep.mubr.bf16.mxu0 0
  %1323 = vmatmul.mubr.bf16.gmra.mrb[0].mxu0 %v165
  %v1324 = vpop.f32.mrb[0].mxu0
  %v1325 = vadd.f32 0.0, %v1324
  %v1326 = vpop.f32.mrb[0].mxu0
  %v1327 = vpop.f32.mrb[0].mxu0
  %v1328 = vadd.f32 0.0, %v1327
  %v1329 = vpop.f32.mrb[0].mxu0
  %1330 = vmatprep.mubr.bf16.mxu0 0
  %1331 = vmatmul.mubr.bf16.gmra.mrb[0].mxu0 %v168
  %v1332 = vpop.f32.mrb[0].mxu0
  %v1333 = vadd.f32 0.0, %v1332
  %v1334 = vpop.f32.mrb[0].mxu0
  %v1335 = vpop.f32.mrb[0].mxu0
  %v1336 = vadd.f32 0.0, %v1335
  %v1337 = vpop.f32.mrb[0].mxu0
  %1338 = vmatprep.mubr.bf16.mxu0 0
  %1339 = vmatmul.mubr.bf16.gmra.mrb[0].mxu0 %v171
  %v1340 = vpop.f32.mrb[0].mxu0
  %v1341 = vadd.f32 0.0, %v1340
  %v1342 = vpop.f32.mrb[0].mxu0
  %v1343 = vpop.f32.mrb[0].mxu0
  %v1344 = vadd.f32 0.0, %v1343
  %v1345 = vpop.f32.mrb[0].mxu0
  %1346 = vmatprep.mubr.bf16.mxu0 0
  %1347 = vmatmul.mubr.bf16.gmra.mrb[0].mxu0 %v174
  %v1348 = vpop.f32.mrb[0].mxu0
  %v1349 = vadd.f32 0.0, %v1348
  %v1350 = vpop.f32.mrb[0].mxu0
  %v1351 = vpop.f32.mrb[0].mxu0
  %v1352 = vadd.f32 0.0, %v1351
  %v1353 = vpop.f32.mrb[0].mxu0
  %1354 = vmatprep.mubr.bf16.mxu0 0
  %1355 = vmatmul.mubr.bf16.gmra.mrb[0].mxu0 %v177
  %v1356 = vpop.f32.mrb[0].mxu0
  %v1357 = vadd.f32 0.0, %v1356
  %v1358 = vpop.f32.mrb[0].mxu0
  %v1359 = vpop.f32.mrb[0].mxu0
  %v1360 = vadd.f32 0.0, %v1359
  %v1361 = vpop.f32.mrb[0].mxu0
  %1362 = vmatprep.mubr.bf16.mxu0 0
  %1363 = vmatmul.mubr.bf16.gmra.mrb[0].mxu0 %v180
  %v1364 = vpop.f32.mrb[0].mxu0
  %v1365 = vadd.f32 0.0, %v1364
  %v1366 = vpop.f32.mrb[0].mxu0
  %v1367 = vpop.f32.mrb[0].mxu0
  %v1368 = vadd.f32 0.0, %v1367
  %v1369 = vpop.f32.mrb[0].mxu0
  %1370 = vmatprep.mubr.bf16.mxu0 0
  %1371 = vmatmul.mubr.bf16.gmra.mrb[0].mxu0 %v183
  %v1372 = vpop.f32.mrb[0].mxu0
  %v1373 = vadd.f32 0.0, %v1372
  %v1374 = vpop.f32.mrb[0].mxu0
  %v1375 = vpop.f32.mrb[0].mxu0
  %v1376 = vpop.f32.mrb[0].mxu0
  %1377 = vdwg.mxu0
  %v1378 = vadd.f32 %v1220, %v1293
  %v1379 = vadd.f32 %v1221, %v1296
  %v1380 = vadd.f32 %v1222, %v1301
  %v1381 = vadd.f32 %v1223, %v1304
  %v1382 = vadd.f32 %v1224, %v1309
  %v1383 = vadd.f32 %v1225, %v1312
  %v1384 = vadd.f32 %v1226, %v1317
  %v1385 = vadd.f32 %v1227, %v1320
  %v1386 = vadd.f32 %v1228, %v1325
  %v1387 = vadd.f32 %v1229, %v1328
  %v1388 = vadd.f32 %v1230, %v1333
  %v1389 = vadd.f32 %v1231, %v1336
  %v1390 = vadd.f32 %v1232, %v1341
  %v1391 = vadd.f32 %v1233, %v1344
  %v1392 = vadd.f32 %v1234, %v1349
  %v1393 = vadd.f32 %v1235, %v1352
  %v1394 = vadd.f32 %v1236, %v1357
  %v1395 = vadd.f32 %v1237, %v1360
  %v1396 = vadd.f32 %v1238, %v1365
  %v1397 = vadd.f32 %v1239, %v1368
  %v1398 = vadd.f32 %v1240, %v1373
  %v1399 = vld [vmem:[%s2] sm:$0x1]
  %v1401 = vlaneseq
  %v1402 = vshrl.u32 %v1401, 7
  %v1403 = vsub.s32 0, %v1402
  %v1404 = vrot.slane %v1399, %v1403
  %v1410 = vunpack.c.l.b16 %v125
  %v1411 = vunpack.c.l.b16 %v126
  %v1412 = vunpack.c.l.b16 %v127
  %v1413 = vunpack.c.l.b16 %v128
  %v1414 = vpack.c.b16 %v1411, %v1410
  %v1415 = vpack.c.b16 %v1413, %v1412
  %1418 = vmatprep.subr.bf16.mxu0 0
  %1419 = vmatpush1.bf16.msra.mxu0 %v1414
  %1420 = vmatprep.subr.bf16.mxu0 0
  %1421 = vmatpush1.bf16.msra.mxu0 %v1415
  %1422 = vmatprep.subr.bf16.mxu0 0
  %1423 = vmatpush1.bf16.msra.mxu0 0
  %1424 = vmatprep.subr.bf16.mxu0 0
  %1425 = vmatpush1.bf16.msra.mxu0 0
  %1426 = vmatprep.subr.bf16.mxu0 0
  %1427 = vmatpush1.bf16.msra.mxu0 0
  %1428 = vmatprep.subr.bf16.mxu0 0
  %1429 = vmatpush1.bf16.msra.mxu0 0
  %1430 = vmatprep.subr.bf16.mxu0 0
  %1431 = vmatpush1.bf16.msra.mxu0 0
  %1432 = vmatprep.subr.bf16.mxu0 0
  %1433 = vmatpush1.bf16.msra.mxu0 0
  %1434 = vmatprep.subr.bf16.mxu0 0
  %1435 = vmatpush1.bf16.msra.mxu0 0
  %1436 = vmatprep.subr.bf16.mxu0 0
  %1437 = vmatpush1.bf16.msra.mxu0 0
  %1438 = vmatprep.subr.bf16.mxu0 0
  %1439 = vmatpush1.bf16.msra.mxu0 0
  %1440 = vmatprep.subr.bf16.mxu0 0
  %1441 = vmatpush1.bf16.msra.mxu0 0
  %1442 = vmatprep.subr.bf16.mxu0 0
  %1443 = vmatpush1.bf16.msra.mxu0 0
  %1444 = vmatprep.subr.bf16.mxu0 0
  %1445 = vmatpush1.bf16.msra.mxu0 0
  %1446 = vmatprep.subr.bf16.mxu0 0
  %1447 = vmatpush1.bf16.msra.mxu0 0
  %1448 = vmatprep.subr.bf16.mxu0 0
  %1449 = vmatpush1.bf16.msra.mxu0 0
  %1450 = vmatprep.mubr.bf16.mxu0 0
  %1451 = vmatmul.mubr.bf16.gmra.mrb[0].mxu0 %v153
  %v1452 = vpop.f32.mrb[0].mxu0
  %v1453 = vadd.f32 %v1404, %v1452
  %v1454 = vpop.f32.mrb[0].mxu0
  %v1455 = vpop.f32.mrb[0].mxu0
  %v1456 = vadd.f32 %v1404, %v1455
  %v1457 = vpop.f32.mrb[0].mxu0
  %1458 = vmatprep.mubr.bf16.mxu0 0
  %1459 = vmatmul.mubr.bf16.gmra.mrb[0].mxu0 %v156
  %v1460 = vpop.f32.mrb[0].mxu0
  %v1461 = vadd.f32 %v1404, %v1460
  %v1462 = vpop.f32.mrb[0].mxu0
  %v1463 = vpop.f32.mrb[0].mxu0
  %v1464 = vadd.f32 %v1404, %v1463
  %v1465 = vpop.f32.mrb[0].mxu0
  %1466 = vmatprep.mubr.bf16.mxu0 0
  %1467 = vmatmul.mubr.bf16.gmra.mrb[0].mxu0 %v159
  %v1468 = vpop.f32.mrb[0].mxu0
  %v1469 = vadd.f32 %v1404, %v1468
  %v1470 = vpop.f32.mrb[0].mxu0
  %v1471 = vpop.f32.mrb[0].mxu0
  %v1472 = vadd.f32 %v1404, %v1471
  %v1473 = vpop.f32.mrb[0].mxu0
  %1474 = vmatprep.mubr.bf16.mxu0 0
  %1475 = vmatmul.mubr.bf16.gmra.mrb[0].mxu0 %v162
  %v1476 = vpop.f32.mrb[0].mxu0
  %v1477 = vadd.f32 %v1404, %v1476
  %v1478 = vpop.f32.mrb[0].mxu0
  %v1479 = vpop.f32.mrb[0].mxu0
  %v1480 = vadd.f32 %v1404, %v1479
  %v1481 = vpop.f32.mrb[0].mxu0
  %1482 = vmatprep.mubr.bf16.mxu0 0
  %1483 = vmatmul.mubr.bf16.gmra.mrb[0].mxu0 %v165
  %v1484 = vpop.f32.mrb[0].mxu0
  %v1485 = vadd.f32 %v1404, %v1484
  %v1486 = vpop.f32.mrb[0].mxu0
  %v1487 = vpop.f32.mrb[0].mxu0
  %v1488 = vadd.f32 %v1404, %v1487
  %v1489 = vpop.f32.mrb[0].mxu0
  %1490 = vmatprep.mubr.bf16.mxu0 0
  %1491 = vmatmul.mubr.bf16.gmra.mrb[0].mxu0 %v168
  %v1492 = vpop.f32.mrb[0].mxu0
  %v1493 = vadd.f32 %v1404, %v1492
  %v1494 = vpop.f32.mrb[0].mxu0
  %v1495 = vpop.f32.mrb[0].mxu0
  %v1496 = vadd.f32 %v1404, %v1495
  %v1497 = vpop.f32.mrb[0].mxu0
  %1498 = vmatprep.mubr.bf16.mxu0 0
  %1499 = vmatmul.mubr.bf16.gmra.mrb[0].mxu0 %v171
  %v1500 = vpop.f32.mrb[0].mxu0
  %v1501 = vadd.f32 %v1404, %v1500
  %v1502 = vpop.f32.mrb[0].mxu0
  %v1503 = vpop.f32.mrb[0].mxu0
  %v1504 = vadd.f32 %v1404, %v1503
  %v1505 = vpop.f32.mrb[0].mxu0
  %1506 = vmatprep.mubr.bf16.mxu0 0
  %1507 = vmatmul.mubr.bf16.gmra.mrb[0].mxu0 %v174
  %v1508 = vpop.f32.mrb[0].mxu0
  %v1509 = vadd.f32 %v1404, %v1508
  %v1510 = vpop.f32.mrb[0].mxu0
  %v1511 = vpop.f32.mrb[0].mxu0
  %v1512 = vadd.f32 %v1404, %v1511
  %v1513 = vpop.f32.mrb[0].mxu0
  %1514 = vmatprep.mubr.bf16.mxu0 0
  %1515 = vmatmul.mubr.bf16.gmra.mrb[0].mxu0 %v177
  %v1516 = vpop.f32.mrb[0].mxu0
  %v1517 = vadd.f32 %v1404, %v1516
  %v1518 = vpop.f32.mrb[0].mxu0
  %v1519 = vpop.f32.mrb[0].mxu0
  %v1520 = vadd.f32 %v1404, %v1519
  %v1521 = vpop.f32.mrb[0].mxu0
  %1522 = vmatprep.mubr.bf16.mxu0 0
  %1523 = vmatmul.mubr.bf16.gmra.mrb[0].mxu0 %v180
  %v1524 = vpop.f32.mrb[0].mxu0
  %v1525 = vadd.f32 %v1404, %v1524
  %v1526 = vpop.f32.mrb[0].mxu0
  %v1527 = vpop.f32.mrb[0].mxu0
  %v1528 = vadd.f32 %v1404, %v1527
  %v1529 = vpop.f32.mrb[0].mxu0
  %1530 = vmatprep.mubr.bf16.mxu0 0
  %1531 = vmatmul.mubr.bf16.gmra.mrb[0].mxu0 %v183
  %v1532 = vpop.f32.mrb[0].mxu0
  %v1533 = vadd.f32 %v1404, %v1532
  %v1534 = vpop.f32.mrb[0].mxu0
  %v1535 = vpop.f32.mrb[0].mxu0
  %v1536 = vpop.f32.mrb[0].mxu0
  %1537 = vdwg.mxu0
  %v1538 = vsub.f32 0.0, %v1453
  %v1539 = vsub.f32 0.0, %v1456
  %v1540 = vsub.f32 0.0, %v1461
  %v1541 = vsub.f32 0.0, %v1464
  %v1542 = vsub.f32 0.0, %v1469
  %v1543 = vsub.f32 0.0, %v1472
  %v1544 = vsub.f32 0.0, %v1477
  %v1545 = vsub.f32 0.0, %v1480
  %v1546 = vsub.f32 0.0, %v1485
  %v1547 = vsub.f32 0.0, %v1488
  %v1548 = vsub.f32 0.0, %v1493
  %v1549 = vsub.f32 0.0, %v1496
  %v1550 = vsub.f32 0.0, %v1501
  %v1551 = vsub.f32 0.0, %v1504
  %v1552 = vsub.f32 0.0, %v1509
  %v1553 = vsub.f32 0.0, %v1512
  %v1554 = vsub.f32 0.0, %v1517
  %v1555 = vsub.f32 0.0, %v1520
  %v1556 = vsub.f32 0.0, %v1525
  %v1557 = vsub.f32 0.0, %v1528
  %v1558 = vsub.f32 0.0, %v1533
  %v1559 = vmul.f32 %v1538, 1.442695
  %v1560 = vpow.pop %v1559
  %v1561 = vmul.f32 %v1539, 1.442695
  %v1562 = vpow.pop %v1561
  %v1563 = vmul.f32 %v1540, 1.442695
  %v1564 = vpow.pop %v1563
  %v1565 = vmul.f32 %v1541, 1.442695
  %v1566 = vpow.pop %v1565
  %v1567 = vmul.f32 %v1542, 1.442695
  %v1568 = vpow.pop %v1567
  %v1569 = vmul.f32 %v1543, 1.442695
  %v1570 = vpow.pop %v1569
  %v1571 = vmul.f32 %v1544, 1.442695
  %v1572 = vpow.pop %v1571
  %v1573 = vmul.f32 %v1545, 1.442695
  %v1574 = vpow.pop %v1573
  %v1575 = vmul.f32 %v1546, 1.442695
  %v1576 = vpow.pop %v1575
  %v1577 = vmul.f32 %v1547, 1.442695
  %v1578 = vpow.pop %v1577
  %v1579 = vmul.f32 %v1548, 1.442695
  %v1580 = vpow.pop %v1579
  %v1581 = vmul.f32 %v1549, 1.442695
  %v1582 = vpow.pop %v1581
  %v1583 = vmul.f32 %v1550, 1.442695
  %v1584 = vpow.pop %v1583
  %v1585 = vmul.f32 %v1551, 1.442695
  %v1586 = vpow.pop %v1585
  %v1587 = vmul.f32 %v1552, 1.442695
  %v1588 = vpow.pop %v1587
  %v1589 = vmul.f32 %v1553, 1.442695
  %v1590 = vpow.pop %v1589
  %v1591 = vmul.f32 %v1554, 1.442695
  %v1592 = vpow.pop %v1591
  %v1593 = vmul.f32 %v1555, 1.442695
  %v1594 = vpow.pop %v1593
  %v1595 = vmul.f32 %v1556, 1.442695
  %v1596 = vpow.pop %v1595
  %v1597 = vmul.f32 %v1557, 1.442695
  %v1598 = vpow.pop %v1597
  %v1599 = vmul.f32 %v1558, 1.442695
  %v1600 = vpow.pop %v1599
  %v1601 = vadd.f32 %v1560, 1.0
  %v1602 = vadd.f32 %v1562, 1.0
  %v1603 = vadd.f32 %v1564, 1.0
  %v1604 = vadd.f32 %v1566, 1.0
  %v1605 = vadd.f32 %v1568, 1.0
  %v1606 = vadd.f32 %v1570, 1.0
  %v1607 = vadd.f32 %v1572, 1.0
  %v1608 = vadd.f32 %v1574, 1.0
  %v1609 = vadd.f32 %v1576, 1.0
  %v1610 = vadd.f32 %v1578, 1.0
  %v1611 = vadd.f32 %v1580, 1.0
  %v1612 = vadd.f32 %v1582, 1.0
  %v1613 = vadd.f32 %v1584, 1.0
  %v1614 = vadd.f32 %v1586, 1.0
  %v1615 = vadd.f32 %v1588, 1.0
  %v1616 = vadd.f32 %v1590, 1.0
  %v1617 = vadd.f32 %v1592, 1.0
  %v1618 = vadd.f32 %v1594, 1.0
  %v1619 = vadd.f32 %v1596, 1.0
  %v1620 = vadd.f32 %v1598, 1.0
  %v1621 = vadd.f32 %v1600, 1.0
  %v1622 = vrcp.pop %v1601
  %v1623 = vrcp.pop %v1602
  %v1624 = vrcp.pop %v1603
  %v1625 = vrcp.pop %v1604
  %v1626 = vrcp.pop %v1605
  %v1627 = vrcp.pop %v1606
  %v1628 = vrcp.pop %v1607
  %v1629 = vrcp.pop %v1608
  %v1630 = vrcp.pop %v1609
  %v1631 = vrcp.pop %v1610
  %v1632 = vrcp.pop %v1611
  %v1633 = vrcp.pop %v1612
  %v1634 = vrcp.pop %v1613
  %v1635 = vrcp.pop %v1614
  %v1636 = vrcp.pop %v1615
  %v1637 = vrcp.pop %v1616
  %v1638 = vrcp.pop %v1617
  %v1639 = vrcp.pop %v1618
  %v1640 = vrcp.pop %v1619
  %v1641 = vrcp.pop %v1620
  %v1642 = vrcp.pop %v1621
  %1643 = vst [vmem:[%s3] sm:$0xff] %v1622
  %1644 = vst [vmem:[%s3 + $0x8] sm:$0xff] %v1623
  %1645 = vst [vmem:[%s3 + $0x10] sm:$0xff] %v1624
  %1646 = vst [vmem:[%s3 + $0x18] sm:$0xff] %v1625
  %1647 = vst [vmem:[%s3 + $0x20] sm:$0xff] %v1626
  %1648 = vst [vmem:[%s3 + $0x28] sm:$0xff] %v1627
  %1649 = vst [vmem:[%s3 + $0x30] sm:$0xff] %v1628
  %1650 = vst [vmem:[%s3 + $0x38] sm:$0xff] %v1629
  %1651 = vst [vmem:[%s3 + $0x40] sm:$0xff] %v1630
  %1652 = vst [vmem:[%s3 + $0x48] sm:$0xff] %v1631
  %1653 = vst [vmem:[%s3 + $0x50] sm:$0xff] %v1632
  %1654 = vst [vmem:[%s3 + $0x58] sm:$0xff] %v1633
  %1655 = vst [vmem:[%s3 + $0x60] sm:$0xff] %v1634
  %1656 = vst [vmem:[%s3 + $0x68] sm:$0xff] %v1635
  %1657 = vst [vmem:[%s3 + $0x70] sm:$0xff] %v1636
  %1658 = vst [vmem:[%s3 + $0x78] sm:$0xff] %v1637
  %1659 = vst [vmem:[%s3 + $0x80] sm:$0xff] %v1638
  %1660 = vst [vmem:[%s3 + $0x88] sm:$0xff] %v1639
  %1661 = vst [vmem:[%s3 + $0x90] sm:$0xff] %v1640
  %1662 = vst [vmem:[%s3 + $0x98] sm:$0xff] %v1641
  %1663 = vst [vmem:[%s3 + $0xa0] sm:$0x3] %v1642
  %v1664 = vld [vmem:[%s2] sm:$0x1]
  %v1666 = vlaneseq
  %v1667 = vshrl.u32 %v1666, 7
  %v1668 = vsub.s32 0, %v1667
  %v1669 = vrot.slane %v1664, %v1668
  %v1671 = vadd.f32 %v385, %v1669
  %v1672 = vadd.f32 %v388, %v1669
  %v1673 = vadd.f32 %v393, %v1669
  %v1674 = vadd.f32 %v396, %v1669
  %v1675 = vadd.f32 %v401, %v1669
  %v1676 = vadd.f32 %v404, %v1669
  %v1677 = vadd.f32 %v409, %v1669
  %v1678 = vadd.f32 %v412, %v1669
  %v1679 = vadd.f32 %v417, %v1669
  %v1680 = vadd.f32 %v420, %v1669
  %v1681 = vadd.f32 %v425, %v1669
  %v1682 = vadd.f32 %v428, %v1669
  %v1683 = vadd.f32 %v433, %v1669
  %v1684 = vadd.f32 %v436, %v1669
  %v1685 = vadd.f32 %v441, %v1669
  %v1686 = vadd.f32 %v444, %v1669
  %v1687 = vadd.f32 %v449, %v1669
  %v1688 = vadd.f32 %v452, %v1669
  %v1689 = vadd.f32 %v457, %v1669
  %v1690 = vadd.f32 %v460, %v1669
  %v1691 = vadd.f32 %v465, %v1669
  %v1692 = vsub.f32 0.0, %v1671
  %v1693 = vsub.f32 0.0, %v1672
  %v1694 = vsub.f32 0.0, %v1673
  %v1695 = vsub.f32 0.0, %v1674
  %v1696 = vsub.f32 0.0, %v1675
  %v1697 = vsub.f32 0.0, %v1676
  %v1698 = vsub.f32 0.0, %v1677
  %v1699 = vsub.f32 0.0, %v1678
  %v1700 = vsub.f32 0.0, %v1679
  %v1701 = vsub.f32 0.0, %v1680
  %v1702 = vsub.f32 0.0, %v1681
  %v1703 = vsub.f32 0.0, %v1682
  %v1704 = vsub.f32 0.0, %v1683
  %v1705 = vsub.f32 0.0, %v1684
  %v1706 = vsub.f32 0.0, %v1685
  %v1707 = vsub.f32 0.0, %v1686
  %v1708 = vsub.f32 0.0, %v1687
  %v1709 = vsub.f32 0.0, %v1688
  %v1710 = vsub.f32 0.0, %v1689
  %v1711 = vsub.f32 0.0, %v1690
  %v1712 = vsub.f32 0.0, %v1691
  %v1713 = vmul.f32 %v1692, 1.442695
  %v1714 = vpow.pop %v1713
  %v1715 = vmul.f32 %v1693, 1.442695
  %v1716 = vpow.pop %v1715
  %v1717 = vmul.f32 %v1694, 1.442695
  %v1718 = vpow.pop %v1717
  %v1719 = vmul.f32 %v1695, 1.442695
  %v1720 = vpow.pop %v1719
  %v1721 = vmul.f32 %v1696, 1.442695
  %v1722 = vpow.pop %v1721
  %v1723 = vmul.f32 %v1697, 1.442695
  %v1724 = vpow.pop %v1723
  %v1725 = vmul.f32 %v1698, 1.442695
  %v1726 = vpow.pop %v1725
  %v1727 = vmul.f32 %v1699, 1.442695
  %v1728 = vpow.pop %v1727
  %v1729 = vmul.f32 %v1700, 1.442695
  %v1730 = vpow.pop %v1729
  %v1731 = vmul.f32 %v1701, 1.442695
  %v1732 = vpow.pop %v1731
  %v1733 = vmul.f32 %v1702, 1.442695
  %v1734 = vpow.pop %v1733
  %v1735 = vmul.f32 %v1703, 1.442695
  %v1736 = vpow.pop %v1735
  %v1737 = vmul.f32 %v1704, 1.442695
  %v1738 = vpow.pop %v1737
  %v1739 = vmul.f32 %v1705, 1.442695
  %v1740 = vpow.pop %v1739
  %v1741 = vmul.f32 %v1706, 1.442695
  %v1742 = vpow.pop %v1741
  %v1743 = vmul.f32 %v1707, 1.442695
  %v1744 = vpow.pop %v1743
  %v1745 = vmul.f32 %v1708, 1.442695
  %v1746 = vpow.pop %v1745
  %v1747 = vmul.f32 %v1709, 1.442695
  %v1748 = vpow.pop %v1747
  %v1749 = vmul.f32 %v1710, 1.442695
  %v1750 = vpow.pop %v1749
  %v1751 = vmul.f32 %v1711, 1.442695
  %v1752 = vpow.pop %v1751
  %v1753 = vmul.f32 %v1712, 1.442695
  %v1754 = vpow.pop %v1753
  %v1755 = vadd.f32 %v1714, 1.0
  %v1756 = vadd.f32 %v1716, 1.0
  %v1757 = vadd.f32 %v1718, 1.0
  %v1758 = vadd.f32 %v1720, 1.0
  %v1759 = vadd.f32 %v1722, 1.0
  %v1760 = vadd.f32 %v1724, 1.0
  %v1761 = vadd.f32 %v1726, 1.0
  %v1762 = vadd.f32 %v1728, 1.0
  %v1763 = vadd.f32 %v1730, 1.0
  %v1764 = vadd.f32 %v1732, 1.0
  %v1765 = vadd.f32 %v1734, 1.0
  %v1766 = vadd.f32 %v1736, 1.0
  %v1767 = vadd.f32 %v1738, 1.0
  %v1768 = vadd.f32 %v1740, 1.0
  %v1769 = vadd.f32 %v1742, 1.0
  %v1770 = vadd.f32 %v1744, 1.0
  %v1771 = vadd.f32 %v1746, 1.0
  %v1772 = vadd.f32 %v1748, 1.0
  %v1773 = vadd.f32 %v1750, 1.0
  %v1774 = vadd.f32 %v1752, 1.0
  %v1775 = vadd.f32 %v1754, 1.0
  %v1776 = vrcp.pop %v1755
  %v1777 = vrcp.pop %v1756
  %v1778 = vrcp.pop %v1757
  %v1779 = vrcp.pop %v1758
  %v1780 = vrcp.pop %v1759
  %v1781 = vrcp.pop %v1760
  %v1782 = vrcp.pop %v1761
  %v1783 = vrcp.pop %v1762
  %v1784 = vrcp.pop %v1763
  %v1785 = vrcp.pop %v1764
  %v1786 = vrcp.pop %v1765
  %v1787 = vrcp.pop %v1766
  %v1788 = vrcp.pop %v1767
  %v1789 = vrcp.pop %v1768
  %v1790 = vrcp.pop %v1769
  %v1791 = vrcp.pop %v1770
  %v1792 = vrcp.pop %v1771
  %v1793 = vrcp.pop %v1772
  %v1794 = vrcp.pop %v1773
  %v1795 = vrcp.pop %v1774
  %v1796 = vrcp.pop %v1775
  %s1797 = scalar_lea.vmem %s3, 168
  %1798 = vst [vmem:[%s1797] sm:$0xff] %v1776
  %1799 = vst [vmem:[%s1797 + $0x8] sm:$0xff] %v1777
  %1800 = vst [vmem:[%s1797 + $0x10] sm:$0xff] %v1778
  %1801 = vst [vmem:[%s1797 + $0x18] sm:$0xff] %v1779
  %1802 = vst [vmem:[%s1797 + $0x20] sm:$0xff] %v1780
  %1803 = vst [vmem:[%s1797 + $0x28] sm:$0xff] %v1781
  %1804 = vst [vmem:[%s1797 + $0x30] sm:$0xff] %v1782
  %1805 = vst [vmem:[%s1797 + $0x38] sm:$0xff] %v1783
  %1806 = vst [vmem:[%s1797 + $0x40] sm:$0xff] %v1784
  %1807 = vst [vmem:[%s1797 + $0x48] sm:$0xff] %v1785
  %1808 = vst [vmem:[%s1797 + $0x50] sm:$0xff] %v1786
  %1809 = vst [vmem:[%s1797 + $0x58] sm:$0xff] %v1787
  %1810 = vst [vmem:[%s1797 + $0x60] sm:$0xff] %v1788
  %1811 = vst [vmem:[%s1797 + $0x68] sm:$0xff] %v1789
  %1812 = vst [vmem:[%s1797 + $0x70] sm:$0xff] %v1790
  %1813 = vst [vmem:[%s1797 + $0x78] sm:$0xff] %v1791
  %1814 = vst [vmem:[%s1797 + $0x80] sm:$0xff] %v1792
  %1815 = vst [vmem:[%s1797 + $0x88] sm:$0xff] %v1793
  %1816 = vst [vmem:[%s1797 + $0x90] sm:$0xff] %v1794
  %1817 = vst [vmem:[%s1797 + $0x98] sm:$0xff] %v1795
  %1818 = vst [vmem:[%s1797 + $0xa0] sm:$0x3] %v1796
  %v1819 = vld [vmem:[%s2] sm:$0x1]
  %v1821 = vlaneseq
  %v1822 = vshrl.u32 %v1821, 7
  %v1823 = vsub.s32 0, %v1822
  %v1824 = vrot.slane %v1819, %v1823
  %v1826 = vadd.f32 %v692, %v1824
  %v1827 = vadd.f32 %v695, %v1824
  %v1828 = vadd.f32 %v700, %v1824
  %v1829 = vadd.f32 %v703, %v1824
  %v1830 = vadd.f32 %v708, %v1824
  %v1831 = vadd.f32 %v711, %v1824
  %v1832 = vadd.f32 %v716, %v1824
  %v1833 = vadd.f32 %v719, %v1824
  %v1834 = vadd.f32 %v724, %v1824
  %v1835 = vadd.f32 %v727, %v1824
  %v1836 = vadd.f32 %v732, %v1824
  %v1837 = vadd.f32 %v735, %v1824
  %v1838 = vadd.f32 %v740, %v1824
  %v1839 = vadd.f32 %v743, %v1824
  %v1840 = vadd.f32 %v748, %v1824
  %v1841 = vadd.f32 %v751, %v1824
  %v1842 = vadd.f32 %v756, %v1824
  %v1843 = vadd.f32 %v759, %v1824
  %v1844 = vadd.f32 %v764, %v1824
  %v1845 = vadd.f32 %v767, %v1824
  %v1846 = vadd.f32 %v772, %v1824
  %v1847 = vsub.f32 0.0, %v1826
  %v1848 = vsub.f32 0.0, %v1827
  %v1849 = vsub.f32 0.0, %v1828
  %v1850 = vsub.f32 0.0, %v1829
  %v1851 = vsub.f32 0.0, %v1830
  %v1852 = vsub.f32 0.0, %v1831
  %v1853 = vsub.f32 0.0, %v1832
  %v1854 = vsub.f32 0.0, %v1833
  %v1855 = vsub.f32 0.0, %v1834
  %v1856 = vsub.f32 0.0, %v1835
  %v1857 = vsub.f32 0.0, %v1836
  %v1858 = vsub.f32 0.0, %v1837
  %v1859 = vsub.f32 0.0, %v1838
  %v1860 = vsub.f32 0.0, %v1839
  %v1861 = vsub.f32 0.0, %v1840
  %v1862 = vsub.f32 0.0, %v1841
  %v1863 = vsub.f32 0.0, %v1842
  %v1864 = vsub.f32 0.0, %v1843
  %v1865 = vsub.f32 0.0, %v1844
  %v1866 = vsub.f32 0.0, %v1845
  %v1867 = vsub.f32 0.0, %v1846
  %v1868 = vmul.f32 %v1847, 1.442695
  %v1869 = vpow.pop %v1868
  %v1870 = vmul.f32 %v1848, 1.442695
  %v1871 = vpow.pop %v1870
  %v1872 = vmul.f32 %v1849, 1.442695
  %v1873 = vpow.pop %v1872
  %v1874 = vmul.f32 %v1850, 1.442695
  %v1875 = vpow.pop %v1874
  %v1876 = vmul.f32 %v1851, 1.442695
  %v1877 = vpow.pop %v1876
  %v1878 = vmul.f32 %v1852, 1.442695
  %v1879 = vpow.pop %v1878
  %v1880 = vmul.f32 %v1853, 1.442695
  %v1881 = vpow.pop %v1880
  %v1882 = vmul.f32 %v1854, 1.442695
  %v1883 = vpow.pop %v1882
  %v1884 = vmul.f32 %v1855, 1.442695
  %v1885 = vpow.pop %v1884
  %v1886 = vmul.f32 %v1856, 1.442695
  %v1887 = vpow.pop %v1886
  %v1888 = vmul.f32 %v1857, 1.442695
  %v1889 = vpow.pop %v1888
  %v1890 = vmul.f32 %v1858, 1.442695
  %v1891 = vpow.pop %v1890
  %v1892 = vmul.f32 %v1859, 1.442695
  %v1893 = vpow.pop %v1892
  %v1894 = vmul.f32 %v1860, 1.442695
  %v1895 = vpow.pop %v1894
  %v1896 = vmul.f32 %v1861, 1.442695
  %v1897 = vpow.pop %v1896
  %v1898 = vmul.f32 %v1862, 1.442695
  %v1899 = vpow.pop %v1898
  %v1900 = vmul.f32 %v1863, 1.442695
  %v1901 = vpow.pop %v1900
  %v1902 = vmul.f32 %v1864, 1.442695
  %v1903 = vpow.pop %v1902
  %v1904 = vmul.f32 %v1865, 1.442695
  %v1905 = vpow.pop %v1904
  %v1906 = vmul.f32 %v1866, 1.442695
  %v1907 = vpow.pop %v1906
  %v1908 = vmul.f32 %v1867, 1.442695
  %v1909 = vpow.pop %v1908
  %v1910 = vadd.f32 %v1869, 1.0
  %v1911 = vadd.f32 %v1871, 1.0
  %v1912 = vadd.f32 %v1873, 1.0
  %v1913 = vadd.f32 %v1875, 1.0
  %v1914 = vadd.f32 %v1877, 1.0
  %v1915 = vadd.f32 %v1879, 1.0
  %v1916 = vadd.f32 %v1881, 1.0
  %v1917 = vadd.f32 %v1883, 1.0
  %v1918 = vadd.f32 %v1885, 1.0
  %v1919 = vadd.f32 %v1887, 1.0
  %v1920 = vadd.f32 %v1889, 1.0
  %v1921 = vadd.f32 %v1891, 1.0
  %v1922 = vadd.f32 %v1893, 1.0
  %v1923 = vadd.f32 %v1895, 1.0
  %v1924 = vadd.f32 %v1897, 1.0
  %v1925 = vadd.f32 %v1899, 1.0
  %v1926 = vadd.f32 %v1901, 1.0
  %v1927 = vadd.f32 %v1903, 1.0
  %v1928 = vadd.f32 %v1905, 1.0
  %v1929 = vadd.f32 %v1907, 1.0
  %v1930 = vadd.f32 %v1909, 1.0
  %v1931 = vrcp.pop %v1910
  %v1932 = vrcp.pop %v1911
  %v1933 = vrcp.pop %v1912
  %v1934 = vrcp.pop %v1913
  %v1935 = vrcp.pop %v1914
  %v1936 = vrcp.pop %v1915
  %v1937 = vrcp.pop %v1916
  %v1938 = vrcp.pop %v1917
  %v1939 = vrcp.pop %v1918
  %v1940 = vrcp.pop %v1919
  %v1941 = vrcp.pop %v1920
  %v1942 = vrcp.pop %v1921
  %v1943 = vrcp.pop %v1922
  %v1944 = vrcp.pop %v1923
  %v1945 = vrcp.pop %v1924
  %v1946 = vrcp.pop %v1925
  %v1947 = vrcp.pop %v1926
  %v1948 = vrcp.pop %v1927
  %v1949 = vrcp.pop %v1928
  %v1950 = vrcp.pop %v1929
  %v1951 = vrcp.pop %v1930
  %s1952 = scalar_lea.vmem %s3, 336
  %1953 = vst [vmem:[%s1952] sm:$0xff] %v1931
  %1954 = vst [vmem:[%s1952 + $0x8] sm:$0xff] %v1932
  %1955 = vst [vmem:[%s1952 + $0x10] sm:$0xff] %v1933
  %1956 = vst [vmem:[%s1952 + $0x18] sm:$0xff] %v1934
  %1957 = vst [vmem:[%s1952 + $0x20] sm:$0xff] %v1935
  %1958 = vst [vmem:[%s1952 + $0x28] sm:$0xff] %v1936
  %1959 = vst [vmem:[%s1952 + $0x30] sm:$0xff] %v1937
  %1960 = vst [vmem:[%s1952 + $0x38] sm:$0xff] %v1938
  %1961 = vst [vmem:[%s1952 + $0x40] sm:$0xff] %v1939
  %1962 = vst [vmem:[%s1952 + $0x48] sm:$0xff] %v1940
  %1963 = vst [vmem:[%s1952 + $0x50] sm:$0xff] %v1941
  %1964 = vst [vmem:[%s1952 + $0x58] sm:$0xff] %v1942
  %1965 = vst [vmem:[%s1952 + $0x60] sm:$0xff] %v1943
  %1966 = vst [vmem:[%s1952 + $0x68] sm:$0xff] %v1944
  %1967 = vst [vmem:[%s1952 + $0x70] sm:$0xff] %v1945
  %1968 = vst [vmem:[%s1952 + $0x78] sm:$0xff] %v1946
  %1969 = vst [vmem:[%s1952 + $0x80] sm:$0xff] %v1947
  %1970 = vst [vmem:[%s1952 + $0x88] sm:$0xff] %v1948
  %1971 = vst [vmem:[%s1952 + $0x90] sm:$0xff] %v1949
  %1972 = vst [vmem:[%s1952 + $0x98] sm:$0xff] %v1950
  %1973 = vst [vmem:[%s1952 + $0xa0] sm:$0x3] %v1951
  %v1974 = vld [vmem:[%s2] sm:$0x1]
  %v1976 = vlaneseq
  %v1977 = vshrl.u32 %v1976, 7
  %v1978 = vsub.s32 0, %v1977
  %v1979 = vrot.slane %v1974, %v1978
  %v1981 = vadd.f32 %v1378, %v1979
  %v1982 = vadd.f32 %v1379, %v1979
  %v1983 = vadd.f32 %v1380, %v1979
  %v1984 = vadd.f32 %v1381, %v1979
  %v1985 = vadd.f32 %v1382, %v1979
  %v1986 = vadd.f32 %v1383, %v1979
  %v1987 = vadd.f32 %v1384, %v1979
  %v1988 = vadd.f32 %v1385, %v1979
  %v1989 = vadd.f32 %v1386, %v1979
  %v1990 = vadd.f32 %v1387, %v1979
  %v1991 = vadd.f32 %v1388, %v1979
  %v1992 = vadd.f32 %v1389, %v1979
  %v1993 = vadd.f32 %v1390, %v1979
  %v1994 = vadd.f32 %v1391, %v1979
  %v1995 = vadd.f32 %v1392, %v1979
  %v1996 = vadd.f32 %v1393, %v1979
  %v1997 = vadd.f32 %v1394, %v1979
  %v1998 = vadd.f32 %v1395, %v1979
  %v1999 = vadd.f32 %v1396, %v1979
  %v2000 = vadd.f32 %v1397, %v1979
  %v2001 = vadd.f32 %v1398, %v1979
  %v2002 = vsub.f32 0.0, %v1981
  %v2003 = vsub.f32 0.0, %v1982
  %v2004 = vsub.f32 0.0, %v1983
  %v2005 = vsub.f32 0.0, %v1984
  %v2006 = vsub.f32 0.0, %v1985
  %v2007 = vsub.f32 0.0, %v1986
  %v2008 = vsub.f32 0.0, %v1987
  %v2009 = vsub.f32 0.0, %v1988
  %v2010 = vsub.f32 0.0, %v1989
  %v2011 = vsub.f32 0.0, %v1990
  %v2012 = vsub.f32 0.0, %v1991
  %v2013 = vsub.f32 0.0, %v1992
  %v2014 = vsub.f32 0.0, %v1993
  %v2015 = vsub.f32 0.0, %v1994
  %v2016 = vsub.f32 0.0, %v1995
  %v2017 = vsub.f32 0.0, %v1996
  %v2018 = vsub.f32 0.0, %v1997
  %v2019 = vsub.f32 0.0, %v1998
  %v2020 = vsub.f32 0.0, %v1999
  %v2021 = vsub.f32 0.0, %v2000
  %v2022 = vsub.f32 0.0, %v2001
  %v2023 = vmul.f32 %v2002, 1.442695
  %v2024 = vpow.pop %v2023
  %v2025 = vmul.f32 %v2003, 1.442695
  %v2026 = vpow.pop %v2025
  %v2027 = vmul.f32 %v2004, 1.442695
  %v2028 = vpow.pop %v2027
  %v2029 = vmul.f32 %v2005, 1.442695
  %v2030 = vpow.pop %v2029
  %v2031 = vmul.f32 %v2006, 1.442695
  %v2032 = vpow.pop %v2031
  %v2033 = vmul.f32 %v2007, 1.442695
  %v2034 = vpow.pop %v2033
  %v2035 = vmul.f32 %v2008, 1.442695
  %v2036 = vpow.pop %v2035
  %v2037 = vmul.f32 %v2009, 1.442695
  %v2038 = vpow.pop %v2037
  %v2039 = vmul.f32 %v2010, 1.442695
  %v2040 = vpow.pop %v2039
  %v2041 = vmul.f32 %v2011, 1.442695
  %v2042 = vpow.pop %v2041
  %v2043 = vmul.f32 %v2012, 1.442695
  %v2044 = vpow.pop %v2043
  %v2045 = vmul.f32 %v2013, 1.442695
  %v2046 = vpow.pop %v2045
  %v2047 = vmul.f32 %v2014, 1.442695
  %v2048 = vpow.pop %v2047
  %v2049 = vmul.f32 %v2015, 1.442695
  %v2050 = vpow.pop %v2049
  %v2051 = vmul.f32 %v2016, 1.442695
  %v2052 = vpow.pop %v2051
  %v2053 = vmul.f32 %v2017, 1.442695
  %v2054 = vpow.pop %v2053
  %v2055 = vmul.f32 %v2018, 1.442695
  %v2056 = vpow.pop %v2055
  %v2057 = vmul.f32 %v2019, 1.442695
  %v2058 = vpow.pop %v2057
  %v2059 = vmul.f32 %v2020, 1.442695
  %v2060 = vpow.pop %v2059
  %v2061 = vmul.f32 %v2021, 1.442695
  %v2062 = vpow.pop %v2061
  %v2063 = vmul.f32 %v2022, 1.442695
  %v2064 = vpow.pop %v2063
  %v2065 = vadd.f32 %v2024, 1.0
  %v2066 = vadd.f32 %v2026, 1.0
  %v2067 = vadd.f32 %v2028, 1.0
  %v2068 = vadd.f32 %v2030, 1.0
  %v2069 = vadd.f32 %v2032, 1.0
  %v2070 = vadd.f32 %v2034, 1.0
  %v2071 = vadd.f32 %v2036, 1.0
  %v2072 = vadd.f32 %v2038, 1.0
  %v2073 = vadd.f32 %v2040, 1.0
  %v2074 = vadd.f32 %v2042, 1.0
  %v2075 = vadd.f32 %v2044, 1.0
  %v2076 = vadd.f32 %v2046, 1.0
  %v2077 = vadd.f32 %v2048, 1.0
  %v2078 = vadd.f32 %v2050, 1.0
  %v2079 = vadd.f32 %v2052, 1.0
  %v2080 = vadd.f32 %v2054, 1.0
  %v2081 = vadd.f32 %v2056, 1.0
  %v2082 = vadd.f32 %v2058, 1.0
  %v2083 = vadd.f32 %v2060, 1.0
  %v2084 = vadd.f32 %v2062, 1.0
  %v2085 = vadd.f32 %v2064, 1.0
  %v2086 = vrcp.pop %v2065
  %v2087 = vrcp.pop %v2066
  %v2088 = vrcp.pop %v2067
  %v2089 = vrcp.pop %v2068
  %v2090 = vrcp.pop %v2069
  %v2091 = vrcp.pop %v2070
  %v2092 = vrcp.pop %v2071
  %v2093 = vrcp.pop %v2072
  %v2094 = vrcp.pop %v2073
  %v2095 = vrcp.pop %v2074
  %v2096 = vrcp.pop %v2075
  %v2097 = vrcp.pop %v2076
  %v2098 = vrcp.pop %v2077
  %v2099 = vrcp.pop %v2078
  %v2100 = vrcp.pop %v2079
  %v2101 = vrcp.pop %v2080
  %v2102 = vrcp.pop %v2081
  %v2103 = vrcp.pop %v2082
  %v2104 = vrcp.pop %v2083
  %v2105 = vrcp.pop %v2084
  %v2106 = vrcp.pop %v2085
  %s2107 = scalar_lea.vmem %s3, 504
  %2108 = vst [vmem:[%s2107] sm:$0xff] %v2086
  %2109 = vst [vmem:[%s2107 + $0x8] sm:$0xff] %v2087
  %2110 = vst [vmem:[%s2107 + $0x10] sm:$0xff] %v2088
  %2111 = vst [vmem:[%s2107 + $0x18] sm:$0xff] %v2089
  %2112 = vst [vmem:[%s2107 + $0x20] sm:$0xff] %v2090
  %2113 = vst [vmem:[%s2107 + $0x28] sm:$0xff] %v2091
  %2114 = vst [vmem:[%s2107 + $0x30] sm:$0xff] %v2092
  %2115 = vst [vmem:[%s2107 + $0x38] sm:$0xff] %v2093
  %2116 = vst [vmem:[%s2107 + $0x40] sm:$0xff] %v2094
  %2117 = vst [vmem:[%s2107 + $0x48] sm:$0xff] %v2095
  %2118 = vst [vmem:[%s2107 + $0x50] sm:$0xff] %v2096
  %2119 = vst [vmem:[%s2107 + $0x58] sm:$0xff] %v2097
  %2120 = vst [vmem:[%s2107 + $0x60] sm:$0xff] %v2098
  %2121 = vst [vmem:[%s2107 + $0x68] sm:$0xff] %v2099
  %2122 = vst [vmem:[%s2107 + $0x70] sm:$0xff] %v2100
  %2123 = vst [vmem:[%s2107 + $0x78] sm:$0xff] %v2101
  %2124 = vst [vmem:[%s2107 + $0x80] sm:$0xff] %v2102
  %2125 = vst [vmem:[%s2107 + $0x88] sm:$0xff] %v2103
  %2126 = vst [vmem:[%s2107 + $0x90] sm:$0xff] %v2104
  %2127 = vst [vmem:[%s2107 + $0x98] sm:$0xff] %v2105
  %2128 = vst [vmem:[%s2107 + $0xa0] sm:$0x3] %v2106
  // Predicated region
  $region14: #{capsule_autoencoder_forward.11} parent=0 // pred_check
    _
  $region15: #{capsule_autoencoder_forward.11} parent=0 // pred_check_branch
    %2130 = sbr.rel (0) target = $region17
  $region16: #{capsule_autoencoder_forward.11} parent=0 // pred_region
    _
  $region17: #{capsule_autoencoder_forward.11} parent=0 // pred_fallthru
    _
  // Predicated region
  $region18: #{capsule_autoencoder_forward.11} parent=0 // pred_check
    _
  $region19: #{capsule_autoencoder_forward.11} parent=0 // pred_check_branch
    %2132 = sbr.rel (0) target = $region21
  $region20: #{capsule_autoencoder_forward.11} parent=0 // pred_region
    _
  $region21: #{capsule_autoencoder_forward.11} parent=0 // pred_fallthru
    _

</llo_original>
